<compile_context>
chip_gen: v5e
topology: v5e:2x2
jax: 0.10.0
libtpu: 0.0.40
codegen_flags: <defaults>
</compile_context>

<pallas_src>
import functools
import math

import jax
import jax.numpy as jnp
from jax.experimental import pallas as pl
from jax.experimental.pallas import tpu as pltpu

F32 = jnp.float32
BF16 = jnp.bfloat16


# ------------------------------ weight packing --------------------------------

def _offsets(entries):
    offs, o = {}, 0
    for name, w in entries:
        offs[name] = (o, w)
        o += w
    return offs, o


def make_packing(H, FF):
    """Static column-offset tables for the three per-stream weight slabs."""
    wh_entries = [  # weights whose input dim is H (rows = H)
        ('e_wq', H), ('e_wk', H), ('e_wv', H), ('e_wo', H), ('e_wf1', FF),
        ('d1_wq', H), ('d1_wk', H), ('d1_wv', H), ('d1_wo', H),
        ('d2_wq', H), ('d2_wk', H), ('d2_wv', H), ('d2_wo', H),
        ('d_wf1', FF),
    ]
    wff_entries = [('e_wf2', H), ('d_wf2', H)]           # input dim FF (rows = FF)
    vec_entries = [  # biases + LayerNorm gamma/beta, all row vectors
        ('e_bq', H), ('e_bk', H), ('e_bv', H), ('e_bo', H),
        ('e_bf1', FF), ('e_bf2', H),
        ('e_g1', H), ('e_b1', H), ('e_g2', H), ('e_b2', H),
        ('d1_bq', H), ('d1_bk', H), ('d1_bv', H), ('d1_bo', H),
        ('d2_bq', H), ('d2_bk', H), ('d2_bv', H), ('d2_bo', H),
        ('d_bf1', FF), ('d_bf2', H),
        ('d_g1', H), ('d_b1', H), ('d_g2', H), ('d_b2', H),
        ('d_g3', H), ('d_b3', H),
    ]
    return _offsets(wh_entries), _offsets(wff_entries), _offsets(vec_entries)


# ------------------------------- fused kernel ---------------------------------

def _fused_forward_kernel(img_ref, guide_ref, mask_ref,
                          convw_ref, fmapw_ref, bbias_ref,
                          wh_ref, wff_ref, vec_ref, whead_ref,
                          out_ref, *,
                          nh, layers, eps, feat_dim, hidden,
                          wh_off, wff_off, vec_off):
    """Backbone + whole MCA stack + pooled head-partials for one (stream, batch)."""
    H = hidden
    dh = H // nh
    scale = 1.0 / math.sqrt(dh)

    def dot(a, w):  # bf16 MXU matmul, f32 accumulation
        return jnp.dot(a.astype(BF16), w, preferred_element_type=F32)

    # --- static window loads from the packed per-stream weight slabs ---
    def w_h(l, name, r0=0, rn=None, c0=0, cn=None):
        o, w = wh_off[name]
        rn = H if rn is None else rn
        cn = w if cn is None else cn
        return wh_ref[0, l, r0:r0 + rn, o + c0:o + c0 + cn]

    def w_ff(l, name):
        o, w = wff_off[name]
        return wff_ref[0, l, :, o:o + w]

    def v_(l, name, c0=0, cn=None):
        o, w = vec_off[name]
        cn = w if cn is None else cn
        return vec_ref[0, l, :, o + c0:o + c0 + cn]

    def layer_norm(y, gam, bet):
        # MCAN LayerNorm: gamma * (y - mean) / (std + eps) + beta,
        # unbiased (n-1) std, eps OUTSIDE the sqrt (matches MCAN, not nn.LayerNorm).
        n = y.shape[-1]
        mu = jnp.mean(y, axis=-1, keepdims=True)
        c = y - mu
        var = jnp.sum(c * c, axis=-1, keepdims=True) * (1.0 / (n - 1))
        return gam * (c / (jnp.sqrt(var) + eps)) + bet

    def mha(q_in, kv_in, mask_qk, l, pre):
        # Per-head Q/K/V/Wo come out of static weight-window loads (no activation
        # lane slicing); the head concat is folded into the output projection.
        acc = None
        for h in range(nh):
            lo = h * dh
            qh = dot(q_in, w_h(l, pre + 'wq', c0=lo, cn=dh)) + v_(l, pre + 'bq', lo, dh)
            kh = dot(kv_in, w_h(l, pre + 'wk', c0=lo, cn=dh)) + v_(l, pre + 'bk', lo, dh)
            vh = dot(kv_in, w_h(l, pre + 'wv', c0=lo, cn=dh)) + v_(l, pre + 'bv', lo, dh)
            s = jnp.einsum('qd,kd->qk', qh.astype(BF16), kh.astype(BF16),
                           preferred_element_type=F32) * scale
            if mask_qk is not None:
                s = s + mask_qk                      # pre-broadcast additive key mask
            s = s - jnp.max(s, axis=-1, keepdims=True)
            e = jnp.exp(s)
            p_attn = e / jnp.sum(e, axis=-1, keepdims=True)
            oh = jnp.dot(p_attn.astype(BF16), vh.astype(BF16),
                         preferred_element_type=F32)                 # (Tq, dh)
            contrib = dot(oh, w_h(l, pre + 'wo', r0=lo, rn=dh))      # (Tq, H)
            acc = contrib if acc is None else acc + contrib
        return acc + v_(l, pre + 'bo')

    def ffn(y, l, pre):
        h1 = jnp.maximum(dot(y, w_h(l, pre + 'wf1')) + v_(l, pre + 'bf1'), 0.0)
        return dot(h1, w_ff(l, pre + 'wf2')) + v_(l, pre + 'bf2')

    # ---- person backbone stand-in (pointwise conv + ReLU + feature_map Linear) ----
    # TODO(synk): external CNN person backbone replaced by a pointwise conv stand-in.
    img = img_ref[0]                                           # (HW, C)
    conv_b = bbias_ref[:, 0:feat_dim]                          # (1, FEAT)
    fmap_b = bbias_ref[:, feat_dim:feat_dim + H]               # (1, H)
    hcv = jnp.maximum(dot(img, convw_ref[...]) + conv_b, 0.0)  # (HW, FEAT)
    p = dot(hcv, fmapw_ref[...]) + fmap_b                      # (HW, H)

    x = guide_ref[0, 0]                                        # (T, H) guiding stream
    mrow = mask_ref[0, 0]                                      # (1, T) additive key mask
    Tq = x.shape[0]
    HW = p.shape[0]
    # Hoist the mask broadcasts out of the per-head / per-layer loops.
    mask_enc = jnp.broadcast_to(mrow, (Tq, Tq))
    mask_dec = jnp.broadcast_to(mrow, (HW, Tq))

    # ---- SA encoder stack on the guiding stream ----
    for l in range(layers):
        x = layer_norm(x + mha(x, x, mask_enc, l, 'e_'), v_(l, 'e_g1'), v_(l, 'e_b1'))
        x = layer_norm(x + ffn(x, l, 'e_'), v_(l, 'e_g2'), v_(l, 'e_b2'))

    # ---- SGA decoder stack on the person stream (guided by encoded x) ----
    for l in range(layers):
        p = layer_norm(p + mha(p, p, None, l, 'd1_'), v_(l, 'd_g1'), v_(l, 'd_b1'))
        p = layer_norm(p + mha(p, x, mask_dec, l, 'd2_'), v_(l, 'd_g2'), v_(l, 'd_b2'))
        p = layer_norm(p + ffn(p, l, 'd_'), v_(l, 'd_g3'), v_(l, 'd_b3'))

    # ---- token-mean pool + this stream's half of both classifier matmuls ----
    pooled = jnp.sum(p, axis=0, keepdims=True) * (1.0 / HW)    # (1, H)
    out_ref[0, 0] = jnp.dot(pooled.astype(BF16), whead_ref[0],
                            preferred_element_type=F32)         # (1, N_DISC+N_CONT)


def _fused_forward(img_tokens, guide, mask_add, conv_w, fmap_w, bb_bias,
                   wh, wff, vec, whead, *, nh):
    """One pallas_call for the whole forward.  Grid = (stream, batch), both parallel."""
    _, B, Tmax, H = guide.shape
    HW, C = img_tokens.shape[1], img_tokens.shape[2]
    L = wh.shape[1]
    FF = wff.shape[2]
    FEAT = conv_w.shape[1]
    NDC = whead.shape[2]
    (wh_off, _), (wff_off, _), (vec_off, _) = make_packing(H, FF)

    kernel = functools.partial(
        _fused_forward_kernel, nh=nh, layers=L, eps=1e-6,
        feat_dim=FEAT, hidden=H,
        wh_off=wh_off, wff_off=wff_off, vec_off=vec_off)

    return pl.pallas_call(
        kernel,
        grid=(2, B),
        in_specs=[
            pl.BlockSpec((1, HW, C), lambda s, b: (b, 0, 0)),
            pl.BlockSpec((1, 1, Tmax, H), lambda s, b: (s, b, 0, 0)),
            pl.BlockSpec((1, 1, 1, Tmax), lambda s, b: (s, b, 0, 0)),
            pl.BlockSpec((C, FEAT), lambda s, b: (0, 0)),
            pl.BlockSpec((FEAT, H), lambda s, b: (0, 0)),
            pl.BlockSpec((1, FEAT + H), lambda s, b: (0, 0)),
            pl.BlockSpec((1, L, H, wh.shape[3]), lambda s, b: (s, 0, 0, 0)),
            pl.BlockSpec((1, L, FF, wff.shape[3]), lambda s, b: (s, 0, 0, 0)),
            pl.BlockSpec((1, L, 1, vec.shape[3]), lambda s, b: (s, 0, 0, 0)),
            pl.BlockSpec((1, H, NDC), lambda s, b: (s, 0, 0)),
        ],
        out_specs=pl.BlockSpec((1, 1, 1, NDC), lambda s, b: (s, b, 0, 0)),
        out_shape=jax.ShapeDtypeStruct((2, B, 1, NDC), F32),
        compiler_params=pltpu.CompilerParams(
            dimension_semantics=("parallel", "parallel"),
            vmem_limit_bytes=32 * 1024 * 1024),
    )(img_tokens, guide, mask_add, conv_w, fmap_w, bb_bias, wh, wff, vec, whead)


# --------------------------------- parameters ----------------------------------

def init_mca_slabs(key, H, FF, L):
    (_, wh_tot), (_, wff_tot), (vec_off, vec_tot) = make_packing(H, FF)
    k1, k2 = jax.random.split(key)
    wh = (0.02 * jax.random.normal(k1, (L, H, wh_tot), F32)).astype(BF16)
    wff = (0.02 * jax.random.normal(k2, (L, FF, wff_tot), F32)).astype(BF16)
    vec = jnp.zeros((L, 1, vec_tot), F32)
    for g in ('e_g1', 'e_g2', 'd_g1', 'd_g2', 'd_g3'):      # LayerNorm gammas = 1
        o, w = vec_off[g]
        vec = vec.at[:, :, o:o + w].set(1.0)
    return wh, wff, vec


def init_params(key, C_in, FEAT, H, FF, L, VOCAB, N_DISC, N_CONT):
    ks = jax.random.split(key, 8)
    wh_t, wff_t, vec_t = init_mca_slabs(ks[0], H, FF, L)       # text-guided MCA
    wh_s, wff_s, vec_s = init_mca_slabs(ks[1], H, FF, L)       # scene-guided MCA
    cls_disc_w = 0.02 * jax.random.normal(ks[2], (2 * H, N_DISC), F32)
    cls_cont_w = 0.02 * jax.random.normal(ks[3], (2 * H, N_CONT), F32)
    # concat([text_avg, scene_avg]) @ W  ==  text_avg @ W[:H] + scene_avg @ W[H:]
    whead = jnp.stack([
        jnp.concatenate([cls_disc_w[:H], cls_cont_w[:H]], axis=1),
        jnp.concatenate([cls_disc_w[H:], cls_cont_w[H:]], axis=1),
    ], axis=0).astype(BF16)                                     # (2, H, N_DISC+N_CONT)
    return {
        'bert_emb': 0.02 * jax.random.normal(ks[4], (VOCAB, H), F32),
        'conv_w': (0.02 * jax.random.normal(ks[5], (C_in, FEAT), F32)).astype(BF16),
        'fmap_w': (0.02 * jax.random.normal(ks[6], (FEAT, H), F32)).astype(BF16),
        'bb_bias': jnp.zeros((1, FEAT + H), F32),
        'mca_wh': jnp.stack([wh_t, wh_s], axis=0),
        'mca_wff': jnp.stack([wff_t, wff_s], axis=0),
        'mca_vec': jnp.stack([vec_t, vec_s], axis=0),
        'cls_w_stream': whead,
        'cls_disc_b': jnp.zeros((N_DISC,), F32),
        'cls_cont_b': jnp.zeros((N_CONT,), F32),
    }


# ------------------------------------ forward -----------------------------------

def forward(params, image_data, inp_scene_feat, input_ids, text_mask, *, nh):
    # torch: input_ids.squeeze(1), text_mask.squeeze(1)
    input_ids = input_ids[:, 0, :]
    text_mask = text_mask[:, 0, :].astype(F32)

    # TODO(synk): frozen pretrained BertModel replaced by a deterministic
    # token-embedding lookup producing text_feat (B, T, H) with H == MCAN hidden.
    text_feat = jnp.take(params['bert_emb'], input_ids, axis=0)      # (B, T, H)

    B, T, H = text_feat.shape
    S = inp_scene_feat.shape[1]
    Tmax = ((max(T, S) + 7) // 8) * 8

    def pad_tokens(feat, n):
        return jnp.pad(feat, ((0, 0), (0, n - feat.shape[1]), (0, 0)))

    text_pad = pad_tokens(text_feat, Tmax)
    scene_pad = pad_tokens(inp_scene_feat.astype(F32), Tmax)

    # Additive key masks: -1e9 on padding / invalid keys, 0 on valid keys.
    text_mask_full = jnp.pad(text_mask, ((0, 0), (0, Tmax - T)))
    text_add = (1.0 - text_mask_full)[:, None, :] * (-1e9)           # (B, 1, Tmax)
    pos = jnp.arange(Tmax)
    scene_add = jnp.broadcast_to(
        jnp.where(pos < S, 0.0, -1e9)[None, None, :], (B, 1, Tmax)).astype(F32)

    guide = jnp.stack([text_pad, scene_pad], axis=0)                  # (2, B, Tmax, H)
    mask_add = jnp.stack([text_add, scene_add], axis=0)               # (2, B, 1, Tmax)

    # Person tokens: NCHW -> (B, HW, C); backbone conv runs inside the fused kernel.
    Bi, C, Hh, Ww = image_data.shape
    img_tokens = jnp.transpose(image_data, (0, 2, 3, 1)).reshape(Bi, Hh * Ww, C)

    parts = _fused_forward(
        img_tokens, guide, mask_add,
        params['conv_w'], params['fmap_w'], params['bb_bias'],
        params['mca_wh'], params['mca_wff'], params['mca_vec'],
        params['cls_w_stream'], nh=nh)                                # (2, B, 1, NDC)

    n_disc = params['cls_disc_b'].shape[0]
    tot = parts[0, :, 0, :] + parts[1, :, 0, :]                       # (B, NDC)
    logits_discrete = tot[:, :n_disc] + params['cls_disc_b']
    logits_cont = jax.nn.sigmoid(tot[:, n_disc:] + params['cls_cont_b'])
    return logits_cont, logits_discrete


# -------------------------------------- main -------------------------------------

if __name__ == "__main__":
    B = 2                   # batch
    C_IN, IMG = 3, 4        # image (B, 3, 4, 4) -> 16 person tokens
    FEAT_DIM = 48           # person-backbone channel dim (feat_dim)
    H = 32                  # scene_feat_dim == MCAN hidden size
    NH = 4                  # MCAN heads
    FF = 64                 # MCAN FF size
    LAYERS = 2              # MCAN layers
    T = 8                   # text tokens
    S = 6                   # scene tokens
    VOCAB = 100
    N_DISC = 7              # num_discrete_classes
    N_CONT = 3              # num_cont_classes

    key = jax.random.PRNGKey(0)
    k_par, k_img, k_scene, k_ids = jax.random.split(key, 4)
    params = init_params(k_par, C_IN, FEAT_DIM, H, FF, LAYERS, VOCAB, N_DISC, N_CONT)

    image_data = jax.random.normal(k_img, (B, C_IN, IMG, IMG), F32)
    inp_scene_feat = jax.random.normal(k_scene, (B, S, H), F32)

    lengths = jnp.array([T, 5])
    valid = (jnp.arange(T)[None, :] < lengths[:, None]).astype(jnp.int32)   # (B, T)
    text_mask = valid[:, None, :]                                           # (B, 1, T)
    ids = jax.random.randint(k_ids, (B, T), 1, VOCAB)
    input_ids = (ids * valid).astype(jnp.int32)[:, None, :]                 # (B, 1, T)

    fwd = jax.jit(functools.partial(forward, nh=NH))
    logits_cont, logits_discrete = fwd(params, image_data, inp_scene_feat,
                                       input_ids, text_mask)
    jax.block_until_ready((logits_cont, logits_discrete))

    assert logits_cont.shape == (B, N_CONT)
    assert logits_discrete.shape == (B, N_DISC)
    assert bool(jnp.all(jnp.isfinite(logits_cont)))
    assert bool(jnp.all(jnp.isfinite(logits_discrete)))
    assert bool(jnp.all((logits_cont >= 0.0) & (logits_cont <= 1.0)))
    print("KERNEL_OK")
</pallas_src>

<mosaic_0001>
module attributes {stable_mosaic.version = 11 : i64} {
  func.func @_fused_forward_kernel(%arg0: i32, %arg1: i32, %arg2: memref<1x16x3xf32, #tpu.memory_space<vmem>>, %arg3: memref<1x1x8x32xf32, #tpu.memory_space<vmem>>, %arg4: memref<1x1x1x8xf32, #tpu.memory_space<vmem>>, %arg5: memref<3x48xbf16, #tpu.memory_space<vmem>>, %arg6: memref<48x32xbf16, #tpu.memory_space<vmem>>, %arg7: memref<1x80xf32, #tpu.memory_space<vmem>>, %arg8: memref<1x2x32x512xbf16, #tpu.memory_space<vmem>>, %arg9: memref<1x2x64x64xbf16, #tpu.memory_space<vmem>>, %arg10: memref<1x2x1x896xf32, #tpu.memory_space<vmem>>, %arg11: memref<1x32x10xbf16, #tpu.memory_space<vmem>>, %arg12: memref<1x1x1x10xf32, #tpu.memory_space<vmem>>) attributes {dimension_semantics = [#tpu.dimension_semantics<parallel>, #tpu.dimension_semantics<parallel>], iteration_bounds = array<i64: 2, 2>, scalar_prefetch = 0 : i64, scratch_operands = 0 : i64, tpu.core_type = #tpu.core_type<tc>, window_params = [{transform_indices = @transform_0, window_bounds = array<i64: 1, 16, 3>}, {transform_indices = @transform_1, window_bounds = array<i64: 1, 1, 8, 32>}, {transform_indices = @transform_2, window_bounds = array<i64: 1, 1, 1, 8>}, {pipeline_mode = #tpu.pipeline_mode<synchronous>, transform_indices = @transform_3, window_bounds = array<i64: 3, 48>}, {pipeline_mode = #tpu.pipeline_mode<synchronous>, transform_indices = @transform_4, window_bounds = array<i64: 48, 32>}, {pipeline_mode = #tpu.pipeline_mode<synchronous>, transform_indices = @transform_5, window_bounds = array<i64: 1, 80>}, {transform_indices = @transform_6, window_bounds = array<i64: 1, 2, 32, 512>}, {transform_indices = @transform_7, window_bounds = array<i64: 1, 2, 64, 64>}, {transform_indices = @transform_8, window_bounds = array<i64: 1, 2, 1, 896>}, {transform_indices = @transform_9, window_bounds = array<i64: 1, 32, 10>}, {transform_indices = @transform_10, window_bounds = array<i64: 1, 1, 1, 10>}]} {
    %c0 = arith.constant 0 : index
    %c0_0 = arith.constant 0 : index
    %c0_1 = arith.constant 0 : index
    %0 = vector.load %arg2[%c0, %c0_0, %c0_1] : memref<1x16x3xf32, #tpu.memory_space<vmem>>, vector<1x16x3xf32>
    %1 = vector.shape_cast %0 : vector<1x16x3xf32> to vector<16x3xf32>
    %c0_2 = arith.constant 0 : index
    %c0_3 = arith.constant 0 : index
    %2 = vector.load %arg7[%c0_2, %c0_3] : memref<1x80xf32, #tpu.memory_space<vmem>>, vector<1x48xf32>
    %c0_4 = arith.constant 0 : index
    %c48 = arith.constant 48 : index
    %3 = vector.load %arg7[%c0_4, %c48] : memref<1x80xf32, #tpu.memory_space<vmem>>, vector<1x32xf32>
    %c0_5 = arith.constant 0 : index
    %c0_6 = arith.constant 0 : index
    %4 = vector.load %arg5[%c0_5, %c0_6] : memref<3x48xbf16, #tpu.memory_space<vmem>>, vector<3x48xbf16>
    %5 = arith.truncf %1 : vector<16x3xf32> to vector<16x3xbf16>
    %cst = arith.constant dense<0.000000e+00> : vector<16x48xf32>
    %6 = tpu.matmul %5, %4, %cst {dimension_numbers = #tpu.dot_dimension_numbers<[1], [0], [0], [1], [0, 0, 1, 1], [], []>} : vector<16x3xbf16>, vector<3x48xbf16>, vector<16x48xf32> -> vector<16x48xf32>
    %7 = vector.broadcast %2 : vector<1x48xf32> to vector<16x48xf32>
    %8 = arith.addf %6, %7 : vector<16x48xf32>
    %cst_7 = arith.constant 0.000000e+00 : f32
    %9 = vector.broadcast %cst_7 : f32 to vector<16x48xf32>
    %10 = arith.maximumf %8, %9 : vector<16x48xf32>
    %c0_8 = arith.constant 0 : index
    %c0_9 = arith.constant 0 : index
    %11 = vector.load %arg6[%c0_8, %c0_9] : memref<48x32xbf16, #tpu.memory_space<vmem>>, vector<48x32xbf16>
    %12 = arith.truncf %10 : vector<16x48xf32> to vector<16x48xbf16>
    %cst_10 = arith.constant dense<0.000000e+00> : vector<16x32xf32>
    %13 = tpu.matmul %12, %11, %cst_10 {dimension_numbers = #tpu.dot_dimension_numbers<[1], [0], [0], [1], [0, 0, 1, 1], [], []>} : vector<16x48xbf16>, vector<48x32xbf16>, vector<16x32xf32> -> vector<16x32xf32>
    %14 = vector.broadcast %3 : vector<1x32xf32> to vector<16x32xf32>
    %15 = arith.addf %13, %14 : vector<16x32xf32>
    %c0_11 = arith.constant 0 : index
    %c0_12 = arith.constant 0 : index
    %c0_13 = arith.constant 0 : index
    %c0_14 = arith.constant 0 : index
    %16 = vector.load %arg3[%c0_11, %c0_12, %c0_13, %c0_14] : memref<1x1x8x32xf32, #tpu.memory_space<vmem>>, vector<1x1x8x32xf32>
    %17 = vector.shape_cast %16 : vector<1x1x8x32xf32> to vector<8x32xf32>
    %c0_15 = arith.constant 0 : index
    %c0_16 = arith.constant 0 : index
    %c0_17 = arith.constant 0 : index
    %c0_18 = arith.constant 0 : index
    %18 = vector.load %arg4[%c0_15, %c0_16, %c0_17, %c0_18] : memref<1x1x1x8xf32, #tpu.memory_space<vmem>>, vector<1x1x1x8xf32>
    %19 = vector.shape_cast %18 : vector<1x1x1x8xf32> to vector<1x8xf32>
    %20 = vector.shape_cast %19 : vector<1x8xf32> to vector<1x8xf32>
    %21 = vector.broadcast %20 : vector<1x8xf32> to vector<8x8xf32>
    %22 = vector.shape_cast %19 : vector<1x8xf32> to vector<1x8xf32>
    %23 = vector.broadcast %22 : vector<1x8xf32> to vector<16x8xf32>
    %c0_19 = arith.constant 0 : index
    %c0_20 = arith.constant 0 : index
    %c0_21 = arith.constant 0 : index
    %c0_22 = arith.constant 0 : index
    %24 = vector.load %arg8[%c0_19, %c0_20, %c0_21, %c0_22] : memref<1x2x32x512xbf16, #tpu.memory_space<vmem>>, vector<1x1x32x8xbf16>
    %25 = vector.shape_cast %24 : vector<1x1x32x8xbf16> to vector<32x8xbf16>
    %26 = arith.truncf %17 : vector<8x32xf32> to vector<8x32xbf16>
    %cst_23 = arith.constant dense<0.000000e+00> : vector<8x8xf32>
    %27 = tpu.matmul %26, %25, %cst_23 {dimension_numbers = #tpu.dot_dimension_numbers<[1], [0], [0], [1], [0, 0, 1, 1], [], []>} : vector<8x32xbf16>, vector<32x8xbf16>, vector<8x8xf32> -> vector<8x8xf32>
    %c0_24 = arith.constant 0 : index
    %c0_25 = arith.constant 0 : index
    %c0_26 = arith.constant 0 : index
    %c0_27 = arith.constant 0 : index
    %28 = vector.load %arg10[%c0_24, %c0_25, %c0_26, %c0_27] : memref<1x2x1x896xf32, #tpu.memory_space<vmem>>, vector<1x1x1x8xf32>
    %29 = vector.shape_cast %28 : vector<1x1x1x8xf32> to vector<1x8xf32>
    %30 = vector.broadcast %29 : vector<1x8xf32> to vector<8x8xf32>
    %31 = arith.addf %27, %30 : vector<8x8xf32>
    %c0_28 = arith.constant 0 : index
    %c0_29 = arith.constant 0 : index
    %c0_30 = arith.constant 0 : index
    %c32 = arith.constant 32 : index
    %32 = vector.load %arg8[%c0_28, %c0_29, %c0_30, %c32] : memref<1x2x32x512xbf16, #tpu.memory_space<vmem>>, vector<1x1x32x8xbf16>
    %33 = vector.shape_cast %32 : vector<1x1x32x8xbf16> to vector<32x8xbf16>
    %34 = arith.truncf %17 : vector<8x32xf32> to vector<8x32xbf16>
    %cst_31 = arith.constant dense<0.000000e+00> : vector<8x8xf32>
    %35 = tpu.matmul %34, %33, %cst_31 {dimension_numbers = #tpu.dot_dimension_numbers<[1], [0], [0], [1], [0, 0, 1, 1], [], []>} : vector<8x32xbf16>, vector<32x8xbf16>, vector<8x8xf32> -> vector<8x8xf32>
    %c0_32 = arith.constant 0 : index
    %c0_33 = arith.constant 0 : index
    %c0_34 = arith.constant 0 : index
    %c32_35 = arith.constant 32 : index
    %36 = vector.load %arg10[%c0_32, %c0_33, %c0_34, %c32_35] : memref<1x2x1x896xf32, #tpu.memory_space<vmem>>, vector<1x1x1x8xf32>
    %37 = vector.shape_cast %36 : vector<1x1x1x8xf32> to vector<1x8xf32>
    %38 = vector.broadcast %37 : vector<1x8xf32> to vector<8x8xf32>
    %39 = arith.addf %35, %38 : vector<8x8xf32>
    %c0_36 = arith.constant 0 : index
    %c0_37 = arith.constant 0 : index
    %c0_38 = arith.constant 0 : index
    %c64 = arith.constant 64 : index
    %40 = vector.load %arg8[%c0_36, %c0_37, %c0_38, %c64] : memref<1x2x32x512xbf16, #tpu.memory_space<vmem>>, vector<1x1x32x8xbf16>
    %41 = vector.shape_cast %40 : vector<1x1x32x8xbf16> to vector<32x8xbf16>
    %42 = arith.truncf %17 : vector<8x32xf32> to vector<8x32xbf16>
    %cst_39 = arith.constant dense<0.000000e+00> : vector<8x8xf32>
    %43 = tpu.matmul %42, %41, %cst_39 {dimension_numbers = #tpu.dot_dimension_numbers<[1], [0], [0], [1], [0, 0, 1, 1], [], []>} : vector<8x32xbf16>, vector<32x8xbf16>, vector<8x8xf32> -> vector<8x8xf32>
    %c0_40 = arith.constant 0 : index
    %c0_41 = arith.constant 0 : index
    %c0_42 = arith.constant 0 : index
    %c64_43 = arith.constant 64 : index
    %44 = vector.load %arg10[%c0_40, %c0_41, %c0_42, %c64_43] : memref<1x2x1x896xf32, #tpu.memory_space<vmem>>, vector<1x1x1x8xf32>
    %45 = vector.shape_cast %44 : vector<1x1x1x8xf32> to vector<1x8xf32>
    %46 = vector.broadcast %45 : vector<1x8xf32> to vector<8x8xf32>
    %47 = arith.addf %43, %46 : vector<8x8xf32>
    %48 = arith.truncf %31 : vector<8x8xf32> to vector<8x8xbf16>
    %49 = arith.truncf %39 : vector<8x8xf32> to vector<8x8xbf16>
    "tpu.trace_start"() <{level = 10 : i32, message = "qd,kd->qk"}> : () -> ()
    %cst_44 = arith.constant dense<0.000000e+00> : vector<8x8xf32>
    %50 = tpu.matmul %48, %49, %cst_44 {dimension_numbers = #tpu.dot_dimension_numbers<[1], [1], [0], [0], [0, 0, 1, 0], [], []>} : vector<8x8xbf16>, vector<8x8xbf16>, vector<8x8xf32> -> vector<8x8xf32>
    "tpu.trace_stop"() : () -> ()
    %cst_45 = arith.constant 0.353553385 : f32
    %51 = vector.broadcast %cst_45 : f32 to vector<8x8xf32>
    %52 = arith.mulf %50, %51 : vector<8x8xf32>
    %53 = arith.addf %52, %21 : vector<8x8xf32>
    %cst_46 = arith.constant dense<0xFF800000> : vector<8xf32>
    %54 = vector.multi_reduction <maximumf>, %53, %cst_46 [1] : vector<8x8xf32> to vector<8xf32>
    %55 = vector.shape_cast %54 : vector<8xf32> to vector<8x1xf32>
    %56 = vector.broadcast %55 : vector<8x1xf32> to vector<8x8xf32>
    %57 = arith.subf %53, %56 : vector<8x8xf32>
    %58 = math.exp %57 : vector<8x8xf32>
    %cst_47 = arith.constant dense<0.000000e+00> : vector<8xf32>
    %59 = vector.multi_reduction <add>, %58, %cst_47 [1] : vector<8x8xf32> to vector<8xf32>
    %60 = vector.shape_cast %59 : vector<8xf32> to vector<8x1xf32>
    %61 = vector.broadcast %60 : vector<8x1xf32> to vector<8x8xf32>
    %62 = arith.divf %58, %61 : vector<8x8xf32>
    %63 = arith.truncf %62 : vector<8x8xf32> to vector<8x8xbf16>
    %64 = arith.truncf %47 : vector<8x8xf32> to vector<8x8xbf16>
    %cst_48 = arith.constant dense<0.000000e+00> : vector<8x8xf32>
    %65 = tpu.matmul %63, %64, %cst_48 {dimension_numbers = #tpu.dot_dimension_numbers<[1], [0], [0], [1], [0, 0, 1, 1], [], []>} : vector<8x8xbf16>, vector<8x8xbf16>, vector<8x8xf32> -> vector<8x8xf32>
    %c0_49 = arith.constant 0 : index
    %c0_50 = arith.constant 0 : index
    %c0_51 = arith.constant 0 : index
    %c96 = arith.constant 96 : index
    %66 = vector.load %arg8[%c0_49, %c0_50, %c0_51, %c96] : memref<1x2x32x512xbf16, #tpu.memory_space<vmem>>, vector<1x1x8x32xbf16>
    %67 = vector.shape_cast %66 : vector<1x1x8x32xbf16> to vector<8x32xbf16>
    %68 = arith.truncf %65 : vector<8x8xf32> to vector<8x8xbf16>
    %cst_52 = arith.constant dense<0.000000e+00> : vector<8x32xf32>
    %69 = tpu.matmul %68, %67, %cst_52 {dimension_numbers = #tpu.dot_dimension_numbers<[1], [0], [0], [1], [0, 0, 1, 1], [], []>} : vector<8x8xbf16>, vector<8x32xbf16>, vector<8x32xf32> -> vector<8x32xf32>
    %c0_53 = arith.constant 0 : index
    %c0_54 = arith.constant 0 : index
    %c0_55 = arith.constant 0 : index
    %c8 = arith.constant 8 : index
    %70 = vector.load %arg8[%c0_53, %c0_54, %c0_55, %c8] : memref<1x2x32x512xbf16, #tpu.memory_space<vmem>>, vector<1x1x32x8xbf16>
    %71 = vector.shape_cast %70 : vector<1x1x32x8xbf16> to vector<32x8xbf16>
    %72 = arith.truncf %17 : vector<8x32xf32> to vector<8x32xbf16>
    %cst_56 = arith.constant dense<0.000000e+00> : vector<8x8xf32>
    %73 = tpu.matmul %72, %71, %cst_56 {dimension_numbers = #tpu.dot_dimension_numbers<[1], [0], [0], [1], [0, 0, 1, 1], [], []>} : vector<8x32xbf16>, vector<32x8xbf16>, vector<8x8xf32> -> vector<8x8xf32>
    %c0_57 = arith.constant 0 : index
    %c0_58 = arith.constant 0 : index
    %c0_59 = arith.constant 0 : index
    %c8_60 = arith.constant 8 : index
    %74 = vector.load %arg10[%c0_57, %c0_58, %c0_59, %c8_60] : memref<1x2x1x896xf32, #tpu.memory_space<vmem>>, vector<1x1x1x8xf32>
    %75 = vector.shape_cast %74 : vector<1x1x1x8xf32> to vector<1x8xf32>
    %76 = vector.broadcast %75 : vector<1x8xf32> to vector<8x8xf32>
    %77 = arith.addf %73, %76 : vector<8x8xf32>
    %c0_61 = arith.constant 0 : index
    %c0_62 = arith.constant 0 : index
    %c0_63 = arith.constant 0 : index
    %c40 = arith.constant 40 : index
    %78 = vector.load %arg8[%c0_61, %c0_62, %c0_63, %c40] : memref<1x2x32x512xbf16, #tpu.memory_space<vmem>>, vector<1x1x32x8xbf16>
    %79 = vector.shape_cast %78 : vector<1x1x32x8xbf16> to vector<32x8xbf16>
    %80 = arith.truncf %17 : vector<8x32xf32> to vector<8x32xbf16>
    %cst_64 = arith.constant dense<0.000000e+00> : vector<8x8xf32>
    %81 = tpu.matmul %80, %79, %cst_64 {dimension_numbers = #tpu.dot_dimension_numbers<[1], [0], [0], [1], [0, 0, 1, 1], [], []>} : vector<8x32xbf16>, vector<32x8xbf16>, vector<8x8xf32> -> vector<8x8xf32>
    %c0_65 = arith.constant 0 : index
    %c0_66 = arith.constant 0 : index
    %c0_67 = arith.constant 0 : index
    %c40_68 = arith.constant 40 : index
    %82 = vector.load %arg10[%c0_65, %c0_66, %c0_67, %c40_68] : memref<1x2x1x896xf32, #tpu.memory_space<vmem>>, vector<1x1x1x8xf32>
    %83 = vector.shape_cast %82 : vector<1x1x1x8xf32> to vector<1x8xf32>
    %84 = vector.broadcast %83 : vector<1x8xf32> to vector<8x8xf32>
    %85 = arith.addf %81, %84 : vector<8x8xf32>
    %c0_69 = arith.constant 0 : index
    %c0_70 = arith.constant 0 : index
    %c0_71 = arith.constant 0 : index
    %c72 = arith.constant 72 : index
    %86 = vector.load %arg8[%c0_69, %c0_70, %c0_71, %c72] : memref<1x2x32x512xbf16, #tpu.memory_space<vmem>>, vector<1x1x32x8xbf16>
    %87 = vector.shape_cast %86 : vector<1x1x32x8xbf16> to vector<32x8xbf16>
    %88 = arith.truncf %17 : vector<8x32xf32> to vector<8x32xbf16>
    %cst_72 = arith.constant dense<0.000000e+00> : vector<8x8xf32>
    %89 = tpu.matmul %88, %87, %cst_72 {dimension_numbers = #tpu.dot_dimension_numbers<[1], [0], [0], [1], [0, 0, 1, 1], [], []>} : vector<8x32xbf16>, vector<32x8xbf16>, vector<8x8xf32> -> vector<8x8xf32>
    %c0_73 = arith.constant 0 : index
    %c0_74 = arith.constant 0 : index
    %c0_75 = arith.constant 0 : index
    %c72_76 = arith.constant 72 : index
    %90 = vector.load %arg10[%c0_73, %c0_74, %c0_75, %c72_76] : memref<1x2x1x896xf32, #tpu.memory_space<vmem>>, vector<1x1x1x8xf32>
    %91 = vector.shape_cast %90 : vector<1x1x1x8xf32> to vector<1x8xf32>
    %92 = vector.broadcast %91 : vector<1x8xf32> to vector<8x8xf32>
    %93 = arith.addf %89, %92 : vector<8x8xf32>
    %94 = arith.truncf %77 : vector<8x8xf32> to vector<8x8xbf16>
    %95 = arith.truncf %85 : vector<8x8xf32> to vector<8x8xbf16>
    "tpu.trace_start"() <{level = 10 : i32, message = "qd,kd->qk"}> : () -> ()
    %cst_77 = arith.constant dense<0.000000e+00> : vector<8x8xf32>
    %96 = tpu.matmul %94, %95, %cst_77 {dimension_numbers = #tpu.dot_dimension_numbers<[1], [1], [0], [0], [0, 0, 1, 0], [], []>} : vector<8x8xbf16>, vector<8x8xbf16>, vector<8x8xf32> -> vector<8x8xf32>
    "tpu.trace_stop"() : () -> ()
    %cst_78 = arith.constant 0.353553385 : f32
    %97 = vector.broadcast %cst_78 : f32 to vector<8x8xf32>
    %98 = arith.mulf %96, %97 : vector<8x8xf32>
    %99 = arith.addf %98, %21 : vector<8x8xf32>
    %cst_79 = arith.constant dense<0xFF800000> : vector<8xf32>
    %100 = vector.multi_reduction <maximumf>, %99, %cst_79 [1] : vector<8x8xf32> to vector<8xf32>
    %101 = vector.shape_cast %100 : vector<8xf32> to vector<8x1xf32>
    %102 = vector.broadcast %101 : vector<8x1xf32> to vector<8x8xf32>
    %103 = arith.subf %99, %102 : vector<8x8xf32>
    %104 = math.exp %103 : vector<8x8xf32>
    %cst_80 = arith.constant dense<0.000000e+00> : vector<8xf32>
    %105 = vector.multi_reduction <add>, %104, %cst_80 [1] : vector<8x8xf32> to vector<8xf32>
    %106 = vector.shape_cast %105 : vector<8xf32> to vector<8x1xf32>
    %107 = vector.broadcast %106 : vector<8x1xf32> to vector<8x8xf32>
    %108 = arith.divf %104, %107 : vector<8x8xf32>
    %109 = arith.truncf %108 : vector<8x8xf32> to vector<8x8xbf16>
    %110 = arith.truncf %93 : vector<8x8xf32> to vector<8x8xbf16>
    %cst_81 = arith.constant dense<0.000000e+00> : vector<8x8xf32>
    %111 = tpu.matmul %109, %110, %cst_81 {dimension_numbers = #tpu.dot_dimension_numbers<[1], [0], [0], [1], [0, 0, 1, 1], [], []>} : vector<8x8xbf16>, vector<8x8xbf16>, vector<8x8xf32> -> vector<8x8xf32>
    %c0_82 = arith.constant 0 : index
    %c0_83 = arith.constant 0 : index
    %c8_84 = arith.constant 8 : index
    %c96_85 = arith.constant 96 : index
    %112 = vector.load %arg8[%c0_82, %c0_83, %c8_84, %c96_85] : memref<1x2x32x512xbf16, #tpu.memory_space<vmem>>, vector<1x1x8x32xbf16>
    %113 = vector.shape_cast %112 : vector<1x1x8x32xbf16> to vector<8x32xbf16>
    %114 = arith.truncf %111 : vector<8x8xf32> to vector<8x8xbf16>
    %cst_86 = arith.constant dense<0.000000e+00> : vector<8x32xf32>
    %115 = tpu.matmul %114, %113, %cst_86 {dimension_numbers = #tpu.dot_dimension_numbers<[1], [0], [0], [1], [0, 0, 1, 1], [], []>} : vector<8x8xbf16>, vector<8x32xbf16>, vector<8x32xf32> -> vector<8x32xf32>
    %116 = arith.addf %69, %115 : vector<8x32xf32>
    %c0_87 = arith.constant 0 : index
    %c0_88 = arith.constant 0 : index
    %c0_89 = arith.constant 0 : index
    %c16 = arith.constant 16 : index
    %117 = vector.load %arg8[%c0_87, %c0_88, %c0_89, %c16] : memref<1x2x32x512xbf16, #tpu.memory_space<vmem>>, vector<1x1x32x8xbf16>
    %118 = vector.shape_cast %117 : vector<1x1x32x8xbf16> to vector<32x8xbf16>
    %119 = arith.truncf %17 : vector<8x32xf32> to vector<8x32xbf16>
    %cst_90 = arith.constant dense<0.000000e+00> : vector<8x8xf32>
    %120 = tpu.matmul %119, %118, %cst_90 {dimension_numbers = #tpu.dot_dimension_numbers<[1], [0], [0], [1], [0, 0, 1, 1], [], []>} : vector<8x32xbf16>, vector<32x8xbf16>, vector<8x8xf32> -> vector<8x8xf32>
    %c0_91 = arith.constant 0 : index
    %c0_92 = arith.constant 0 : index
    %c0_93 = arith.constant 0 : index
    %c16_94 = arith.constant 16 : index
    %121 = vector.load %arg10[%c0_91, %c0_92, %c0_93, %c16_94] : memref<1x2x1x896xf32, #tpu.memory_space<vmem>>, vector<1x1x1x8xf32>
    %122 = vector.shape_cast %121 : vector<1x1x1x8xf32> to vector<1x8xf32>
    %123 = vector.broadcast %122 : vector<1x8xf32> to vector<8x8xf32>
    %124 = arith.addf %120, %123 : vector<8x8xf32>
    %c0_95 = arith.constant 0 : index
    %c0_96 = arith.constant 0 : index
    %c0_97 = arith.constant 0 : index
    %c48_98 = arith.constant 48 : index
    %125 = vector.load %arg8[%c0_95, %c0_96, %c0_97, %c48_98] : memref<1x2x32x512xbf16, #tpu.memory_space<vmem>>, vector<1x1x32x8xbf16>
    %126 = vector.shape_cast %125 : vector<1x1x32x8xbf16> to vector<32x8xbf16>
    %127 = arith.truncf %17 : vector<8x32xf32> to vector<8x32xbf16>
    %cst_99 = arith.constant dense<0.000000e+00> : vector<8x8xf32>
    %128 = tpu.matmul %127, %126, %cst_99 {dimension_numbers = #tpu.dot_dimension_numbers<[1], [0], [0], [1], [0, 0, 1, 1], [], []>} : vector<8x32xbf16>, vector<32x8xbf16>, vector<8x8xf32> -> vector<8x8xf32>
    %c0_100 = arith.constant 0 : index
    %c0_101 = arith.constant 0 : index
    %c0_102 = arith.constant 0 : index
    %c48_103 = arith.constant 48 : index
    %129 = vector.load %arg10[%c0_100, %c0_101, %c0_102, %c48_103] : memref<1x2x1x896xf32, #tpu.memory_space<vmem>>, vector<1x1x1x8xf32>
    %130 = vector.shape_cast %129 : vector<1x1x1x8xf32> to vector<1x8xf32>
    %131 = vector.broadcast %130 : vector<1x8xf32> to vector<8x8xf32>
    %132 = arith.addf %128, %131 : vector<8x8xf32>
    %c0_104 = arith.constant 0 : index
    %c0_105 = arith.constant 0 : index
    %c0_106 = arith.constant 0 : index
    %c80 = arith.constant 80 : index
    %133 = vector.load %arg8[%c0_104, %c0_105, %c0_106, %c80] : memref<1x2x32x512xbf16, #tpu.memory_space<vmem>>, vector<1x1x32x8xbf16>
    %134 = vector.shape_cast %133 : vector<1x1x32x8xbf16> to vector<32x8xbf16>
    %135 = arith.truncf %17 : vector<8x32xf32> to vector<8x32xbf16>
    %cst_107 = arith.constant dense<0.000000e+00> : vector<8x8xf32>
    %136 = tpu.matmul %135, %134, %cst_107 {dimension_numbers = #tpu.dot_dimension_numbers<[1], [0], [0], [1], [0, 0, 1, 1], [], []>} : vector<8x32xbf16>, vector<32x8xbf16>, vector<8x8xf32> -> vector<8x8xf32>
    %c0_108 = arith.constant 0 : index
    %c0_109 = arith.constant 0 : index
    %c0_110 = arith.constant 0 : index
    %c80_111 = arith.constant 80 : index
    %137 = vector.load %arg10[%c0_108, %c0_109, %c0_110, %c80_111] : memref<1x2x1x896xf32, #tpu.memory_space<vmem>>, vector<1x1x1x8xf32>
    %138 = vector.shape_cast %137 : vector<1x1x1x8xf32> to vector<1x8xf32>
    %139 = vector.broadcast %138 : vector<1x8xf32> to vector<8x8xf32>
    %140 = arith.addf %136, %139 : vector<8x8xf32>
    %141 = arith.truncf %124 : vector<8x8xf32> to vector<8x8xbf16>
    %142 = arith.truncf %132 : vector<8x8xf32> to vector<8x8xbf16>
    "tpu.trace_start"() <{level = 10 : i32, message = "qd,kd->qk"}> : () -> ()
    %cst_112 = arith.constant dense<0.000000e+00> : vector<8x8xf32>
    %143 = tpu.matmul %141, %142, %cst_112 {dimension_numbers = #tpu.dot_dimension_numbers<[1], [1], [0], [0], [0, 0, 1, 0], [], []>} : vector<8x8xbf16>, vector<8x8xbf16>, vector<8x8xf32> -> vector<8x8xf32>
    "tpu.trace_stop"() : () -> ()
    %cst_113 = arith.constant 0.353553385 : f32
    %144 = vector.broadcast %cst_113 : f32 to vector<8x8xf32>
    %145 = arith.mulf %143, %144 : vector<8x8xf32>
    %146 = arith.addf %145, %21 : vector<8x8xf32>
    %cst_114 = arith.constant dense<0xFF800000> : vector<8xf32>
    %147 = vector.multi_reduction <maximumf>, %146, %cst_114 [1] : vector<8x8xf32> to vector<8xf32>
    %148 = vector.shape_cast %147 : vector<8xf32> to vector<8x1xf32>
    %149 = vector.broadcast %148 : vector<8x1xf32> to vector<8x8xf32>
    %150 = arith.subf %146, %149 : vector<8x8xf32>
    %151 = math.exp %150 : vector<8x8xf32>
    %cst_115 = arith.constant dense<0.000000e+00> : vector<8xf32>
    %152 = vector.multi_reduction <add>, %151, %cst_115 [1] : vector<8x8xf32> to vector<8xf32>
    %153 = vector.shape_cast %152 : vector<8xf32> to vector<8x1xf32>
    %154 = vector.broadcast %153 : vector<8x1xf32> to vector<8x8xf32>
    %155 = arith.divf %151, %154 : vector<8x8xf32>
    %156 = arith.truncf %155 : vector<8x8xf32> to vector<8x8xbf16>
    %157 = arith.truncf %140 : vector<8x8xf32> to vector<8x8xbf16>
    %cst_116 = arith.constant dense<0.000000e+00> : vector<8x8xf32>
    %158 = tpu.matmul %156, %157, %cst_116 {dimension_numbers = #tpu.dot_dimension_numbers<[1], [0], [0], [1], [0, 0, 1, 1], [], []>} : vector<8x8xbf16>, vector<8x8xbf16>, vector<8x8xf32> -> vector<8x8xf32>
    %c0_117 = arith.constant 0 : index
    %c0_118 = arith.constant 0 : index
    %c16_119 = arith.constant 16 : index
    %c96_120 = arith.constant 96 : index
    %159 = vector.load %arg8[%c0_117, %c0_118, %c16_119, %c96_120] : memref<1x2x32x512xbf16, #tpu.memory_space<vmem>>, vector<1x1x8x32xbf16>
    %160 = vector.shape_cast %159 : vector<1x1x8x32xbf16> to vector<8x32xbf16>
    %161 = arith.truncf %158 : vector<8x8xf32> to vector<8x8xbf16>
    %cst_121 = arith.constant dense<0.000000e+00> : vector<8x32xf32>
    %162 = tpu.matmul %161, %160, %cst_121 {dimension_numbers = #tpu.dot_dimension_numbers<[1], [0], [0], [1], [0, 0, 1, 1], [], []>} : vector<8x8xbf16>, vector<8x32xbf16>, vector<8x32xf32> -> vector<8x32xf32>
    %163 = arith.addf %116, %162 : vector<8x32xf32>
    %c0_122 = arith.constant 0 : index
    %c0_123 = arith.constant 0 : index
    %c0_124 = arith.constant 0 : index
    %c24 = arith.constant 24 : index
    %164 = vector.load %arg8[%c0_122, %c0_123, %c0_124, %c24] : memref<1x2x32x512xbf16, #tpu.memory_space<vmem>>, vector<1x1x32x8xbf16>
    %165 = vector.shape_cast %164 : vector<1x1x32x8xbf16> to vector<32x8xbf16>
    %166 = arith.truncf %17 : vector<8x32xf32> to vector<8x32xbf16>
    %cst_125 = arith.constant dense<0.000000e+00> : vector<8x8xf32>
    %167 = tpu.matmul %166, %165, %cst_125 {dimension_numbers = #tpu.dot_dimension_numbers<[1], [0], [0], [1], [0, 0, 1, 1], [], []>} : vector<8x32xbf16>, vector<32x8xbf16>, vector<8x8xf32> -> vector<8x8xf32>
    %c0_126 = arith.constant 0 : index
    %c0_127 = arith.constant 0 : index
    %c0_128 = arith.constant 0 : index
    %c24_129 = arith.constant 24 : index
    %168 = vector.load %arg10[%c0_126, %c0_127, %c0_128, %c24_129] : memref<1x2x1x896xf32, #tpu.memory_space<vmem>>, vector<1x1x1x8xf32>
    %169 = vector.shape_cast %168 : vector<1x1x1x8xf32> to vector<1x8xf32>
    %170 = vector.broadcast %169 : vector<1x8xf32> to vector<8x8xf32>
    %171 = arith.addf %167, %170 : vector<8x8xf32>
    %c0_130 = arith.constant 0 : index
    %c0_131 = arith.constant 0 : index
    %c0_132 = arith.constant 0 : index
    %c56 = arith.constant 56 : index
    %172 = vector.load %arg8[%c0_130, %c0_131, %c0_132, %c56] : memref<1x2x32x512xbf16, #tpu.memory_space<vmem>>, vector<1x1x32x8xbf16>
    %173 = vector.shape_cast %172 : vector<1x1x32x8xbf16> to vector<32x8xbf16>
    %174 = arith.truncf %17 : vector<8x32xf32> to vector<8x32xbf16>
    %cst_133 = arith.constant dense<0.000000e+00> : vector<8x8xf32>
    %175 = tpu.matmul %174, %173, %cst_133 {dimension_numbers = #tpu.dot_dimension_numbers<[1], [0], [0], [1], [0, 0, 1, 1], [], []>} : vector<8x32xbf16>, vector<32x8xbf16>, vector<8x8xf32> -> vector<8x8xf32>
    %c0_134 = arith.constant 0 : index
    %c0_135 = arith.constant 0 : index
    %c0_136 = arith.constant 0 : index
    %c56_137 = arith.constant 56 : index
    %176 = vector.load %arg10[%c0_134, %c0_135, %c0_136, %c56_137] : memref<1x2x1x896xf32, #tpu.memory_space<vmem>>, vector<1x1x1x8xf32>
    %177 = vector.shape_cast %176 : vector<1x1x1x8xf32> to vector<1x8xf32>
    %178 = vector.broadcast %177 : vector<1x8xf32> to vector<8x8xf32>
    %179 = arith.addf %175, %178 : vector<8x8xf32>
    %c0_138 = arith.constant 0 : index
    %c0_139 = arith.constant 0 : index
    %c0_140 = arith.constant 0 : index
    %c88 = arith.constant 88 : index
    %180 = vector.load %arg8[%c0_138, %c0_139, %c0_140, %c88] : memref<1x2x32x512xbf16, #tpu.memory_space<vmem>>, vector<1x1x32x8xbf16>
    %181 = vector.shape_cast %180 : vector<1x1x32x8xbf16> to vector<32x8xbf16>
    %182 = arith.truncf %17 : vector<8x32xf32> to vector<8x32xbf16>
    %cst_141 = arith.constant dense<0.000000e+00> : vector<8x8xf32>
    %183 = tpu.matmul %182, %181, %cst_141 {dimension_numbers = #tpu.dot_dimension_numbers<[1], [0], [0], [1], [0, 0, 1, 1], [], []>} : vector<8x32xbf16>, vector<32x8xbf16>, vector<8x8xf32> -> vector<8x8xf32>
    %c0_142 = arith.constant 0 : index
    %c0_143 = arith.constant 0 : index
    %c0_144 = arith.constant 0 : index
    %c88_145 = arith.constant 88 : index
    %184 = vector.load %arg10[%c0_142, %c0_143, %c0_144, %c88_145] : memref<1x2x1x896xf32, #tpu.memory_space<vmem>>, vector<1x1x1x8xf32>
    %185 = vector.shape_cast %184 : vector<1x1x1x8xf32> to vector<1x8xf32>
    %186 = vector.broadcast %185 : vector<1x8xf32> to vector<8x8xf32>
    %187 = arith.addf %183, %186 : vector<8x8xf32>
    %188 = arith.truncf %171 : vector<8x8xf32> to vector<8x8xbf16>
    %189 = arith.truncf %179 : vector<8x8xf32> to vector<8x8xbf16>
    "tpu.trace_start"() <{level = 10 : i32, message = "qd,kd->qk"}> : () -> ()
    %cst_146 = arith.constant dense<0.000000e+00> : vector<8x8xf32>
    %190 = tpu.matmul %188, %189, %cst_146 {dimension_numbers = #tpu.dot_dimension_numbers<[1], [1], [0], [0], [0, 0, 1, 0], [], []>} : vector<8x8xbf16>, vector<8x8xbf16>, vector<8x8xf32> -> vector<8x8xf32>
    "tpu.trace_stop"() : () -> ()
    %cst_147 = arith.constant 0.353553385 : f32
    %191 = vector.broadcast %cst_147 : f32 to vector<8x8xf32>
    %192 = arith.mulf %190, %191 : vector<8x8xf32>
    %193 = arith.addf %192, %21 : vector<8x8xf32>
    %cst_148 = arith.constant dense<0xFF800000> : vector<8xf32>
    %194 = vector.multi_reduction <maximumf>, %193, %cst_148 [1] : vector<8x8xf32> to vector<8xf32>
    %195 = vector.shape_cast %194 : vector<8xf32> to vector<8x1xf32>
    %196 = vector.broadcast %195 : vector<8x1xf32> to vector<8x8xf32>
    %197 = arith.subf %193, %196 : vector<8x8xf32>
    %198 = math.exp %197 : vector<8x8xf32>
    %cst_149 = arith.constant dense<0.000000e+00> : vector<8xf32>
    %199 = vector.multi_reduction <add>, %198, %cst_149 [1] : vector<8x8xf32> to vector<8xf32>
    %200 = vector.shape_cast %199 : vector<8xf32> to vector<8x1xf32>
    %201 = vector.broadcast %200 : vector<8x1xf32> to vector<8x8xf32>
    %202 = arith.divf %198, %201 : vector<8x8xf32>
    %203 = arith.truncf %202 : vector<8x8xf32> to vector<8x8xbf16>
    %204 = arith.truncf %187 : vector<8x8xf32> to vector<8x8xbf16>
    %cst_150 = arith.constant dense<0.000000e+00> : vector<8x8xf32>
    %205 = tpu.matmul %203, %204, %cst_150 {dimension_numbers = #tpu.dot_dimension_numbers<[1], [0], [0], [1], [0, 0, 1, 1], [], []>} : vector<8x8xbf16>, vector<8x8xbf16>, vector<8x8xf32> -> vector<8x8xf32>
    %c0_151 = arith.constant 0 : index
    %c0_152 = arith.constant 0 : index
    %c24_153 = arith.constant 24 : index
    %c96_154 = arith.constant 96 : index
    %206 = vector.load %arg8[%c0_151, %c0_152, %c24_153, %c96_154] : memref<1x2x32x512xbf16, #tpu.memory_space<vmem>>, vector<1x1x8x32xbf16>
    %207 = vector.shape_cast %206 : vector<1x1x8x32xbf16> to vector<8x32xbf16>
    %208 = arith.truncf %205 : vector<8x8xf32> to vector<8x8xbf16>
    %cst_155 = arith.constant dense<0.000000e+00> : vector<8x32xf32>
    %209 = tpu.matmul %208, %207, %cst_155 {dimension_numbers = #tpu.dot_dimension_numbers<[1], [0], [0], [1], [0, 0, 1, 1], [], []>} : vector<8x8xbf16>, vector<8x32xbf16>, vector<8x32xf32> -> vector<8x32xf32>
    %210 = arith.addf %163, %209 : vector<8x32xf32>
    %c0_156 = arith.constant 0 : index
    %c0_157 = arith.constant 0 : index
    %c0_158 = arith.constant 0 : index
    %c96_159 = arith.constant 96 : index
    %211 = vector.load %arg10[%c0_156, %c0_157, %c0_158, %c96_159] : memref<1x2x1x896xf32, #tpu.memory_space<vmem>>, vector<1x1x1x32xf32>
    %212 = vector.shape_cast %211 : vector<1x1x1x32xf32> to vector<1x32xf32>
    %213 = vector.broadcast %212 : vector<1x32xf32> to vector<8x32xf32>
    %214 = arith.addf %210, %213 : vector<8x32xf32>
    %215 = arith.addf %17, %214 : vector<8x32xf32>
    %c0_160 = arith.constant 0 : index
    %c0_161 = arith.constant 0 : index
    %c0_162 = arith.constant 0 : index
    %c224 = arith.constant 224 : index
    %216 = vector.load %arg10[%c0_160, %c0_161, %c0_162, %c224] : memref<1x2x1x896xf32, #tpu.memory_space<vmem>>, vector<1x1x1x32xf32>
    %217 = vector.shape_cast %216 : vector<1x1x1x32xf32> to vector<1x32xf32>
    %c0_163 = arith.constant 0 : index
    %c0_164 = arith.constant 0 : index
    %c0_165 = arith.constant 0 : index
    %c256 = arith.constant 256 : index
    %218 = vector.load %arg10[%c0_163, %c0_164, %c0_165, %c256] : memref<1x2x1x896xf32, #tpu.memory_space<vmem>>, vector<1x1x1x32xf32>
    %219 = vector.shape_cast %218 : vector<1x1x1x32xf32> to vector<1x32xf32>
    %cst_166 = arith.constant dense<0.000000e+00> : vector<8xf32>
    %220 = vector.multi_reduction <add>, %215, %cst_166 [1] : vector<8x32xf32> to vector<8xf32>
    %221 = vector.shape_cast %220 : vector<8xf32> to vector<8x1xf32>
    %cst_167 = arith.constant 3.200000e+01 : f32
    %222 = vector.broadcast %cst_167 : f32 to vector<8x1xf32>
    %223 = arith.divf %221, %222 : vector<8x1xf32>
    %224 = vector.broadcast %223 : vector<8x1xf32> to vector<8x32xf32>
    %225 = arith.subf %215, %224 : vector<8x32xf32>
    %226 = arith.mulf %225, %225 : vector<8x32xf32>
    %cst_168 = arith.constant dense<0.000000e+00> : vector<8xf32>
    %227 = vector.multi_reduction <add>, %226, %cst_168 [1] : vector<8x32xf32> to vector<8xf32>
    %228 = vector.shape_cast %227 : vector<8xf32> to vector<8x1xf32>
    %cst_169 = arith.constant 0.0322580636 : f32
    %229 = vector.broadcast %cst_169 : f32 to vector<8x1xf32>
    %230 = arith.mulf %228, %229 : vector<8x1xf32>
    %231 = math.sqrt %230 : vector<8x1xf32>
    %cst_170 = arith.constant 9.99999997E-7 : f32
    %232 = vector.broadcast %cst_170 : f32 to vector<8x1xf32>
    %233 = arith.addf %231, %232 : vector<8x1xf32>
    %234 = vector.broadcast %233 : vector<8x1xf32> to vector<8x32xf32>
    %235 = arith.divf %225, %234 : vector<8x32xf32>
    %236 = vector.broadcast %217 : vector<1x32xf32> to vector<8x32xf32>
    %237 = arith.mulf %236, %235 : vector<8x32xf32>
    %238 = vector.broadcast %219 : vector<1x32xf32> to vector<8x32xf32>
    %239 = arith.addf %237, %238 : vector<8x32xf32>
    %c0_171 = arith.constant 0 : index
    %c0_172 = arith.constant 0 : index
    %c0_173 = arith.constant 0 : index
    %c128 = arith.constant 128 : index
    %240 = vector.load %arg8[%c0_171, %c0_172, %c0_173, %c128] : memref<1x2x32x512xbf16, #tpu.memory_space<vmem>>, vector<1x1x32x64xbf16>
    %241 = vector.shape_cast %240 : vector<1x1x32x64xbf16> to vector<32x64xbf16>
    %242 = arith.truncf %239 : vector<8x32xf32> to vector<8x32xbf16>
    %cst_174 = arith.constant dense<0.000000e+00> : vector<8x64xf32>
    %243 = tpu.matmul %242, %241, %cst_174 {dimension_numbers = #tpu.dot_dimension_numbers<[1], [0], [0], [1], [0, 0, 1, 1], [], []>} : vector<8x32xbf16>, vector<32x64xbf16>, vector<8x64xf32> -> vector<8x64xf32>
    %c0_175 = arith.constant 0 : index
    %c0_176 = arith.constant 0 : index
    %c0_177 = arith.constant 0 : index
    %c128_178 = arith.constant 128 : index
    %244 = vector.load %arg10[%c0_175, %c0_176, %c0_177, %c128_178] : memref<1x2x1x896xf32, #tpu.memory_space<vmem>>, vector<1x1x1x64xf32>
    %245 = vector.shape_cast %244 : vector<1x1x1x64xf32> to vector<1x64xf32>
    %246 = vector.broadcast %245 : vector<1x64xf32> to vector<8x64xf32>
    %247 = arith.addf %243, %246 : vector<8x64xf32>
    %cst_179 = arith.constant 0.000000e+00 : f32
    %248 = vector.broadcast %cst_179 : f32 to vector<8x64xf32>
    %249 = arith.maximumf %247, %248 : vector<8x64xf32>
    %c0_180 = arith.constant 0 : index
    %c0_181 = arith.constant 0 : index
    %c0_182 = arith.constant 0 : index
    %c0_183 = arith.constant 0 : index
    %250 = vector.load %arg9[%c0_180, %c0_181, %c0_182, %c0_183] : memref<1x2x64x64xbf16, #tpu.memory_space<vmem>>, vector<1x1x64x32xbf16>
    %251 = vector.shape_cast %250 : vector<1x1x64x32xbf16> to vector<64x32xbf16>
    %252 = arith.truncf %249 : vector<8x64xf32> to vector<8x64xbf16>
    %cst_184 = arith.constant dense<0.000000e+00> : vector<8x32xf32>
    %253 = tpu.matmul %252, %251, %cst_184 {dimension_numbers = #tpu.dot_dimension_numbers<[1], [0], [0], [1], [0, 0, 1, 1], [], []>} : vector<8x64xbf16>, vector<64x32xbf16>, vector<8x32xf32> -> vector<8x32xf32>
    %c0_185 = arith.constant 0 : index
    %c0_186 = arith.constant 0 : index
    %c0_187 = arith.constant 0 : index
    %c192 = arith.constant 192 : index
    %254 = vector.load %arg10[%c0_185, %c0_186, %c0_187, %c192] : memref<1x2x1x896xf32, #tpu.memory_space<vmem>>, vector<1x1x1x32xf32>
    %255 = vector.shape_cast %254 : vector<1x1x1x32xf32> to vector<1x32xf32>
    %256 = vector.broadcast %255 : vector<1x32xf32> to vector<8x32xf32>
    %257 = arith.addf %253, %256 : vector<8x32xf32>
    %258 = arith.addf %239, %257 : vector<8x32xf32>
    %c0_188 = arith.constant 0 : index
    %c0_189 = arith.constant 0 : index
    %c0_190 = arith.constant 0 : index
    %c288 = arith.constant 288 : index
    %259 = vector.load %arg10[%c0_188, %c0_189, %c0_190, %c288] : memref<1x2x1x896xf32, #tpu.memory_space<vmem>>, vector<1x1x1x32xf32>
    %260 = vector.shape_cast %259 : vector<1x1x1x32xf32> to vector<1x32xf32>
    %c0_191 = arith.constant 0 : index
    %c0_192 = arith.constant 0 : index
    %c0_193 = arith.constant 0 : index
    %c320 = arith.constant 320 : index
    %261 = vector.load %arg10[%c0_191, %c0_192, %c0_193, %c320] : memref<1x2x1x896xf32, #tpu.memory_space<vmem>>, vector<1x1x1x32xf32>
    %262 = vector.shape_cast %261 : vector<1x1x1x32xf32> to vector<1x32xf32>
    %cst_194 = arith.constant dense<0.000000e+00> : vector<8xf32>
    %263 = vector.multi_reduction <add>, %258, %cst_194 [1] : vector<8x32xf32> to vector<8xf32>
    %264 = vector.shape_cast %263 : vector<8xf32> to vector<8x1xf32>
    %cst_195 = arith.constant 3.200000e+01 : f32
    %265 = vector.broadcast %cst_195 : f32 to vector<8x1xf32>
    %266 = arith.divf %264, %265 : vector<8x1xf32>
    %267 = vector.broadcast %266 : vector<8x1xf32> to vector<8x32xf32>
    %268 = arith.subf %258, %267 : vector<8x32xf32>
    %269 = arith.mulf %268, %268 : vector<8x32xf32>
    %cst_196 = arith.constant dense<0.000000e+00> : vector<8xf32>
    %270 = vector.multi_reduction <add>, %269, %cst_196 [1] : vector<8x32xf32> to vector<8xf32>
    %271 = vector.shape_cast %270 : vector<8xf32> to vector<8x1xf32>
    %cst_197 = arith.constant 0.0322580636 : f32
    %272 = vector.broadcast %cst_197 : f32 to vector<8x1xf32>
    %273 = arith.mulf %271, %272 : vector<8x1xf32>
    %274 = math.sqrt %273 : vector<8x1xf32>
    %cst_198 = arith.constant 9.99999997E-7 : f32
    %275 = vector.broadcast %cst_198 : f32 to vector<8x1xf32>
    %276 = arith.addf %274, %275 : vector<8x1xf32>
    %277 = vector.broadcast %276 : vector<8x1xf32> to vector<8x32xf32>
    %278 = arith.divf %268, %277 : vector<8x32xf32>
    %279 = vector.broadcast %260 : vector<1x32xf32> to vector<8x32xf32>
    %280 = arith.mulf %279, %278 : vector<8x32xf32>
    %281 = vector.broadcast %262 : vector<1x32xf32> to vector<8x32xf32>
    %282 = arith.addf %280, %281 : vector<8x32xf32>
    %c0_199 = arith.constant 0 : index
    %c1 = arith.constant 1 : index
    %c0_200 = arith.constant 0 : index
    %c0_201 = arith.constant 0 : index
    %283 = vector.load %arg8[%c0_199, %c1, %c0_200, %c0_201] : memref<1x2x32x512xbf16, #tpu.memory_space<vmem>>, vector<1x1x32x8xbf16>
    %284 = vector.shape_cast %283 : vector<1x1x32x8xbf16> to vector<32x8xbf16>
    %285 = arith.truncf %282 : vector<8x32xf32> to vector<8x32xbf16>
    %cst_202 = arith.constant dense<0.000000e+00> : vector<8x8xf32>
    %286 = tpu.matmul %285, %284, %cst_202 {dimension_numbers = #tpu.dot_dimension_numbers<[1], [0], [0], [1], [0, 0, 1, 1], [], []>} : vector<8x32xbf16>, vector<32x8xbf16>, vector<8x8xf32> -> vector<8x8xf32>
    %c0_203 = arith.constant 0 : index
    %c1_204 = arith.constant 1 : index
    %c0_205 = arith.constant 0 : index
    %c0_206 = arith.constant 0 : index
    %287 = vector.load %arg10[%c0_203, %c1_204, %c0_205, %c0_206] : memref<1x2x1x896xf32, #tpu.memory_space<vmem>>, vector<1x1x1x8xf32>
    %288 = vector.shape_cast %287 : vector<1x1x1x8xf32> to vector<1x8xf32>
    %289 = vector.broadcast %288 : vector<1x8xf32> to vector<8x8xf32>
    %290 = arith.addf %286, %289 : vector<8x8xf32>
    %c0_207 = arith.constant 0 : index
    %c1_208 = arith.constant 1 : index
    %c0_209 = arith.constant 0 : index
    %c32_210 = arith.constant 32 : index
    %291 = vector.load %arg8[%c0_207, %c1_208, %c0_209, %c32_210] : memref<1x2x32x512xbf16, #tpu.memory_space<vmem>>, vector<1x1x32x8xbf16>
    %292 = vector.shape_cast %291 : vector<1x1x32x8xbf16> to vector<32x8xbf16>
    %293 = arith.truncf %282 : vector<8x32xf32> to vector<8x32xbf16>
    %cst_211 = arith.constant dense<0.000000e+00> : vector<8x8xf32>
    %294 = tpu.matmul %293, %292, %cst_211 {dimension_numbers = #tpu.dot_dimension_numbers<[1], [0], [0], [1], [0, 0, 1, 1], [], []>} : vector<8x32xbf16>, vector<32x8xbf16>, vector<8x8xf32> -> vector<8x8xf32>
    %c0_212 = arith.constant 0 : index
    %c1_213 = arith.constant 1 : index
    %c0_214 = arith.constant 0 : index
    %c32_215 = arith.constant 32 : index
    %295 = vector.load %arg10[%c0_212, %c1_213, %c0_214, %c32_215] : memref<1x2x1x896xf32, #tpu.memory_space<vmem>>, vector<1x1x1x8xf32>
    %296 = vector.shape_cast %295 : vector<1x1x1x8xf32> to vector<1x8xf32>
    %297 = vector.broadcast %296 : vector<1x8xf32> to vector<8x8xf32>
    %298 = arith.addf %294, %297 : vector<8x8xf32>
    %c0_216 = arith.constant 0 : index
    %c1_217 = arith.constant 1 : index
    %c0_218 = arith.constant 0 : index
    %c64_219 = arith.constant 64 : index
    %299 = vector.load %arg8[%c0_216, %c1_217, %c0_218, %c64_219] : memref<1x2x32x512xbf16, #tpu.memory_space<vmem>>, vector<1x1x32x8xbf16>
    %300 = vector.shape_cast %299 : vector<1x1x32x8xbf16> to vector<32x8xbf16>
    %301 = arith.truncf %282 : vector<8x32xf32> to vector<8x32xbf16>
    %cst_220 = arith.constant dense<0.000000e+00> : vector<8x8xf32>
    %302 = tpu.matmul %301, %300, %cst_220 {dimension_numbers = #tpu.dot_dimension_numbers<[1], [0], [0], [1], [0, 0, 1, 1], [], []>} : vector<8x32xbf16>, vector<32x8xbf16>, vector<8x8xf32> -> vector<8x8xf32>
    %c0_221 = arith.constant 0 : index
    %c1_222 = arith.constant 1 : index
    %c0_223 = arith.constant 0 : index
    %c64_224 = arith.constant 64 : index
    %303 = vector.load %arg10[%c0_221, %c1_222, %c0_223, %c64_224] : memref<1x2x1x896xf32, #tpu.memory_space<vmem>>, vector<1x1x1x8xf32>
    %304 = vector.shape_cast %303 : vector<1x1x1x8xf32> to vector<1x8xf32>
    %305 = vector.broadcast %304 : vector<1x8xf32> to vector<8x8xf32>
    %306 = arith.addf %302, %305 : vector<8x8xf32>
    %307 = arith.truncf %290 : vector<8x8xf32> to vector<8x8xbf16>
    %308 = arith.truncf %298 : vector<8x8xf32> to vector<8x8xbf16>
    "tpu.trace_start"() <{level = 10 : i32, message = "qd,kd->qk"}> : () -> ()
    %cst_225 = arith.constant dense<0.000000e+00> : vector<8x8xf32>
    %309 = tpu.matmul %307, %308, %cst_225 {dimension_numbers = #tpu.dot_dimension_numbers<[1], [1], [0], [0], [0, 0, 1, 0], [], []>} : vector<8x8xbf16>, vector<8x8xbf16>, vector<8x8xf32> -> vector<8x8xf32>
    "tpu.trace_stop"() : () -> ()
    %cst_226 = arith.constant 0.353553385 : f32
    %310 = vector.broadcast %cst_226 : f32 to vector<8x8xf32>
    %311 = arith.mulf %309, %310 : vector<8x8xf32>
    %312 = arith.addf %311, %21 : vector<8x8xf32>
    %cst_227 = arith.constant dense<0xFF800000> : vector<8xf32>
    %313 = vector.multi_reduction <maximumf>, %312, %cst_227 [1] : vector<8x8xf32> to vector<8xf32>
    %314 = vector.shape_cast %313 : vector<8xf32> to vector<8x1xf32>
    %315 = vector.broadcast %314 : vector<8x1xf32> to vector<8x8xf32>
    %316 = arith.subf %312, %315 : vector<8x8xf32>
    %317 = math.exp %316 : vector<8x8xf32>
    %cst_228 = arith.constant dense<0.000000e+00> : vector<8xf32>
    %318 = vector.multi_reduction <add>, %317, %cst_228 [1] : vector<8x8xf32> to vector<8xf32>
    %319 = vector.shape_cast %318 : vector<8xf32> to vector<8x1xf32>
    %320 = vector.broadcast %319 : vector<8x1xf32> to vector<8x8xf32>
    %321 = arith.divf %317, %320 : vector<8x8xf32>
    %322 = arith.truncf %321 : vector<8x8xf32> to vector<8x8xbf16>
    %323 = arith.truncf %306 : vector<8x8xf32> to vector<8x8xbf16>
    %cst_229 = arith.constant dense<0.000000e+00> : vector<8x8xf32>
    %324 = tpu.matmul %322, %323, %cst_229 {dimension_numbers = #tpu.dot_dimension_numbers<[1], [0], [0], [1], [0, 0, 1, 1], [], []>} : vector<8x8xbf16>, vector<8x8xbf16>, vector<8x8xf32> -> vector<8x8xf32>
    %c0_230 = arith.constant 0 : index
    %c1_231 = arith.constant 1 : index
    %c0_232 = arith.constant 0 : index
    %c96_233 = arith.constant 96 : index
    %325 = vector.load %arg8[%c0_230, %c1_231, %c0_232, %c96_233] : memref<1x2x32x512xbf16, #tpu.memory_space<vmem>>, vector<1x1x8x32xbf16>
    %326 = vector.shape_cast %325 : vector<1x1x8x32xbf16> to vector<8x32xbf16>
    %327 = arith.truncf %324 : vector<8x8xf32> to vector<8x8xbf16>
    %cst_234 = arith.constant dense<0.000000e+00> : vector<8x32xf32>
    %328 = tpu.matmul %327, %326, %cst_234 {dimension_numbers = #tpu.dot_dimension_numbers<[1], [0], [0], [1], [0, 0, 1, 1], [], []>} : vector<8x8xbf16>, vector<8x32xbf16>, vector<8x32xf32> -> vector<8x32xf32>
    %c0_235 = arith.constant 0 : index
    %c1_236 = arith.constant 1 : index
    %c0_237 = arith.constant 0 : index
    %c8_238 = arith.constant 8 : index
    %329 = vector.load %arg8[%c0_235, %c1_236, %c0_237, %c8_238] : memref<1x2x32x512xbf16, #tpu.memory_space<vmem>>, vector<1x1x32x8xbf16>
    %330 = vector.shape_cast %329 : vector<1x1x32x8xbf16> to vector<32x8xbf16>
    %331 = arith.truncf %282 : vector<8x32xf32> to vector<8x32xbf16>
    %cst_239 = arith.constant dense<0.000000e+00> : vector<8x8xf32>
    %332 = tpu.matmul %331, %330, %cst_239 {dimension_numbers = #tpu.dot_dimension_numbers<[1], [0], [0], [1], [0, 0, 1, 1], [], []>} : vector<8x32xbf16>, vector<32x8xbf16>, vector<8x8xf32> -> vector<8x8xf32>
    %c0_240 = arith.constant 0 : index
    %c1_241 = arith.constant 1 : index
    %c0_242 = arith.constant 0 : index
    %c8_243 = arith.constant 8 : index
    %333 = vector.load %arg10[%c0_240, %c1_241, %c0_242, %c8_243] : memref<1x2x1x896xf32, #tpu.memory_space<vmem>>, vector<1x1x1x8xf32>
    %334 = vector.shape_cast %333 : vector<1x1x1x8xf32> to vector<1x8xf32>
    %335 = vector.broadcast %334 : vector<1x8xf32> to vector<8x8xf32>
    %336 = arith.addf %332, %335 : vector<8x8xf32>
    %c0_244 = arith.constant 0 : index
    %c1_245 = arith.constant 1 : index
    %c0_246 = arith.constant 0 : index
    %c40_247 = arith.constant 40 : index
    %337 = vector.load %arg8[%c0_244, %c1_245, %c0_246, %c40_247] : memref<1x2x32x512xbf16, #tpu.memory_space<vmem>>, vector<1x1x32x8xbf16>
    %338 = vector.shape_cast %337 : vector<1x1x32x8xbf16> to vector<32x8xbf16>
    %339 = arith.truncf %282 : vector<8x32xf32> to vector<8x32xbf16>
    %cst_248 = arith.constant dense<0.000000e+00> : vector<8x8xf32>
    %340 = tpu.matmul %339, %338, %cst_248 {dimension_numbers = #tpu.dot_dimension_numbers<[1], [0], [0], [1], [0, 0, 1, 1], [], []>} : vector<8x32xbf16>, vector<32x8xbf16>, vector<8x8xf32> -> vector<8x8xf32>
    %c0_249 = arith.constant 0 : index
    %c1_250 = arith.constant 1 : index
    %c0_251 = arith.constant 0 : index
    %c40_252 = arith.constant 40 : index
    %341 = vector.load %arg10[%c0_249, %c1_250, %c0_251, %c40_252] : memref<1x2x1x896xf32, #tpu.memory_space<vmem>>, vector<1x1x1x8xf32>
    %342 = vector.shape_cast %341 : vector<1x1x1x8xf32> to vector<1x8xf32>
    %343 = vector.broadcast %342 : vector<1x8xf32> to vector<8x8xf32>
    %344 = arith.addf %340, %343 : vector<8x8xf32>
    %c0_253 = arith.constant 0 : index
    %c1_254 = arith.constant 1 : index
    %c0_255 = arith.constant 0 : index
    %c72_256 = arith.constant 72 : index
    %345 = vector.load %arg8[%c0_253, %c1_254, %c0_255, %c72_256] : memref<1x2x32x512xbf16, #tpu.memory_space<vmem>>, vector<1x1x32x8xbf16>
    %346 = vector.shape_cast %345 : vector<1x1x32x8xbf16> to vector<32x8xbf16>
    %347 = arith.truncf %282 : vector<8x32xf32> to vector<8x32xbf16>
    %cst_257 = arith.constant dense<0.000000e+00> : vector<8x8xf32>
    %348 = tpu.matmul %347, %346, %cst_257 {dimension_numbers = #tpu.dot_dimension_numbers<[1], [0], [0], [1], [0, 0, 1, 1], [], []>} : vector<8x32xbf16>, vector<32x8xbf16>, vector<8x8xf32> -> vector<8x8xf32>
    %c0_258 = arith.constant 0 : index
    %c1_259 = arith.constant 1 : index
    %c0_260 = arith.constant 0 : index
    %c72_261 = arith.constant 72 : index
    %349 = vector.load %arg10[%c0_258, %c1_259, %c0_260, %c72_261] : memref<1x2x1x896xf32, #tpu.memory_space<vmem>>, vector<1x1x1x8xf32>
    %350 = vector.shape_cast %349 : vector<1x1x1x8xf32> to vector<1x8xf32>
    %351 = vector.broadcast %350 : vector<1x8xf32> to vector<8x8xf32>
    %352 = arith.addf %348, %351 : vector<8x8xf32>
    %353 = arith.truncf %336 : vector<8x8xf32> to vector<8x8xbf16>
    %354 = arith.truncf %344 : vector<8x8xf32> to vector<8x8xbf16>
    "tpu.trace_start"() <{level = 10 : i32, message = "qd,kd->qk"}> : () -> ()
    %cst_262 = arith.constant dense<0.000000e+00> : vector<8x8xf32>
    %355 = tpu.matmul %353, %354, %cst_262 {dimension_numbers = #tpu.dot_dimension_numbers<[1], [1], [0], [0], [0, 0, 1, 0], [], []>} : vector<8x8xbf16>, vector<8x8xbf16>, vector<8x8xf32> -> vector<8x8xf32>
    "tpu.trace_stop"() : () -> ()
    %cst_263 = arith.constant 0.353553385 : f32
    %356 = vector.broadcast %cst_263 : f32 to vector<8x8xf32>
    %357 = arith.mulf %355, %356 : vector<8x8xf32>
    %358 = arith.addf %357, %21 : vector<8x8xf32>
    %cst_264 = arith.constant dense<0xFF800000> : vector<8xf32>
    %359 = vector.multi_reduction <maximumf>, %358, %cst_264 [1] : vector<8x8xf32> to vector<8xf32>
    %360 = vector.shape_cast %359 : vector<8xf32> to vector<8x1xf32>
    %361 = vector.broadcast %360 : vector<8x1xf32> to vector<8x8xf32>
    %362 = arith.subf %358, %361 : vector<8x8xf32>
    %363 = math.exp %362 : vector<8x8xf32>
    %cst_265 = arith.constant dense<0.000000e+00> : vector<8xf32>
    %364 = vector.multi_reduction <add>, %363, %cst_265 [1] : vector<8x8xf32> to vector<8xf32>
    %365 = vector.shape_cast %364 : vector<8xf32> to vector<8x1xf32>
    %366 = vector.broadcast %365 : vector<8x1xf32> to vector<8x8xf32>
    %367 = arith.divf %363, %366 : vector<8x8xf32>
    %368 = arith.truncf %367 : vector<8x8xf32> to vector<8x8xbf16>
    %369 = arith.truncf %352 : vector<8x8xf32> to vector<8x8xbf16>
    %cst_266 = arith.constant dense<0.000000e+00> : vector<8x8xf32>
    %370 = tpu.matmul %368, %369, %cst_266 {dimension_numbers = #tpu.dot_dimension_numbers<[1], [0], [0], [1], [0, 0, 1, 1], [], []>} : vector<8x8xbf16>, vector<8x8xbf16>, vector<8x8xf32> -> vector<8x8xf32>
    %c0_267 = arith.constant 0 : index
    %c1_268 = arith.constant 1 : index
    %c8_269 = arith.constant 8 : index
    %c96_270 = arith.constant 96 : index
    %371 = vector.load %arg8[%c0_267, %c1_268, %c8_269, %c96_270] : memref<1x2x32x512xbf16, #tpu.memory_space<vmem>>, vector<1x1x8x32xbf16>
    %372 = vector.shape_cast %371 : vector<1x1x8x32xbf16> to vector<8x32xbf16>
    %373 = arith.truncf %370 : vector<8x8xf32> to vector<8x8xbf16>
    %cst_271 = arith.constant dense<0.000000e+00> : vector<8x32xf32>
    %374 = tpu.matmul %373, %372, %cst_271 {dimension_numbers = #tpu.dot_dimension_numbers<[1], [0], [0], [1], [0, 0, 1, 1], [], []>} : vector<8x8xbf16>, vector<8x32xbf16>, vector<8x32xf32> -> vector<8x32xf32>
    %375 = arith.addf %328, %374 : vector<8x32xf32>
    %c0_272 = arith.constant 0 : index
    %c1_273 = arith.constant 1 : index
    %c0_274 = arith.constant 0 : index
    %c16_275 = arith.constant 16 : index
    %376 = vector.load %arg8[%c0_272, %c1_273, %c0_274, %c16_275] : memref<1x2x32x512xbf16, #tpu.memory_space<vmem>>, vector<1x1x32x8xbf16>
    %377 = vector.shape_cast %376 : vector<1x1x32x8xbf16> to vector<32x8xbf16>
    %378 = arith.truncf %282 : vector<8x32xf32> to vector<8x32xbf16>
    %cst_276 = arith.constant dense<0.000000e+00> : vector<8x8xf32>
    %379 = tpu.matmul %378, %377, %cst_276 {dimension_numbers = #tpu.dot_dimension_numbers<[1], [0], [0], [1], [0, 0, 1, 1], [], []>} : vector<8x32xbf16>, vector<32x8xbf16>, vector<8x8xf32> -> vector<8x8xf32>
    %c0_277 = arith.constant 0 : index
    %c1_278 = arith.constant 1 : index
    %c0_279 = arith.constant 0 : index
    %c16_280 = arith.constant 16 : index
    %380 = vector.load %arg10[%c0_277, %c1_278, %c0_279, %c16_280] : memref<1x2x1x896xf32, #tpu.memory_space<vmem>>, vector<1x1x1x8xf32>
    %381 = vector.shape_cast %380 : vector<1x1x1x8xf32> to vector<1x8xf32>
    %382 = vector.broadcast %381 : vector<1x8xf32> to vector<8x8xf32>
    %383 = arith.addf %379, %382 : vector<8x8xf32>
    %c0_281 = arith.constant 0 : index
    %c1_282 = arith.constant 1 : index
    %c0_283 = arith.constant 0 : index
    %c48_284 = arith.constant 48 : index
    %384 = vector.load %arg8[%c0_281, %c1_282, %c0_283, %c48_284] : memref<1x2x32x512xbf16, #tpu.memory_space<vmem>>, vector<1x1x32x8xbf16>
    %385 = vector.shape_cast %384 : vector<1x1x32x8xbf16> to vector<32x8xbf16>
    %386 = arith.truncf %282 : vector<8x32xf32> to vector<8x32xbf16>
    %cst_285 = arith.constant dense<0.000000e+00> : vector<8x8xf32>
    %387 = tpu.matmul %386, %385, %cst_285 {dimension_numbers = #tpu.dot_dimension_numbers<[1], [0], [0], [1], [0, 0, 1, 1], [], []>} : vector<8x32xbf16>, vector<32x8xbf16>, vector<8x8xf32> -> vector<8x8xf32>
    %c0_286 = arith.constant 0 : index
    %c1_287 = arith.constant 1 : index
    %c0_288 = arith.constant 0 : index
    %c48_289 = arith.constant 48 : index
    %388 = vector.load %arg10[%c0_286, %c1_287, %c0_288, %c48_289] : memref<1x2x1x896xf32, #tpu.memory_space<vmem>>, vector<1x1x1x8xf32>
    %389 = vector.shape_cast %388 : vector<1x1x1x8xf32> to vector<1x8xf32>
    %390 = vector.broadcast %389 : vector<1x8xf32> to vector<8x8xf32>
    %391 = arith.addf %387, %390 : vector<8x8xf32>
    %c0_290 = arith.constant 0 : index
    %c1_291 = arith.constant 1 : index
    %c0_292 = arith.constant 0 : index
    %c80_293 = arith.constant 80 : index
    %392 = vector.load %arg8[%c0_290, %c1_291, %c0_292, %c80_293] : memref<1x2x32x512xbf16, #tpu.memory_space<vmem>>, vector<1x1x32x8xbf16>
    %393 = vector.shape_cast %392 : vector<1x1x32x8xbf16> to vector<32x8xbf16>
    %394 = arith.truncf %282 : vector<8x32xf32> to vector<8x32xbf16>
    %cst_294 = arith.constant dense<0.000000e+00> : vector<8x8xf32>
    %395 = tpu.matmul %394, %393, %cst_294 {dimension_numbers = #tpu.dot_dimension_numbers<[1], [0], [0], [1], [0, 0, 1, 1], [], []>} : vector<8x32xbf16>, vector<32x8xbf16>, vector<8x8xf32> -> vector<8x8xf32>
    %c0_295 = arith.constant 0 : index
    %c1_296 = arith.constant 1 : index
    %c0_297 = arith.constant 0 : index
    %c80_298 = arith.constant 80 : index
    %396 = vector.load %arg10[%c0_295, %c1_296, %c0_297, %c80_298] : memref<1x2x1x896xf32, #tpu.memory_space<vmem>>, vector<1x1x1x8xf32>
    %397 = vector.shape_cast %396 : vector<1x1x1x8xf32> to vector<1x8xf32>
    %398 = vector.broadcast %397 : vector<1x8xf32> to vector<8x8xf32>
    %399 = arith.addf %395, %398 : vector<8x8xf32>
    %400 = arith.truncf %383 : vector<8x8xf32> to vector<8x8xbf16>
    %401 = arith.truncf %391 : vector<8x8xf32> to vector<8x8xbf16>
    "tpu.trace_start"() <{level = 10 : i32, message = "qd,kd->qk"}> : () -> ()
    %cst_299 = arith.constant dense<0.000000e+00> : vector<8x8xf32>
    %402 = tpu.matmul %400, %401, %cst_299 {dimension_numbers = #tpu.dot_dimension_numbers<[1], [1], [0], [0], [0, 0, 1, 0], [], []>} : vector<8x8xbf16>, vector<8x8xbf16>, vector<8x8xf32> -> vector<8x8xf32>
    "tpu.trace_stop"() : () -> ()
    %cst_300 = arith.constant 0.353553385 : f32
    %403 = vector.broadcast %cst_300 : f32 to vector<8x8xf32>
    %404 = arith.mulf %402, %403 : vector<8x8xf32>
    %405 = arith.addf %404, %21 : vector<8x8xf32>
    %cst_301 = arith.constant dense<0xFF800000> : vector<8xf32>
    %406 = vector.multi_reduction <maximumf>, %405, %cst_301 [1] : vector<8x8xf32> to vector<8xf32>
    %407 = vector.shape_cast %406 : vector<8xf32> to vector<8x1xf32>
    %408 = vector.broadcast %407 : vector<8x1xf32> to vector<8x8xf32>
    %409 = arith.subf %405, %408 : vector<8x8xf32>
    %410 = math.exp %409 : vector<8x8xf32>
    %cst_302 = arith.constant dense<0.000000e+00> : vector<8xf32>
    %411 = vector.multi_reduction <add>, %410, %cst_302 [1] : vector<8x8xf32> to vector<8xf32>
    %412 = vector.shape_cast %411 : vector<8xf32> to vector<8x1xf32>
    %413 = vector.broadcast %412 : vector<8x1xf32> to vector<8x8xf32>
    %414 = arith.divf %410, %413 : vector<8x8xf32>
    %415 = arith.truncf %414 : vector<8x8xf32> to vector<8x8xbf16>
    %416 = arith.truncf %399 : vector<8x8xf32> to vector<8x8xbf16>
    %cst_303 = arith.constant dense<0.000000e+00> : vector<8x8xf32>
    %417 = tpu.matmul %415, %416, %cst_303 {dimension_numbers = #tpu.dot_dimension_numbers<[1], [0], [0], [1], [0, 0, 1, 1], [], []>} : vector<8x8xbf16>, vector<8x8xbf16>, vector<8x8xf32> -> vector<8x8xf32>
    %c0_304 = arith.constant 0 : index
    %c1_305 = arith.constant 1 : index
    %c16_306 = arith.constant 16 : index
    %c96_307 = arith.constant 96 : index
    %418 = vector.load %arg8[%c0_304, %c1_305, %c16_306, %c96_307] : memref<1x2x32x512xbf16, #tpu.memory_space<vmem>>, vector<1x1x8x32xbf16>
    %419 = vector.shape_cast %418 : vector<1x1x8x32xbf16> to vector<8x32xbf16>
    %420 = arith.truncf %417 : vector<8x8xf32> to vector<8x8xbf16>
    %cst_308 = arith.constant dense<0.000000e+00> : vector<8x32xf32>
    %421 = tpu.matmul %420, %419, %cst_308 {dimension_numbers = #tpu.dot_dimension_numbers<[1], [0], [0], [1], [0, 0, 1, 1], [], []>} : vector<8x8xbf16>, vector<8x32xbf16>, vector<8x32xf32> -> vector<8x32xf32>
    %422 = arith.addf %375, %421 : vector<8x32xf32>
    %c0_309 = arith.constant 0 : index
    %c1_310 = arith.constant 1 : index
    %c0_311 = arith.constant 0 : index
    %c24_312 = arith.constant 24 : index
    %423 = vector.load %arg8[%c0_309, %c1_310, %c0_311, %c24_312] : memref<1x2x32x512xbf16, #tpu.memory_space<vmem>>, vector<1x1x32x8xbf16>
    %424 = vector.shape_cast %423 : vector<1x1x32x8xbf16> to vector<32x8xbf16>
    %425 = arith.truncf %282 : vector<8x32xf32> to vector<8x32xbf16>
    %cst_313 = arith.constant dense<0.000000e+00> : vector<8x8xf32>
    %426 = tpu.matmul %425, %424, %cst_313 {dimension_numbers = #tpu.dot_dimension_numbers<[1], [0], [0], [1], [0, 0, 1, 1], [], []>} : vector<8x32xbf16>, vector<32x8xbf16>, vector<8x8xf32> -> vector<8x8xf32>
    %c0_314 = arith.constant 0 : index
    %c1_315 = arith.constant 1 : index
    %c0_316 = arith.constant 0 : index
    %c24_317 = arith.constant 24 : index
    %427 = vector.load %arg10[%c0_314, %c1_315, %c0_316, %c24_317] : memref<1x2x1x896xf32, #tpu.memory_space<vmem>>, vector<1x1x1x8xf32>
    %428 = vector.shape_cast %427 : vector<1x1x1x8xf32> to vector<1x8xf32>
    %429 = vector.broadcast %428 : vector<1x8xf32> to vector<8x8xf32>
    %430 = arith.addf %426, %429 : vector<8x8xf32>
    %c0_318 = arith.constant 0 : index
    %c1_319 = arith.constant 1 : index
    %c0_320 = arith.constant 0 : index
    %c56_321 = arith.constant 56 : index
    %431 = vector.load %arg8[%c0_318, %c1_319, %c0_320, %c56_321] : memref<1x2x32x512xbf16, #tpu.memory_space<vmem>>, vector<1x1x32x8xbf16>
    %432 = vector.shape_cast %431 : vector<1x1x32x8xbf16> to vector<32x8xbf16>
    %433 = arith.truncf %282 : vector<8x32xf32> to vector<8x32xbf16>
    %cst_322 = arith.constant dense<0.000000e+00> : vector<8x8xf32>
    %434 = tpu.matmul %433, %432, %cst_322 {dimension_numbers = #tpu.dot_dimension_numbers<[1], [0], [0], [1], [0, 0, 1, 1], [], []>} : vector<8x32xbf16>, vector<32x8xbf16>, vector<8x8xf32> -> vector<8x8xf32>
    %c0_323 = arith.constant 0 : index
    %c1_324 = arith.constant 1 : index
    %c0_325 = arith.constant 0 : index
    %c56_326 = arith.constant 56 : index
    %435 = vector.load %arg10[%c0_323, %c1_324, %c0_325, %c56_326] : memref<1x2x1x896xf32, #tpu.memory_space<vmem>>, vector<1x1x1x8xf32>
    %436 = vector.shape_cast %435 : vector<1x1x1x8xf32> to vector<1x8xf32>
    %437 = vector.broadcast %436 : vector<1x8xf32> to vector<8x8xf32>
    %438 = arith.addf %434, %437 : vector<8x8xf32>
    %c0_327 = arith.constant 0 : index
    %c1_328 = arith.constant 1 : index
    %c0_329 = arith.constant 0 : index
    %c88_330 = arith.constant 88 : index
    %439 = vector.load %arg8[%c0_327, %c1_328, %c0_329, %c88_330] : memref<1x2x32x512xbf16, #tpu.memory_space<vmem>>, vector<1x1x32x8xbf16>
    %440 = vector.shape_cast %439 : vector<1x1x32x8xbf16> to vector<32x8xbf16>
    %441 = arith.truncf %282 : vector<8x32xf32> to vector<8x32xbf16>
    %cst_331 = arith.constant dense<0.000000e+00> : vector<8x8xf32>
    %442 = tpu.matmul %441, %440, %cst_331 {dimension_numbers = #tpu.dot_dimension_numbers<[1], [0], [0], [1], [0, 0, 1, 1], [], []>} : vector<8x32xbf16>, vector<32x8xbf16>, vector<8x8xf32> -> vector<8x8xf32>
    %c0_332 = arith.constant 0 : index
    %c1_333 = arith.constant 1 : index
    %c0_334 = arith.constant 0 : index
    %c88_335 = arith.constant 88 : index
    %443 = vector.load %arg10[%c0_332, %c1_333, %c0_334, %c88_335] : memref<1x2x1x896xf32, #tpu.memory_space<vmem>>, vector<1x1x1x8xf32>
    %444 = vector.shape_cast %443 : vector<1x1x1x8xf32> to vector<1x8xf32>
    %445 = vector.broadcast %444 : vector<1x8xf32> to vector<8x8xf32>
    %446 = arith.addf %442, %445 : vector<8x8xf32>
    %447 = arith.truncf %430 : vector<8x8xf32> to vector<8x8xbf16>
    %448 = arith.truncf %438 : vector<8x8xf32> to vector<8x8xbf16>
    "tpu.trace_start"() <{level = 10 : i32, message = "qd,kd->qk"}> : () -> ()
    %cst_336 = arith.constant dense<0.000000e+00> : vector<8x8xf32>
    %449 = tpu.matmul %447, %448, %cst_336 {dimension_numbers = #tpu.dot_dimension_numbers<[1], [1], [0], [0], [0, 0, 1, 0], [], []>} : vector<8x8xbf16>, vector<8x8xbf16>, vector<8x8xf32> -> vector<8x8xf32>
    "tpu.trace_stop"() : () -> ()
    %cst_337 = arith.constant 0.353553385 : f32
    %450 = vector.broadcast %cst_337 : f32 to vector<8x8xf32>
    %451 = arith.mulf %449, %450 : vector<8x8xf32>
    %452 = arith.addf %451, %21 : vector<8x8xf32>
    %cst_338 = arith.constant dense<0xFF800000> : vector<8xf32>
    %453 = vector.multi_reduction <maximumf>, %452, %cst_338 [1] : vector<8x8xf32> to vector<8xf32>
    %454 = vector.shape_cast %453 : vector<8xf32> to vector<8x1xf32>
    %455 = vector.broadcast %454 : vector<8x1xf32> to vector<8x8xf32>
    %456 = arith.subf %452, %455 : vector<8x8xf32>
    %457 = math.exp %456 : vector<8x8xf32>
    %cst_339 = arith.constant dense<0.000000e+00> : vector<8xf32>
    %458 = vector.multi_reduction <add>, %457, %cst_339 [1] : vector<8x8xf32> to vector<8xf32>
    %459 = vector.shape_cast %458 : vector<8xf32> to vector<8x1xf32>
    %460 = vector.broadcast %459 : vector<8x1xf32> to vector<8x8xf32>
    %461 = arith.divf %457, %460 : vector<8x8xf32>
    %462 = arith.truncf %461 : vector<8x8xf32> to vector<8x8xbf16>
    %463 = arith.truncf %446 : vector<8x8xf32> to vector<8x8xbf16>
    %cst_340 = arith.constant dense<0.000000e+00> : vector<8x8xf32>
    %464 = tpu.matmul %462, %463, %cst_340 {dimension_numbers = #tpu.dot_dimension_numbers<[1], [0], [0], [1], [0, 0, 1, 1], [], []>} : vector<8x8xbf16>, vector<8x8xbf16>, vector<8x8xf32> -> vector<8x8xf32>
    %c0_341 = arith.constant 0 : index
    %c1_342 = arith.constant 1 : index
    %c24_343 = arith.constant 24 : index
    %c96_344 = arith.constant 96 : index
    %465 = vector.load %arg8[%c0_341, %c1_342, %c24_343, %c96_344] : memref<1x2x32x512xbf16, #tpu.memory_space<vmem>>, vector<1x1x8x32xbf16>
    %466 = vector.shape_cast %465 : vector<1x1x8x32xbf16> to vector<8x32xbf16>
    %467 = arith.truncf %464 : vector<8x8xf32> to vector<8x8xbf16>
    %cst_345 = arith.constant dense<0.000000e+00> : vector<8x32xf32>
    %468 = tpu.matmul %467, %466, %cst_345 {dimension_numbers = #tpu.dot_dimension_numbers<[1], [0], [0], [1], [0, 0, 1, 1], [], []>} : vector<8x8xbf16>, vector<8x32xbf16>, vector<8x32xf32> -> vector<8x32xf32>
    %469 = arith.addf %422, %468 : vector<8x32xf32>
    %c0_346 = arith.constant 0 : index
    %c1_347 = arith.constant 1 : index
    %c0_348 = arith.constant 0 : index
    %c96_349 = arith.constant 96 : index
    %470 = vector.load %arg10[%c0_346, %c1_347, %c0_348, %c96_349] : memref<1x2x1x896xf32, #tpu.memory_space<vmem>>, vector<1x1x1x32xf32>
    %471 = vector.shape_cast %470 : vector<1x1x1x32xf32> to vector<1x32xf32>
    %472 = vector.broadcast %471 : vector<1x32xf32> to vector<8x32xf32>
    %473 = arith.addf %469, %472 : vector<8x32xf32>
    %474 = arith.addf %282, %473 : vector<8x32xf32>
    %c0_350 = arith.constant 0 : index
    %c1_351 = arith.constant 1 : index
    %c0_352 = arith.constant 0 : index
    %c224_353 = arith.constant 224 : index
    %475 = vector.load %arg10[%c0_350, %c1_351, %c0_352, %c224_353] : memref<1x2x1x896xf32, #tpu.memory_space<vmem>>, vector<1x1x1x32xf32>
    %476 = vector.shape_cast %475 : vector<1x1x1x32xf32> to vector<1x32xf32>
    %c0_354 = arith.constant 0 : index
    %c1_355 = arith.constant 1 : index
    %c0_356 = arith.constant 0 : index
    %c256_357 = arith.constant 256 : index
    %477 = vector.load %arg10[%c0_354, %c1_355, %c0_356, %c256_357] : memref<1x2x1x896xf32, #tpu.memory_space<vmem>>, vector<1x1x1x32xf32>
    %478 = vector.shape_cast %477 : vector<1x1x1x32xf32> to vector<1x32xf32>
    %cst_358 = arith.constant dense<0.000000e+00> : vector<8xf32>
    %479 = vector.multi_reduction <add>, %474, %cst_358 [1] : vector<8x32xf32> to vector<8xf32>
    %480 = vector.shape_cast %479 : vector<8xf32> to vector<8x1xf32>
    %cst_359 = arith.constant 3.200000e+01 : f32
    %481 = vector.broadcast %cst_359 : f32 to vector<8x1xf32>
    %482 = arith.divf %480, %481 : vector<8x1xf32>
    %483 = vector.broadcast %482 : vector<8x1xf32> to vector<8x32xf32>
    %484 = arith.subf %474, %483 : vector<8x32xf32>
    %485 = arith.mulf %484, %484 : vector<8x32xf32>
    %cst_360 = arith.constant dense<0.000000e+00> : vector<8xf32>
    %486 = vector.multi_reduction <add>, %485, %cst_360 [1] : vector<8x32xf32> to vector<8xf32>
    %487 = vector.shape_cast %486 : vector<8xf32> to vector<8x1xf32>
    %cst_361 = arith.constant 0.0322580636 : f32
    %488 = vector.broadcast %cst_361 : f32 to vector<8x1xf32>
    %489 = arith.mulf %487, %488 : vector<8x1xf32>
    %490 = math.sqrt %489 : vector<8x1xf32>
    %cst_362 = arith.constant 9.99999997E-7 : f32
    %491 = vector.broadcast %cst_362 : f32 to vector<8x1xf32>
    %492 = arith.addf %490, %491 : vector<8x1xf32>
    %493 = vector.broadcast %492 : vector<8x1xf32> to vector<8x32xf32>
    %494 = arith.divf %484, %493 : vector<8x32xf32>
    %495 = vector.broadcast %476 : vector<1x32xf32> to vector<8x32xf32>
    %496 = arith.mulf %495, %494 : vector<8x32xf32>
    %497 = vector.broadcast %478 : vector<1x32xf32> to vector<8x32xf32>
    %498 = arith.addf %496, %497 : vector<8x32xf32>
    %c0_363 = arith.constant 0 : index
    %c1_364 = arith.constant 1 : index
    %c0_365 = arith.constant 0 : index
    %c128_366 = arith.constant 128 : index
    %499 = vector.load %arg8[%c0_363, %c1_364, %c0_365, %c128_366] : memref<1x2x32x512xbf16, #tpu.memory_space<vmem>>, vector<1x1x32x64xbf16>
    %500 = vector.shape_cast %499 : vector<1x1x32x64xbf16> to vector<32x64xbf16>
    %501 = arith.truncf %498 : vector<8x32xf32> to vector<8x32xbf16>
    %cst_367 = arith.constant dense<0.000000e+00> : vector<8x64xf32>
    %502 = tpu.matmul %501, %500, %cst_367 {dimension_numbers = #tpu.dot_dimension_numbers<[1], [0], [0], [1], [0, 0, 1, 1], [], []>} : vector<8x32xbf16>, vector<32x64xbf16>, vector<8x64xf32> -> vector<8x64xf32>
    %c0_368 = arith.constant 0 : index
    %c1_369 = arith.constant 1 : index
    %c0_370 = arith.constant 0 : index
    %c128_371 = arith.constant 128 : index
    %503 = vector.load %arg10[%c0_368, %c1_369, %c0_370, %c128_371] : memref<1x2x1x896xf32, #tpu.memory_space<vmem>>, vector<1x1x1x64xf32>
    %504 = vector.shape_cast %503 : vector<1x1x1x64xf32> to vector<1x64xf32>
    %505 = vector.broadcast %504 : vector<1x64xf32> to vector<8x64xf32>
    %506 = arith.addf %502, %505 : vector<8x64xf32>
    %cst_372 = arith.constant 0.000000e+00 : f32
    %507 = vector.broadcast %cst_372 : f32 to vector<8x64xf32>
    %508 = arith.maximumf %506, %507 : vector<8x64xf32>
    %c0_373 = arith.constant 0 : index
    %c1_374 = arith.constant 1 : index
    %c0_375 = arith.constant 0 : index
    %c0_376 = arith.constant 0 : index
    %509 = vector.load %arg9[%c0_373, %c1_374, %c0_375, %c0_376] : memref<1x2x64x64xbf16, #tpu.memory_space<vmem>>, vector<1x1x64x32xbf16>
    %510 = vector.shape_cast %509 : vector<1x1x64x32xbf16> to vector<64x32xbf16>
    %511 = arith.truncf %508 : vector<8x64xf32> to vector<8x64xbf16>
    %cst_377 = arith.constant dense<0.000000e+00> : vector<8x32xf32>
    %512 = tpu.matmul %511, %510, %cst_377 {dimension_numbers = #tpu.dot_dimension_numbers<[1], [0], [0], [1], [0, 0, 1, 1], [], []>} : vector<8x64xbf16>, vector<64x32xbf16>, vector<8x32xf32> -> vector<8x32xf32>
    %c0_378 = arith.constant 0 : index
    %c1_379 = arith.constant 1 : index
    %c0_380 = arith.constant 0 : index
    %c192_381 = arith.constant 192 : index
    %513 = vector.load %arg10[%c0_378, %c1_379, %c0_380, %c192_381] : memref<1x2x1x896xf32, #tpu.memory_space<vmem>>, vector<1x1x1x32xf32>
    %514 = vector.shape_cast %513 : vector<1x1x1x32xf32> to vector<1x32xf32>
    %515 = vector.broadcast %514 : vector<1x32xf32> to vector<8x32xf32>
    %516 = arith.addf %512, %515 : vector<8x32xf32>
    %517 = arith.addf %498, %516 : vector<8x32xf32>
    %c0_382 = arith.constant 0 : index
    %c1_383 = arith.constant 1 : index
    %c0_384 = arith.constant 0 : index
    %c288_385 = arith.constant 288 : index
    %518 = vector.load %arg10[%c0_382, %c1_383, %c0_384, %c288_385] : memref<1x2x1x896xf32, #tpu.memory_space<vmem>>, vector<1x1x1x32xf32>
    %519 = vector.shape_cast %518 : vector<1x1x1x32xf32> to vector<1x32xf32>
    %c0_386 = arith.constant 0 : index
    %c1_387 = arith.constant 1 : index
    %c0_388 = arith.constant 0 : index
    %c320_389 = arith.constant 320 : index
    %520 = vector.load %arg10[%c0_386, %c1_387, %c0_388, %c320_389] : memref<1x2x1x896xf32, #tpu.memory_space<vmem>>, vector<1x1x1x32xf32>
    %521 = vector.shape_cast %520 : vector<1x1x1x32xf32> to vector<1x32xf32>
    %cst_390 = arith.constant dense<0.000000e+00> : vector<8xf32>
    %522 = vector.multi_reduction <add>, %517, %cst_390 [1] : vector<8x32xf32> to vector<8xf32>
    %523 = vector.shape_cast %522 : vector<8xf32> to vector<8x1xf32>
    %cst_391 = arith.constant 3.200000e+01 : f32
    %524 = vector.broadcast %cst_391 : f32 to vector<8x1xf32>
    %525 = arith.divf %523, %524 : vector<8x1xf32>
    %526 = vector.broadcast %525 : vector<8x1xf32> to vector<8x32xf32>
    %527 = arith.subf %517, %526 : vector<8x32xf32>
    %528 = arith.mulf %527, %527 : vector<8x32xf32>
    %cst_392 = arith.constant dense<0.000000e+00> : vector<8xf32>
    %529 = vector.multi_reduction <add>, %528, %cst_392 [1] : vector<8x32xf32> to vector<8xf32>
    %530 = vector.shape_cast %529 : vector<8xf32> to vector<8x1xf32>
    %cst_393 = arith.constant 0.0322580636 : f32
    %531 = vector.broadcast %cst_393 : f32 to vector<8x1xf32>
    %532 = arith.mulf %530, %531 : vector<8x1xf32>
    %533 = math.sqrt %532 : vector<8x1xf32>
    %cst_394 = arith.constant 9.99999997E-7 : f32
    %534 = vector.broadcast %cst_394 : f32 to vector<8x1xf32>
    %535 = arith.addf %533, %534 : vector<8x1xf32>
    %536 = vector.broadcast %535 : vector<8x1xf32> to vector<8x32xf32>
    %537 = arith.divf %527, %536 : vector<8x32xf32>
    %538 = vector.broadcast %519 : vector<1x32xf32> to vector<8x32xf32>
    %539 = arith.mulf %538, %537 : vector<8x32xf32>
    %540 = vector.broadcast %521 : vector<1x32xf32> to vector<8x32xf32>
    %541 = arith.addf %539, %540 : vector<8x32xf32>
    %c0_395 = arith.constant 0 : index
    %c0_396 = arith.constant 0 : index
    %c0_397 = arith.constant 0 : index
    %c192_398 = arith.constant 192 : index
    %542 = vector.load %arg8[%c0_395, %c0_396, %c0_397, %c192_398] : memref<1x2x32x512xbf16, #tpu.memory_space<vmem>>, vector<1x1x32x8xbf16>
    %543 = vector.shape_cast %542 : vector<1x1x32x8xbf16> to vector<32x8xbf16>
    %544 = arith.truncf %15 : vector<16x32xf32> to vector<16x32xbf16>
    %cst_399 = arith.constant dense<0.000000e+00> : vector<16x8xf32>
    %545 = tpu.matmul %544, %543, %cst_399 {dimension_numbers = #tpu.dot_dimension_numbers<[1], [0], [0], [1], [0, 0, 1, 1], [], []>} : vector<16x32xbf16>, vector<32x8xbf16>, vector<16x8xf32> -> vector<16x8xf32>
    %c0_400 = arith.constant 0 : index
    %c0_401 = arith.constant 0 : index
    %c0_402 = arith.constant 0 : index
    %c352 = arith.constant 352 : index
    %546 = vector.load %arg10[%c0_400, %c0_401, %c0_402, %c352] : memref<1x2x1x896xf32, #tpu.memory_space<vmem>>, vector<1x1x1x8xf32>
    %547 = vector.shape_cast %546 : vector<1x1x1x8xf32> to vector<1x8xf32>
    %548 = vector.broadcast %547 : vector<1x8xf32> to vector<16x8xf32>
    %549 = arith.addf %545, %548 : vector<16x8xf32>
    %c0_403 = arith.constant 0 : index
    %c0_404 = arith.constant 0 : index
    %c0_405 = arith.constant 0 : index
    %c224_406 = arith.constant 224 : index
    %550 = vector.load %arg8[%c0_403, %c0_404, %c0_405, %c224_406] : memref<1x2x32x512xbf16, #tpu.memory_space<vmem>>, vector<1x1x32x8xbf16>
    %551 = vector.shape_cast %550 : vector<1x1x32x8xbf16> to vector<32x8xbf16>
    %552 = arith.truncf %15 : vector<16x32xf32> to vector<16x32xbf16>
    %cst_407 = arith.constant dense<0.000000e+00> : vector<16x8xf32>
    %553 = tpu.matmul %552, %551, %cst_407 {dimension_numbers = #tpu.dot_dimension_numbers<[1], [0], [0], [1], [0, 0, 1, 1], [], []>} : vector<16x32xbf16>, vector<32x8xbf16>, vector<16x8xf32> -> vector<16x8xf32>
    %c0_408 = arith.constant 0 : index
    %c0_409 = arith.constant 0 : index
    %c0_410 = arith.constant 0 : index
    %c384 = arith.constant 384 : index
    %554 = vector.load %arg10[%c0_408, %c0_409, %c0_410, %c384] : memref<1x2x1x896xf32, #tpu.memory_space<vmem>>, vector<1x1x1x8xf32>
    %555 = vector.shape_cast %554 : vector<1x1x1x8xf32> to vector<1x8xf32>
    %556 = vector.broadcast %555 : vector<1x8xf32> to vector<16x8xf32>
    %557 = arith.addf %553, %556 : vector<16x8xf32>
    %c0_411 = arith.constant 0 : index
    %c0_412 = arith.constant 0 : index
    %c0_413 = arith.constant 0 : index
    %c256_414 = arith.constant 256 : index
    %558 = vector.load %arg8[%c0_411, %c0_412, %c0_413, %c256_414] : memref<1x2x32x512xbf16, #tpu.memory_space<vmem>>, vector<1x1x32x8xbf16>
    %559 = vector.shape_cast %558 : vector<1x1x32x8xbf16> to vector<32x8xbf16>
    %560 = arith.truncf %15 : vector<16x32xf32> to vector<16x32xbf16>
    %cst_415 = arith.constant dense<0.000000e+00> : vector<16x8xf32>
    %561 = tpu.matmul %560, %559, %cst_415 {dimension_numbers = #tpu.dot_dimension_numbers<[1], [0], [0], [1], [0, 0, 1, 1], [], []>} : vector<16x32xbf16>, vector<32x8xbf16>, vector<16x8xf32> -> vector<16x8xf32>
    %c0_416 = arith.constant 0 : index
    %c0_417 = arith.constant 0 : index
    %c0_418 = arith.constant 0 : index
    %c416 = arith.constant 416 : index
    %562 = vector.load %arg10[%c0_416, %c0_417, %c0_418, %c416] : memref<1x2x1x896xf32, #tpu.memory_space<vmem>>, vector<1x1x1x8xf32>
    %563 = vector.shape_cast %562 : vector<1x1x1x8xf32> to vector<1x8xf32>
    %564 = vector.broadcast %563 : vector<1x8xf32> to vector<16x8xf32>
    %565 = arith.addf %561, %564 : vector<16x8xf32>
    %566 = arith.truncf %549 : vector<16x8xf32> to vector<16x8xbf16>
    %567 = arith.truncf %557 : vector<16x8xf32> to vector<16x8xbf16>
    "tpu.trace_start"() <{level = 10 : i32, message = "qd,kd->qk"}> : () -> ()
    %cst_419 = arith.constant dense<0.000000e+00> : vector<16x16xf32>
    %568 = tpu.matmul %566, %567, %cst_419 {dimension_numbers = #tpu.dot_dimension_numbers<[1], [1], [0], [0], [0, 0, 1, 0], [], []>} : vector<16x8xbf16>, vector<16x8xbf16>, vector<16x16xf32> -> vector<16x16xf32>
    "tpu.trace_stop"() : () -> ()
    %cst_420 = arith.constant 0.353553385 : f32
    %569 = vector.broadcast %cst_420 : f32 to vector<16x16xf32>
    %570 = arith.mulf %568, %569 : vector<16x16xf32>
    %cst_421 = arith.constant dense<0xFF800000> : vector<16xf32>
    %571 = vector.multi_reduction <maximumf>, %570, %cst_421 [1] : vector<16x16xf32> to vector<16xf32>
    %572 = vector.shape_cast %571 : vector<16xf32> to vector<16x1xf32>
    %573 = vector.broadcast %572 : vector<16x1xf32> to vector<16x16xf32>
    %574 = arith.subf %570, %573 : vector<16x16xf32>
    %575 = math.exp %574 : vector<16x16xf32>
    %cst_422 = arith.constant dense<0.000000e+00> : vector<16xf32>
    %576 = vector.multi_reduction <add>, %575, %cst_422 [1] : vector<16x16xf32> to vector<16xf32>
    %577 = vector.shape_cast %576 : vector<16xf32> to vector<16x1xf32>
    %578 = vector.broadcast %577 : vector<16x1xf32> to vector<16x16xf32>
    %579 = arith.divf %575, %578 : vector<16x16xf32>
    %580 = arith.truncf %579 : vector<16x16xf32> to vector<16x16xbf16>
    %581 = arith.truncf %565 : vector<16x8xf32> to vector<16x8xbf16>
    %cst_423 = arith.constant dense<0.000000e+00> : vector<16x8xf32>
    %582 = tpu.matmul %580, %581, %cst_423 {dimension_numbers = #tpu.dot_dimension_numbers<[1], [0], [0], [1], [0, 0, 1, 1], [], []>} : vector<16x16xbf16>, vector<16x8xbf16>, vector<16x8xf32> -> vector<16x8xf32>
    %c0_424 = arith.constant 0 : index
    %c0_425 = arith.constant 0 : index
    %c0_426 = arith.constant 0 : index
    %c288_427 = arith.constant 288 : index
    %583 = vector.load %arg8[%c0_424, %c0_425, %c0_426, %c288_427] : memref<1x2x32x512xbf16, #tpu.memory_space<vmem>>, vector<1x1x8x32xbf16>
    %584 = vector.shape_cast %583 : vector<1x1x8x32xbf16> to vector<8x32xbf16>
    %585 = arith.truncf %582 : vector<16x8xf32> to vector<16x8xbf16>
    %cst_428 = arith.constant dense<0.000000e+00> : vector<16x32xf32>
    %586 = tpu.matmul %585, %584, %cst_428 {dimension_numbers = #tpu.dot_dimension_numbers<[1], [0], [0], [1], [0, 0, 1, 1], [], []>} : vector<16x8xbf16>, vector<8x32xbf16>, vector<16x32xf32> -> vector<16x32xf32>
    %c0_429 = arith.constant 0 : index
    %c0_430 = arith.constant 0 : index
    %c0_431 = arith.constant 0 : index
    %c200 = arith.constant 200 : index
    %587 = vector.load %arg8[%c0_429, %c0_430, %c0_431, %c200] : memref<1x2x32x512xbf16, #tpu.memory_space<vmem>>, vector<1x1x32x8xbf16>
    %588 = vector.shape_cast %587 : vector<1x1x32x8xbf16> to vector<32x8xbf16>
    %589 = arith.truncf %15 : vector<16x32xf32> to vector<16x32xbf16>
    %cst_432 = arith.constant dense<0.000000e+00> : vector<16x8xf32>
    %590 = tpu.matmul %589, %588, %cst_432 {dimension_numbers = #tpu.dot_dimension_numbers<[1], [0], [0], [1], [0, 0, 1, 1], [], []>} : vector<16x32xbf16>, vector<32x8xbf16>, vector<16x8xf32> -> vector<16x8xf32>
    %c0_433 = arith.constant 0 : index
    %c0_434 = arith.constant 0 : index
    %c0_435 = arith.constant 0 : index
    %c360 = arith.constant 360 : index
    %591 = vector.load %arg10[%c0_433, %c0_434, %c0_435, %c360] : memref<1x2x1x896xf32, #tpu.memory_space<vmem>>, vector<1x1x1x8xf32>
    %592 = vector.shape_cast %591 : vector<1x1x1x8xf32> to vector<1x8xf32>
    %593 = vector.broadcast %592 : vector<1x8xf32> to vector<16x8xf32>
    %594 = arith.addf %590, %593 : vector<16x8xf32>
    %c0_436 = arith.constant 0 : index
    %c0_437 = arith.constant 0 : index
    %c0_438 = arith.constant 0 : index
    %c232 = arith.constant 232 : index
    %595 = vector.load %arg8[%c0_436, %c0_437, %c0_438, %c232] : memref<1x2x32x512xbf16, #tpu.memory_space<vmem>>, vector<1x1x32x8xbf16>
    %596 = vector.shape_cast %595 : vector<1x1x32x8xbf16> to vector<32x8xbf16>
    %597 = arith.truncf %15 : vector<16x32xf32> to vector<16x32xbf16>
    %cst_439 = arith.constant dense<0.000000e+00> : vector<16x8xf32>
    %598 = tpu.matmul %597, %596, %cst_439 {dimension_numbers = #tpu.dot_dimension_numbers<[1], [0], [0], [1], [0, 0, 1, 1], [], []>} : vector<16x32xbf16>, vector<32x8xbf16>, vector<16x8xf32> -> vector<16x8xf32>
    %c0_440 = arith.constant 0 : index
    %c0_441 = arith.constant 0 : index
    %c0_442 = arith.constant 0 : index
    %c392 = arith.constant 392 : index
    %599 = vector.load %arg10[%c0_440, %c0_441, %c0_442, %c392] : memref<1x2x1x896xf32, #tpu.memory_space<vmem>>, vector<1x1x1x8xf32>
    %600 = vector.shape_cast %599 : vector<1x1x1x8xf32> to vector<1x8xf32>
    %601 = vector.broadcast %600 : vector<1x8xf32> to vector<16x8xf32>
    %602 = arith.addf %598, %601 : vector<16x8xf32>
    %c0_443 = arith.constant 0 : index
    %c0_444 = arith.constant 0 : index
    %c0_445 = arith.constant 0 : index
    %c264 = arith.constant 264 : index
    %603 = vector.load %arg8[%c0_443, %c0_444, %c0_445, %c264] : memref<1x2x32x512xbf16, #tpu.memory_space<vmem>>, vector<1x1x32x8xbf16>
    %604 = vector.shape_cast %603 : vector<1x1x32x8xbf16> to vector<32x8xbf16>
    %605 = arith.truncf %15 : vector<16x32xf32> to vector<16x32xbf16>
    %cst_446 = arith.constant dense<0.000000e+00> : vector<16x8xf32>
    %606 = tpu.matmul %605, %604, %cst_446 {dimension_numbers = #tpu.dot_dimension_numbers<[1], [0], [0], [1], [0, 0, 1, 1], [], []>} : vector<16x32xbf16>, vector<32x8xbf16>, vector<16x8xf32> -> vector<16x8xf32>
    %c0_447 = arith.constant 0 : index
    %c0_448 = arith.constant 0 : index
    %c0_449 = arith.constant 0 : index
    %c424 = arith.constant 424 : index
    %607 = vector.load %arg10[%c0_447, %c0_448, %c0_449, %c424] : memref<1x2x1x896xf32, #tpu.memory_space<vmem>>, vector<1x1x1x8xf32>
    %608 = vector.shape_cast %607 : vector<1x1x1x8xf32> to vector<1x8xf32>
    %609 = vector.broadcast %608 : vector<1x8xf32> to vector<16x8xf32>
    %610 = arith.addf %606, %609 : vector<16x8xf32>
    %611 = arith.truncf %594 : vector<16x8xf32> to vector<16x8xbf16>
    %612 = arith.truncf %602 : vector<16x8xf32> to vector<16x8xbf16>
    "tpu.trace_start"() <{level = 10 : i32, message = "qd,kd->qk"}> : () -> ()
    %cst_450 = arith.constant dense<0.000000e+00> : vector<16x16xf32>
    %613 = tpu.matmul %611, %612, %cst_450 {dimension_numbers = #tpu.dot_dimension_numbers<[1], [1], [0], [0], [0, 0, 1, 0], [], []>} : vector<16x8xbf16>, vector<16x8xbf16>, vector<16x16xf32> -> vector<16x16xf32>
    "tpu.trace_stop"() : () -> ()
    %cst_451 = arith.constant 0.353553385 : f32
    %614 = vector.broadcast %cst_451 : f32 to vector<16x16xf32>
    %615 = arith.mulf %613, %614 : vector<16x16xf32>
    %cst_452 = arith.constant dense<0xFF800000> : vector<16xf32>
    %616 = vector.multi_reduction <maximumf>, %615, %cst_452 [1] : vector<16x16xf32> to vector<16xf32>
    %617 = vector.shape_cast %616 : vector<16xf32> to vector<16x1xf32>
    %618 = vector.broadcast %617 : vector<16x1xf32> to vector<16x16xf32>
    %619 = arith.subf %615, %618 : vector<16x16xf32>
    %620 = math.exp %619 : vector<16x16xf32>
    %cst_453 = arith.constant dense<0.000000e+00> : vector<16xf32>
    %621 = vector.multi_reduction <add>, %620, %cst_453 [1] : vector<16x16xf32> to vector<16xf32>
    %622 = vector.shape_cast %621 : vector<16xf32> to vector<16x1xf32>
    %623 = vector.broadcast %622 : vector<16x1xf32> to vector<16x16xf32>
    %624 = arith.divf %620, %623 : vector<16x16xf32>
    %625 = arith.truncf %624 : vector<16x16xf32> to vector<16x16xbf16>
    %626 = arith.truncf %610 : vector<16x8xf32> to vector<16x8xbf16>
    %cst_454 = arith.constant dense<0.000000e+00> : vector<16x8xf32>
    %627 = tpu.matmul %625, %626, %cst_454 {dimension_numbers = #tpu.dot_dimension_numbers<[1], [0], [0], [1], [0, 0, 1, 1], [], []>} : vector<16x16xbf16>, vector<16x8xbf16>, vector<16x8xf32> -> vector<16x8xf32>
    %c0_455 = arith.constant 0 : index
    %c0_456 = arith.constant 0 : index
    %c8_457 = arith.constant 8 : index
    %c288_458 = arith.constant 288 : index
    %628 = vector.load %arg8[%c0_455, %c0_456, %c8_457, %c288_458] : memref<1x2x32x512xbf16, #tpu.memory_space<vmem>>, vector<1x1x8x32xbf16>
    %629 = vector.shape_cast %628 : vector<1x1x8x32xbf16> to vector<8x32xbf16>
    %630 = arith.truncf %627 : vector<16x8xf32> to vector<16x8xbf16>
    %cst_459 = arith.constant dense<0.000000e+00> : vector<16x32xf32>
    %631 = tpu.matmul %630, %629, %cst_459 {dimension_numbers = #tpu.dot_dimension_numbers<[1], [0], [0], [1], [0, 0, 1, 1], [], []>} : vector<16x8xbf16>, vector<8x32xbf16>, vector<16x32xf32> -> vector<16x32xf32>
    %632 = arith.addf %586, %631 : vector<16x32xf32>
    %c0_460 = arith.constant 0 : index
    %c0_461 = arith.constant 0 : index
    %c0_462 = arith.constant 0 : index
    %c208 = arith.constant 208 : index
    %633 = vector.load %arg8[%c0_460, %c0_461, %c0_462, %c208] : memref<1x2x32x512xbf16, #tpu.memory_space<vmem>>, vector<1x1x32x8xbf16>
    %634 = vector.shape_cast %633 : vector<1x1x32x8xbf16> to vector<32x8xbf16>
    %635 = arith.truncf %15 : vector<16x32xf32> to vector<16x32xbf16>
    %cst_463 = arith.constant dense<0.000000e+00> : vector<16x8xf32>
    %636 = tpu.matmul %635, %634, %cst_463 {dimension_numbers = #tpu.dot_dimension_numbers<[1], [0], [0], [1], [0, 0, 1, 1], [], []>} : vector<16x32xbf16>, vector<32x8xbf16>, vector<16x8xf32> -> vector<16x8xf32>
    %c0_464 = arith.constant 0 : index
    %c0_465 = arith.constant 0 : index
    %c0_466 = arith.constant 0 : index
    %c368 = arith.constant 368 : index
    %637 = vector.load %arg10[%c0_464, %c0_465, %c0_466, %c368] : memref<1x2x1x896xf32, #tpu.memory_space<vmem>>, vector<1x1x1x8xf32>
    %638 = vector.shape_cast %637 : vector<1x1x1x8xf32> to vector<1x8xf32>
    %639 = vector.broadcast %638 : vector<1x8xf32> to vector<16x8xf32>
    %640 = arith.addf %636, %639 : vector<16x8xf32>
    %c0_467 = arith.constant 0 : index
    %c0_468 = arith.constant 0 : index
    %c0_469 = arith.constant 0 : index
    %c240 = arith.constant 240 : index
    %641 = vector.load %arg8[%c0_467, %c0_468, %c0_469, %c240] : memref<1x2x32x512xbf16, #tpu.memory_space<vmem>>, vector<1x1x32x8xbf16>
    %642 = vector.shape_cast %641 : vector<1x1x32x8xbf16> to vector<32x8xbf16>
    %643 = arith.truncf %15 : vector<16x32xf32> to vector<16x32xbf16>
    %cst_470 = arith.constant dense<0.000000e+00> : vector<16x8xf32>
    %644 = tpu.matmul %643, %642, %cst_470 {dimension_numbers = #tpu.dot_dimension_numbers<[1], [0], [0], [1], [0, 0, 1, 1], [], []>} : vector<16x32xbf16>, vector<32x8xbf16>, vector<16x8xf32> -> vector<16x8xf32>
    %c0_471 = arith.constant 0 : index
    %c0_472 = arith.constant 0 : index
    %c0_473 = arith.constant 0 : index
    %c400 = arith.constant 400 : index
    %645 = vector.load %arg10[%c0_471, %c0_472, %c0_473, %c400] : memref<1x2x1x896xf32, #tpu.memory_space<vmem>>, vector<1x1x1x8xf32>
    %646 = vector.shape_cast %645 : vector<1x1x1x8xf32> to vector<1x8xf32>
    %647 = vector.broadcast %646 : vector<1x8xf32> to vector<16x8xf32>
    %648 = arith.addf %644, %647 : vector<16x8xf32>
    %c0_474 = arith.constant 0 : index
    %c0_475 = arith.constant 0 : index
    %c0_476 = arith.constant 0 : index
    %c272 = arith.constant 272 : index
    %649 = vector.load %arg8[%c0_474, %c0_475, %c0_476, %c272] : memref<1x2x32x512xbf16, #tpu.memory_space<vmem>>, vector<1x1x32x8xbf16>
    %650 = vector.shape_cast %649 : vector<1x1x32x8xbf16> to vector<32x8xbf16>
    %651 = arith.truncf %15 : vector<16x32xf32> to vector<16x32xbf16>
    %cst_477 = arith.constant dense<0.000000e+00> : vector<16x8xf32>
    %652 = tpu.matmul %651, %650, %cst_477 {dimension_numbers = #tpu.dot_dimension_numbers<[1], [0], [0], [1], [0, 0, 1, 1], [], []>} : vector<16x32xbf16>, vector<32x8xbf16>, vector<16x8xf32> -> vector<16x8xf32>
    %c0_478 = arith.constant 0 : index
    %c0_479 = arith.constant 0 : index
    %c0_480 = arith.constant 0 : index
    %c432 = arith.constant 432 : index
    %653 = vector.load %arg10[%c0_478, %c0_479, %c0_480, %c432] : memref<1x2x1x896xf32, #tpu.memory_space<vmem>>, vector<1x1x1x8xf32>
    %654 = vector.shape_cast %653 : vector<1x1x1x8xf32> to vector<1x8xf32>
    %655 = vector.broadcast %654 : vector<1x8xf32> to vector<16x8xf32>
    %656 = arith.addf %652, %655 : vector<16x8xf32>
    %657 = arith.truncf %640 : vector<16x8xf32> to vector<16x8xbf16>
    %658 = arith.truncf %648 : vector<16x8xf32> to vector<16x8xbf16>
    "tpu.trace_start"() <{level = 10 : i32, message = "qd,kd->qk"}> : () -> ()
    %cst_481 = arith.constant dense<0.000000e+00> : vector<16x16xf32>
    %659 = tpu.matmul %657, %658, %cst_481 {dimension_numbers = #tpu.dot_dimension_numbers<[1], [1], [0], [0], [0, 0, 1, 0], [], []>} : vector<16x8xbf16>, vector<16x8xbf16>, vector<16x16xf32> -> vector<16x16xf32>
    "tpu.trace_stop"() : () -> ()
    %cst_482 = arith.constant 0.353553385 : f32
    %660 = vector.broadcast %cst_482 : f32 to vector<16x16xf32>
    %661 = arith.mulf %659, %660 : vector<16x16xf32>
    %cst_483 = arith.constant dense<0xFF800000> : vector<16xf32>
    %662 = vector.multi_reduction <maximumf>, %661, %cst_483 [1] : vector<16x16xf32> to vector<16xf32>
    %663 = vector.shape_cast %662 : vector<16xf32> to vector<16x1xf32>
    %664 = vector.broadcast %663 : vector<16x1xf32> to vector<16x16xf32>
    %665 = arith.subf %661, %664 : vector<16x16xf32>
    %666 = math.exp %665 : vector<16x16xf32>
    %cst_484 = arith.constant dense<0.000000e+00> : vector<16xf32>
    %667 = vector.multi_reduction <add>, %666, %cst_484 [1] : vector<16x16xf32> to vector<16xf32>
    %668 = vector.shape_cast %667 : vector<16xf32> to vector<16x1xf32>
    %669 = vector.broadcast %668 : vector<16x1xf32> to vector<16x16xf32>
    %670 = arith.divf %666, %669 : vector<16x16xf32>
    %671 = arith.truncf %670 : vector<16x16xf32> to vector<16x16xbf16>
    %672 = arith.truncf %656 : vector<16x8xf32> to vector<16x8xbf16>
    %cst_485 = arith.constant dense<0.000000e+00> : vector<16x8xf32>
    %673 = tpu.matmul %671, %672, %cst_485 {dimension_numbers = #tpu.dot_dimension_numbers<[1], [0], [0], [1], [0, 0, 1, 1], [], []>} : vector<16x16xbf16>, vector<16x8xbf16>, vector<16x8xf32> -> vector<16x8xf32>
    %c0_486 = arith.constant 0 : index
    %c0_487 = arith.constant 0 : index
    %c16_488 = arith.constant 16 : index
    %c288_489 = arith.constant 288 : index
    %674 = vector.load %arg8[%c0_486, %c0_487, %c16_488, %c288_489] : memref<1x2x32x512xbf16, #tpu.memory_space<vmem>>, vector<1x1x8x32xbf16>
    %675 = vector.shape_cast %674 : vector<1x1x8x32xbf16> to vector<8x32xbf16>
    %676 = arith.truncf %673 : vector<16x8xf32> to vector<16x8xbf16>
    %cst_490 = arith.constant dense<0.000000e+00> : vector<16x32xf32>
    %677 = tpu.matmul %676, %675, %cst_490 {dimension_numbers = #tpu.dot_dimension_numbers<[1], [0], [0], [1], [0, 0, 1, 1], [], []>} : vector<16x8xbf16>, vector<8x32xbf16>, vector<16x32xf32> -> vector<16x32xf32>
    %678 = arith.addf %632, %677 : vector<16x32xf32>
    %c0_491 = arith.constant 0 : index
    %c0_492 = arith.constant 0 : index
    %c0_493 = arith.constant 0 : index
    %c216 = arith.constant 216 : index
    %679 = vector.load %arg8[%c0_491, %c0_492, %c0_493, %c216] : memref<1x2x32x512xbf16, #tpu.memory_space<vmem>>, vector<1x1x32x8xbf16>
    %680 = vector.shape_cast %679 : vector<1x1x32x8xbf16> to vector<32x8xbf16>
    %681 = arith.truncf %15 : vector<16x32xf32> to vector<16x32xbf16>
    %cst_494 = arith.constant dense<0.000000e+00> : vector<16x8xf32>
    %682 = tpu.matmul %681, %680, %cst_494 {dimension_numbers = #tpu.dot_dimension_numbers<[1], [0], [0], [1], [0, 0, 1, 1], [], []>} : vector<16x32xbf16>, vector<32x8xbf16>, vector<16x8xf32> -> vector<16x8xf32>
    %c0_495 = arith.constant 0 : index
    %c0_496 = arith.constant 0 : index
    %c0_497 = arith.constant 0 : index
    %c376 = arith.constant 376 : index
    %683 = vector.load %arg10[%c0_495, %c0_496, %c0_497, %c376] : memref<1x2x1x896xf32, #tpu.memory_space<vmem>>, vector<1x1x1x8xf32>
    %684 = vector.shape_cast %683 : vector<1x1x1x8xf32> to vector<1x8xf32>
    %685 = vector.broadcast %684 : vector<1x8xf32> to vector<16x8xf32>
    %686 = arith.addf %682, %685 : vector<16x8xf32>
    %c0_498 = arith.constant 0 : index
    %c0_499 = arith.constant 0 : index
    %c0_500 = arith.constant 0 : index
    %c248 = arith.constant 248 : index
    %687 = vector.load %arg8[%c0_498, %c0_499, %c0_500, %c248] : memref<1x2x32x512xbf16, #tpu.memory_space<vmem>>, vector<1x1x32x8xbf16>
    %688 = vector.shape_cast %687 : vector<1x1x32x8xbf16> to vector<32x8xbf16>
    %689 = arith.truncf %15 : vector<16x32xf32> to vector<16x32xbf16>
    %cst_501 = arith.constant dense<0.000000e+00> : vector<16x8xf32>
    %690 = tpu.matmul %689, %688, %cst_501 {dimension_numbers = #tpu.dot_dimension_numbers<[1], [0], [0], [1], [0, 0, 1, 1], [], []>} : vector<16x32xbf16>, vector<32x8xbf16>, vector<16x8xf32> -> vector<16x8xf32>
    %c0_502 = arith.constant 0 : index
    %c0_503 = arith.constant 0 : index
    %c0_504 = arith.constant 0 : index
    %c408 = arith.constant 408 : index
    %691 = vector.load %arg10[%c0_502, %c0_503, %c0_504, %c408] : memref<1x2x1x896xf32, #tpu.memory_space<vmem>>, vector<1x1x1x8xf32>
    %692 = vector.shape_cast %691 : vector<1x1x1x8xf32> to vector<1x8xf32>
    %693 = vector.broadcast %692 : vector<1x8xf32> to vector<16x8xf32>
    %694 = arith.addf %690, %693 : vector<16x8xf32>
    %c0_505 = arith.constant 0 : index
    %c0_506 = arith.constant 0 : index
    %c0_507 = arith.constant 0 : index
    %c280 = arith.constant 280 : index
    %695 = vector.load %arg8[%c0_505, %c0_506, %c0_507, %c280] : memref<1x2x32x512xbf16, #tpu.memory_space<vmem>>, vector<1x1x32x8xbf16>
    %696 = vector.shape_cast %695 : vector<1x1x32x8xbf16> to vector<32x8xbf16>
    %697 = arith.truncf %15 : vector<16x32xf32> to vector<16x32xbf16>
    %cst_508 = arith.constant dense<0.000000e+00> : vector<16x8xf32>
    %698 = tpu.matmul %697, %696, %cst_508 {dimension_numbers = #tpu.dot_dimension_numbers<[1], [0], [0], [1], [0, 0, 1, 1], [], []>} : vector<16x32xbf16>, vector<32x8xbf16>, vector<16x8xf32> -> vector<16x8xf32>
    %c0_509 = arith.constant 0 : index
    %c0_510 = arith.constant 0 : index
    %c0_511 = arith.constant 0 : index
    %c440 = arith.constant 440 : index
    %699 = vector.load %arg10[%c0_509, %c0_510, %c0_511, %c440] : memref<1x2x1x896xf32, #tpu.memory_space<vmem>>, vector<1x1x1x8xf32>
    %700 = vector.shape_cast %699 : vector<1x1x1x8xf32> to vector<1x8xf32>
    %701 = vector.broadcast %700 : vector<1x8xf32> to vector<16x8xf32>
    %702 = arith.addf %698, %701 : vector<16x8xf32>
    %703 = arith.truncf %686 : vector<16x8xf32> to vector<16x8xbf16>
    %704 = arith.truncf %694 : vector<16x8xf32> to vector<16x8xbf16>
    "tpu.trace_start"() <{level = 10 : i32, message = "qd,kd->qk"}> : () -> ()
    %cst_512 = arith.constant dense<0.000000e+00> : vector<16x16xf32>
    %705 = tpu.matmul %703, %704, %cst_512 {dimension_numbers = #tpu.dot_dimension_numbers<[1], [1], [0], [0], [0, 0, 1, 0], [], []>} : vector<16x8xbf16>, vector<16x8xbf16>, vector<16x16xf32> -> vector<16x16xf32>
    "tpu.trace_stop"() : () -> ()
    %cst_513 = arith.constant 0.353553385 : f32
    %706 = vector.broadcast %cst_513 : f32 to vector<16x16xf32>
    %707 = arith.mulf %705, %706 : vector<16x16xf32>
    %cst_514 = arith.constant dense<0xFF800000> : vector<16xf32>
    %708 = vector.multi_reduction <maximumf>, %707, %cst_514 [1] : vector<16x16xf32> to vector<16xf32>
    %709 = vector.shape_cast %708 : vector<16xf32> to vector<16x1xf32>
    %710 = vector.broadcast %709 : vector<16x1xf32> to vector<16x16xf32>
    %711 = arith.subf %707, %710 : vector<16x16xf32>
    %712 = math.exp %711 : vector<16x16xf32>
    %cst_515 = arith.constant dense<0.000000e+00> : vector<16xf32>
    %713 = vector.multi_reduction <add>, %712, %cst_515 [1] : vector<16x16xf32> to vector<16xf32>
    %714 = vector.shape_cast %713 : vector<16xf32> to vector<16x1xf32>
    %715 = vector.broadcast %714 : vector<16x1xf32> to vector<16x16xf32>
    %716 = arith.divf %712, %715 : vector<16x16xf32>
    %717 = arith.truncf %716 : vector<16x16xf32> to vector<16x16xbf16>
    %718 = arith.truncf %702 : vector<16x8xf32> to vector<16x8xbf16>
    %cst_516 = arith.constant dense<0.000000e+00> : vector<16x8xf32>
    %719 = tpu.matmul %717, %718, %cst_516 {dimension_numbers = #tpu.dot_dimension_numbers<[1], [0], [0], [1], [0, 0, 1, 1], [], []>} : vector<16x16xbf16>, vector<16x8xbf16>, vector<16x8xf32> -> vector<16x8xf32>
    %c0_517 = arith.constant 0 : index
    %c0_518 = arith.constant 0 : index
    %c24_519 = arith.constant 24 : index
    %c288_520 = arith.constant 288 : index
    %720 = vector.load %arg8[%c0_517, %c0_518, %c24_519, %c288_520] : memref<1x2x32x512xbf16, #tpu.memory_space<vmem>>, vector<1x1x8x32xbf16>
    %721 = vector.shape_cast %720 : vector<1x1x8x32xbf16> to vector<8x32xbf16>
    %722 = arith.truncf %719 : vector<16x8xf32> to vector<16x8xbf16>
    %cst_521 = arith.constant dense<0.000000e+00> : vector<16x32xf32>
    %723 = tpu.matmul %722, %721, %cst_521 {dimension_numbers = #tpu.dot_dimension_numbers<[1], [0], [0], [1], [0, 0, 1, 1], [], []>} : vector<16x8xbf16>, vector<8x32xbf16>, vector<16x32xf32> -> vector<16x32xf32>
    %724 = arith.addf %678, %723 : vector<16x32xf32>
    %c0_522 = arith.constant 0 : index
    %c0_523 = arith.constant 0 : index
    %c0_524 = arith.constant 0 : index
    %c448 = arith.constant 448 : index
    %725 = vector.load %arg10[%c0_522, %c0_523, %c0_524, %c448] : memref<1x2x1x896xf32, #tpu.memory_space<vmem>>, vector<1x1x1x32xf32>
    %726 = vector.shape_cast %725 : vector<1x1x1x32xf32> to vector<1x32xf32>
    %727 = vector.broadcast %726 : vector<1x32xf32> to vector<16x32xf32>
    %728 = arith.addf %724, %727 : vector<16x32xf32>
    %729 = arith.addf %15, %728 : vector<16x32xf32>
    %c0_525 = arith.constant 0 : index
    %c0_526 = arith.constant 0 : index
    %c0_527 = arith.constant 0 : index
    %c704 = arith.constant 704 : index
    %730 = vector.load %arg10[%c0_525, %c0_526, %c0_527, %c704] : memref<1x2x1x896xf32, #tpu.memory_space<vmem>>, vector<1x1x1x32xf32>
    %731 = vector.shape_cast %730 : vector<1x1x1x32xf32> to vector<1x32xf32>
    %c0_528 = arith.constant 0 : index
    %c0_529 = arith.constant 0 : index
    %c0_530 = arith.constant 0 : index
    %c736 = arith.constant 736 : index
    %732 = vector.load %arg10[%c0_528, %c0_529, %c0_530, %c736] : memref<1x2x1x896xf32, #tpu.memory_space<vmem>>, vector<1x1x1x32xf32>
    %733 = vector.shape_cast %732 : vector<1x1x1x32xf32> to vector<1x32xf32>
    %cst_531 = arith.constant dense<0.000000e+00> : vector<16xf32>
    %734 = vector.multi_reduction <add>, %729, %cst_531 [1] : vector<16x32xf32> to vector<16xf32>
    %735 = vector.shape_cast %734 : vector<16xf32> to vector<16x1xf32>
    %cst_532 = arith.constant 3.200000e+01 : f32
    %736 = vector.broadcast %cst_532 : f32 to vector<16x1xf32>
    %737 = arith.divf %735, %736 : vector<16x1xf32>
    %738 = vector.broadcast %737 : vector<16x1xf32> to vector<16x32xf32>
    %739 = arith.subf %729, %738 : vector<16x32xf32>
    %740 = arith.mulf %739, %739 : vector<16x32xf32>
    %cst_533 = arith.constant dense<0.000000e+00> : vector<16xf32>
    %741 = vector.multi_reduction <add>, %740, %cst_533 [1] : vector<16x32xf32> to vector<16xf32>
    %742 = vector.shape_cast %741 : vector<16xf32> to vector<16x1xf32>
    %cst_534 = arith.constant 0.0322580636 : f32
    %743 = vector.broadcast %cst_534 : f32 to vector<16x1xf32>
    %744 = arith.mulf %742, %743 : vector<16x1xf32>
    %745 = math.sqrt %744 : vector<16x1xf32>
    %cst_535 = arith.constant 9.99999997E-7 : f32
    %746 = vector.broadcast %cst_535 : f32 to vector<16x1xf32>
    %747 = arith.addf %745, %746 : vector<16x1xf32>
    %748 = vector.broadcast %747 : vector<16x1xf32> to vector<16x32xf32>
    %749 = arith.divf %739, %748 : vector<16x32xf32>
    %750 = vector.broadcast %731 : vector<1x32xf32> to vector<16x32xf32>
    %751 = arith.mulf %750, %749 : vector<16x32xf32>
    %752 = vector.broadcast %733 : vector<1x32xf32> to vector<16x32xf32>
    %753 = arith.addf %751, %752 : vector<16x32xf32>
    %c0_536 = arith.constant 0 : index
    %c0_537 = arith.constant 0 : index
    %c0_538 = arith.constant 0 : index
    %c320_539 = arith.constant 320 : index
    %754 = vector.load %arg8[%c0_536, %c0_537, %c0_538, %c320_539] : memref<1x2x32x512xbf16, #tpu.memory_space<vmem>>, vector<1x1x32x8xbf16>
    %755 = vector.shape_cast %754 : vector<1x1x32x8xbf16> to vector<32x8xbf16>
    %756 = arith.truncf %753 : vector<16x32xf32> to vector<16x32xbf16>
    %cst_540 = arith.constant dense<0.000000e+00> : vector<16x8xf32>
    %757 = tpu.matmul %756, %755, %cst_540 {dimension_numbers = #tpu.dot_dimension_numbers<[1], [0], [0], [1], [0, 0, 1, 1], [], []>} : vector<16x32xbf16>, vector<32x8xbf16>, vector<16x8xf32> -> vector<16x8xf32>
    %c0_541 = arith.constant 0 : index
    %c0_542 = arith.constant 0 : index
    %c0_543 = arith.constant 0 : index
    %c480 = arith.constant 480 : index
    %758 = vector.load %arg10[%c0_541, %c0_542, %c0_543, %c480] : memref<1x2x1x896xf32, #tpu.memory_space<vmem>>, vector<1x1x1x8xf32>
    %759 = vector.shape_cast %758 : vector<1x1x1x8xf32> to vector<1x8xf32>
    %760 = vector.broadcast %759 : vector<1x8xf32> to vector<16x8xf32>
    %761 = arith.addf %757, %760 : vector<16x8xf32>
    %c0_544 = arith.constant 0 : index
    %c0_545 = arith.constant 0 : index
    %c0_546 = arith.constant 0 : index
    %c352_547 = arith.constant 352 : index
    %762 = vector.load %arg8[%c0_544, %c0_545, %c0_546, %c352_547] : memref<1x2x32x512xbf16, #tpu.memory_space<vmem>>, vector<1x1x32x8xbf16>
    %763 = vector.shape_cast %762 : vector<1x1x32x8xbf16> to vector<32x8xbf16>
    %764 = arith.truncf %541 : vector<8x32xf32> to vector<8x32xbf16>
    %cst_548 = arith.constant dense<0.000000e+00> : vector<8x8xf32>
    %765 = tpu.matmul %764, %763, %cst_548 {dimension_numbers = #tpu.dot_dimension_numbers<[1], [0], [0], [1], [0, 0, 1, 1], [], []>} : vector<8x32xbf16>, vector<32x8xbf16>, vector<8x8xf32> -> vector<8x8xf32>
    %c0_549 = arith.constant 0 : index
    %c0_550 = arith.constant 0 : index
    %c0_551 = arith.constant 0 : index
    %c512 = arith.constant 512 : index
    %766 = vector.load %arg10[%c0_549, %c0_550, %c0_551, %c512] : memref<1x2x1x896xf32, #tpu.memory_space<vmem>>, vector<1x1x1x8xf32>
    %767 = vector.shape_cast %766 : vector<1x1x1x8xf32> to vector<1x8xf32>
    %768 = vector.broadcast %767 : vector<1x8xf32> to vector<8x8xf32>
    %769 = arith.addf %765, %768 : vector<8x8xf32>
    %c0_552 = arith.constant 0 : index
    %c0_553 = arith.constant 0 : index
    %c0_554 = arith.constant 0 : index
    %c384_555 = arith.constant 384 : index
    %770 = vector.load %arg8[%c0_552, %c0_553, %c0_554, %c384_555] : memref<1x2x32x512xbf16, #tpu.memory_space<vmem>>, vector<1x1x32x8xbf16>
    %771 = vector.shape_cast %770 : vector<1x1x32x8xbf16> to vector<32x8xbf16>
    %772 = arith.truncf %541 : vector<8x32xf32> to vector<8x32xbf16>
    %cst_556 = arith.constant dense<0.000000e+00> : vector<8x8xf32>
    %773 = tpu.matmul %772, %771, %cst_556 {dimension_numbers = #tpu.dot_dimension_numbers<[1], [0], [0], [1], [0, 0, 1, 1], [], []>} : vector<8x32xbf16>, vector<32x8xbf16>, vector<8x8xf32> -> vector<8x8xf32>
    %c0_557 = arith.constant 0 : index
    %c0_558 = arith.constant 0 : index
    %c0_559 = arith.constant 0 : index
    %c544 = arith.constant 544 : index
    %774 = vector.load %arg10[%c0_557, %c0_558, %c0_559, %c544] : memref<1x2x1x896xf32, #tpu.memory_space<vmem>>, vector<1x1x1x8xf32>
    %775 = vector.shape_cast %774 : vector<1x1x1x8xf32> to vector<1x8xf32>
    %776 = vector.broadcast %775 : vector<1x8xf32> to vector<8x8xf32>
    %777 = arith.addf %773, %776 : vector<8x8xf32>
    %778 = arith.truncf %761 : vector<16x8xf32> to vector<16x8xbf16>
    %779 = arith.truncf %769 : vector<8x8xf32> to vector<8x8xbf16>
    "tpu.trace_start"() <{level = 10 : i32, message = "qd,kd->qk"}> : () -> ()
    %cst_560 = arith.constant dense<0.000000e+00> : vector<16x8xf32>
    %780 = tpu.matmul %778, %779, %cst_560 {dimension_numbers = #tpu.dot_dimension_numbers<[1], [1], [0], [0], [0, 0, 1, 0], [], []>} : vector<16x8xbf16>, vector<8x8xbf16>, vector<16x8xf32> -> vector<16x8xf32>
    "tpu.trace_stop"() : () -> ()
    %cst_561 = arith.constant 0.353553385 : f32
    %781 = vector.broadcast %cst_561 : f32 to vector<16x8xf32>
    %782 = arith.mulf %780, %781 : vector<16x8xf32>
    %783 = arith.addf %782, %23 : vector<16x8xf32>
    %cst_562 = arith.constant dense<0xFF800000> : vector<16xf32>
    %784 = vector.multi_reduction <maximumf>, %783, %cst_562 [1] : vector<16x8xf32> to vector<16xf32>
    %785 = vector.shape_cast %784 : vector<16xf32> to vector<16x1xf32>
    %786 = vector.broadcast %785 : vector<16x1xf32> to vector<16x8xf32>
    %787 = arith.subf %783, %786 : vector<16x8xf32>
    %788 = math.exp %787 : vector<16x8xf32>
    %cst_563 = arith.constant dense<0.000000e+00> : vector<16xf32>
    %789 = vector.multi_reduction <add>, %788, %cst_563 [1] : vector<16x8xf32> to vector<16xf32>
    %790 = vector.shape_cast %789 : vector<16xf32> to vector<16x1xf32>
    %791 = vector.broadcast %790 : vector<16x1xf32> to vector<16x8xf32>
    %792 = arith.divf %788, %791 : vector<16x8xf32>
    %793 = arith.truncf %792 : vector<16x8xf32> to vector<16x8xbf16>
    %794 = arith.truncf %777 : vector<8x8xf32> to vector<8x8xbf16>
    %cst_564 = arith.constant dense<0.000000e+00> : vector<16x8xf32>
    %795 = tpu.matmul %793, %794, %cst_564 {dimension_numbers = #tpu.dot_dimension_numbers<[1], [0], [0], [1], [0, 0, 1, 1], [], []>} : vector<16x8xbf16>, vector<8x8xbf16>, vector<16x8xf32> -> vector<16x8xf32>
    %c0_565 = arith.constant 0 : index
    %c0_566 = arith.constant 0 : index
    %c0_567 = arith.constant 0 : index
    %c416_568 = arith.constant 416 : index
    %796 = vector.load %arg8[%c0_565, %c0_566, %c0_567, %c416_568] : memref<1x2x32x512xbf16, #tpu.memory_space<vmem>>, vector<1x1x8x32xbf16>
    %797 = vector.shape_cast %796 : vector<1x1x8x32xbf16> to vector<8x32xbf16>
    %798 = arith.truncf %795 : vector<16x8xf32> to vector<16x8xbf16>
    %cst_569 = arith.constant dense<0.000000e+00> : vector<16x32xf32>
    %799 = tpu.matmul %798, %797, %cst_569 {dimension_numbers = #tpu.dot_dimension_numbers<[1], [0], [0], [1], [0, 0, 1, 1], [], []>} : vector<16x8xbf16>, vector<8x32xbf16>, vector<16x32xf32> -> vector<16x32xf32>
    %c0_570 = arith.constant 0 : index
    %c0_571 = arith.constant 0 : index
    %c0_572 = arith.constant 0 : index
    %c328 = arith.constant 328 : index
    %800 = vector.load %arg8[%c0_570, %c0_571, %c0_572, %c328] : memref<1x2x32x512xbf16, #tpu.memory_space<vmem>>, vector<1x1x32x8xbf16>
    %801 = vector.shape_cast %800 : vector<1x1x32x8xbf16> to vector<32x8xbf16>
    %802 = arith.truncf %753 : vector<16x32xf32> to vector<16x32xbf16>
    %cst_573 = arith.constant dense<0.000000e+00> : vector<16x8xf32>
    %803 = tpu.matmul %802, %801, %cst_573 {dimension_numbers = #tpu.dot_dimension_numbers<[1], [0], [0], [1], [0, 0, 1, 1], [], []>} : vector<16x32xbf16>, vector<32x8xbf16>, vector<16x8xf32> -> vector<16x8xf32>
    %c0_574 = arith.constant 0 : index
    %c0_575 = arith.constant 0 : index
    %c0_576 = arith.constant 0 : index
    %c488 = arith.constant 488 : index
    %804 = vector.load %arg10[%c0_574, %c0_575, %c0_576, %c488] : memref<1x2x1x896xf32, #tpu.memory_space<vmem>>, vector<1x1x1x8xf32>
    %805 = vector.shape_cast %804 : vector<1x1x1x8xf32> to vector<1x8xf32>
    %806 = vector.broadcast %805 : vector<1x8xf32> to vector<16x8xf32>
    %807 = arith.addf %803, %806 : vector<16x8xf32>
    %c0_577 = arith.constant 0 : index
    %c0_578 = arith.constant 0 : index
    %c0_579 = arith.constant 0 : index
    %c360_580 = arith.constant 360 : index
    %808 = vector.load %arg8[%c0_577, %c0_578, %c0_579, %c360_580] : memref<1x2x32x512xbf16, #tpu.memory_space<vmem>>, vector<1x1x32x8xbf16>
    %809 = vector.shape_cast %808 : vector<1x1x32x8xbf16> to vector<32x8xbf16>
    %810 = arith.truncf %541 : vector<8x32xf32> to vector<8x32xbf16>
    %cst_581 = arith.constant dense<0.000000e+00> : vector<8x8xf32>
    %811 = tpu.matmul %810, %809, %cst_581 {dimension_numbers = #tpu.dot_dimension_numbers<[1], [0], [0], [1], [0, 0, 1, 1], [], []>} : vector<8x32xbf16>, vector<32x8xbf16>, vector<8x8xf32> -> vector<8x8xf32>
    %c0_582 = arith.constant 0 : index
    %c0_583 = arith.constant 0 : index
    %c0_584 = arith.constant 0 : index
    %c520 = arith.constant 520 : index
    %812 = vector.load %arg10[%c0_582, %c0_583, %c0_584, %c520] : memref<1x2x1x896xf32, #tpu.memory_space<vmem>>, vector<1x1x1x8xf32>
    %813 = vector.shape_cast %812 : vector<1x1x1x8xf32> to vector<1x8xf32>
    %814 = vector.broadcast %813 : vector<1x8xf32> to vector<8x8xf32>
    %815 = arith.addf %811, %814 : vector<8x8xf32>
    %c0_585 = arith.constant 0 : index
    %c0_586 = arith.constant 0 : index
    %c0_587 = arith.constant 0 : index
    %c392_588 = arith.constant 392 : index
    %816 = vector.load %arg8[%c0_585, %c0_586, %c0_587, %c392_588] : memref<1x2x32x512xbf16, #tpu.memory_space<vmem>>, vector<1x1x32x8xbf16>
    %817 = vector.shape_cast %816 : vector<1x1x32x8xbf16> to vector<32x8xbf16>
    %818 = arith.truncf %541 : vector<8x32xf32> to vector<8x32xbf16>
    %cst_589 = arith.constant dense<0.000000e+00> : vector<8x8xf32>
    %819 = tpu.matmul %818, %817, %cst_589 {dimension_numbers = #tpu.dot_dimension_numbers<[1], [0], [0], [1], [0, 0, 1, 1], [], []>} : vector<8x32xbf16>, vector<32x8xbf16>, vector<8x8xf32> -> vector<8x8xf32>
    %c0_590 = arith.constant 0 : index
    %c0_591 = arith.constant 0 : index
    %c0_592 = arith.constant 0 : index
    %c552 = arith.constant 552 : index
    %820 = vector.load %arg10[%c0_590, %c0_591, %c0_592, %c552] : memref<1x2x1x896xf32, #tpu.memory_space<vmem>>, vector<1x1x1x8xf32>
    %821 = vector.shape_cast %820 : vector<1x1x1x8xf32> to vector<1x8xf32>
    %822 = vector.broadcast %821 : vector<1x8xf32> to vector<8x8xf32>
    %823 = arith.addf %819, %822 : vector<8x8xf32>
    %824 = arith.truncf %807 : vector<16x8xf32> to vector<16x8xbf16>
    %825 = arith.truncf %815 : vector<8x8xf32> to vector<8x8xbf16>
    "tpu.trace_start"() <{level = 10 : i32, message = "qd,kd->qk"}> : () -> ()
    %cst_593 = arith.constant dense<0.000000e+00> : vector<16x8xf32>
    %826 = tpu.matmul %824, %825, %cst_593 {dimension_numbers = #tpu.dot_dimension_numbers<[1], [1], [0], [0], [0, 0, 1, 0], [], []>} : vector<16x8xbf16>, vector<8x8xbf16>, vector<16x8xf32> -> vector<16x8xf32>
    "tpu.trace_stop"() : () -> ()
    %cst_594 = arith.constant 0.353553385 : f32
    %827 = vector.broadcast %cst_594 : f32 to vector<16x8xf32>
    %828 = arith.mulf %826, %827 : vector<16x8xf32>
    %829 = arith.addf %828, %23 : vector<16x8xf32>
    %cst_595 = arith.constant dense<0xFF800000> : vector<16xf32>
    %830 = vector.multi_reduction <maximumf>, %829, %cst_595 [1] : vector<16x8xf32> to vector<16xf32>
    %831 = vector.shape_cast %830 : vector<16xf32> to vector<16x1xf32>
    %832 = vector.broadcast %831 : vector<16x1xf32> to vector<16x8xf32>
    %833 = arith.subf %829, %832 : vector<16x8xf32>
    %834 = math.exp %833 : vector<16x8xf32>
    %cst_596 = arith.constant dense<0.000000e+00> : vector<16xf32>
    %835 = vector.multi_reduction <add>, %834, %cst_596 [1] : vector<16x8xf32> to vector<16xf32>
    %836 = vector.shape_cast %835 : vector<16xf32> to vector<16x1xf32>
    %837 = vector.broadcast %836 : vector<16x1xf32> to vector<16x8xf32>
    %838 = arith.divf %834, %837 : vector<16x8xf32>
    %839 = arith.truncf %838 : vector<16x8xf32> to vector<16x8xbf16>
    %840 = arith.truncf %823 : vector<8x8xf32> to vector<8x8xbf16>
    %cst_597 = arith.constant dense<0.000000e+00> : vector<16x8xf32>
    %841 = tpu.matmul %839, %840, %cst_597 {dimension_numbers = #tpu.dot_dimension_numbers<[1], [0], [0], [1], [0, 0, 1, 1], [], []>} : vector<16x8xbf16>, vector<8x8xbf16>, vector<16x8xf32> -> vector<16x8xf32>
    %c0_598 = arith.constant 0 : index
    %c0_599 = arith.constant 0 : index
    %c8_600 = arith.constant 8 : index
    %c416_601 = arith.constant 416 : index
    %842 = vector.load %arg8[%c0_598, %c0_599, %c8_600, %c416_601] : memref<1x2x32x512xbf16, #tpu.memory_space<vmem>>, vector<1x1x8x32xbf16>
    %843 = vector.shape_cast %842 : vector<1x1x8x32xbf16> to vector<8x32xbf16>
    %844 = arith.truncf %841 : vector<16x8xf32> to vector<16x8xbf16>
    %cst_602 = arith.constant dense<0.000000e+00> : vector<16x32xf32>
    %845 = tpu.matmul %844, %843, %cst_602 {dimension_numbers = #tpu.dot_dimension_numbers<[1], [0], [0], [1], [0, 0, 1, 1], [], []>} : vector<16x8xbf16>, vector<8x32xbf16>, vector<16x32xf32> -> vector<16x32xf32>
    %846 = arith.addf %799, %845 : vector<16x32xf32>
    %c0_603 = arith.constant 0 : index
    %c0_604 = arith.constant 0 : index
    %c0_605 = arith.constant 0 : index
    %c336 = arith.constant 336 : index
    %847 = vector.load %arg8[%c0_603, %c0_604, %c0_605, %c336] : memref<1x2x32x512xbf16, #tpu.memory_space<vmem>>, vector<1x1x32x8xbf16>
    %848 = vector.shape_cast %847 : vector<1x1x32x8xbf16> to vector<32x8xbf16>
    %849 = arith.truncf %753 : vector<16x32xf32> to vector<16x32xbf16>
    %cst_606 = arith.constant dense<0.000000e+00> : vector<16x8xf32>
    %850 = tpu.matmul %849, %848, %cst_606 {dimension_numbers = #tpu.dot_dimension_numbers<[1], [0], [0], [1], [0, 0, 1, 1], [], []>} : vector<16x32xbf16>, vector<32x8xbf16>, vector<16x8xf32> -> vector<16x8xf32>
    %c0_607 = arith.constant 0 : index
    %c0_608 = arith.constant 0 : index
    %c0_609 = arith.constant 0 : index
    %c496 = arith.constant 496 : index
    %851 = vector.load %arg10[%c0_607, %c0_608, %c0_609, %c496] : memref<1x2x1x896xf32, #tpu.memory_space<vmem>>, vector<1x1x1x8xf32>
    %852 = vector.shape_cast %851 : vector<1x1x1x8xf32> to vector<1x8xf32>
    %853 = vector.broadcast %852 : vector<1x8xf32> to vector<16x8xf32>
    %854 = arith.addf %850, %853 : vector<16x8xf32>
    %c0_610 = arith.constant 0 : index
    %c0_611 = arith.constant 0 : index
    %c0_612 = arith.constant 0 : index
    %c368_613 = arith.constant 368 : index
    %855 = vector.load %arg8[%c0_610, %c0_611, %c0_612, %c368_613] : memref<1x2x32x512xbf16, #tpu.memory_space<vmem>>, vector<1x1x32x8xbf16>
    %856 = vector.shape_cast %855 : vector<1x1x32x8xbf16> to vector<32x8xbf16>
    %857 = arith.truncf %541 : vector<8x32xf32> to vector<8x32xbf16>
    %cst_614 = arith.constant dense<0.000000e+00> : vector<8x8xf32>
    %858 = tpu.matmul %857, %856, %cst_614 {dimension_numbers = #tpu.dot_dimension_numbers<[1], [0], [0], [1], [0, 0, 1, 1], [], []>} : vector<8x32xbf16>, vector<32x8xbf16>, vector<8x8xf32> -> vector<8x8xf32>
    %c0_615 = arith.constant 0 : index
    %c0_616 = arith.constant 0 : index
    %c0_617 = arith.constant 0 : index
    %c528 = arith.constant 528 : index
    %859 = vector.load %arg10[%c0_615, %c0_616, %c0_617, %c528] : memref<1x2x1x896xf32, #tpu.memory_space<vmem>>, vector<1x1x1x8xf32>
    %860 = vector.shape_cast %859 : vector<1x1x1x8xf32> to vector<1x8xf32>
    %861 = vector.broadcast %860 : vector<1x8xf32> to vector<8x8xf32>
    %862 = arith.addf %858, %861 : vector<8x8xf32>
    %c0_618 = arith.constant 0 : index
    %c0_619 = arith.constant 0 : index
    %c0_620 = arith.constant 0 : index
    %c400_621 = arith.constant 400 : index
    %863 = vector.load %arg8[%c0_618, %c0_619, %c0_620, %c400_621] : memref<1x2x32x512xbf16, #tpu.memory_space<vmem>>, vector<1x1x32x8xbf16>
    %864 = vector.shape_cast %863 : vector<1x1x32x8xbf16> to vector<32x8xbf16>
    %865 = arith.truncf %541 : vector<8x32xf32> to vector<8x32xbf16>
    %cst_622 = arith.constant dense<0.000000e+00> : vector<8x8xf32>
    %866 = tpu.matmul %865, %864, %cst_622 {dimension_numbers = #tpu.dot_dimension_numbers<[1], [0], [0], [1], [0, 0, 1, 1], [], []>} : vector<8x32xbf16>, vector<32x8xbf16>, vector<8x8xf32> -> vector<8x8xf32>
    %c0_623 = arith.constant 0 : index
    %c0_624 = arith.constant 0 : index
    %c0_625 = arith.constant 0 : index
    %c560 = arith.constant 560 : index
    %867 = vector.load %arg10[%c0_623, %c0_624, %c0_625, %c560] : memref<1x2x1x896xf32, #tpu.memory_space<vmem>>, vector<1x1x1x8xf32>
    %868 = vector.shape_cast %867 : vector<1x1x1x8xf32> to vector<1x8xf32>
    %869 = vector.broadcast %868 : vector<1x8xf32> to vector<8x8xf32>
    %870 = arith.addf %866, %869 : vector<8x8xf32>
    %871 = arith.truncf %854 : vector<16x8xf32> to vector<16x8xbf16>
    %872 = arith.truncf %862 : vector<8x8xf32> to vector<8x8xbf16>
    "tpu.trace_start"() <{level = 10 : i32, message = "qd,kd->qk"}> : () -> ()
    %cst_626 = arith.constant dense<0.000000e+00> : vector<16x8xf32>
    %873 = tpu.matmul %871, %872, %cst_626 {dimension_numbers = #tpu.dot_dimension_numbers<[1], [1], [0], [0], [0, 0, 1, 0], [], []>} : vector<16x8xbf16>, vector<8x8xbf16>, vector<16x8xf32> -> vector<16x8xf32>
    "tpu.trace_stop"() : () -> ()
    %cst_627 = arith.constant 0.353553385 : f32
    %874 = vector.broadcast %cst_627 : f32 to vector<16x8xf32>
    %875 = arith.mulf %873, %874 : vector<16x8xf32>
    %876 = arith.addf %875, %23 : vector<16x8xf32>
    %cst_628 = arith.constant dense<0xFF800000> : vector<16xf32>
    %877 = vector.multi_reduction <maximumf>, %876, %cst_628 [1] : vector<16x8xf32> to vector<16xf32>
    %878 = vector.shape_cast %877 : vector<16xf32> to vector<16x1xf32>
    %879 = vector.broadcast %878 : vector<16x1xf32> to vector<16x8xf32>
    %880 = arith.subf %876, %879 : vector<16x8xf32>
    %881 = math.exp %880 : vector<16x8xf32>
    %cst_629 = arith.constant dense<0.000000e+00> : vector<16xf32>
    %882 = vector.multi_reduction <add>, %881, %cst_629 [1] : vector<16x8xf32> to vector<16xf32>
    %883 = vector.shape_cast %882 : vector<16xf32> to vector<16x1xf32>
    %884 = vector.broadcast %883 : vector<16x1xf32> to vector<16x8xf32>
    %885 = arith.divf %881, %884 : vector<16x8xf32>
    %886 = arith.truncf %885 : vector<16x8xf32> to vector<16x8xbf16>
    %887 = arith.truncf %870 : vector<8x8xf32> to vector<8x8xbf16>
    %cst_630 = arith.constant dense<0.000000e+00> : vector<16x8xf32>
    %888 = tpu.matmul %886, %887, %cst_630 {dimension_numbers = #tpu.dot_dimension_numbers<[1], [0], [0], [1], [0, 0, 1, 1], [], []>} : vector<16x8xbf16>, vector<8x8xbf16>, vector<16x8xf32> -> vector<16x8xf32>
    %c0_631 = arith.constant 0 : index
    %c0_632 = arith.constant 0 : index
    %c16_633 = arith.constant 16 : index
    %c416_634 = arith.constant 416 : index
    %889 = vector.load %arg8[%c0_631, %c0_632, %c16_633, %c416_634] : memref<1x2x32x512xbf16, #tpu.memory_space<vmem>>, vector<1x1x8x32xbf16>
    %890 = vector.shape_cast %889 : vector<1x1x8x32xbf16> to vector<8x32xbf16>
    %891 = arith.truncf %888 : vector<16x8xf32> to vector<16x8xbf16>
    %cst_635 = arith.constant dense<0.000000e+00> : vector<16x32xf32>
    %892 = tpu.matmul %891, %890, %cst_635 {dimension_numbers = #tpu.dot_dimension_numbers<[1], [0], [0], [1], [0, 0, 1, 1], [], []>} : vector<16x8xbf16>, vector<8x32xbf16>, vector<16x32xf32> -> vector<16x32xf32>
    %893 = arith.addf %846, %892 : vector<16x32xf32>
    %c0_636 = arith.constant 0 : index
    %c0_637 = arith.constant 0 : index
    %c0_638 = arith.constant 0 : index
    %c344 = arith.constant 344 : index
    %894 = vector.load %arg8[%c0_636, %c0_637, %c0_638, %c344] : memref<1x2x32x512xbf16, #tpu.memory_space<vmem>>, vector<1x1x32x8xbf16>
    %895 = vector.shape_cast %894 : vector<1x1x32x8xbf16> to vector<32x8xbf16>
    %896 = arith.truncf %753 : vector<16x32xf32> to vector<16x32xbf16>
    %cst_639 = arith.constant dense<0.000000e+00> : vector<16x8xf32>
    %897 = tpu.matmul %896, %895, %cst_639 {dimension_numbers = #tpu.dot_dimension_numbers<[1], [0], [0], [1], [0, 0, 1, 1], [], []>} : vector<16x32xbf16>, vector<32x8xbf16>, vector<16x8xf32> -> vector<16x8xf32>
    %c0_640 = arith.constant 0 : index
    %c0_641 = arith.constant 0 : index
    %c0_642 = arith.constant 0 : index
    %c504 = arith.constant 504 : index
    %898 = vector.load %arg10[%c0_640, %c0_641, %c0_642, %c504] : memref<1x2x1x896xf32, #tpu.memory_space<vmem>>, vector<1x1x1x8xf32>
    %899 = vector.shape_cast %898 : vector<1x1x1x8xf32> to vector<1x8xf32>
    %900 = vector.broadcast %899 : vector<1x8xf32> to vector<16x8xf32>
    %901 = arith.addf %897, %900 : vector<16x8xf32>
    %c0_643 = arith.constant 0 : index
    %c0_644 = arith.constant 0 : index
    %c0_645 = arith.constant 0 : index
    %c376_646 = arith.constant 376 : index
    %902 = vector.load %arg8[%c0_643, %c0_644, %c0_645, %c376_646] : memref<1x2x32x512xbf16, #tpu.memory_space<vmem>>, vector<1x1x32x8xbf16>
    %903 = vector.shape_cast %902 : vector<1x1x32x8xbf16> to vector<32x8xbf16>
    %904 = arith.truncf %541 : vector<8x32xf32> to vector<8x32xbf16>
    %cst_647 = arith.constant dense<0.000000e+00> : vector<8x8xf32>
    %905 = tpu.matmul %904, %903, %cst_647 {dimension_numbers = #tpu.dot_dimension_numbers<[1], [0], [0], [1], [0, 0, 1, 1], [], []>} : vector<8x32xbf16>, vector<32x8xbf16>, vector<8x8xf32> -> vector<8x8xf32>
    %c0_648 = arith.constant 0 : index
    %c0_649 = arith.constant 0 : index
    %c0_650 = arith.constant 0 : index
    %c536 = arith.constant 536 : index
    %906 = vector.load %arg10[%c0_648, %c0_649, %c0_650, %c536] : memref<1x2x1x896xf32, #tpu.memory_space<vmem>>, vector<1x1x1x8xf32>
    %907 = vector.shape_cast %906 : vector<1x1x1x8xf32> to vector<1x8xf32>
    %908 = vector.broadcast %907 : vector<1x8xf32> to vector<8x8xf32>
    %909 = arith.addf %905, %908 : vector<8x8xf32>
    %c0_651 = arith.constant 0 : index
    %c0_652 = arith.constant 0 : index
    %c0_653 = arith.constant 0 : index
    %c408_654 = arith.constant 408 : index
    %910 = vector.load %arg8[%c0_651, %c0_652, %c0_653, %c408_654] : memref<1x2x32x512xbf16, #tpu.memory_space<vmem>>, vector<1x1x32x8xbf16>
    %911 = vector.shape_cast %910 : vector<1x1x32x8xbf16> to vector<32x8xbf16>
    %912 = arith.truncf %541 : vector<8x32xf32> to vector<8x32xbf16>
    %cst_655 = arith.constant dense<0.000000e+00> : vector<8x8xf32>
    %913 = tpu.matmul %912, %911, %cst_655 {dimension_numbers = #tpu.dot_dimension_numbers<[1], [0], [0], [1], [0, 0, 1, 1], [], []>} : vector<8x32xbf16>, vector<32x8xbf16>, vector<8x8xf32> -> vector<8x8xf32>
    %c0_656 = arith.constant 0 : index
    %c0_657 = arith.constant 0 : index
    %c0_658 = arith.constant 0 : index
    %c568 = arith.constant 568 : index
    %914 = vector.load %arg10[%c0_656, %c0_657, %c0_658, %c568] : memref<1x2x1x896xf32, #tpu.memory_space<vmem>>, vector<1x1x1x8xf32>
    %915 = vector.shape_cast %914 : vector<1x1x1x8xf32> to vector<1x8xf32>
    %916 = vector.broadcast %915 : vector<1x8xf32> to vector<8x8xf32>
    %917 = arith.addf %913, %916 : vector<8x8xf32>
    %918 = arith.truncf %901 : vector<16x8xf32> to vector<16x8xbf16>
    %919 = arith.truncf %909 : vector<8x8xf32> to vector<8x8xbf16>
    "tpu.trace_start"() <{level = 10 : i32, message = "qd,kd->qk"}> : () -> ()
    %cst_659 = arith.constant dense<0.000000e+00> : vector<16x8xf32>
    %920 = tpu.matmul %918, %919, %cst_659 {dimension_numbers = #tpu.dot_dimension_numbers<[1], [1], [0], [0], [0, 0, 1, 0], [], []>} : vector<16x8xbf16>, vector<8x8xbf16>, vector<16x8xf32> -> vector<16x8xf32>
    "tpu.trace_stop"() : () -> ()
    %cst_660 = arith.constant 0.353553385 : f32
    %921 = vector.broadcast %cst_660 : f32 to vector<16x8xf32>
    %922 = arith.mulf %920, %921 : vector<16x8xf32>
    %923 = arith.addf %922, %23 : vector<16x8xf32>
    %cst_661 = arith.constant dense<0xFF800000> : vector<16xf32>
    %924 = vector.multi_reduction <maximumf>, %923, %cst_661 [1] : vector<16x8xf32> to vector<16xf32>
    %925 = vector.shape_cast %924 : vector<16xf32> to vector<16x1xf32>
    %926 = vector.broadcast %925 : vector<16x1xf32> to vector<16x8xf32>
    %927 = arith.subf %923, %926 : vector<16x8xf32>
    %928 = math.exp %927 : vector<16x8xf32>
    %cst_662 = arith.constant dense<0.000000e+00> : vector<16xf32>
    %929 = vector.multi_reduction <add>, %928, %cst_662 [1] : vector<16x8xf32> to vector<16xf32>
    %930 = vector.shape_cast %929 : vector<16xf32> to vector<16x1xf32>
    %931 = vector.broadcast %930 : vector<16x1xf32> to vector<16x8xf32>
    %932 = arith.divf %928, %931 : vector<16x8xf32>
    %933 = arith.truncf %932 : vector<16x8xf32> to vector<16x8xbf16>
    %934 = arith.truncf %917 : vector<8x8xf32> to vector<8x8xbf16>
    %cst_663 = arith.constant dense<0.000000e+00> : vector<16x8xf32>
    %935 = tpu.matmul %933, %934, %cst_663 {dimension_numbers = #tpu.dot_dimension_numbers<[1], [0], [0], [1], [0, 0, 1, 1], [], []>} : vector<16x8xbf16>, vector<8x8xbf16>, vector<16x8xf32> -> vector<16x8xf32>
    %c0_664 = arith.constant 0 : index
    %c0_665 = arith.constant 0 : index
    %c24_666 = arith.constant 24 : index
    %c416_667 = arith.constant 416 : index
    %936 = vector.load %arg8[%c0_664, %c0_665, %c24_666, %c416_667] : memref<1x2x32x512xbf16, #tpu.memory_space<vmem>>, vector<1x1x8x32xbf16>
    %937 = vector.shape_cast %936 : vector<1x1x8x32xbf16> to vector<8x32xbf16>
    %938 = arith.truncf %935 : vector<16x8xf32> to vector<16x8xbf16>
    %cst_668 = arith.constant dense<0.000000e+00> : vector<16x32xf32>
    %939 = tpu.matmul %938, %937, %cst_668 {dimension_numbers = #tpu.dot_dimension_numbers<[1], [0], [0], [1], [0, 0, 1, 1], [], []>} : vector<16x8xbf16>, vector<8x32xbf16>, vector<16x32xf32> -> vector<16x32xf32>
    %940 = arith.addf %893, %939 : vector<16x32xf32>
    %c0_669 = arith.constant 0 : index
    %c0_670 = arith.constant 0 : index
    %c0_671 = arith.constant 0 : index
    %c576 = arith.constant 576 : index
    %941 = vector.load %arg10[%c0_669, %c0_670, %c0_671, %c576] : memref<1x2x1x896xf32, #tpu.memory_space<vmem>>, vector<1x1x1x32xf32>
    %942 = vector.shape_cast %941 : vector<1x1x1x32xf32> to vector<1x32xf32>
    %943 = vector.broadcast %942 : vector<1x32xf32> to vector<16x32xf32>
    %944 = arith.addf %940, %943 : vector<16x32xf32>
    %945 = arith.addf %753, %944 : vector<16x32xf32>
    %c0_672 = arith.constant 0 : index
    %c0_673 = arith.constant 0 : index
    %c0_674 = arith.constant 0 : index
    %c768 = arith.constant 768 : index
    %946 = vector.load %arg10[%c0_672, %c0_673, %c0_674, %c768] : memref<1x2x1x896xf32, #tpu.memory_space<vmem>>, vector<1x1x1x32xf32>
    %947 = vector.shape_cast %946 : vector<1x1x1x32xf32> to vector<1x32xf32>
    %c0_675 = arith.constant 0 : index
    %c0_676 = arith.constant 0 : index
    %c0_677 = arith.constant 0 : index
    %c800 = arith.constant 800 : index
    %948 = vector.load %arg10[%c0_675, %c0_676, %c0_677, %c800] : memref<1x2x1x896xf32, #tpu.memory_space<vmem>>, vector<1x1x1x32xf32>
    %949 = vector.shape_cast %948 : vector<1x1x1x32xf32> to vector<1x32xf32>
    %cst_678 = arith.constant dense<0.000000e+00> : vector<16xf32>
    %950 = vector.multi_reduction <add>, %945, %cst_678 [1] : vector<16x32xf32> to vector<16xf32>
    %951 = vector.shape_cast %950 : vector<16xf32> to vector<16x1xf32>
    %cst_679 = arith.constant 3.200000e+01 : f32
    %952 = vector.broadcast %cst_679 : f32 to vector<16x1xf32>
    %953 = arith.divf %951, %952 : vector<16x1xf32>
    %954 = vector.broadcast %953 : vector<16x1xf32> to vector<16x32xf32>
    %955 = arith.subf %945, %954 : vector<16x32xf32>
    %956 = arith.mulf %955, %955 : vector<16x32xf32>
    %cst_680 = arith.constant dense<0.000000e+00> : vector<16xf32>
    %957 = vector.multi_reduction <add>, %956, %cst_680 [1] : vector<16x32xf32> to vector<16xf32>
    %958 = vector.shape_cast %957 : vector<16xf32> to vector<16x1xf32>
    %cst_681 = arith.constant 0.0322580636 : f32
    %959 = vector.broadcast %cst_681 : f32 to vector<16x1xf32>
    %960 = arith.mulf %958, %959 : vector<16x1xf32>
    %961 = math.sqrt %960 : vector<16x1xf32>
    %cst_682 = arith.constant 9.99999997E-7 : f32
    %962 = vector.broadcast %cst_682 : f32 to vector<16x1xf32>
    %963 = arith.addf %961, %962 : vector<16x1xf32>
    %964 = vector.broadcast %963 : vector<16x1xf32> to vector<16x32xf32>
    %965 = arith.divf %955, %964 : vector<16x32xf32>
    %966 = vector.broadcast %947 : vector<1x32xf32> to vector<16x32xf32>
    %967 = arith.mulf %966, %965 : vector<16x32xf32>
    %968 = vector.broadcast %949 : vector<1x32xf32> to vector<16x32xf32>
    %969 = arith.addf %967, %968 : vector<16x32xf32>
    %c0_683 = arith.constant 0 : index
    %c0_684 = arith.constant 0 : index
    %c0_685 = arith.constant 0 : index
    %c448_686 = arith.constant 448 : index
    %970 = vector.load %arg8[%c0_683, %c0_684, %c0_685, %c448_686] : memref<1x2x32x512xbf16, #tpu.memory_space<vmem>>, vector<1x1x32x64xbf16>
    %971 = vector.shape_cast %970 : vector<1x1x32x64xbf16> to vector<32x64xbf16>
    %972 = arith.truncf %969 : vector<16x32xf32> to vector<16x32xbf16>
    %cst_687 = arith.constant dense<0.000000e+00> : vector<16x64xf32>
    %973 = tpu.matmul %972, %971, %cst_687 {dimension_numbers = #tpu.dot_dimension_numbers<[1], [0], [0], [1], [0, 0, 1, 1], [], []>} : vector<16x32xbf16>, vector<32x64xbf16>, vector<16x64xf32> -> vector<16x64xf32>
    %c0_688 = arith.constant 0 : index
    %c0_689 = arith.constant 0 : index
    %c0_690 = arith.constant 0 : index
    %c608 = arith.constant 608 : index
    %974 = vector.load %arg10[%c0_688, %c0_689, %c0_690, %c608] : memref<1x2x1x896xf32, #tpu.memory_space<vmem>>, vector<1x1x1x64xf32>
    %975 = vector.shape_cast %974 : vector<1x1x1x64xf32> to vector<1x64xf32>
    %976 = vector.broadcast %975 : vector<1x64xf32> to vector<16x64xf32>
    %977 = arith.addf %973, %976 : vector<16x64xf32>
    %cst_691 = arith.constant 0.000000e+00 : f32
    %978 = vector.broadcast %cst_691 : f32 to vector<16x64xf32>
    %979 = arith.maximumf %977, %978 : vector<16x64xf32>
    %c0_692 = arith.constant 0 : index
    %c0_693 = arith.constant 0 : index
    %c0_694 = arith.constant 0 : index
    %c32_695 = arith.constant 32 : index
    %980 = vector.load %arg9[%c0_692, %c0_693, %c0_694, %c32_695] : memref<1x2x64x64xbf16, #tpu.memory_space<vmem>>, vector<1x1x64x32xbf16>
    %981 = vector.shape_cast %980 : vector<1x1x64x32xbf16> to vector<64x32xbf16>
    %982 = arith.truncf %979 : vector<16x64xf32> to vector<16x64xbf16>
    %cst_696 = arith.constant dense<0.000000e+00> : vector<16x32xf32>
    %983 = tpu.matmul %982, %981, %cst_696 {dimension_numbers = #tpu.dot_dimension_numbers<[1], [0], [0], [1], [0, 0, 1, 1], [], []>} : vector<16x64xbf16>, vector<64x32xbf16>, vector<16x32xf32> -> vector<16x32xf32>
    %c0_697 = arith.constant 0 : index
    %c0_698 = arith.constant 0 : index
    %c0_699 = arith.constant 0 : index
    %c672 = arith.constant 672 : index
    %984 = vector.load %arg10[%c0_697, %c0_698, %c0_699, %c672] : memref<1x2x1x896xf32, #tpu.memory_space<vmem>>, vector<1x1x1x32xf32>
    %985 = vector.shape_cast %984 : vector<1x1x1x32xf32> to vector<1x32xf32>
    %986 = vector.broadcast %985 : vector<1x32xf32> to vector<16x32xf32>
    %987 = arith.addf %983, %986 : vector<16x32xf32>
    %988 = arith.addf %969, %987 : vector<16x32xf32>
    %c0_700 = arith.constant 0 : index
    %c0_701 = arith.constant 0 : index
    %c0_702 = arith.constant 0 : index
    %c832 = arith.constant 832 : index
    %989 = vector.load %arg10[%c0_700, %c0_701, %c0_702, %c832] : memref<1x2x1x896xf32, #tpu.memory_space<vmem>>, vector<1x1x1x32xf32>
    %990 = vector.shape_cast %989 : vector<1x1x1x32xf32> to vector<1x32xf32>
    %c0_703 = arith.constant 0 : index
    %c0_704 = arith.constant 0 : index
    %c0_705 = arith.constant 0 : index
    %c864 = arith.constant 864 : index
    %991 = vector.load %arg10[%c0_703, %c0_704, %c0_705, %c864] : memref<1x2x1x896xf32, #tpu.memory_space<vmem>>, vector<1x1x1x32xf32>
    %992 = vector.shape_cast %991 : vector<1x1x1x32xf32> to vector<1x32xf32>
    %cst_706 = arith.constant dense<0.000000e+00> : vector<16xf32>
    %993 = vector.multi_reduction <add>, %988, %cst_706 [1] : vector<16x32xf32> to vector<16xf32>
    %994 = vector.shape_cast %993 : vector<16xf32> to vector<16x1xf32>
    %cst_707 = arith.constant 3.200000e+01 : f32
    %995 = vector.broadcast %cst_707 : f32 to vector<16x1xf32>
    %996 = arith.divf %994, %995 : vector<16x1xf32>
    %997 = vector.broadcast %996 : vector<16x1xf32> to vector<16x32xf32>
    %998 = arith.subf %988, %997 : vector<16x32xf32>
    %999 = arith.mulf %998, %998 : vector<16x32xf32>
    %cst_708 = arith.constant dense<0.000000e+00> : vector<16xf32>
    %1000 = vector.multi_reduction <add>, %999, %cst_708 [1] : vector<16x32xf32> to vector<16xf32>
    %1001 = vector.shape_cast %1000 : vector<16xf32> to vector<16x1xf32>
    %cst_709 = arith.constant 0.0322580636 : f32
    %1002 = vector.broadcast %cst_709 : f32 to vector<16x1xf32>
    %1003 = arith.mulf %1001, %1002 : vector<16x1xf32>
    %1004 = math.sqrt %1003 : vector<16x1xf32>
    %cst_710 = arith.constant 9.99999997E-7 : f32
    %1005 = vector.broadcast %cst_710 : f32 to vector<16x1xf32>
    %1006 = arith.addf %1004, %1005 : vector<16x1xf32>
    %1007 = vector.broadcast %1006 : vector<16x1xf32> to vector<16x32xf32>
    %1008 = arith.divf %998, %1007 : vector<16x32xf32>
    %1009 = vector.broadcast %990 : vector<1x32xf32> to vector<16x32xf32>
    %1010 = arith.mulf %1009, %1008 : vector<16x32xf32>
    %1011 = vector.broadcast %992 : vector<1x32xf32> to vector<16x32xf32>
    %1012 = arith.addf %1010, %1011 : vector<16x32xf32>
    %c0_711 = arith.constant 0 : index
    %c1_712 = arith.constant 1 : index
    %c0_713 = arith.constant 0 : index
    %c192_714 = arith.constant 192 : index
    %1013 = vector.load %arg8[%c0_711, %c1_712, %c0_713, %c192_714] : memref<1x2x32x512xbf16, #tpu.memory_space<vmem>>, vector<1x1x32x8xbf16>
    %1014 = vector.shape_cast %1013 : vector<1x1x32x8xbf16> to vector<32x8xbf16>
    %1015 = arith.truncf %1012 : vector<16x32xf32> to vector<16x32xbf16>
    %cst_715 = arith.constant dense<0.000000e+00> : vector<16x8xf32>
    %1016 = tpu.matmul %1015, %1014, %cst_715 {dimension_numbers = #tpu.dot_dimension_numbers<[1], [0], [0], [1], [0, 0, 1, 1], [], []>} : vector<16x32xbf16>, vector<32x8xbf16>, vector<16x8xf32> -> vector<16x8xf32>
    %c0_716 = arith.constant 0 : index
    %c1_717 = arith.constant 1 : index
    %c0_718 = arith.constant 0 : index
    %c352_719 = arith.constant 352 : index
    %1017 = vector.load %arg10[%c0_716, %c1_717, %c0_718, %c352_719] : memref<1x2x1x896xf32, #tpu.memory_space<vmem>>, vector<1x1x1x8xf32>
    %1018 = vector.shape_cast %1017 : vector<1x1x1x8xf32> to vector<1x8xf32>
    %1019 = vector.broadcast %1018 : vector<1x8xf32> to vector<16x8xf32>
    %1020 = arith.addf %1016, %1019 : vector<16x8xf32>
    %c0_720 = arith.constant 0 : index
    %c1_721 = arith.constant 1 : index
    %c0_722 = arith.constant 0 : index
    %c224_723 = arith.constant 224 : index
    %1021 = vector.load %arg8[%c0_720, %c1_721, %c0_722, %c224_723] : memref<1x2x32x512xbf16, #tpu.memory_space<vmem>>, vector<1x1x32x8xbf16>
    %1022 = vector.shape_cast %1021 : vector<1x1x32x8xbf16> to vector<32x8xbf16>
    %1023 = arith.truncf %1012 : vector<16x32xf32> to vector<16x32xbf16>
    %cst_724 = arith.constant dense<0.000000e+00> : vector<16x8xf32>
    %1024 = tpu.matmul %1023, %1022, %cst_724 {dimension_numbers = #tpu.dot_dimension_numbers<[1], [0], [0], [1], [0, 0, 1, 1], [], []>} : vector<16x32xbf16>, vector<32x8xbf16>, vector<16x8xf32> -> vector<16x8xf32>
    %c0_725 = arith.constant 0 : index
    %c1_726 = arith.constant 1 : index
    %c0_727 = arith.constant 0 : index
    %c384_728 = arith.constant 384 : index
    %1025 = vector.load %arg10[%c0_725, %c1_726, %c0_727, %c384_728] : memref<1x2x1x896xf32, #tpu.memory_space<vmem>>, vector<1x1x1x8xf32>
    %1026 = vector.shape_cast %1025 : vector<1x1x1x8xf32> to vector<1x8xf32>
    %1027 = vector.broadcast %1026 : vector<1x8xf32> to vector<16x8xf32>
    %1028 = arith.addf %1024, %1027 : vector<16x8xf32>
    %c0_729 = arith.constant 0 : index
    %c1_730 = arith.constant 1 : index
    %c0_731 = arith.constant 0 : index
    %c256_732 = arith.constant 256 : index
    %1029 = vector.load %arg8[%c0_729, %c1_730, %c0_731, %c256_732] : memref<1x2x32x512xbf16, #tpu.memory_space<vmem>>, vector<1x1x32x8xbf16>
    %1030 = vector.shape_cast %1029 : vector<1x1x32x8xbf16> to vector<32x8xbf16>
    %1031 = arith.truncf %1012 : vector<16x32xf32> to vector<16x32xbf16>
    %cst_733 = arith.constant dense<0.000000e+00> : vector<16x8xf32>
    %1032 = tpu.matmul %1031, %1030, %cst_733 {dimension_numbers = #tpu.dot_dimension_numbers<[1], [0], [0], [1], [0, 0, 1, 1], [], []>} : vector<16x32xbf16>, vector<32x8xbf16>, vector<16x8xf32> -> vector<16x8xf32>
    %c0_734 = arith.constant 0 : index
    %c1_735 = arith.constant 1 : index
    %c0_736 = arith.constant 0 : index
    %c416_737 = arith.constant 416 : index
    %1033 = vector.load %arg10[%c0_734, %c1_735, %c0_736, %c416_737] : memref<1x2x1x896xf32, #tpu.memory_space<vmem>>, vector<1x1x1x8xf32>
    %1034 = vector.shape_cast %1033 : vector<1x1x1x8xf32> to vector<1x8xf32>
    %1035 = vector.broadcast %1034 : vector<1x8xf32> to vector<16x8xf32>
    %1036 = arith.addf %1032, %1035 : vector<16x8xf32>
    %1037 = arith.truncf %1020 : vector<16x8xf32> to vector<16x8xbf16>
    %1038 = arith.truncf %1028 : vector<16x8xf32> to vector<16x8xbf16>
    "tpu.trace_start"() <{level = 10 : i32, message = "qd,kd->qk"}> : () -> ()
    %cst_738 = arith.constant dense<0.000000e+00> : vector<16x16xf32>
    %1039 = tpu.matmul %1037, %1038, %cst_738 {dimension_numbers = #tpu.dot_dimension_numbers<[1], [1], [0], [0], [0, 0, 1, 0], [], []>} : vector<16x8xbf16>, vector<16x8xbf16>, vector<16x16xf32> -> vector<16x16xf32>
    "tpu.trace_stop"() : () -> ()
    %cst_739 = arith.constant 0.353553385 : f32
    %1040 = vector.broadcast %cst_739 : f32 to vector<16x16xf32>
    %1041 = arith.mulf %1039, %1040 : vector<16x16xf32>
    %cst_740 = arith.constant dense<0xFF800000> : vector<16xf32>
    %1042 = vector.multi_reduction <maximumf>, %1041, %cst_740 [1] : vector<16x16xf32> to vector<16xf32>
    %1043 = vector.shape_cast %1042 : vector<16xf32> to vector<16x1xf32>
    %1044 = vector.broadcast %1043 : vector<16x1xf32> to vector<16x16xf32>
    %1045 = arith.subf %1041, %1044 : vector<16x16xf32>
    %1046 = math.exp %1045 : vector<16x16xf32>
    %cst_741 = arith.constant dense<0.000000e+00> : vector<16xf32>
    %1047 = vector.multi_reduction <add>, %1046, %cst_741 [1] : vector<16x16xf32> to vector<16xf32>
    %1048 = vector.shape_cast %1047 : vector<16xf32> to vector<16x1xf32>
    %1049 = vector.broadcast %1048 : vector<16x1xf32> to vector<16x16xf32>
    %1050 = arith.divf %1046, %1049 : vector<16x16xf32>
    %1051 = arith.truncf %1050 : vector<16x16xf32> to vector<16x16xbf16>
    %1052 = arith.truncf %1036 : vector<16x8xf32> to vector<16x8xbf16>
    %cst_742 = arith.constant dense<0.000000e+00> : vector<16x8xf32>
    %1053 = tpu.matmul %1051, %1052, %cst_742 {dimension_numbers = #tpu.dot_dimension_numbers<[1], [0], [0], [1], [0, 0, 1, 1], [], []>} : vector<16x16xbf16>, vector<16x8xbf16>, vector<16x8xf32> -> vector<16x8xf32>
    %c0_743 = arith.constant 0 : index
    %c1_744 = arith.constant 1 : index
    %c0_745 = arith.constant 0 : index
    %c288_746 = arith.constant 288 : index
    %1054 = vector.load %arg8[%c0_743, %c1_744, %c0_745, %c288_746] : memref<1x2x32x512xbf16, #tpu.memory_space<vmem>>, vector<1x1x8x32xbf16>
    %1055 = vector.shape_cast %1054 : vector<1x1x8x32xbf16> to vector<8x32xbf16>
    %1056 = arith.truncf %1053 : vector<16x8xf32> to vector<16x8xbf16>
    %cst_747 = arith.constant dense<0.000000e+00> : vector<16x32xf32>
    %1057 = tpu.matmul %1056, %1055, %cst_747 {dimension_numbers = #tpu.dot_dimension_numbers<[1], [0], [0], [1], [0, 0, 1, 1], [], []>} : vector<16x8xbf16>, vector<8x32xbf16>, vector<16x32xf32> -> vector<16x32xf32>
    %c0_748 = arith.constant 0 : index
    %c1_749 = arith.constant 1 : index
    %c0_750 = arith.constant 0 : index
    %c200_751 = arith.constant 200 : index
    %1058 = vector.load %arg8[%c0_748, %c1_749, %c0_750, %c200_751] : memref<1x2x32x512xbf16, #tpu.memory_space<vmem>>, vector<1x1x32x8xbf16>
    %1059 = vector.shape_cast %1058 : vector<1x1x32x8xbf16> to vector<32x8xbf16>
    %1060 = arith.truncf %1012 : vector<16x32xf32> to vector<16x32xbf16>
    %cst_752 = arith.constant dense<0.000000e+00> : vector<16x8xf32>
    %1061 = tpu.matmul %1060, %1059, %cst_752 {dimension_numbers = #tpu.dot_dimension_numbers<[1], [0], [0], [1], [0, 0, 1, 1], [], []>} : vector<16x32xbf16>, vector<32x8xbf16>, vector<16x8xf32> -> vector<16x8xf32>
    %c0_753 = arith.constant 0 : index
    %c1_754 = arith.constant 1 : index
    %c0_755 = arith.constant 0 : index
    %c360_756 = arith.constant 360 : index
    %1062 = vector.load %arg10[%c0_753, %c1_754, %c0_755, %c360_756] : memref<1x2x1x896xf32, #tpu.memory_space<vmem>>, vector<1x1x1x8xf32>
    %1063 = vector.shape_cast %1062 : vector<1x1x1x8xf32> to vector<1x8xf32>
    %1064 = vector.broadcast %1063 : vector<1x8xf32> to vector<16x8xf32>
    %1065 = arith.addf %1061, %1064 : vector<16x8xf32>
    %c0_757 = arith.constant 0 : index
    %c1_758 = arith.constant 1 : index
    %c0_759 = arith.constant 0 : index
    %c232_760 = arith.constant 232 : index
    %1066 = vector.load %arg8[%c0_757, %c1_758, %c0_759, %c232_760] : memref<1x2x32x512xbf16, #tpu.memory_space<vmem>>, vector<1x1x32x8xbf16>
    %1067 = vector.shape_cast %1066 : vector<1x1x32x8xbf16> to vector<32x8xbf16>
    %1068 = arith.truncf %1012 : vector<16x32xf32> to vector<16x32xbf16>
    %cst_761 = arith.constant dense<0.000000e+00> : vector<16x8xf32>
    %1069 = tpu.matmul %1068, %1067, %cst_761 {dimension_numbers = #tpu.dot_dimension_numbers<[1], [0], [0], [1], [0, 0, 1, 1], [], []>} : vector<16x32xbf16>, vector<32x8xbf16>, vector<16x8xf32> -> vector<16x8xf32>
    %c0_762 = arith.constant 0 : index
    %c1_763 = arith.constant 1 : index
    %c0_764 = arith.constant 0 : index
    %c392_765 = arith.constant 392 : index
    %1070 = vector.load %arg10[%c0_762, %c1_763, %c0_764, %c392_765] : memref<1x2x1x896xf32, #tpu.memory_space<vmem>>, vector<1x1x1x8xf32>
    %1071 = vector.shape_cast %1070 : vector<1x1x1x8xf32> to vector<1x8xf32>
    %1072 = vector.broadcast %1071 : vector<1x8xf32> to vector<16x8xf32>
    %1073 = arith.addf %1069, %1072 : vector<16x8xf32>
    %c0_766 = arith.constant 0 : index
    %c1_767 = arith.constant 1 : index
    %c0_768 = arith.constant 0 : index
    %c264_769 = arith.constant 264 : index
    %1074 = vector.load %arg8[%c0_766, %c1_767, %c0_768, %c264_769] : memref<1x2x32x512xbf16, #tpu.memory_space<vmem>>, vector<1x1x32x8xbf16>
    %1075 = vector.shape_cast %1074 : vector<1x1x32x8xbf16> to vector<32x8xbf16>
    %1076 = arith.truncf %1012 : vector<16x32xf32> to vector<16x32xbf16>
    %cst_770 = arith.constant dense<0.000000e+00> : vector<16x8xf32>
    %1077 = tpu.matmul %1076, %1075, %cst_770 {dimension_numbers = #tpu.dot_dimension_numbers<[1], [0], [0], [1], [0, 0, 1, 1], [], []>} : vector<16x32xbf16>, vector<32x8xbf16>, vector<16x8xf32> -> vector<16x8xf32>
    %c0_771 = arith.constant 0 : index
    %c1_772 = arith.constant 1 : index
    %c0_773 = arith.constant 0 : index
    %c424_774 = arith.constant 424 : index
    %1078 = vector.load %arg10[%c0_771, %c1_772, %c0_773, %c424_774] : memref<1x2x1x896xf32, #tpu.memory_space<vmem>>, vector<1x1x1x8xf32>
    %1079 = vector.shape_cast %1078 : vector<1x1x1x8xf32> to vector<1x8xf32>
    %1080 = vector.broadcast %1079 : vector<1x8xf32> to vector<16x8xf32>
    %1081 = arith.addf %1077, %1080 : vector<16x8xf32>
    %1082 = arith.truncf %1065 : vector<16x8xf32> to vector<16x8xbf16>
    %1083 = arith.truncf %1073 : vector<16x8xf32> to vector<16x8xbf16>
    "tpu.trace_start"() <{level = 10 : i32, message = "qd,kd->qk"}> : () -> ()
    %cst_775 = arith.constant dense<0.000000e+00> : vector<16x16xf32>
    %1084 = tpu.matmul %1082, %1083, %cst_775 {dimension_numbers = #tpu.dot_dimension_numbers<[1], [1], [0], [0], [0, 0, 1, 0], [], []>} : vector<16x8xbf16>, vector<16x8xbf16>, vector<16x16xf32> -> vector<16x16xf32>
    "tpu.trace_stop"() : () -> ()
    %cst_776 = arith.constant 0.353553385 : f32
    %1085 = vector.broadcast %cst_776 : f32 to vector<16x16xf32>
    %1086 = arith.mulf %1084, %1085 : vector<16x16xf32>
    %cst_777 = arith.constant dense<0xFF800000> : vector<16xf32>
    %1087 = vector.multi_reduction <maximumf>, %1086, %cst_777 [1] : vector<16x16xf32> to vector<16xf32>
    %1088 = vector.shape_cast %1087 : vector<16xf32> to vector<16x1xf32>
    %1089 = vector.broadcast %1088 : vector<16x1xf32> to vector<16x16xf32>
    %1090 = arith.subf %1086, %1089 : vector<16x16xf32>
    %1091 = math.exp %1090 : vector<16x16xf32>
    %cst_778 = arith.constant dense<0.000000e+00> : vector<16xf32>
    %1092 = vector.multi_reduction <add>, %1091, %cst_778 [1] : vector<16x16xf32> to vector<16xf32>
    %1093 = vector.shape_cast %1092 : vector<16xf32> to vector<16x1xf32>
    %1094 = vector.broadcast %1093 : vector<16x1xf32> to vector<16x16xf32>
    %1095 = arith.divf %1091, %1094 : vector<16x16xf32>
    %1096 = arith.truncf %1095 : vector<16x16xf32> to vector<16x16xbf16>
    %1097 = arith.truncf %1081 : vector<16x8xf32> to vector<16x8xbf16>
    %cst_779 = arith.constant dense<0.000000e+00> : vector<16x8xf32>
    %1098 = tpu.matmul %1096, %1097, %cst_779 {dimension_numbers = #tpu.dot_dimension_numbers<[1], [0], [0], [1], [0, 0, 1, 1], [], []>} : vector<16x16xbf16>, vector<16x8xbf16>, vector<16x8xf32> -> vector<16x8xf32>
    %c0_780 = arith.constant 0 : index
    %c1_781 = arith.constant 1 : index
    %c8_782 = arith.constant 8 : index
    %c288_783 = arith.constant 288 : index
    %1099 = vector.load %arg8[%c0_780, %c1_781, %c8_782, %c288_783] : memref<1x2x32x512xbf16, #tpu.memory_space<vmem>>, vector<1x1x8x32xbf16>
    %1100 = vector.shape_cast %1099 : vector<1x1x8x32xbf16> to vector<8x32xbf16>
    %1101 = arith.truncf %1098 : vector<16x8xf32> to vector<16x8xbf16>
    %cst_784 = arith.constant dense<0.000000e+00> : vector<16x32xf32>
    %1102 = tpu.matmul %1101, %1100, %cst_784 {dimension_numbers = #tpu.dot_dimension_numbers<[1], [0], [0], [1], [0, 0, 1, 1], [], []>} : vector<16x8xbf16>, vector<8x32xbf16>, vector<16x32xf32> -> vector<16x32xf32>
    %1103 = arith.addf %1057, %1102 : vector<16x32xf32>
    %c0_785 = arith.constant 0 : index
    %c1_786 = arith.constant 1 : index
    %c0_787 = arith.constant 0 : index
    %c208_788 = arith.constant 208 : index
    %1104 = vector.load %arg8[%c0_785, %c1_786, %c0_787, %c208_788] : memref<1x2x32x512xbf16, #tpu.memory_space<vmem>>, vector<1x1x32x8xbf16>
    %1105 = vector.shape_cast %1104 : vector<1x1x32x8xbf16> to vector<32x8xbf16>
    %1106 = arith.truncf %1012 : vector<16x32xf32> to vector<16x32xbf16>
    %cst_789 = arith.constant dense<0.000000e+00> : vector<16x8xf32>
    %1107 = tpu.matmul %1106, %1105, %cst_789 {dimension_numbers = #tpu.dot_dimension_numbers<[1], [0], [0], [1], [0, 0, 1, 1], [], []>} : vector<16x32xbf16>, vector<32x8xbf16>, vector<16x8xf32> -> vector<16x8xf32>
    %c0_790 = arith.constant 0 : index
    %c1_791 = arith.constant 1 : index
    %c0_792 = arith.constant 0 : index
    %c368_793 = arith.constant 368 : index
    %1108 = vector.load %arg10[%c0_790, %c1_791, %c0_792, %c368_793] : memref<1x2x1x896xf32, #tpu.memory_space<vmem>>, vector<1x1x1x8xf32>
    %1109 = vector.shape_cast %1108 : vector<1x1x1x8xf32> to vector<1x8xf32>
    %1110 = vector.broadcast %1109 : vector<1x8xf32> to vector<16x8xf32>
    %1111 = arith.addf %1107, %1110 : vector<16x8xf32>
    %c0_794 = arith.constant 0 : index
    %c1_795 = arith.constant 1 : index
    %c0_796 = arith.constant 0 : index
    %c240_797 = arith.constant 240 : index
    %1112 = vector.load %arg8[%c0_794, %c1_795, %c0_796, %c240_797] : memref<1x2x32x512xbf16, #tpu.memory_space<vmem>>, vector<1x1x32x8xbf16>
    %1113 = vector.shape_cast %1112 : vector<1x1x32x8xbf16> to vector<32x8xbf16>
    %1114 = arith.truncf %1012 : vector<16x32xf32> to vector<16x32xbf16>
    %cst_798 = arith.constant dense<0.000000e+00> : vector<16x8xf32>
    %1115 = tpu.matmul %1114, %1113, %cst_798 {dimension_numbers = #tpu.dot_dimension_numbers<[1], [0], [0], [1], [0, 0, 1, 1], [], []>} : vector<16x32xbf16>, vector<32x8xbf16>, vector<16x8xf32> -> vector<16x8xf32>
    %c0_799 = arith.constant 0 : index
    %c1_800 = arith.constant 1 : index
    %c0_801 = arith.constant 0 : index
    %c400_802 = arith.constant 400 : index
    %1116 = vector.load %arg10[%c0_799, %c1_800, %c0_801, %c400_802] : memref<1x2x1x896xf32, #tpu.memory_space<vmem>>, vector<1x1x1x8xf32>
    %1117 = vector.shape_cast %1116 : vector<1x1x1x8xf32> to vector<1x8xf32>
    %1118 = vector.broadcast %1117 : vector<1x8xf32> to vector<16x8xf32>
    %1119 = arith.addf %1115, %1118 : vector<16x8xf32>
    %c0_803 = arith.constant 0 : index
    %c1_804 = arith.constant 1 : index
    %c0_805 = arith.constant 0 : index
    %c272_806 = arith.constant 272 : index
    %1120 = vector.load %arg8[%c0_803, %c1_804, %c0_805, %c272_806] : memref<1x2x32x512xbf16, #tpu.memory_space<vmem>>, vector<1x1x32x8xbf16>
    %1121 = vector.shape_cast %1120 : vector<1x1x32x8xbf16> to vector<32x8xbf16>
    %1122 = arith.truncf %1012 : vector<16x32xf32> to vector<16x32xbf16>
    %cst_807 = arith.constant dense<0.000000e+00> : vector<16x8xf32>
    %1123 = tpu.matmul %1122, %1121, %cst_807 {dimension_numbers = #tpu.dot_dimension_numbers<[1], [0], [0], [1], [0, 0, 1, 1], [], []>} : vector<16x32xbf16>, vector<32x8xbf16>, vector<16x8xf32> -> vector<16x8xf32>
    %c0_808 = arith.constant 0 : index
    %c1_809 = arith.constant 1 : index
    %c0_810 = arith.constant 0 : index
    %c432_811 = arith.constant 432 : index
    %1124 = vector.load %arg10[%c0_808, %c1_809, %c0_810, %c432_811] : memref<1x2x1x896xf32, #tpu.memory_space<vmem>>, vector<1x1x1x8xf32>
    %1125 = vector.shape_cast %1124 : vector<1x1x1x8xf32> to vector<1x8xf32>
    %1126 = vector.broadcast %1125 : vector<1x8xf32> to vector<16x8xf32>
    %1127 = arith.addf %1123, %1126 : vector<16x8xf32>
    %1128 = arith.truncf %1111 : vector<16x8xf32> to vector<16x8xbf16>
    %1129 = arith.truncf %1119 : vector<16x8xf32> to vector<16x8xbf16>
    "tpu.trace_start"() <{level = 10 : i32, message = "qd,kd->qk"}> : () -> ()
    %cst_812 = arith.constant dense<0.000000e+00> : vector<16x16xf32>
    %1130 = tpu.matmul %1128, %1129, %cst_812 {dimension_numbers = #tpu.dot_dimension_numbers<[1], [1], [0], [0], [0, 0, 1, 0], [], []>} : vector<16x8xbf16>, vector<16x8xbf16>, vector<16x16xf32> -> vector<16x16xf32>
    "tpu.trace_stop"() : () -> ()
    %cst_813 = arith.constant 0.353553385 : f32
    %1131 = vector.broadcast %cst_813 : f32 to vector<16x16xf32>
    %1132 = arith.mulf %1130, %1131 : vector<16x16xf32>
    %cst_814 = arith.constant dense<0xFF800000> : vector<16xf32>
    %1133 = vector.multi_reduction <maximumf>, %1132, %cst_814 [1] : vector<16x16xf32> to vector<16xf32>
    %1134 = vector.shape_cast %1133 : vector<16xf32> to vector<16x1xf32>
    %1135 = vector.broadcast %1134 : vector<16x1xf32> to vector<16x16xf32>
    %1136 = arith.subf %1132, %1135 : vector<16x16xf32>
    %1137 = math.exp %1136 : vector<16x16xf32>
    %cst_815 = arith.constant dense<0.000000e+00> : vector<16xf32>
    %1138 = vector.multi_reduction <add>, %1137, %cst_815 [1] : vector<16x16xf32> to vector<16xf32>
    %1139 = vector.shape_cast %1138 : vector<16xf32> to vector<16x1xf32>
    %1140 = vector.broadcast %1139 : vector<16x1xf32> to vector<16x16xf32>
    %1141 = arith.divf %1137, %1140 : vector<16x16xf32>
    %1142 = arith.truncf %1141 : vector<16x16xf32> to vector<16x16xbf16>
    %1143 = arith.truncf %1127 : vector<16x8xf32> to vector<16x8xbf16>
    %cst_816 = arith.constant dense<0.000000e+00> : vector<16x8xf32>
    %1144 = tpu.matmul %1142, %1143, %cst_816 {dimension_numbers = #tpu.dot_dimension_numbers<[1], [0], [0], [1], [0, 0, 1, 1], [], []>} : vector<16x16xbf16>, vector<16x8xbf16>, vector<16x8xf32> -> vector<16x8xf32>
    %c0_817 = arith.constant 0 : index
    %c1_818 = arith.constant 1 : index
    %c16_819 = arith.constant 16 : index
    %c288_820 = arith.constant 288 : index
    %1145 = vector.load %arg8[%c0_817, %c1_818, %c16_819, %c288_820] : memref<1x2x32x512xbf16, #tpu.memory_space<vmem>>, vector<1x1x8x32xbf16>
    %1146 = vector.shape_cast %1145 : vector<1x1x8x32xbf16> to vector<8x32xbf16>
    %1147 = arith.truncf %1144 : vector<16x8xf32> to vector<16x8xbf16>
    %cst_821 = arith.constant dense<0.000000e+00> : vector<16x32xf32>
    %1148 = tpu.matmul %1147, %1146, %cst_821 {dimension_numbers = #tpu.dot_dimension_numbers<[1], [0], [0], [1], [0, 0, 1, 1], [], []>} : vector<16x8xbf16>, vector<8x32xbf16>, vector<16x32xf32> -> vector<16x32xf32>
    %1149 = arith.addf %1103, %1148 : vector<16x32xf32>
    %c0_822 = arith.constant 0 : index
    %c1_823 = arith.constant 1 : index
    %c0_824 = arith.constant 0 : index
    %c216_825 = arith.constant 216 : index
    %1150 = vector.load %arg8[%c0_822, %c1_823, %c0_824, %c216_825] : memref<1x2x32x512xbf16, #tpu.memory_space<vmem>>, vector<1x1x32x8xbf16>
    %1151 = vector.shape_cast %1150 : vector<1x1x32x8xbf16> to vector<32x8xbf16>
    %1152 = arith.truncf %1012 : vector<16x32xf32> to vector<16x32xbf16>
    %cst_826 = arith.constant dense<0.000000e+00> : vector<16x8xf32>
    %1153 = tpu.matmul %1152, %1151, %cst_826 {dimension_numbers = #tpu.dot_dimension_numbers<[1], [0], [0], [1], [0, 0, 1, 1], [], []>} : vector<16x32xbf16>, vector<32x8xbf16>, vector<16x8xf32> -> vector<16x8xf32>
    %c0_827 = arith.constant 0 : index
    %c1_828 = arith.constant 1 : index
    %c0_829 = arith.constant 0 : index
    %c376_830 = arith.constant 376 : index
    %1154 = vector.load %arg10[%c0_827, %c1_828, %c0_829, %c376_830] : memref<1x2x1x896xf32, #tpu.memory_space<vmem>>, vector<1x1x1x8xf32>
    %1155 = vector.shape_cast %1154 : vector<1x1x1x8xf32> to vector<1x8xf32>
    %1156 = vector.broadcast %1155 : vector<1x8xf32> to vector<16x8xf32>
    %1157 = arith.addf %1153, %1156 : vector<16x8xf32>
    %c0_831 = arith.constant 0 : index
    %c1_832 = arith.constant 1 : index
    %c0_833 = arith.constant 0 : index
    %c248_834 = arith.constant 248 : index
    %1158 = vector.load %arg8[%c0_831, %c1_832, %c0_833, %c248_834] : memref<1x2x32x512xbf16, #tpu.memory_space<vmem>>, vector<1x1x32x8xbf16>
    %1159 = vector.shape_cast %1158 : vector<1x1x32x8xbf16> to vector<32x8xbf16>
    %1160 = arith.truncf %1012 : vector<16x32xf32> to vector<16x32xbf16>
    %cst_835 = arith.constant dense<0.000000e+00> : vector<16x8xf32>
    %1161 = tpu.matmul %1160, %1159, %cst_835 {dimension_numbers = #tpu.dot_dimension_numbers<[1], [0], [0], [1], [0, 0, 1, 1], [], []>} : vector<16x32xbf16>, vector<32x8xbf16>, vector<16x8xf32> -> vector<16x8xf32>
    %c0_836 = arith.constant 0 : index
    %c1_837 = arith.constant 1 : index
    %c0_838 = arith.constant 0 : index
    %c408_839 = arith.constant 408 : index
    %1162 = vector.load %arg10[%c0_836, %c1_837, %c0_838, %c408_839] : memref<1x2x1x896xf32, #tpu.memory_space<vmem>>, vector<1x1x1x8xf32>
    %1163 = vector.shape_cast %1162 : vector<1x1x1x8xf32> to vector<1x8xf32>
    %1164 = vector.broadcast %1163 : vector<1x8xf32> to vector<16x8xf32>
    %1165 = arith.addf %1161, %1164 : vector<16x8xf32>
    %c0_840 = arith.constant 0 : index
    %c1_841 = arith.constant 1 : index
    %c0_842 = arith.constant 0 : index
    %c280_843 = arith.constant 280 : index
    %1166 = vector.load %arg8[%c0_840, %c1_841, %c0_842, %c280_843] : memref<1x2x32x512xbf16, #tpu.memory_space<vmem>>, vector<1x1x32x8xbf16>
    %1167 = vector.shape_cast %1166 : vector<1x1x32x8xbf16> to vector<32x8xbf16>
    %1168 = arith.truncf %1012 : vector<16x32xf32> to vector<16x32xbf16>
    %cst_844 = arith.constant dense<0.000000e+00> : vector<16x8xf32>
    %1169 = tpu.matmul %1168, %1167, %cst_844 {dimension_numbers = #tpu.dot_dimension_numbers<[1], [0], [0], [1], [0, 0, 1, 1], [], []>} : vector<16x32xbf16>, vector<32x8xbf16>, vector<16x8xf32> -> vector<16x8xf32>
    %c0_845 = arith.constant 0 : index
    %c1_846 = arith.constant 1 : index
    %c0_847 = arith.constant 0 : index
    %c440_848 = arith.constant 440 : index
    %1170 = vector.load %arg10[%c0_845, %c1_846, %c0_847, %c440_848] : memref<1x2x1x896xf32, #tpu.memory_space<vmem>>, vector<1x1x1x8xf32>
    %1171 = vector.shape_cast %1170 : vector<1x1x1x8xf32> to vector<1x8xf32>
    %1172 = vector.broadcast %1171 : vector<1x8xf32> to vector<16x8xf32>
    %1173 = arith.addf %1169, %1172 : vector<16x8xf32>
    %1174 = arith.truncf %1157 : vector<16x8xf32> to vector<16x8xbf16>
    %1175 = arith.truncf %1165 : vector<16x8xf32> to vector<16x8xbf16>
    "tpu.trace_start"() <{level = 10 : i32, message = "qd,kd->qk"}> : () -> ()
    %cst_849 = arith.constant dense<0.000000e+00> : vector<16x16xf32>
    %1176 = tpu.matmul %1174, %1175, %cst_849 {dimension_numbers = #tpu.dot_dimension_numbers<[1], [1], [0], [0], [0, 0, 1, 0], [], []>} : vector<16x8xbf16>, vector<16x8xbf16>, vector<16x16xf32> -> vector<16x16xf32>
    "tpu.trace_stop"() : () -> ()
    %cst_850 = arith.constant 0.353553385 : f32
    %1177 = vector.broadcast %cst_850 : f32 to vector<16x16xf32>
    %1178 = arith.mulf %1176, %1177 : vector<16x16xf32>
    %cst_851 = arith.constant dense<0xFF800000> : vector<16xf32>
    %1179 = vector.multi_reduction <maximumf>, %1178, %cst_851 [1] : vector<16x16xf32> to vector<16xf32>
    %1180 = vector.shape_cast %1179 : vector<16xf32> to vector<16x1xf32>
    %1181 = vector.broadcast %1180 : vector<16x1xf32> to vector<16x16xf32>
    %1182 = arith.subf %1178, %1181 : vector<16x16xf32>
    %1183 = math.exp %1182 : vector<16x16xf32>
    %cst_852 = arith.constant dense<0.000000e+00> : vector<16xf32>
    %1184 = vector.multi_reduction <add>, %1183, %cst_852 [1] : vector<16x16xf32> to vector<16xf32>
    %1185 = vector.shape_cast %1184 : vector<16xf32> to vector<16x1xf32>
    %1186 = vector.broadcast %1185 : vector<16x1xf32> to vector<16x16xf32>
    %1187 = arith.divf %1183, %1186 : vector<16x16xf32>
    %1188 = arith.truncf %1187 : vector<16x16xf32> to vector<16x16xbf16>
    %1189 = arith.truncf %1173 : vector<16x8xf32> to vector<16x8xbf16>
    %cst_853 = arith.constant dense<0.000000e+00> : vector<16x8xf32>
    %1190 = tpu.matmul %1188, %1189, %cst_853 {dimension_numbers = #tpu.dot_dimension_numbers<[1], [0], [0], [1], [0, 0, 1, 1], [], []>} : vector<16x16xbf16>, vector<16x8xbf16>, vector<16x8xf32> -> vector<16x8xf32>
    %c0_854 = arith.constant 0 : index
    %c1_855 = arith.constant 1 : index
    %c24_856 = arith.constant 24 : index
    %c288_857 = arith.constant 288 : index
    %1191 = vector.load %arg8[%c0_854, %c1_855, %c24_856, %c288_857] : memref<1x2x32x512xbf16, #tpu.memory_space<vmem>>, vector<1x1x8x32xbf16>
    %1192 = vector.shape_cast %1191 : vector<1x1x8x32xbf16> to vector<8x32xbf16>
    %1193 = arith.truncf %1190 : vector<16x8xf32> to vector<16x8xbf16>
    %cst_858 = arith.constant dense<0.000000e+00> : vector<16x32xf32>
    %1194 = tpu.matmul %1193, %1192, %cst_858 {dimension_numbers = #tpu.dot_dimension_numbers<[1], [0], [0], [1], [0, 0, 1, 1], [], []>} : vector<16x8xbf16>, vector<8x32xbf16>, vector<16x32xf32> -> vector<16x32xf32>
    %1195 = arith.addf %1149, %1194 : vector<16x32xf32>
    %c0_859 = arith.constant 0 : index
    %c1_860 = arith.constant 1 : index
    %c0_861 = arith.constant 0 : index
    %c448_862 = arith.constant 448 : index
    %1196 = vector.load %arg10[%c0_859, %c1_860, %c0_861, %c448_862] : memref<1x2x1x896xf32, #tpu.memory_space<vmem>>, vector<1x1x1x32xf32>
    %1197 = vector.shape_cast %1196 : vector<1x1x1x32xf32> to vector<1x32xf32>
    %1198 = vector.broadcast %1197 : vector<1x32xf32> to vector<16x32xf32>
    %1199 = arith.addf %1195, %1198 : vector<16x32xf32>
    %1200 = arith.addf %1012, %1199 : vector<16x32xf32>
    %c0_863 = arith.constant 0 : index
    %c1_864 = arith.constant 1 : index
    %c0_865 = arith.constant 0 : index
    %c704_866 = arith.constant 704 : index
    %1201 = vector.load %arg10[%c0_863, %c1_864, %c0_865, %c704_866] : memref<1x2x1x896xf32, #tpu.memory_space<vmem>>, vector<1x1x1x32xf32>
    %1202 = vector.shape_cast %1201 : vector<1x1x1x32xf32> to vector<1x32xf32>
    %c0_867 = arith.constant 0 : index
    %c1_868 = arith.constant 1 : index
    %c0_869 = arith.constant 0 : index
    %c736_870 = arith.constant 736 : index
    %1203 = vector.load %arg10[%c0_867, %c1_868, %c0_869, %c736_870] : memref<1x2x1x896xf32, #tpu.memory_space<vmem>>, vector<1x1x1x32xf32>
    %1204 = vector.shape_cast %1203 : vector<1x1x1x32xf32> to vector<1x32xf32>
    %cst_871 = arith.constant dense<0.000000e+00> : vector<16xf32>
    %1205 = vector.multi_reduction <add>, %1200, %cst_871 [1] : vector<16x32xf32> to vector<16xf32>
    %1206 = vector.shape_cast %1205 : vector<16xf32> to vector<16x1xf32>
    %cst_872 = arith.constant 3.200000e+01 : f32
    %1207 = vector.broadcast %cst_872 : f32 to vector<16x1xf32>
    %1208 = arith.divf %1206, %1207 : vector<16x1xf32>
    %1209 = vector.broadcast %1208 : vector<16x1xf32> to vector<16x32xf32>
    %1210 = arith.subf %1200, %1209 : vector<16x32xf32>
    %1211 = arith.mulf %1210, %1210 : vector<16x32xf32>
    %cst_873 = arith.constant dense<0.000000e+00> : vector<16xf32>
    %1212 = vector.multi_reduction <add>, %1211, %cst_873 [1] : vector<16x32xf32> to vector<16xf32>
    %1213 = vector.shape_cast %1212 : vector<16xf32> to vector<16x1xf32>
    %cst_874 = arith.constant 0.0322580636 : f32
    %1214 = vector.broadcast %cst_874 : f32 to vector<16x1xf32>
    %1215 = arith.mulf %1213, %1214 : vector<16x1xf32>
    %1216 = math.sqrt %1215 : vector<16x1xf32>
    %cst_875 = arith.constant 9.99999997E-7 : f32
    %1217 = vector.broadcast %cst_875 : f32 to vector<16x1xf32>
    %1218 = arith.addf %1216, %1217 : vector<16x1xf32>
    %1219 = vector.broadcast %1218 : vector<16x1xf32> to vector<16x32xf32>
    %1220 = arith.divf %1210, %1219 : vector<16x32xf32>
    %1221 = vector.broadcast %1202 : vector<1x32xf32> to vector<16x32xf32>
    %1222 = arith.mulf %1221, %1220 : vector<16x32xf32>
    %1223 = vector.broadcast %1204 : vector<1x32xf32> to vector<16x32xf32>
    %1224 = arith.addf %1222, %1223 : vector<16x32xf32>
    %c0_876 = arith.constant 0 : index
    %c1_877 = arith.constant 1 : index
    %c0_878 = arith.constant 0 : index
    %c320_879 = arith.constant 320 : index
    %1225 = vector.load %arg8[%c0_876, %c1_877, %c0_878, %c320_879] : memref<1x2x32x512xbf16, #tpu.memory_space<vmem>>, vector<1x1x32x8xbf16>
    %1226 = vector.shape_cast %1225 : vector<1x1x32x8xbf16> to vector<32x8xbf16>
    %1227 = arith.truncf %1224 : vector<16x32xf32> to vector<16x32xbf16>
    %cst_880 = arith.constant dense<0.000000e+00> : vector<16x8xf32>
    %1228 = tpu.matmul %1227, %1226, %cst_880 {dimension_numbers = #tpu.dot_dimension_numbers<[1], [0], [0], [1], [0, 0, 1, 1], [], []>} : vector<16x32xbf16>, vector<32x8xbf16>, vector<16x8xf32> -> vector<16x8xf32>
    %c0_881 = arith.constant 0 : index
    %c1_882 = arith.constant 1 : index
    %c0_883 = arith.constant 0 : index
    %c480_884 = arith.constant 480 : index
    %1229 = vector.load %arg10[%c0_881, %c1_882, %c0_883, %c480_884] : memref<1x2x1x896xf32, #tpu.memory_space<vmem>>, vector<1x1x1x8xf32>
    %1230 = vector.shape_cast %1229 : vector<1x1x1x8xf32> to vector<1x8xf32>
    %1231 = vector.broadcast %1230 : vector<1x8xf32> to vector<16x8xf32>
    %1232 = arith.addf %1228, %1231 : vector<16x8xf32>
    %c0_885 = arith.constant 0 : index
    %c1_886 = arith.constant 1 : index
    %c0_887 = arith.constant 0 : index
    %c352_888 = arith.constant 352 : index
    %1233 = vector.load %arg8[%c0_885, %c1_886, %c0_887, %c352_888] : memref<1x2x32x512xbf16, #tpu.memory_space<vmem>>, vector<1x1x32x8xbf16>
    %1234 = vector.shape_cast %1233 : vector<1x1x32x8xbf16> to vector<32x8xbf16>
    %1235 = arith.truncf %541 : vector<8x32xf32> to vector<8x32xbf16>
    %cst_889 = arith.constant dense<0.000000e+00> : vector<8x8xf32>
    %1236 = tpu.matmul %1235, %1234, %cst_889 {dimension_numbers = #tpu.dot_dimension_numbers<[1], [0], [0], [1], [0, 0, 1, 1], [], []>} : vector<8x32xbf16>, vector<32x8xbf16>, vector<8x8xf32> -> vector<8x8xf32>
    %c0_890 = arith.constant 0 : index
    %c1_891 = arith.constant 1 : index
    %c0_892 = arith.constant 0 : index
    %c512_893 = arith.constant 512 : index
    %1237 = vector.load %arg10[%c0_890, %c1_891, %c0_892, %c512_893] : memref<1x2x1x896xf32, #tpu.memory_space<vmem>>, vector<1x1x1x8xf32>
    %1238 = vector.shape_cast %1237 : vector<1x1x1x8xf32> to vector<1x8xf32>
    %1239 = vector.broadcast %1238 : vector<1x8xf32> to vector<8x8xf32>
    %1240 = arith.addf %1236, %1239 : vector<8x8xf32>
    %c0_894 = arith.constant 0 : index
    %c1_895 = arith.constant 1 : index
    %c0_896 = arith.constant 0 : index
    %c384_897 = arith.constant 384 : index
    %1241 = vector.load %arg8[%c0_894, %c1_895, %c0_896, %c384_897] : memref<1x2x32x512xbf16, #tpu.memory_space<vmem>>, vector<1x1x32x8xbf16>
    %1242 = vector.shape_cast %1241 : vector<1x1x32x8xbf16> to vector<32x8xbf16>
    %1243 = arith.truncf %541 : vector<8x32xf32> to vector<8x32xbf16>
    %cst_898 = arith.constant dense<0.000000e+00> : vector<8x8xf32>
    %1244 = tpu.matmul %1243, %1242, %cst_898 {dimension_numbers = #tpu.dot_dimension_numbers<[1], [0], [0], [1], [0, 0, 1, 1], [], []>} : vector<8x32xbf16>, vector<32x8xbf16>, vector<8x8xf32> -> vector<8x8xf32>
    %c0_899 = arith.constant 0 : index
    %c1_900 = arith.constant 1 : index
    %c0_901 = arith.constant 0 : index
    %c544_902 = arith.constant 544 : index
    %1245 = vector.load %arg10[%c0_899, %c1_900, %c0_901, %c544_902] : memref<1x2x1x896xf32, #tpu.memory_space<vmem>>, vector<1x1x1x8xf32>
    %1246 = vector.shape_cast %1245 : vector<1x1x1x8xf32> to vector<1x8xf32>
    %1247 = vector.broadcast %1246 : vector<1x8xf32> to vector<8x8xf32>
    %1248 = arith.addf %1244, %1247 : vector<8x8xf32>
    %1249 = arith.truncf %1232 : vector<16x8xf32> to vector<16x8xbf16>
    %1250 = arith.truncf %1240 : vector<8x8xf32> to vector<8x8xbf16>
    "tpu.trace_start"() <{level = 10 : i32, message = "qd,kd->qk"}> : () -> ()
    %cst_903 = arith.constant dense<0.000000e+00> : vector<16x8xf32>
    %1251 = tpu.matmul %1249, %1250, %cst_903 {dimension_numbers = #tpu.dot_dimension_numbers<[1], [1], [0], [0], [0, 0, 1, 0], [], []>} : vector<16x8xbf16>, vector<8x8xbf16>, vector<16x8xf32> -> vector<16x8xf32>
    "tpu.trace_stop"() : () -> ()
    %cst_904 = arith.constant 0.353553385 : f32
    %1252 = vector.broadcast %cst_904 : f32 to vector<16x8xf32>
    %1253 = arith.mulf %1251, %1252 : vector<16x8xf32>
    %1254 = arith.addf %1253, %23 : vector<16x8xf32>
    %cst_905 = arith.constant dense<0xFF800000> : vector<16xf32>
    %1255 = vector.multi_reduction <maximumf>, %1254, %cst_905 [1] : vector<16x8xf32> to vector<16xf32>
    %1256 = vector.shape_cast %1255 : vector<16xf32> to vector<16x1xf32>
    %1257 = vector.broadcast %1256 : vector<16x1xf32> to vector<16x8xf32>
    %1258 = arith.subf %1254, %1257 : vector<16x8xf32>
    %1259 = math.exp %1258 : vector<16x8xf32>
    %cst_906 = arith.constant dense<0.000000e+00> : vector<16xf32>
    %1260 = vector.multi_reduction <add>, %1259, %cst_906 [1] : vector<16x8xf32> to vector<16xf32>
    %1261 = vector.shape_cast %1260 : vector<16xf32> to vector<16x1xf32>
    %1262 = vector.broadcast %1261 : vector<16x1xf32> to vector<16x8xf32>
    %1263 = arith.divf %1259, %1262 : vector<16x8xf32>
    %1264 = arith.truncf %1263 : vector<16x8xf32> to vector<16x8xbf16>
    %1265 = arith.truncf %1248 : vector<8x8xf32> to vector<8x8xbf16>
    %cst_907 = arith.constant dense<0.000000e+00> : vector<16x8xf32>
    %1266 = tpu.matmul %1264, %1265, %cst_907 {dimension_numbers = #tpu.dot_dimension_numbers<[1], [0], [0], [1], [0, 0, 1, 1], [], []>} : vector<16x8xbf16>, vector<8x8xbf16>, vector<16x8xf32> -> vector<16x8xf32>
    %c0_908 = arith.constant 0 : index
    %c1_909 = arith.constant 1 : index
    %c0_910 = arith.constant 0 : index
    %c416_911 = arith.constant 416 : index
    %1267 = vector.load %arg8[%c0_908, %c1_909, %c0_910, %c416_911] : memref<1x2x32x512xbf16, #tpu.memory_space<vmem>>, vector<1x1x8x32xbf16>
    %1268 = vector.shape_cast %1267 : vector<1x1x8x32xbf16> to vector<8x32xbf16>
    %1269 = arith.truncf %1266 : vector<16x8xf32> to vector<16x8xbf16>
    %cst_912 = arith.constant dense<0.000000e+00> : vector<16x32xf32>
    %1270 = tpu.matmul %1269, %1268, %cst_912 {dimension_numbers = #tpu.dot_dimension_numbers<[1], [0], [0], [1], [0, 0, 1, 1], [], []>} : vector<16x8xbf16>, vector<8x32xbf16>, vector<16x32xf32> -> vector<16x32xf32>
    %c0_913 = arith.constant 0 : index
    %c1_914 = arith.constant 1 : index
    %c0_915 = arith.constant 0 : index
    %c328_916 = arith.constant 328 : index
    %1271 = vector.load %arg8[%c0_913, %c1_914, %c0_915, %c328_916] : memref<1x2x32x512xbf16, #tpu.memory_space<vmem>>, vector<1x1x32x8xbf16>
    %1272 = vector.shape_cast %1271 : vector<1x1x32x8xbf16> to vector<32x8xbf16>
    %1273 = arith.truncf %1224 : vector<16x32xf32> to vector<16x32xbf16>
    %cst_917 = arith.constant dense<0.000000e+00> : vector<16x8xf32>
    %1274 = tpu.matmul %1273, %1272, %cst_917 {dimension_numbers = #tpu.dot_dimension_numbers<[1], [0], [0], [1], [0, 0, 1, 1], [], []>} : vector<16x32xbf16>, vector<32x8xbf16>, vector<16x8xf32> -> vector<16x8xf32>
    %c0_918 = arith.constant 0 : index
    %c1_919 = arith.constant 1 : index
    %c0_920 = arith.constant 0 : index
    %c488_921 = arith.constant 488 : index
    %1275 = vector.load %arg10[%c0_918, %c1_919, %c0_920, %c488_921] : memref<1x2x1x896xf32, #tpu.memory_space<vmem>>, vector<1x1x1x8xf32>
    %1276 = vector.shape_cast %1275 : vector<1x1x1x8xf32> to vector<1x8xf32>
    %1277 = vector.broadcast %1276 : vector<1x8xf32> to vector<16x8xf32>
    %1278 = arith.addf %1274, %1277 : vector<16x8xf32>
    %c0_922 = arith.constant 0 : index
    %c1_923 = arith.constant 1 : index
    %c0_924 = arith.constant 0 : index
    %c360_925 = arith.constant 360 : index
    %1279 = vector.load %arg8[%c0_922, %c1_923, %c0_924, %c360_925] : memref<1x2x32x512xbf16, #tpu.memory_space<vmem>>, vector<1x1x32x8xbf16>
    %1280 = vector.shape_cast %1279 : vector<1x1x32x8xbf16> to vector<32x8xbf16>
    %1281 = arith.truncf %541 : vector<8x32xf32> to vector<8x32xbf16>
    %cst_926 = arith.constant dense<0.000000e+00> : vector<8x8xf32>
    %1282 = tpu.matmul %1281, %1280, %cst_926 {dimension_numbers = #tpu.dot_dimension_numbers<[1], [0], [0], [1], [0, 0, 1, 1], [], []>} : vector<8x32xbf16>, vector<32x8xbf16>, vector<8x8xf32> -> vector<8x8xf32>
    %c0_927 = arith.constant 0 : index
    %c1_928 = arith.constant 1 : index
    %c0_929 = arith.constant 0 : index
    %c520_930 = arith.constant 520 : index
    %1283 = vector.load %arg10[%c0_927, %c1_928, %c0_929, %c520_930] : memref<1x2x1x896xf32, #tpu.memory_space<vmem>>, vector<1x1x1x8xf32>
    %1284 = vector.shape_cast %1283 : vector<1x1x1x8xf32> to vector<1x8xf32>
    %1285 = vector.broadcast %1284 : vector<1x8xf32> to vector<8x8xf32>
    %1286 = arith.addf %1282, %1285 : vector<8x8xf32>
    %c0_931 = arith.constant 0 : index
    %c1_932 = arith.constant 1 : index
    %c0_933 = arith.constant 0 : index
    %c392_934 = arith.constant 392 : index
    %1287 = vector.load %arg8[%c0_931, %c1_932, %c0_933, %c392_934] : memref<1x2x32x512xbf16, #tpu.memory_space<vmem>>, vector<1x1x32x8xbf16>
    %1288 = vector.shape_cast %1287 : vector<1x1x32x8xbf16> to vector<32x8xbf16>
    %1289 = arith.truncf %541 : vector<8x32xf32> to vector<8x32xbf16>
    %cst_935 = arith.constant dense<0.000000e+00> : vector<8x8xf32>
    %1290 = tpu.matmul %1289, %1288, %cst_935 {dimension_numbers = #tpu.dot_dimension_numbers<[1], [0], [0], [1], [0, 0, 1, 1], [], []>} : vector<8x32xbf16>, vector<32x8xbf16>, vector<8x8xf32> -> vector<8x8xf32>
    %c0_936 = arith.constant 0 : index
    %c1_937 = arith.constant 1 : index
    %c0_938 = arith.constant 0 : index
    %c552_939 = arith.constant 552 : index
    %1291 = vector.load %arg10[%c0_936, %c1_937, %c0_938, %c552_939] : memref<1x2x1x896xf32, #tpu.memory_space<vmem>>, vector<1x1x1x8xf32>
    %1292 = vector.shape_cast %1291 : vector<1x1x1x8xf32> to vector<1x8xf32>
    %1293 = vector.broadcast %1292 : vector<1x8xf32> to vector<8x8xf32>
    %1294 = arith.addf %1290, %1293 : vector<8x8xf32>
    %1295 = arith.truncf %1278 : vector<16x8xf32> to vector<16x8xbf16>
    %1296 = arith.truncf %1286 : vector<8x8xf32> to vector<8x8xbf16>
    "tpu.trace_start"() <{level = 10 : i32, message = "qd,kd->qk"}> : () -> ()
    %cst_940 = arith.constant dense<0.000000e+00> : vector<16x8xf32>
    %1297 = tpu.matmul %1295, %1296, %cst_940 {dimension_numbers = #tpu.dot_dimension_numbers<[1], [1], [0], [0], [0, 0, 1, 0], [], []>} : vector<16x8xbf16>, vector<8x8xbf16>, vector<16x8xf32> -> vector<16x8xf32>
    "tpu.trace_stop"() : () -> ()
    %cst_941 = arith.constant 0.353553385 : f32
    %1298 = vector.broadcast %cst_941 : f32 to vector<16x8xf32>
    %1299 = arith.mulf %1297, %1298 : vector<16x8xf32>
    %1300 = arith.addf %1299, %23 : vector<16x8xf32>
    %cst_942 = arith.constant dense<0xFF800000> : vector<16xf32>
    %1301 = vector.multi_reduction <maximumf>, %1300, %cst_942 [1] : vector<16x8xf32> to vector<16xf32>
    %1302 = vector.shape_cast %1301 : vector<16xf32> to vector<16x1xf32>
    %1303 = vector.broadcast %1302 : vector<16x1xf32> to vector<16x8xf32>
    %1304 = arith.subf %1300, %1303 : vector<16x8xf32>
    %1305 = math.exp %1304 : vector<16x8xf32>
    %cst_943 = arith.constant dense<0.000000e+00> : vector<16xf32>
    %1306 = vector.multi_reduction <add>, %1305, %cst_943 [1] : vector<16x8xf32> to vector<16xf32>
    %1307 = vector.shape_cast %1306 : vector<16xf32> to vector<16x1xf32>
    %1308 = vector.broadcast %1307 : vector<16x1xf32> to vector<16x8xf32>
    %1309 = arith.divf %1305, %1308 : vector<16x8xf32>
    %1310 = arith.truncf %1309 : vector<16x8xf32> to vector<16x8xbf16>
    %1311 = arith.truncf %1294 : vector<8x8xf32> to vector<8x8xbf16>
    %cst_944 = arith.constant dense<0.000000e+00> : vector<16x8xf32>
    %1312 = tpu.matmul %1310, %1311, %cst_944 {dimension_numbers = #tpu.dot_dimension_numbers<[1], [0], [0], [1], [0, 0, 1, 1], [], []>} : vector<16x8xbf16>, vector<8x8xbf16>, vector<16x8xf32> -> vector<16x8xf32>
    %c0_945 = arith.constant 0 : index
    %c1_946 = arith.constant 1 : index
    %c8_947 = arith.constant 8 : index
    %c416_948 = arith.constant 416 : index
    %1313 = vector.load %arg8[%c0_945, %c1_946, %c8_947, %c416_948] : memref<1x2x32x512xbf16, #tpu.memory_space<vmem>>, vector<1x1x8x32xbf16>
    %1314 = vector.shape_cast %1313 : vector<1x1x8x32xbf16> to vector<8x32xbf16>
    %1315 = arith.truncf %1312 : vector<16x8xf32> to vector<16x8xbf16>
    %cst_949 = arith.constant dense<0.000000e+00> : vector<16x32xf32>
    %1316 = tpu.matmul %1315, %1314, %cst_949 {dimension_numbers = #tpu.dot_dimension_numbers<[1], [0], [0], [1], [0, 0, 1, 1], [], []>} : vector<16x8xbf16>, vector<8x32xbf16>, vector<16x32xf32> -> vector<16x32xf32>
    %1317 = arith.addf %1270, %1316 : vector<16x32xf32>
    %c0_950 = arith.constant 0 : index
    %c1_951 = arith.constant 1 : index
    %c0_952 = arith.constant 0 : index
    %c336_953 = arith.constant 336 : index
    %1318 = vector.load %arg8[%c0_950, %c1_951, %c0_952, %c336_953] : memref<1x2x32x512xbf16, #tpu.memory_space<vmem>>, vector<1x1x32x8xbf16>
    %1319 = vector.shape_cast %1318 : vector<1x1x32x8xbf16> to vector<32x8xbf16>
    %1320 = arith.truncf %1224 : vector<16x32xf32> to vector<16x32xbf16>
    %cst_954 = arith.constant dense<0.000000e+00> : vector<16x8xf32>
    %1321 = tpu.matmul %1320, %1319, %cst_954 {dimension_numbers = #tpu.dot_dimension_numbers<[1], [0], [0], [1], [0, 0, 1, 1], [], []>} : vector<16x32xbf16>, vector<32x8xbf16>, vector<16x8xf32> -> vector<16x8xf32>
    %c0_955 = arith.constant 0 : index
    %c1_956 = arith.constant 1 : index
    %c0_957 = arith.constant 0 : index
    %c496_958 = arith.constant 496 : index
    %1322 = vector.load %arg10[%c0_955, %c1_956, %c0_957, %c496_958] : memref<1x2x1x896xf32, #tpu.memory_space<vmem>>, vector<1x1x1x8xf32>
    %1323 = vector.shape_cast %1322 : vector<1x1x1x8xf32> to vector<1x8xf32>
    %1324 = vector.broadcast %1323 : vector<1x8xf32> to vector<16x8xf32>
    %1325 = arith.addf %1321, %1324 : vector<16x8xf32>
    %c0_959 = arith.constant 0 : index
    %c1_960 = arith.constant 1 : index
    %c0_961 = arith.constant 0 : index
    %c368_962 = arith.constant 368 : index
    %1326 = vector.load %arg8[%c0_959, %c1_960, %c0_961, %c368_962] : memref<1x2x32x512xbf16, #tpu.memory_space<vmem>>, vector<1x1x32x8xbf16>
    %1327 = vector.shape_cast %1326 : vector<1x1x32x8xbf16> to vector<32x8xbf16>
    %1328 = arith.truncf %541 : vector<8x32xf32> to vector<8x32xbf16>
    %cst_963 = arith.constant dense<0.000000e+00> : vector<8x8xf32>
    %1329 = tpu.matmul %1328, %1327, %cst_963 {dimension_numbers = #tpu.dot_dimension_numbers<[1], [0], [0], [1], [0, 0, 1, 1], [], []>} : vector<8x32xbf16>, vector<32x8xbf16>, vector<8x8xf32> -> vector<8x8xf32>
    %c0_964 = arith.constant 0 : index
    %c1_965 = arith.constant 1 : index
    %c0_966 = arith.constant 0 : index
    %c528_967 = arith.constant 528 : index
    %1330 = vector.load %arg10[%c0_964, %c1_965, %c0_966, %c528_967] : memref<1x2x1x896xf32, #tpu.memory_space<vmem>>, vector<1x1x1x8xf32>
    %1331 = vector.shape_cast %1330 : vector<1x1x1x8xf32> to vector<1x8xf32>
    %1332 = vector.broadcast %1331 : vector<1x8xf32> to vector<8x8xf32>
    %1333 = arith.addf %1329, %1332 : vector<8x8xf32>
    %c0_968 = arith.constant 0 : index
    %c1_969 = arith.constant 1 : index
    %c0_970 = arith.constant 0 : index
    %c400_971 = arith.constant 400 : index
    %1334 = vector.load %arg8[%c0_968, %c1_969, %c0_970, %c400_971] : memref<1x2x32x512xbf16, #tpu.memory_space<vmem>>, vector<1x1x32x8xbf16>
    %1335 = vector.shape_cast %1334 : vector<1x1x32x8xbf16> to vector<32x8xbf16>
    %1336 = arith.truncf %541 : vector<8x32xf32> to vector<8x32xbf16>
    %cst_972 = arith.constant dense<0.000000e+00> : vector<8x8xf32>
    %1337 = tpu.matmul %1336, %1335, %cst_972 {dimension_numbers = #tpu.dot_dimension_numbers<[1], [0], [0], [1], [0, 0, 1, 1], [], []>} : vector<8x32xbf16>, vector<32x8xbf16>, vector<8x8xf32> -> vector<8x8xf32>
    %c0_973 = arith.constant 0 : index
    %c1_974 = arith.constant 1 : index
    %c0_975 = arith.constant 0 : index
    %c560_976 = arith.constant 560 : index
    %1338 = vector.load %arg10[%c0_973, %c1_974, %c0_975, %c560_976] : memref<1x2x1x896xf32, #tpu.memory_space<vmem>>, vector<1x1x1x8xf32>
    %1339 = vector.shape_cast %1338 : vector<1x1x1x8xf32> to vector<1x8xf32>
    %1340 = vector.broadcast %1339 : vector<1x8xf32> to vector<8x8xf32>
    %1341 = arith.addf %1337, %1340 : vector<8x8xf32>
    %1342 = arith.truncf %1325 : vector<16x8xf32> to vector<16x8xbf16>
    %1343 = arith.truncf %1333 : vector<8x8xf32> to vector<8x8xbf16>
    "tpu.trace_start"() <{level = 10 : i32, message = "qd,kd->qk"}> : () -> ()
    %cst_977 = arith.constant dense<0.000000e+00> : vector<16x8xf32>
    %1344 = tpu.matmul %1342, %1343, %cst_977 {dimension_numbers = #tpu.dot_dimension_numbers<[1], [1], [0], [0], [0, 0, 1, 0], [], []>} : vector<16x8xbf16>, vector<8x8xbf16>, vector<16x8xf32> -> vector<16x8xf32>
    "tpu.trace_stop"() : () -> ()
    %cst_978 = arith.constant 0.353553385 : f32
    %1345 = vector.broadcast %cst_978 : f32 to vector<16x8xf32>
    %1346 = arith.mulf %1344, %1345 : vector<16x8xf32>
    %1347 = arith.addf %1346, %23 : vector<16x8xf32>
    %cst_979 = arith.constant dense<0xFF800000> : vector<16xf32>
    %1348 = vector.multi_reduction <maximumf>, %1347, %cst_979 [1] : vector<16x8xf32> to vector<16xf32>
    %1349 = vector.shape_cast %1348 : vector<16xf32> to vector<16x1xf32>
    %1350 = vector.broadcast %1349 : vector<16x1xf32> to vector<16x8xf32>
    %1351 = arith.subf %1347, %1350 : vector<16x8xf32>
    %1352 = math.exp %1351 : vector<16x8xf32>
    %cst_980 = arith.constant dense<0.000000e+00> : vector<16xf32>
    %1353 = vector.multi_reduction <add>, %1352, %cst_980 [1] : vector<16x8xf32> to vector<16xf32>
    %1354 = vector.shape_cast %1353 : vector<16xf32> to vector<16x1xf32>
    %1355 = vector.broadcast %1354 : vector<16x1xf32> to vector<16x8xf32>
    %1356 = arith.divf %1352, %1355 : vector<16x8xf32>
    %1357 = arith.truncf %1356 : vector<16x8xf32> to vector<16x8xbf16>
    %1358 = arith.truncf %1341 : vector<8x8xf32> to vector<8x8xbf16>
    %cst_981 = arith.constant dense<0.000000e+00> : vector<16x8xf32>
    %1359 = tpu.matmul %1357, %1358, %cst_981 {dimension_numbers = #tpu.dot_dimension_numbers<[1], [0], [0], [1], [0, 0, 1, 1], [], []>} : vector<16x8xbf16>, vector<8x8xbf16>, vector<16x8xf32> -> vector<16x8xf32>
    %c0_982 = arith.constant 0 : index
    %c1_983 = arith.constant 1 : index
    %c16_984 = arith.constant 16 : index
    %c416_985 = arith.constant 416 : index
    %1360 = vector.load %arg8[%c0_982, %c1_983, %c16_984, %c416_985] : memref<1x2x32x512xbf16, #tpu.memory_space<vmem>>, vector<1x1x8x32xbf16>
    %1361 = vector.shape_cast %1360 : vector<1x1x8x32xbf16> to vector<8x32xbf16>
    %1362 = arith.truncf %1359 : vector<16x8xf32> to vector<16x8xbf16>
    %cst_986 = arith.constant dense<0.000000e+00> : vector<16x32xf32>
    %1363 = tpu.matmul %1362, %1361, %cst_986 {dimension_numbers = #tpu.dot_dimension_numbers<[1], [0], [0], [1], [0, 0, 1, 1], [], []>} : vector<16x8xbf16>, vector<8x32xbf16>, vector<16x32xf32> -> vector<16x32xf32>
    %1364 = arith.addf %1317, %1363 : vector<16x32xf32>
    %c0_987 = arith.constant 0 : index
    %c1_988 = arith.constant 1 : index
    %c0_989 = arith.constant 0 : index
    %c344_990 = arith.constant 344 : index
    %1365 = vector.load %arg8[%c0_987, %c1_988, %c0_989, %c344_990] : memref<1x2x32x512xbf16, #tpu.memory_space<vmem>>, vector<1x1x32x8xbf16>
    %1366 = vector.shape_cast %1365 : vector<1x1x32x8xbf16> to vector<32x8xbf16>
    %1367 = arith.truncf %1224 : vector<16x32xf32> to vector<16x32xbf16>
    %cst_991 = arith.constant dense<0.000000e+00> : vector<16x8xf32>
    %1368 = tpu.matmul %1367, %1366, %cst_991 {dimension_numbers = #tpu.dot_dimension_numbers<[1], [0], [0], [1], [0, 0, 1, 1], [], []>} : vector<16x32xbf16>, vector<32x8xbf16>, vector<16x8xf32> -> vector<16x8xf32>
    %c0_992 = arith.constant 0 : index
    %c1_993 = arith.constant 1 : index
    %c0_994 = arith.constant 0 : index
    %c504_995 = arith.constant 504 : index
    %1369 = vector.load %arg10[%c0_992, %c1_993, %c0_994, %c504_995] : memref<1x2x1x896xf32, #tpu.memory_space<vmem>>, vector<1x1x1x8xf32>
    %1370 = vector.shape_cast %1369 : vector<1x1x1x8xf32> to vector<1x8xf32>
    %1371 = vector.broadcast %1370 : vector<1x8xf32> to vector<16x8xf32>
    %1372 = arith.addf %1368, %1371 : vector<16x8xf32>
    %c0_996 = arith.constant 0 : index
    %c1_997 = arith.constant 1 : index
    %c0_998 = arith.constant 0 : index
    %c376_999 = arith.constant 376 : index
    %1373 = vector.load %arg8[%c0_996, %c1_997, %c0_998, %c376_999] : memref<1x2x32x512xbf16, #tpu.memory_space<vmem>>, vector<1x1x32x8xbf16>
    %1374 = vector.shape_cast %1373 : vector<1x1x32x8xbf16> to vector<32x8xbf16>
    %1375 = arith.truncf %541 : vector<8x32xf32> to vector<8x32xbf16>
    %cst_1000 = arith.constant dense<0.000000e+00> : vector<8x8xf32>
    %1376 = tpu.matmul %1375, %1374, %cst_1000 {dimension_numbers = #tpu.dot_dimension_numbers<[1], [0], [0], [1], [0, 0, 1, 1], [], []>} : vector<8x32xbf16>, vector<32x8xbf16>, vector<8x8xf32> -> vector<8x8xf32>
    %c0_1001 = arith.constant 0 : index
    %c1_1002 = arith.constant 1 : index
    %c0_1003 = arith.constant 0 : index
    %c536_1004 = arith.constant 536 : index
    %1377 = vector.load %arg10[%c0_1001, %c1_1002, %c0_1003, %c536_1004] : memref<1x2x1x896xf32, #tpu.memory_space<vmem>>, vector<1x1x1x8xf32>
    %1378 = vector.shape_cast %1377 : vector<1x1x1x8xf32> to vector<1x8xf32>
    %1379 = vector.broadcast %1378 : vector<1x8xf32> to vector<8x8xf32>
    %1380 = arith.addf %1376, %1379 : vector<8x8xf32>
    %c0_1005 = arith.constant 0 : index
    %c1_1006 = arith.constant 1 : index
    %c0_1007 = arith.constant 0 : index
    %c408_1008 = arith.constant 408 : index
    %1381 = vector.load %arg8[%c0_1005, %c1_1006, %c0_1007, %c408_1008] : memref<1x2x32x512xbf16, #tpu.memory_space<vmem>>, vector<1x1x32x8xbf16>
    %1382 = vector.shape_cast %1381 : vector<1x1x32x8xbf16> to vector<32x8xbf16>
    %1383 = arith.truncf %541 : vector<8x32xf32> to vector<8x32xbf16>
    %cst_1009 = arith.constant dense<0.000000e+00> : vector<8x8xf32>
    %1384 = tpu.matmul %1383, %1382, %cst_1009 {dimension_numbers = #tpu.dot_dimension_numbers<[1], [0], [0], [1], [0, 0, 1, 1], [], []>} : vector<8x32xbf16>, vector<32x8xbf16>, vector<8x8xf32> -> vector<8x8xf32>
    %c0_1010 = arith.constant 0 : index
    %c1_1011 = arith.constant 1 : index
    %c0_1012 = arith.constant 0 : index
    %c568_1013 = arith.constant 568 : index
    %1385 = vector.load %arg10[%c0_1010, %c1_1011, %c0_1012, %c568_1013] : memref<1x2x1x896xf32, #tpu.memory_space<vmem>>, vector<1x1x1x8xf32>
    %1386 = vector.shape_cast %1385 : vector<1x1x1x8xf32> to vector<1x8xf32>
    %1387 = vector.broadcast %1386 : vector<1x8xf32> to vector<8x8xf32>
    %1388 = arith.addf %1384, %1387 : vector<8x8xf32>
    %1389 = arith.truncf %1372 : vector<16x8xf32> to vector<16x8xbf16>
    %1390 = arith.truncf %1380 : vector<8x8xf32> to vector<8x8xbf16>
    "tpu.trace_start"() <{level = 10 : i32, message = "qd,kd->qk"}> : () -> ()
    %cst_1014 = arith.constant dense<0.000000e+00> : vector<16x8xf32>
    %1391 = tpu.matmul %1389, %1390, %cst_1014 {dimension_numbers = #tpu.dot_dimension_numbers<[1], [1], [0], [0], [0, 0, 1, 0], [], []>} : vector<16x8xbf16>, vector<8x8xbf16>, vector<16x8xf32> -> vector<16x8xf32>
    "tpu.trace_stop"() : () -> ()
    %cst_1015 = arith.constant 0.353553385 : f32
    %1392 = vector.broadcast %cst_1015 : f32 to vector<16x8xf32>
    %1393 = arith.mulf %1391, %1392 : vector<16x8xf32>
    %1394 = arith.addf %1393, %23 : vector<16x8xf32>
    %cst_1016 = arith.constant dense<0xFF800000> : vector<16xf32>
    %1395 = vector.multi_reduction <maximumf>, %1394, %cst_1016 [1] : vector<16x8xf32> to vector<16xf32>
    %1396 = vector.shape_cast %1395 : vector<16xf32> to vector<16x1xf32>
    %1397 = vector.broadcast %1396 : vector<16x1xf32> to vector<16x8xf32>
    %1398 = arith.subf %1394, %1397 : vector<16x8xf32>
    %1399 = math.exp %1398 : vector<16x8xf32>
    %cst_1017 = arith.constant dense<0.000000e+00> : vector<16xf32>
    %1400 = vector.multi_reduction <add>, %1399, %cst_1017 [1] : vector<16x8xf32> to vector<16xf32>
    %1401 = vector.shape_cast %1400 : vector<16xf32> to vector<16x1xf32>
    %1402 = vector.broadcast %1401 : vector<16x1xf32> to vector<16x8xf32>
    %1403 = arith.divf %1399, %1402 : vector<16x8xf32>
    %1404 = arith.truncf %1403 : vector<16x8xf32> to vector<16x8xbf16>
    %1405 = arith.truncf %1388 : vector<8x8xf32> to vector<8x8xbf16>
    %cst_1018 = arith.constant dense<0.000000e+00> : vector<16x8xf32>
    %1406 = tpu.matmul %1404, %1405, %cst_1018 {dimension_numbers = #tpu.dot_dimension_numbers<[1], [0], [0], [1], [0, 0, 1, 1], [], []>} : vector<16x8xbf16>, vector<8x8xbf16>, vector<16x8xf32> -> vector<16x8xf32>
    %c0_1019 = arith.constant 0 : index
    %c1_1020 = arith.constant 1 : index
    %c24_1021 = arith.constant 24 : index
    %c416_1022 = arith.constant 416 : index
    %1407 = vector.load %arg8[%c0_1019, %c1_1020, %c24_1021, %c416_1022] : memref<1x2x32x512xbf16, #tpu.memory_space<vmem>>, vector<1x1x8x32xbf16>
    %1408 = vector.shape_cast %1407 : vector<1x1x8x32xbf16> to vector<8x32xbf16>
    %1409 = arith.truncf %1406 : vector<16x8xf32> to vector<16x8xbf16>
    %cst_1023 = arith.constant dense<0.000000e+00> : vector<16x32xf32>
    %1410 = tpu.matmul %1409, %1408, %cst_1023 {dimension_numbers = #tpu.dot_dimension_numbers<[1], [0], [0], [1], [0, 0, 1, 1], [], []>} : vector<16x8xbf16>, vector<8x32xbf16>, vector<16x32xf32> -> vector<16x32xf32>
    %1411 = arith.addf %1364, %1410 : vector<16x32xf32>
    %c0_1024 = arith.constant 0 : index
    %c1_1025 = arith.constant 1 : index
    %c0_1026 = arith.constant 0 : index
    %c576_1027 = arith.constant 576 : index
    %1412 = vector.load %arg10[%c0_1024, %c1_1025, %c0_1026, %c576_1027] : memref<1x2x1x896xf32, #tpu.memory_space<vmem>>, vector<1x1x1x32xf32>
    %1413 = vector.shape_cast %1412 : vector<1x1x1x32xf32> to vector<1x32xf32>
    %1414 = vector.broadcast %1413 : vector<1x32xf32> to vector<16x32xf32>
    %1415 = arith.addf %1411, %1414 : vector<16x32xf32>
    %1416 = arith.addf %1224, %1415 : vector<16x32xf32>
    %c0_1028 = arith.constant 0 : index
    %c1_1029 = arith.constant 1 : index
    %c0_1030 = arith.constant 0 : index
    %c768_1031 = arith.constant 768 : index
    %1417 = vector.load %arg10[%c0_1028, %c1_1029, %c0_1030, %c768_1031] : memref<1x2x1x896xf32, #tpu.memory_space<vmem>>, vector<1x1x1x32xf32>
    %1418 = vector.shape_cast %1417 : vector<1x1x1x32xf32> to vector<1x32xf32>
    %c0_1032 = arith.constant 0 : index
    %c1_1033 = arith.constant 1 : index
    %c0_1034 = arith.constant 0 : index
    %c800_1035 = arith.constant 800 : index
    %1419 = vector.load %arg10[%c0_1032, %c1_1033, %c0_1034, %c800_1035] : memref<1x2x1x896xf32, #tpu.memory_space<vmem>>, vector<1x1x1x32xf32>
    %1420 = vector.shape_cast %1419 : vector<1x1x1x32xf32> to vector<1x32xf32>
    %cst_1036 = arith.constant dense<0.000000e+00> : vector<16xf32>
    %1421 = vector.multi_reduction <add>, %1416, %cst_1036 [1] : vector<16x32xf32> to vector<16xf32>
    %1422 = vector.shape_cast %1421 : vector<16xf32> to vector<16x1xf32>
    %cst_1037 = arith.constant 3.200000e+01 : f32
    %1423 = vector.broadcast %cst_1037 : f32 to vector<16x1xf32>
    %1424 = arith.divf %1422, %1423 : vector<16x1xf32>
    %1425 = vector.broadcast %1424 : vector<16x1xf32> to vector<16x32xf32>
    %1426 = arith.subf %1416, %1425 : vector<16x32xf32>
    %1427 = arith.mulf %1426, %1426 : vector<16x32xf32>
    %cst_1038 = arith.constant dense<0.000000e+00> : vector<16xf32>
    %1428 = vector.multi_reduction <add>, %1427, %cst_1038 [1] : vector<16x32xf32> to vector<16xf32>
    %1429 = vector.shape_cast %1428 : vector<16xf32> to vector<16x1xf32>
    %cst_1039 = arith.constant 0.0322580636 : f32
    %1430 = vector.broadcast %cst_1039 : f32 to vector<16x1xf32>
    %1431 = arith.mulf %1429, %1430 : vector<16x1xf32>
    %1432 = math.sqrt %1431 : vector<16x1xf32>
    %cst_1040 = arith.constant 9.99999997E-7 : f32
    %1433 = vector.broadcast %cst_1040 : f32 to vector<16x1xf32>
    %1434 = arith.addf %1432, %1433 : vector<16x1xf32>
    %1435 = vector.broadcast %1434 : vector<16x1xf32> to vector<16x32xf32>
    %1436 = arith.divf %1426, %1435 : vector<16x32xf32>
    %1437 = vector.broadcast %1418 : vector<1x32xf32> to vector<16x32xf32>
    %1438 = arith.mulf %1437, %1436 : vector<16x32xf32>
    %1439 = vector.broadcast %1420 : vector<1x32xf32> to vector<16x32xf32>
    %1440 = arith.addf %1438, %1439 : vector<16x32xf32>
    %c0_1041 = arith.constant 0 : index
    %c1_1042 = arith.constant 1 : index
    %c0_1043 = arith.constant 0 : index
    %c448_1044 = arith.constant 448 : index
    %1441 = vector.load %arg8[%c0_1041, %c1_1042, %c0_1043, %c448_1044] : memref<1x2x32x512xbf16, #tpu.memory_space<vmem>>, vector<1x1x32x64xbf16>
    %1442 = vector.shape_cast %1441 : vector<1x1x32x64xbf16> to vector<32x64xbf16>
    %1443 = arith.truncf %1440 : vector<16x32xf32> to vector<16x32xbf16>
    %cst_1045 = arith.constant dense<0.000000e+00> : vector<16x64xf32>
    %1444 = tpu.matmul %1443, %1442, %cst_1045 {dimension_numbers = #tpu.dot_dimension_numbers<[1], [0], [0], [1], [0, 0, 1, 1], [], []>} : vector<16x32xbf16>, vector<32x64xbf16>, vector<16x64xf32> -> vector<16x64xf32>
    %c0_1046 = arith.constant 0 : index
    %c1_1047 = arith.constant 1 : index
    %c0_1048 = arith.constant 0 : index
    %c608_1049 = arith.constant 608 : index
    %1445 = vector.load %arg10[%c0_1046, %c1_1047, %c0_1048, %c608_1049] : memref<1x2x1x896xf32, #tpu.memory_space<vmem>>, vector<1x1x1x64xf32>
    %1446 = vector.shape_cast %1445 : vector<1x1x1x64xf32> to vector<1x64xf32>
    %1447 = vector.broadcast %1446 : vector<1x64xf32> to vector<16x64xf32>
    %1448 = arith.addf %1444, %1447 : vector<16x64xf32>
    %cst_1050 = arith.constant 0.000000e+00 : f32
    %1449 = vector.broadcast %cst_1050 : f32 to vector<16x64xf32>
    %1450 = arith.maximumf %1448, %1449 : vector<16x64xf32>
    %c0_1051 = arith.constant 0 : index
    %c1_1052 = arith.constant 1 : index
    %c0_1053 = arith.constant 0 : index
    %c32_1054 = arith.constant 32 : index
    %1451 = vector.load %arg9[%c0_1051, %c1_1052, %c0_1053, %c32_1054] : memref<1x2x64x64xbf16, #tpu.memory_space<vmem>>, vector<1x1x64x32xbf16>
    %1452 = vector.shape_cast %1451 : vector<1x1x64x32xbf16> to vector<64x32xbf16>
    %1453 = arith.truncf %1450 : vector<16x64xf32> to vector<16x64xbf16>
    %cst_1055 = arith.constant dense<0.000000e+00> : vector<16x32xf32>
    %1454 = tpu.matmul %1453, %1452, %cst_1055 {dimension_numbers = #tpu.dot_dimension_numbers<[1], [0], [0], [1], [0, 0, 1, 1], [], []>} : vector<16x64xbf16>, vector<64x32xbf16>, vector<16x32xf32> -> vector<16x32xf32>
    %c0_1056 = arith.constant 0 : index
    %c1_1057 = arith.constant 1 : index
    %c0_1058 = arith.constant 0 : index
    %c672_1059 = arith.constant 672 : index
    %1455 = vector.load %arg10[%c0_1056, %c1_1057, %c0_1058, %c672_1059] : memref<1x2x1x896xf32, #tpu.memory_space<vmem>>, vector<1x1x1x32xf32>
    %1456 = vector.shape_cast %1455 : vector<1x1x1x32xf32> to vector<1x32xf32>
    %1457 = vector.broadcast %1456 : vector<1x32xf32> to vector<16x32xf32>
    %1458 = arith.addf %1454, %1457 : vector<16x32xf32>
    %1459 = arith.addf %1440, %1458 : vector<16x32xf32>
    %c0_1060 = arith.constant 0 : index
    %c1_1061 = arith.constant 1 : index
    %c0_1062 = arith.constant 0 : index
    %c832_1063 = arith.constant 832 : index
    %1460 = vector.load %arg10[%c0_1060, %c1_1061, %c0_1062, %c832_1063] : memref<1x2x1x896xf32, #tpu.memory_space<vmem>>, vector<1x1x1x32xf32>
    %1461 = vector.shape_cast %1460 : vector<1x1x1x32xf32> to vector<1x32xf32>
    %c0_1064 = arith.constant 0 : index
    %c1_1065 = arith.constant 1 : index
    %c0_1066 = arith.constant 0 : index
    %c864_1067 = arith.constant 864 : index
    %1462 = vector.load %arg10[%c0_1064, %c1_1065, %c0_1066, %c864_1067] : memref<1x2x1x896xf32, #tpu.memory_space<vmem>>, vector<1x1x1x32xf32>
    %1463 = vector.shape_cast %1462 : vector<1x1x1x32xf32> to vector<1x32xf32>
    %cst_1068 = arith.constant dense<0.000000e+00> : vector<16xf32>
    %1464 = vector.multi_reduction <add>, %1459, %cst_1068 [1] : vector<16x32xf32> to vector<16xf32>
    %1465 = vector.shape_cast %1464 : vector<16xf32> to vector<16x1xf32>
    %cst_1069 = arith.constant 3.200000e+01 : f32
    %1466 = vector.broadcast %cst_1069 : f32 to vector<16x1xf32>
    %1467 = arith.divf %1465, %1466 : vector<16x1xf32>
    %1468 = vector.broadcast %1467 : vector<16x1xf32> to vector<16x32xf32>
    %1469 = arith.subf %1459, %1468 : vector<16x32xf32>
    %1470 = arith.mulf %1469, %1469 : vector<16x32xf32>
    %cst_1070 = arith.constant dense<0.000000e+00> : vector<16xf32>
    %1471 = vector.multi_reduction <add>, %1470, %cst_1070 [1] : vector<16x32xf32> to vector<16xf32>
    %1472 = vector.shape_cast %1471 : vector<16xf32> to vector<16x1xf32>
    %cst_1071 = arith.constant 0.0322580636 : f32
    %1473 = vector.broadcast %cst_1071 : f32 to vector<16x1xf32>
    %1474 = arith.mulf %1472, %1473 : vector<16x1xf32>
    %1475 = math.sqrt %1474 : vector<16x1xf32>
    %cst_1072 = arith.constant 9.99999997E-7 : f32
    %1476 = vector.broadcast %cst_1072 : f32 to vector<16x1xf32>
    %1477 = arith.addf %1475, %1476 : vector<16x1xf32>
    %1478 = vector.broadcast %1477 : vector<16x1xf32> to vector<16x32xf32>
    %1479 = arith.divf %1469, %1478 : vector<16x32xf32>
    %1480 = vector.broadcast %1461 : vector<1x32xf32> to vector<16x32xf32>
    %1481 = arith.mulf %1480, %1479 : vector<16x32xf32>
    %1482 = vector.broadcast %1463 : vector<1x32xf32> to vector<16x32xf32>
    %1483 = arith.addf %1481, %1482 : vector<16x32xf32>
    %cst_1073 = arith.constant dense<0.000000e+00> : vector<32xf32>
    %1484 = vector.multi_reduction <add>, %1483, %cst_1073 [0] : vector<16x32xf32> to vector<32xf32>
    %1485 = vector.shape_cast %1484 : vector<32xf32> to vector<1x32xf32>
    %cst_1074 = arith.constant 6.250000e-02 : f32
    %1486 = vector.broadcast %cst_1074 : f32 to vector<1x32xf32>
    %1487 = arith.mulf %1485, %1486 : vector<1x32xf32>
    %1488 = arith.truncf %1487 : vector<1x32xf32> to vector<1x32xbf16>
    %c0_1075 = arith.constant 0 : index
    %c0_1076 = arith.constant 0 : index
    %c0_1077 = arith.constant 0 : index
    %1489 = vector.load %arg11[%c0_1075, %c0_1076, %c0_1077] : memref<1x32x10xbf16, #tpu.memory_space<vmem>>, vector<1x32x10xbf16>
    %1490 = vector.shape_cast %1489 : vector<1x32x10xbf16> to vector<32x10xbf16>
    %cst_1078 = arith.constant dense<0.000000e+00> : vector<1x10xf32>
    %1491 = tpu.matmul %1488, %1490, %cst_1078 {dimension_numbers = #tpu.dot_dimension_numbers<[1], [0], [0], [1], [0, 0, 1, 1], [], []>} : vector<1x32xbf16>, vector<32x10xbf16>, vector<1x10xf32> -> vector<1x10xf32>
    %c0_1079 = arith.constant 0 : index
    %c0_1080 = arith.constant 0 : index
    %c0_1081 = arith.constant 0 : index
    %c0_1082 = arith.constant 0 : index
    %1492 = vector.load %arg12[%c0_1079, %c0_1080, %c0_1081, %c0_1082] : memref<1x1x1x10xf32, #tpu.memory_space<vmem>>, vector<1x1x1x10xf32>
    %1493 = vector.shape_cast %1492 : vector<1x1x1x10xf32> to vector<1x10xf32>
    %1494 = vector.shape_cast %1491 : vector<1x10xf32> to vector<1x1x1x10xf32>
    tpu.vector_store %arg12[%c0_1079, %c0_1080, %c0_1081, %c0_1082], %1494 {strides = array<i32>} : memref<1x1x1x10xf32, #tpu.memory_space<vmem>>, vector<1x1x1x10xf32>,
    return
  }
  func.func @transform_0(%arg0: i32, %arg1: i32) -> (i32, i32, i32) {
    %c0_i32 = arith.constant 0 : i32
    %c0_i32_0 = arith.constant 0 : i32
    %c0_i32_1 = arith.constant 0 : i32
    return %arg1, %c0_i32, %c0_i32_0 : i32, i32, i32
  }
  func.func @transform_1(%arg0: i32, %arg1: i32) -> (i32, i32, i32, i32) {
    %c0_i32 = arith.constant 0 : i32
    %c0_i32_0 = arith.constant 0 : i32
    %c0_i32_1 = arith.constant 0 : i32
    return %arg0, %arg1, %c0_i32, %c0_i32_0 : i32, i32, i32, i32
  }
  func.func @transform_2(%arg0: i32, %arg1: i32) -> (i32, i32, i32, i32) {
    %c0_i32 = arith.constant 0 : i32
    %c0_i32_0 = arith.constant 0 : i32
    %c0_i32_1 = arith.constant 0 : i32
    return %arg0, %arg1, %c0_i32, %c0_i32_0 : i32, i32, i32, i32
  }
  func.func @transform_3(%arg0: i32, %arg1: i32) -> (i32, i32) {
    %c0_i32 = arith.constant 0 : i32
    %c0_i32_0 = arith.constant 0 : i32
    %c0_i32_1 = arith.constant 0 : i32
    return %c0_i32, %c0_i32_0 : i32, i32
  }
  func.func @transform_4(%arg0: i32, %arg1: i32) -> (i32, i32) {
    %c0_i32 = arith.constant 0 : i32
    %c0_i32_0 = arith.constant 0 : i32
    %c0_i32_1 = arith.constant 0 : i32
    return %c0_i32, %c0_i32_0 : i32, i32
  }
  func.func @transform_5(%arg0: i32, %arg1: i32) -> (i32, i32) {
    %c0_i32 = arith.constant 0 : i32
    %c0_i32_0 = arith.constant 0 : i32
    %c0_i32_1 = arith.constant 0 : i32
    return %c0_i32, %c0_i32_0 : i32, i32
  }
  func.func @transform_6(%arg0: i32, %arg1: i32) -> (i32, i32, i32, i32) {
    %c0_i32 = arith.constant 0 : i32
    %c0_i32_0 = arith.constant 0 : i32
    %c0_i32_1 = arith.constant 0 : i32
    %c0_i32_2 = arith.constant 0 : i32
    return %arg0, %c0_i32, %c0_i32_0, %c0_i32_1 : i32, i32, i32, i32
  }
  func.func @transform_7(%arg0: i32, %arg1: i32) -> (i32, i32, i32, i32) {
    %c0_i32 = arith.constant 0 : i32
    %c0_i32_0 = arith.constant 0 : i32
    %c0_i32_1 = arith.constant 0 : i32
    %c0_i32_2 = arith.constant 0 : i32
    return %arg0, %c0_i32, %c0_i32_0, %c0_i32_1 : i32, i32, i32, i32
  }
  func.func @transform_8(%arg0: i32, %arg1: i32) -> (i32, i32, i32, i32) {
    %c0_i32 = arith.constant 0 : i32
    %c0_i32_0 = arith.constant 0 : i32
    %c0_i32_1 = arith.constant 0 : i32
    %c0_i32_2 = arith.constant 0 : i32
    return %arg0, %c0_i32, %c0_i32_0, %c0_i32_1 : i32, i32, i32, i32
  }
  func.func @transform_9(%arg0: i32, %arg1: i32) -> (i32, i32, i32) {
    %c0_i32 = arith.constant 0 : i32
    %c0_i32_0 = arith.constant 0 : i32
    %c0_i32_1 = arith.constant 0 : i32
    return %arg0, %c0_i32, %c0_i32_0 : i32, i32, i32
  }
  func.func @transform_10(%arg0: i32, %arg1: i32) -> (i32, i32, i32, i32) {
    %c0_i32 = arith.constant 0 : i32
    %c0_i32_0 = arith.constant 0 : i32
    %c0_i32_1 = arith.constant 0 : i32
    return %arg0, %arg1, %c0_i32, %c0_i32_0 : i32, i32, i32, i32
  }
}

</mosaic_0001>

<llo_original>
// kernel: forward.1
$region0: #{forward.1}
  #allocation0 [shape = 'u32[]', space=smem, size = 0x4, offset = 0x4, fixed_abs, tag = 'smem constant byte address 0x4 - core index']
  #allocation1 [shape = 'u32[72,128]{1,0:T(1,128)}', space=vmem, size = 0x9000, scoped, tag = 'internal scratch']
  %s0 = inlined_call_operand.vmem [shape: f32[2,16,3], index: 0, kind: input, shape index: {}]
  %s1 = inlined_call_operand.vmem [shape: f32[2,2,8,32], index: 1, kind: input, shape index: {}]
  %s2 = inlined_call_operand.vmem [shape: f32[2,2,1,8], index: 2, kind: input, shape index: {}]
  %s3 = inlined_call_operand.vmem [shape: bf16[3,48], index: 3, kind: input, shape index: {}]
  %s4 = inlined_call_operand.vmem [shape: bf16[48,32], index: 4, kind: input, shape index: {}]
  %s5 = inlined_call_operand.vmem [shape: f32[1,80], index: 5, kind: input, shape index: {}]
  %s6 = inlined_call_operand.vmem [shape: bf16[2,2,32,512], index: 6, kind: input, shape index: {}]
  %s7 = inlined_call_operand.hbm [shape: bf16[2,2,64,64], index: 7, kind: input, shape index: {}]
  %s8 = inlined_call_operand.vmem [shape: f32[2,2,1,896], index: 8, kind: input, shape index: {}]
  %s9 = inlined_call_operand.vmem [shape: bf16[2,32,10], index: 9, kind: input, shape index: {}]
  %s10 = inlined_call_operand.vmem [shape: f32[2,2,1,10], index: 10, kind: output, shape index: {}]
  %s11 = sld [smem:[#allocation0]]
  $region77: #{forward.1} parent=0
    _
  %s13 = ssub.s32 1, %s11
  %s14 = scalar_select 0, %s13, %s11
  $region1: #{forward.1} parent=0
    #allocation2 [shape = 'u8[65536]{0}', space=vmem, size = 0x10000, scoped, tag = 'input window, operand 7']
    #allocation3 [shape = 's32[2]{0}', space=sflag, size = 0x8, scoped, tag = 'scoped memory for forward.1']
    %15 = vsyncpa [#allocation3], 0
    %s16 = scalar_lea.sflag [#allocation3], 1
    %17 = vsyncpa %s16, 0
    loop: start=0, step=1, limit=6
    $region2: #{forward.1} parent=1 // loop_pre_header
      _
    $region3: #{forward.1} parent=1 // loop_header
      %s19 = sphi 0, %s23
      %p20 = scmp.ge.s32.totalorder %s19, 6
      %s26 = sphi 0, %s38
      %s27 = sphi 0, %s34
      %s28 = sphi 0, %s26
      %s29 = sphi 0, %s27
      %s30 = sphi 0, %s28
      %s31 = sphi 0, %s29
      %s41 = sphi 0, %s43
      %s44 = sphi 0, %s41
      %s45 = sphi 0, %s44
      %s61 = sphi 0, %s45
      %s69 = sphi 0, %s71
      %s72 = sphi 0, %s69
      %s73 = sphi 0, %s72
      %s89 = sphi 0, %s73
      %s97 = sphi 0, %s99
      %s100 = sphi 0, %s97
      %s101 = sphi 0, %s100
      %s117 = sphi 0, %s101
      %s121 = sphi 0, %s121
      %s123 = sphi 0, %s121
      %s124 = sphi 0, %s123
      %s138 = sphi 0, %s124
      %s142 = sphi 0, %s142
      %s144 = sphi 0, %s142
      %s145 = sphi 0, %s144
      %s159 = sphi 0, %s145
      %s163 = sphi 0, %s163
      %s165 = sphi 0, %s163
      %s166 = sphi 0, %s165
      %s180 = sphi 0, %s166
      %s186 = sphi 0, %s188
      %s189 = sphi 0, %s186
      %s190 = sphi 0, %s189
      %s206 = sphi 0, %s190
      %s212 = sphi 0, %s214
      %s215 = sphi 0, %s212
      %s216 = sphi 0, %s215
      %s232 = sphi 0, %s216
      %s238 = sphi 0, %s240
      %s241 = sphi 0, %s238
      %s242 = sphi 0, %s241
      %s258 = sphi 0, %s242
      %s264 = sphi 0, %s266
      %s267 = sphi 0, %s264
      %s268 = sphi 0, %s267
      %s284 = sphi 0, %s268
      %s292 = sphi 0, %s294
      %s295 = sphi 0, %s292
      %s296 = sphi 0, %s295
      %s312 = sphi 0, %s296
    $region4: #{forward.1} parent=1 // loop_header_branch
      %22 = sbr.rel (%p20) target = $region8
    $region5: #{forward.1} parent=1 // loop_body
      %s24 = ssub.s32 %s19, 1
      %s25 = ssub.s32 %s19, 2
      %s32 = sadd.s32 1, %s27
      %p33 = scmp.ge.s32.totalorder %s32, 2
      %s34 = scalar_select %p33, 0, %s32
      %s35 = sadd.s32 1, %s26
      %s36 = scalar_select %p33, %s35, %s26
      %p37 = scmp.ge.s32.totalorder %s36, 2
      %s38 = scalar_select %p37, 0, %s36
      %s39 = ssub.s32 %s27, %s34
      %p40 = scmp.eq.s32.totalorder %s39, 0
      %s42 = sadd.s32 %s41, 1
      %s43 = scalar_select %p40, %s41, %s42
      %p46 = pneg %p40
      %p47 = scmp.eq.s32.totalorder %s19, 3
      %p48 = por %p46, %p47
      %p49 = scmp.ne.s32.totalorder %s41, %s44
      %p50 = scmp.eq.s32.totalorder %s19, 0
      %p51 = por %p49, %p50
      %p52 = scmp.ne.s32.totalorder %s41, %s44
      %p53 = scmp.eq.s32.totalorder %s24, 3
      %p54 = por %p52, %p53
      %p55 = scmp.ne.s32.totalorder %s44, %s45
      %p56 = scmp.eq.s32.totalorder %s24, 0
      %p57 = por %p55, %p56
      %p58 = scmp.ne.s32.totalorder %s44, %s45
      %p59 = scmp.eq.s32.totalorder %s25, 3
      %p60 = por %p58, %p59
      %p62 = scmp.ne.s32.totalorder %s45, %s61
      %p63 = scmp.eq.s32.totalorder %s25, 0
      %p64 = por %p62, %p63
      %s65 = ssub.s32 %s26, %s38
      %s66 = ssub.s32 %s27, %s34
      %s67 = sor.u32 %s65, %s66
      %p68 = scmp.eq.s32.totalorder %s67, 0
      %s70 = sadd.s32 %s69, 1
      %s71 = scalar_select %p68, %s69, %s70
      %p74 = pneg %p68
      %p75 = scmp.eq.s32.totalorder %s19, 3
      %p76 = por %p74, %p75
      %p77 = scmp.ne.s32.totalorder %s69, %s72
      %p78 = scmp.eq.s32.totalorder %s19, 0
      %p79 = por %p77, %p78
      %p80 = scmp.ne.s32.totalorder %s69, %s72
      %p81 = scmp.eq.s32.totalorder %s24, 3
      %p82 = por %p80, %p81
      %p83 = scmp.ne.s32.totalorder %s72, %s73
      %p84 = scmp.eq.s32.totalorder %s24, 0
      %p85 = por %p83, %p84
      %p86 = scmp.ne.s32.totalorder %s72, %s73
      %p87 = scmp.eq.s32.totalorder %s25, 3
      %p88 = por %p86, %p87
      %p90 = scmp.ne.s32.totalorder %s73, %s89
      %p91 = scmp.eq.s32.totalorder %s25, 0
      %p92 = por %p90, %p91
      %s93 = ssub.s32 %s26, %s38
      %s94 = ssub.s32 %s27, %s34
      %s95 = sor.u32 %s93, %s94
      %p96 = scmp.eq.s32.totalorder %s95, 0
      %s98 = sadd.s32 %s97, 1
      %s99 = scalar_select %p96, %s97, %s98
      %p102 = pneg %p96
      %p103 = scmp.eq.s32.totalorder %s19, 3
      %p104 = por %p102, %p103
      %p105 = scmp.ne.s32.totalorder %s97, %s100
      %p106 = scmp.eq.s32.totalorder %s19, 0
      %p107 = por %p105, %p106
      %p108 = scmp.ne.s32.totalorder %s97, %s100
      %p109 = scmp.eq.s32.totalorder %s24, 3
      %p110 = por %p108, %p109
      %p111 = scmp.ne.s32.totalorder %s100, %s101
      %p112 = scmp.eq.s32.totalorder %s24, 0
      %p113 = por %p111, %p112
      %p114 = scmp.ne.s32.totalorder %s100, %s101
      %p115 = scmp.eq.s32.totalorder %s25, 3
      %p116 = por %p114, %p115
      %p118 = scmp.ne.s32.totalorder %s101, %s117
      %p119 = scmp.eq.s32.totalorder %s25, 0
      %p120 = por %p118, %p119
      %s122 = sadd.s32 %s121, 1
      %p125 = scmp.eq.s32.totalorder %s19, 3
      %p126 = scmp.ne.s32.totalorder %s121, %s123
      %p127 = scmp.eq.s32.totalorder %s19, 0
      %p128 = por %p126, %p127
      %p129 = scmp.ne.s32.totalorder %s121, %s123
      %p130 = scmp.eq.s32.totalorder %s24, 3
      %p131 = por %p129, %p130
      %p132 = scmp.ne.s32.totalorder %s123, %s124
      %p133 = scmp.eq.s32.totalorder %s24, 0
      %p134 = por %p132, %p133
      %p135 = scmp.ne.s32.totalorder %s123, %s124
      %p136 = scmp.eq.s32.totalorder %s25, 3
      %p137 = por %p135, %p136
      %p139 = scmp.ne.s32.totalorder %s124, %s138
      %p140 = scmp.eq.s32.totalorder %s25, 0
      %p141 = por %p139, %p140
      %s143 = sadd.s32 %s142, 1
      %p146 = scmp.eq.s32.totalorder %s19, 3
      %p147 = scmp.ne.s32.totalorder %s142, %s144
      %p148 = scmp.eq.s32.totalorder %s19, 0
      %p149 = por %p147, %p148
      %p150 = scmp.ne.s32.totalorder %s142, %s144
      %p151 = scmp.eq.s32.totalorder %s24, 3
      %p152 = por %p150, %p151
      %p153 = scmp.ne.s32.totalorder %s144, %s145
      %p154 = scmp.eq.s32.totalorder %s24, 0
      %p155 = por %p153, %p154
      %p156 = scmp.ne.s32.totalorder %s144, %s145
      %p157 = scmp.eq.s32.totalorder %s25, 3
      %p158 = por %p156, %p157
      %p160 = scmp.ne.s32.totalorder %s145, %s159
      %p161 = scmp.eq.s32.totalorder %s25, 0
      %p162 = por %p160, %p161
      %s164 = sadd.s32 %s163, 1
      %p167 = scmp.eq.s32.totalorder %s19, 3
      %p168 = scmp.ne.s32.totalorder %s163, %s165
      %p169 = scmp.eq.s32.totalorder %s19, 0
      %p170 = por %p168, %p169
      %p171 = scmp.ne.s32.totalorder %s163, %s165
      %p172 = scmp.eq.s32.totalorder %s24, 3
      %p173 = por %p171, %p172
      %p174 = scmp.ne.s32.totalorder %s165, %s166
      %p175 = scmp.eq.s32.totalorder %s24, 0
      %p176 = por %p174, %p175
      %p177 = scmp.ne.s32.totalorder %s165, %s166
      %p178 = scmp.eq.s32.totalorder %s25, 3
      %p179 = por %p177, %p178
      %p181 = scmp.ne.s32.totalorder %s166, %s180
      %p182 = scmp.eq.s32.totalorder %s25, 0
      %p183 = por %p181, %p182
      %s184 = ssub.s32 %s26, %s38
      %p185 = scmp.eq.s32.totalorder %s184, 0
      %s187 = sadd.s32 %s186, 1
      %s188 = scalar_select %p185, %s186, %s187
      %p191 = pneg %p185
      %p192 = scmp.eq.s32.totalorder %s19, 3
      %p193 = por %p191, %p192
      %p194 = scmp.ne.s32.totalorder %s186, %s189
      %p195 = scmp.eq.s32.totalorder %s19, 0
      %p196 = por %p194, %p195
      %p197 = scmp.ne.s32.totalorder %s186, %s189
      %p198 = scmp.eq.s32.totalorder %s24, 3
      %p199 = por %p197, %p198
      %p200 = scmp.ne.s32.totalorder %s189, %s190
      %p201 = scmp.eq.s32.totalorder %s24, 0
      %p202 = por %p200, %p201
      %p203 = scmp.ne.s32.totalorder %s189, %s190
      %p204 = scmp.eq.s32.totalorder %s25, 3
      %p205 = por %p203, %p204
      %p207 = scmp.ne.s32.totalorder %s190, %s206
      %p208 = scmp.eq.s32.totalorder %s25, 0
      %p209 = por %p207, %p208
      %s210 = ssub.s32 %s26, %s38
      %p211 = scmp.eq.s32.totalorder %s210, 0
      %s213 = sadd.s32 %s212, 1
      %s214 = scalar_select %p211, %s212, %s213
      %p217 = pneg %p211
      %p218 = scmp.eq.s32.totalorder %s19, 3
      %p219 = por %p217, %p218
      %p220 = scmp.ne.s32.totalorder %s212, %s215
      %p221 = scmp.eq.s32.totalorder %s19, 0
      %p222 = por %p220, %p221
      %p223 = scmp.ne.s32.totalorder %s212, %s215
      %p224 = scmp.eq.s32.totalorder %s24, 3
      %p225 = por %p223, %p224
      %p226 = scmp.ne.s32.totalorder %s215, %s216
      %p227 = scmp.eq.s32.totalorder %s24, 0
      %p228 = por %p226, %p227
      %p229 = scmp.ne.s32.totalorder %s215, %s216
      %p230 = scmp.eq.s32.totalorder %s25, 3
      %p231 = por %p229, %p230
      %p233 = scmp.ne.s32.totalorder %s216, %s232
      %p234 = scmp.eq.s32.totalorder %s25, 0
      %p235 = por %p233, %p234
      %s236 = ssub.s32 %s26, %s38
      %p237 = scmp.eq.s32.totalorder %s236, 0
      %s239 = sadd.s32 %s238, 1
      %s240 = scalar_select %p237, %s238, %s239
      %p243 = pneg %p237
      %p244 = scmp.eq.s32.totalorder %s19, 3
      %p245 = por %p243, %p244
      %p246 = scmp.ne.s32.totalorder %s238, %s241
      %p247 = scmp.eq.s32.totalorder %s19, 0
      %p248 = por %p246, %p247
      %p249 = scmp.ne.s32.totalorder %s238, %s241
      %p250 = scmp.eq.s32.totalorder %s24, 3
      %p251 = por %p249, %p250
      %p252 = scmp.ne.s32.totalorder %s241, %s242
      %p253 = scmp.eq.s32.totalorder %s24, 0
      %p254 = por %p252, %p253
      %p255 = scmp.ne.s32.totalorder %s241, %s242
      %p256 = scmp.eq.s32.totalorder %s25, 3
      %p257 = por %p255, %p256
      %p259 = scmp.ne.s32.totalorder %s242, %s258
      %p260 = scmp.eq.s32.totalorder %s25, 0
      %p261 = por %p259, %p260
      %s262 = ssub.s32 %s26, %s38
      %p263 = scmp.eq.s32.totalorder %s262, 0
      %s265 = sadd.s32 %s264, 1
      %s266 = scalar_select %p263, %s264, %s265
      %p269 = pneg %p263
      %p270 = scmp.eq.s32.totalorder %s19, 3
      %p271 = por %p269, %p270
      %p272 = scmp.ne.s32.totalorder %s264, %s267
      %p273 = scmp.eq.s32.totalorder %s19, 0
      %p274 = por %p272, %p273
      %p275 = scmp.ne.s32.totalorder %s264, %s267
      %p276 = scmp.eq.s32.totalorder %s24, 3
      %p277 = por %p275, %p276
      %p278 = scmp.ne.s32.totalorder %s267, %s268
      %p279 = scmp.eq.s32.totalorder %s24, 0
      %p280 = por %p278, %p279
      %p281 = scmp.ne.s32.totalorder %s267, %s268
      %p282 = scmp.eq.s32.totalorder %s25, 3
      %p283 = por %p281, %p282
      %p285 = scmp.ne.s32.totalorder %s268, %s284
      %p286 = scmp.eq.s32.totalorder %s25, 0
      %p287 = por %p285, %p286
      %s288 = ssub.s32 %s26, %s38
      %s289 = ssub.s32 %s27, %s34
      %s290 = sor.u32 %s288, %s289
      %p291 = scmp.eq.s32.totalorder %s290, 0
      %s293 = sadd.s32 %s292, 1
      %s294 = scalar_select %p291, %s292, %s293
      %p297 = pneg %p291
      %p298 = scmp.eq.s32.totalorder %s19, 3
      %p299 = por %p297, %p298
      %p300 = scmp.ne.s32.totalorder %s292, %s295
      %p301 = scmp.eq.s32.totalorder %s19, 0
      %p302 = por %p300, %p301
      %p303 = scmp.ne.s32.totalorder %s292, %s295
      %p304 = scmp.eq.s32.totalorder %s24, 3
      %p305 = por %p303, %p304
      %p306 = scmp.ne.s32.totalorder %s295, %s296
      %p307 = scmp.eq.s32.totalorder %s24, 0
      %p308 = por %p306, %p307
      %p309 = scmp.ne.s32.totalorder %s295, %s296
      %p310 = scmp.eq.s32.totalorder %s25, 3
      %p311 = por %p309, %p310
      %p313 = scmp.ne.s32.totalorder %s296, %s312
      %p314 = scmp.eq.s32.totalorder %s25, 0
      %p315 = por %p313, %p314
      %p316 = scmp.le.s32.totalorder 1, %s19
      %p317 = scmp.lt.s32.totalorder %s19, 5
      %p318 = pnand %p316, %p317
      %p319 = pneg %p318
      // Predicated region
      $region9: #{forward.1} parent=5 // pred_check
        _
      $region10: #{forward.1} parent=5 // pred_check_branch
        %321 = sbr.rel (%p318) target = $region12
      $region11: #{forward.1} parent=5 // pred_region
        %s322 = ssub.s32 %s19, 1
        // Predicated region
        $region13: #{forward.1} parent=11 // pred_check
          %p323 = pneg %p134
        $region14: #{forward.1} parent=11 // pred_check_branch
          %325 = sbr.rel (%p323) target = $region16
        $region15: #{forward.1} parent=11 // pred_region
          _
        $region16: #{forward.1} parent=11 // pred_fallthru
          _
        // Predicated region
        $region17: #{forward.1} parent=11 // pred_check
          %p326 = pneg %p155
        $region18: #{forward.1} parent=11 // pred_check_branch
          %328 = sbr.rel (%p326) target = $region20
        $region19: #{forward.1} parent=11 // pred_region
          _
        $region20: #{forward.1} parent=11 // pred_fallthru
          _
        // Predicated region
        $region21: #{forward.1} parent=11 // pred_check
          %p329 = pneg %p176
        $region22: #{forward.1} parent=11 // pred_check_branch
          %331 = sbr.rel (%p329) target = $region24
        $region23: #{forward.1} parent=11 // pred_region
          _
        $region24: #{forward.1} parent=11 // pred_fallthru
          _
      $region12: #{forward.1} parent=5 // pred_fallthru
        _
      %p332 = scmp.lt.s32.totalorder %s19, 4
      // Predicated region
      $region25: #{forward.1} parent=5 // pred_check
        %p333 = pneg %p332
      $region26: #{forward.1} parent=5 // pred_check_branch
        %335 = sbr.rel (%p333) target = $region28
      $region27: #{forward.1} parent=5 // pred_region
        // Predicated region
        $region29: #{forward.1} parent=27 // pred_check
          %p336 = pneg %p51
        $region30: #{forward.1} parent=27 // pred_check_branch
          %338 = sbr.rel (%p336) target = $region32
        $region31: #{forward.1} parent=27 // pred_region
          %p339 = scmp.lt.s32.totalorder %s27, 1
          %s340 = scalar_select %p339, %s27, 1
          %s341 = smul.addr %s340, 2
          %s342 = smul.addr %s341, 8
          %s343 = scalar_lea.vmem %s0, %s342
        $region32: #{forward.1} parent=27 // pred_fallthru
          _
        // Predicated region
        $region33: #{forward.1} parent=27 // pred_check
          %p344 = pneg %p79
        $region34: #{forward.1} parent=27 // pred_check_branch
          %346 = sbr.rel (%p344) target = $region36
        $region35: #{forward.1} parent=27 // pred_region
          %p347 = scmp.lt.s32.totalorder %s26, 1
          %s348 = scalar_select %p347, %s26, 1
          %p349 = scmp.lt.s32.totalorder %s27, 1
          %s350 = scalar_select %p349, %s27, 1
          %s351 = smul.addr %s348, 2
          %s352 = sadd.s32 %s350, %s351
          %s353 = smul.addr %s352, 8
          %s354 = scalar_lea.vmem %s1, %s353
        $region36: #{forward.1} parent=27 // pred_fallthru
          _
        // Predicated region
        $region37: #{forward.1} parent=27 // pred_check
          %p355 = pneg %p107
        $region38: #{forward.1} parent=27 // pred_check_branch
          %357 = sbr.rel (%p355) target = $region40
        $region39: #{forward.1} parent=27 // pred_region
          %p358 = scmp.lt.s32.totalorder %s26, 1
          %s359 = scalar_select %p358, %s26, 1
          %p360 = scmp.lt.s32.totalorder %s27, 1
          %s361 = scalar_select %p360, %s27, 1
          %s362 = smul.addr %s359, 2
          %s363 = sadd.s32 %s361, %s362
          %s364 = scalar_lea.vmem %s2, %s363
        $region40: #{forward.1} parent=27 // pred_fallthru
          _
        // Predicated region
        $region41: #{forward.1} parent=27 // pred_check
          %p365 = pneg %p196
        $region42: #{forward.1} parent=27 // pred_check_branch
          %367 = sbr.rel (%p365) target = $region44
        $region43: #{forward.1} parent=27 // pred_region
          %p368 = scmp.lt.s32.totalorder %s26, 1
          %s369 = scalar_select %p368, %s26, 1
          %s370 = smul.addr %s369, 32
          %s371 = smul.addr %s370, 4
          %s372 = scalar_lea.vmem %s6, %s371
        $region44: #{forward.1} parent=27 // pred_fallthru
          _
        // Predicated region
        $region45: #{forward.1} parent=27 // pred_check
          %p373 = pneg %p222
        $region46: #{forward.1} parent=27 // pred_check_branch
          %375 = sbr.rel (%p373) target = $region48
        $region47: #{forward.1} parent=27 // pred_region
          %s376 = sand.u32 %s212, 1
          %s377 = scalar_lea.sflag [#allocation3], %s376
          %s378 = sand.u32 %s212, 1
          %s379 = smul.addr %s378, 64
          %s380 = scalar_lea.vmem [#allocation2], %s379
          %382 = vsyncadd %s377, 0
          %s383 = smul.addr %s26, 16
          %s384 = smul.addr %s383, 4
          %s385 = scalar_lea.hbm %s7, %s384
          %s386 = sshll.u32 %s385, 4
          %s387 = int_to_ptr.hbm [resolvable:$true] %s386
          %s388 = sshll.u32 %s380, 4
          %s389 = int_to_ptr.vmem [resolvable:$true] %s388
          %394 = dma.hbm_to_vmem [thread:$0]  %s387, 1024, %s389, %s377, 64, 64, 4
        $region48: #{forward.1} parent=27 // pred_fallthru
          _
        // Predicated region
        $region49: #{forward.1} parent=27 // pred_check
          %p395 = pneg %p248
        $region50: #{forward.1} parent=27 // pred_check_branch
          %397 = sbr.rel (%p395) target = $region52
        $region51: #{forward.1} parent=27 // pred_region
          %p398 = scmp.lt.s32.totalorder %s26, 1
          %s399 = scalar_select %p398, %s26, 1
          %s400 = smul.addr %s399, 14
          %s401 = scalar_lea.vmem %s8, %s400
        $region52: #{forward.1} parent=27 // pred_fallthru
          _
        // Predicated region
        $region53: #{forward.1} parent=27 // pred_check
          %p402 = pneg %p274
        $region54: #{forward.1} parent=27 // pred_check_branch
          %404 = sbr.rel (%p402) target = $region56
        $region55: #{forward.1} parent=27 // pred_region
          %p405 = scmp.lt.s32.totalorder %s26, 1
          %s406 = scalar_select %p405, %s26, 1
          %s407 = smul.addr %s406, 4
          %s408 = smul.addr %s407, 4
          %s409 = scalar_lea.vmem %s9, %s408
        $region56: #{forward.1} parent=27 // pred_fallthru
          _
      $region28: #{forward.1} parent=5 // pred_fallthru
        _
      %p410 = scmp.le.s32.totalorder 1, %s19
      %p411 = scmp.lt.s32.totalorder %s19, 5
      %p412 = pnand %p410, %p411
      %p413 = pneg %p412
      // Predicated region
      $region57: #{forward.1} parent=5 // pred_check
        _
      $region58: #{forward.1} parent=5 // pred_check_branch
        %415 = sbr.rel (%p412) target = $region60
      $region59: #{forward.1} parent=5 // pred_region
        %s416 = ssub.s32 %s19, 1
        %s417 = sand.u32 %s215, 1
        %s418 = scalar_lea.sflag [#allocation3], %s417
        %s419 = sand.u32 %s215, 1
        %s420 = smul.addr %s419, 64
        %s421 = scalar_lea.vmem [#allocation2], %s420
        // Predicated region
        $region61: #{forward.1} parent=59 // pred_check
          %p422 = pneg %p228
        $region62: #{forward.1} parent=59 // pred_check_branch
          %424 = sbr.rel (%p422) target = $region64
        $region63: #{forward.1} parent=59 // pred_region
          %426 = dma.done %s418, 1024
        $region64: #{forward.1} parent=59 // pred_fallthru
          _
        %p427 = scmp.lt.s32.totalorder %s29, 1
        %s428 = scalar_select %p427, %s29, 1
        %s429 = smul.addr %s428, 2
        %s430 = smul.addr %s429, 8
        %s431 = scalar_lea.vmem %s0, %s430
        %p432 = pneg %p57
        %p433 = pneg %p54
        %p434 = scmp.lt.s32.totalorder %s28, 1
        %s435 = scalar_select %p434, %s28, 1
        %p436 = scmp.lt.s32.totalorder %s29, 1
        %s437 = scalar_select %p436, %s29, 1
        %s438 = smul.addr %s435, 2
        %s439 = sadd.s32 %s437, %s438
        %s440 = smul.addr %s439, 8
        %s441 = scalar_lea.vmem %s1, %s440
        %p442 = pneg %p85
        %p443 = pneg %p82
        %p444 = scmp.lt.s32.totalorder %s28, 1
        %s445 = scalar_select %p444, %s28, 1
        %p446 = scmp.lt.s32.totalorder %s29, 1
        %s447 = scalar_select %p446, %s29, 1
        %s448 = smul.addr %s445, 2
        %s449 = sadd.s32 %s447, %s448
        %s450 = scalar_lea.vmem %s2, %s449
        %p451 = pneg %p113
        %p452 = pneg %p110
        %p453 = pneg %p134
        %p454 = pneg %p131
        %p455 = pneg %p155
        %p456 = pneg %p152
        %p457 = pneg %p176
        %p458 = pneg %p173
        %p459 = scmp.lt.s32.totalorder %s28, 1
        %s460 = scalar_select %p459, %s28, 1
        %s461 = smul.addr %s460, 32
        %s462 = smul.addr %s461, 4
        %s463 = scalar_lea.vmem %s6, %s462
        %p464 = pneg %p202
        %p465 = pneg %p199
        %s466 = sand.u32 %s215, 1
        %s467 = scalar_lea.sflag [#allocation3], %s466
        %s468 = sand.u32 %s215, 1
        %s469 = smul.addr %s468, 64
        %s470 = scalar_lea.vmem [#allocation2], %s469
        %p471 = pneg %p228
        %p472 = pneg %p225
        %p473 = scmp.lt.s32.totalorder %s28, 1
        %s474 = scalar_select %p473, %s28, 1
        %s475 = smul.addr %s474, 14
        %s476 = scalar_lea.vmem %s8, %s475
        %p477 = pneg %p254
        %p478 = pneg %p251
        %p479 = scmp.lt.s32.totalorder %s28, 1
        %s480 = scalar_select %p479, %s28, 1
        %s481 = smul.addr %s480, 4
        %s482 = smul.addr %s481, 4
        %s483 = scalar_lea.vmem %s9, %s482
        %p484 = pneg %p280
        %p485 = pneg %p277
        %p486 = pneg %p308
        %p487 = pneg %p305
        %p488 = scmp.lt.s32.totalorder %s28, 1
        %s489 = scalar_select %p488, %s28, 1
        %p490 = scmp.lt.s32.totalorder %s29, 1
        %s491 = scalar_select %p490, %s29, 1
        %s492 = smul.addr %s489, 2
        %s493 = sadd.s32 %s491, %s492
        %s494 = scalar_lea.vmem %s10, %s493
        %p495 = scmp.lt.s32.totalorder %s29, 1
        %s496 = scalar_select %p495, %s29, 1
        %s497 = smul.addr %s496, 2
        %s498 = smul.addr %s497, 8
        %s499 = scalar_lea.vmem %s0, %s498
        %p500 = scmp.lt.s32.totalorder %s28, 1
        %s501 = scalar_select %p500, %s28, 1
        %p502 = scmp.lt.s32.totalorder %s29, 1
        %s503 = scalar_select %p502, %s29, 1
        %s504 = smul.addr %s501, 2
        %s505 = sadd.s32 %s503, %s504
        %s506 = smul.addr %s505, 8
        %s507 = scalar_lea.vmem %s1, %s506
        %p508 = scmp.lt.s32.totalorder %s28, 1
        %s509 = scalar_select %p508, %s28, 1
        %p510 = scmp.lt.s32.totalorder %s29, 1
        %s511 = scalar_select %p510, %s29, 1
        %s512 = smul.addr %s509, 2
        %s513 = sadd.s32 %s511, %s512
        %s514 = scalar_lea.vmem %s2, %s513
        %p515 = scmp.lt.s32.totalorder %s28, 1
        %s516 = scalar_select %p515, %s28, 1
        %s517 = smul.addr %s516, 32
        %s518 = smul.addr %s517, 4
        %s519 = scalar_lea.vmem %s6, %s518
        %p520 = scmp.lt.s32.totalorder %s28, 1
        %s521 = scalar_select %p520, %s28, 1
        %s522 = smul.addr %s521, 14
        %s523 = scalar_lea.vmem %s8, %s522
        %p524 = scmp.lt.s32.totalorder %s28, 1
        %s525 = scalar_select %p524, %s28, 1
        %s526 = smul.addr %s525, 4
        %s527 = smul.addr %s526, 4
        %s528 = scalar_lea.vmem %s9, %s527
        %p529 = scmp.lt.s32.totalorder %s28, 1
        %s530 = scalar_select %p529, %s28, 1
        %p531 = scmp.lt.s32.totalorder %s29, 1
        %s532 = scalar_select %p531, %s29, 1
        %s533 = smul.addr %s530, 2
        %s534 = sadd.s32 %s532, %s533
        %s535 = scalar_lea.vmem %s10, %s534
        %v537 = vld [vmem:[%s499] sm:$0xff]
        %v538 = vld [vmem:[%s499 + $0x8] sm:$0xff]
        %v539 = vld [vmem:[%s5] sm:$0x1]
        %v540 = vld [vmem:[%s3] sm:$0x3]
        %v541 = vpack.c.bf16 %v538, %v537
        %v543 = vperm.slane %v539, 0
        %vm545 = vcmask 23552
        %v547 = vsel %vm545, %v541, 0
        %vm549 = vcmask 1040384
        %vm550 = vcmask 1041408
        %v551 = vsel %vm549, 4294967295, 65535
        %v552 = vsel %vm550, %v551, 0
        %v554 = vand.u32 %v540, %v552
        %556 = vmatpush.bf16.msra.mxu0 0
        %557 = vmatpush.bf16.msra.mxu0 0
        %558 = vmatpush.bf16.msra.mxu0 0
        %559 = vmatpush.bf16.msra.mxu0 0
        %560 = vmatpush.bf16.msra.mxu0 0
        %561 = vmatpush.bf16.msra.mxu0 0
        %562 = vmatpush.bf16.msra.mxu0 0
        %563 = vmatpush.bf16.msra.mxu0 %v554
        %564 = vmatmul.bf16.gmra.mxu0 %v547
        %v565 = vpop.f32.mrf.mxu0
        %v566 = vadd.f32 %v543, %v565
        %v567 = vpop.f32.mrf.mxu0
        %v568 = vadd.f32 %v543, %v567
        %569 = vdwg.mxu0
        %v570 = vmax.f32 %v566, 0.0
        %v571 = vmax.f32 %v568, 0.0
        %v572 = vld [vmem:[%s4] sm:$0xf]
        %v573 = vld [vmem:[%s4 + $0x4] sm:$0xf]
        %v574 = vld [vmem:[%s4 + $0x8] sm:$0xf]
        %v575 = vld [vmem:[%s4 + $0xc] sm:$0xf]
        %v576 = vld [vmem:[%s4 + $0x10] sm:$0xf]
        %v577 = vld [vmem:[%s4 + $0x14] sm:$0xf]
        %v578 = vpack.c.bf16 %v571, %v570
        %v585 = vunpack.c.l.b16 %v572
        %v586 = vunpack.c.l.b16 %v573
        %v587 = vunpack.c.l.b16 %v574
        %v588 = vunpack.c.l.b16 %v575
        %v589 = vunpack.c.l.b16 %v576
        %v590 = vunpack.c.l.b16 %v577
        %v591 = vpack.c.b16 %v586, %v585
        %v592 = vpack.c.b16 %v588, %v587
        %v593 = vpack.c.b16 %v590, %v589
        %597 = vrot.lane.b32.xlu0 %v543, 80
        %v598 = vpop.permute.xlu0 %597
        %vm600 = vcmask 392192
        %v602 = vsel %vm600, %v578, 0
        %604 = vmatpush.bf16.msra.mxu0 0
        %605 = vmatpush.bf16.msra.mxu0 0
        %606 = vmatpush.bf16.msra.mxu0 0
        %607 = vmatpush.bf16.msra.mxu0 0
        %608 = vmatpush.bf16.msra.mxu0 0
        %609 = vmatpush.bf16.msra.mxu0 %v593
        %610 = vmatpush.bf16.msra.mxu0 %v592
        %611 = vmatpush.bf16.msra.mxu0 %v591
        %612 = vmatmul.bf16.gmra.mxu0 %v602
        %v613 = vpop.f32.mrf.mxu0
        %v614 = vadd.f32 %v598, %v613
        %v615 = vpop.f32.mrf.mxu0
        %v616 = vadd.f32 %v598, %v615
        %617 = vdwg.mxu0
        %v618 = vld [vmem:[%s507] sm:$0xff]
        %v619 = vld [vmem:[%s514] sm:$0x1]
        %v621 = vperm.slane %v619, 0
        %v623 = vld [vmem:[%s519] sm:$0xf]
        %v624 = vld [vmem:[%s519 + $0x10] sm:$0xf]
        %v625 = vld [vmem:[%s519 + $0x20] sm:$0xf]
        %v626 = vld [vmem:[%s519 + $0x30] sm:$0xf]
        %v627 = vpack.c.bf16 %v618, %v618
        %v628 = vld [vmem:[%s523] sm:$0x1]
        %v630 = vperm.slane %v628, 0
        %v636 = vunpack.c.l.b16 %v623
        %v637 = vunpack.c.l.b16 %v624
        %v638 = vunpack.c.l.b16 %v625
        %v639 = vunpack.c.l.b16 %v626
        %v640 = vpack.c.b16 %v637, %v636
        %v641 = vpack.c.b16 %v639, %v638
        %vm644 = vcmask 261120
        %v646 = vsel %vm644, %v627, 0
        %648 = vmatpush.bf16.msra.mxu0 0
        %649 = vmatpush.bf16.msra.mxu0 0
        %650 = vmatpush.bf16.msra.mxu0 0
        %651 = vmatpush.bf16.msra.mxu0 0
        %652 = vmatpush.bf16.msra.mxu0 0
        %653 = vmatpush.bf16.msra.mxu0 0
        %654 = vmatpush.bf16.msra.mxu0 %v641
        %655 = vmatpush.bf16.msra.mxu0 %v640
        %656 = vmatmul.bf16.gmra.mxu0 %v646
        %v657 = vpop.f32.mrf.mxu0
        %v658 = vadd.f32 %v630, %v657
        %v659 = vpop.f32.mrf.mxu0
        %660 = vdwg.mxu0
        %661 = vrot.lane.b32.xlu0 %v640, 96
        %v662 = vpop.permute.xlu0 %661
        %663 = vrot.lane.b32.xlu0 %v641, 96
        %v664 = vpop.permute.xlu0 %663
        %667 = vrot.lane.b32.xlu0 %v630, 96
        %v668 = vpop.permute.xlu0 %667
        %670 = vmatpush.bf16.msra.mxu0 0
        %671 = vmatpush.bf16.msra.mxu0 0
        %672 = vmatpush.bf16.msra.mxu0 0
        %673 = vmatpush.bf16.msra.mxu0 0
        %674 = vmatpush.bf16.msra.mxu0 0
        %675 = vmatpush.bf16.msra.mxu0 0
        %676 = vmatpush.bf16.msra.mxu0 %v664
        %677 = vmatpush.bf16.msra.mxu0 %v662
        %678 = vmatmul.bf16.gmra.mxu0 %v646
        %v679 = vpop.f32.mrf.mxu0
        %v680 = vadd.f32 %v668, %v679
        %v681 = vpop.f32.mrf.mxu0
        %682 = vdwg.mxu0
        %683 = vrot.lane.b32.xlu0 %v640, 64
        %v684 = vpop.permute.xlu0 %683
        %685 = vrot.lane.b32.xlu0 %v641, 64
        %v686 = vpop.permute.xlu0 %685
        %689 = vrot.lane.b32.xlu0 %v630, 64
        %v690 = vpop.permute.xlu0 %689
        %692 = vmatpush.bf16.msra.mxu0 0
        %693 = vmatpush.bf16.msra.mxu0 0
        %694 = vmatpush.bf16.msra.mxu0 0
        %695 = vmatpush.bf16.msra.mxu0 0
        %696 = vmatpush.bf16.msra.mxu0 0
        %697 = vmatpush.bf16.msra.mxu0 0
        %698 = vmatpush.bf16.msra.mxu0 %v686
        %699 = vmatpush.bf16.msra.mxu0 %v684
        %700 = vmatmul.bf16.gmra.mxu0 %v646
        %v701 = vpop.f32.mrf.mxu0
        %v702 = vadd.f32 %v690, %v701
        %v703 = vpop.f32.mrf.mxu0
        %704 = vdwg.mxu0
        %v705 = vpack.c.bf16 %v658, %v658
        %v706 = vpack.c.bf16 %v680, %v680
        %vm707 = vcmask 64512
        %v709 = vsel %vm707, %v705, 0
        %v712 = vsel %vm707, %v706, 0
        %714 = vmatpush.bf16.xpose.msra.mxu0 0
        %715 = vmatpush.bf16.xpose.msra.mxu0 0
        %716 = vmatpush.bf16.xpose.msra.mxu0 0
        %717 = vmatpush.bf16.xpose.msra.mxu0 0
        %718 = vmatpush.bf16.xpose.msra.mxu0 0
        %719 = vmatpush.bf16.xpose.msra.mxu0 0
        %720 = vmatpush.bf16.xpose.msra.mxu0 0
        %721 = vmatpush.bf16.xpose.msra.mxu0 %v712
        %722 = vmatmul.bf16.gmra.mxu0 %v709
        %v723 = vpop.f32.mrf.mxu0
        %v724 = vadd.f32 0.0, %v723
        %v725 = vpop.f32.mrf.mxu0
        %726 = vdwg.mxu0
        %v727 = vmul.f32 %v724, 0.35355338
        %v728 = vadd.f32 %v727, %v621
        %v729 = vsel %vm707, %v728, -inf
        %730 = vmax.xlane.f32.xlu0 %v729
        %v731 = vpop.xlane.xlu0 %730
        %v732 = vsub.f32 %v728, %v731
        %v733 = vmul.f32 %v732, 1.442695
        %v734 = vpow.pop %v733
        %v735 = vsel %vm707, %v734, 0.0
        %736 = vadd.xlane.f32.xlu0 %v735
        %v737 = vpop.xlane.xlu0 %736
        %v738 = vrcp.pop %v737
        %v739 = vmul.f32 %v737, %v738
        %v740 = vsub.f32 1.0, %v739
        %v741 = vmul.f32 %v738, %v740
        %v742 = vadd.f32 %v738, %v741
        %vm743 = vweird.f32 %v737
        %vm744 = vweird.f32 %v738
        %vm745 = vmor %vm743, %vm744
        %v746 = vsel %vm745, %v738, %v742
        %v747 = vand.u32 2147483647, %v737
        %vm748 = vcmp.eq.f32.partialorder %v747, 8.507059e+37
        %v749 = vand.u32 %v737, 2147483648
        %v750 = vor.u32 1.1754944e-38, %v749
        %v751 = vsel %vm748, %v750, %v746
        %v752 = vmul.f32 %v734, %v751
        %v753 = vpack.c.bf16 %v752, %v752
        %v754 = vpack.c.bf16 %v702, %v702
        %v756 = vsel %vm707, %v753, 0
        %vm758 = vcmask 1043456
        %v760 = vsel %vm758, %v754, 0
        %762 = vmatpush.bf16.msra.mxu0 0
        %763 = vmatpush.bf16.msra.mxu0 0
        %764 = vmatpush.bf16.msra.mxu0 0
        %765 = vmatpush.bf16.msra.mxu0 0
        %766 = vmatpush.bf16.msra.mxu0 0
        %767 = vmatpush.bf16.msra.mxu0 0
        %768 = vmatpush.bf16.msra.mxu0 0
        %769 = vmatpush.bf16.msra.mxu0 %v760
        %770 = vmatmul.bf16.gmra.mxu0 %v756
        %v771 = vpop.f32.mrf.mxu0
        %v772 = vadd.f32 0.0, %v771
        %v773 = vpop.f32.mrf.mxu0
        %774 = vdwg.mxu0
        %v775 = vld [vmem:[%s519] sm:$0xf]
        %v776 = vpack.c.bf16 %v772, %v772
        %v777 = vld [vmem:[%s519 + $0x10] sm:$0xf]
        %v778 = vld [vmem:[%s519 + $0x20] sm:$0xf]
        %v779 = vld [vmem:[%s519 + $0x30] sm:$0xf]
        %v780 = vld [vmem:[%s523] sm:$0x1]
        %v782 = vperm.slane %v780, 0
        %v787 = vunpack.c.l.b16 %v775
        %v788 = vunpack.c.l.b16 %v777
        %v789 = vunpack.c.l.b16 %v778
        %v790 = vunpack.c.l.b16 %v779
        %v791 = vpack.c.b16 %v788, %v787
        %v792 = vpack.c.b16 %v790, %v789
        %793 = vrot.lane.b32.xlu0 %v791, 120
        %v794 = vpop.permute.xlu0 %793
        %795 = vrot.lane.b32.xlu0 %v792, 120
        %v796 = vpop.permute.xlu0 %795
        %799 = vrot.lane.b32.xlu0 %v782, 120
        %v800 = vpop.permute.xlu0 %799
        %802 = vmatpush.bf16.msra.mxu0 0
        %803 = vmatpush.bf16.msra.mxu0 0
        %804 = vmatpush.bf16.msra.mxu0 0
        %805 = vmatpush.bf16.msra.mxu0 0
        %806 = vmatpush.bf16.msra.mxu0 0
        %807 = vmatpush.bf16.msra.mxu0 0
        %808 = vmatpush.bf16.msra.mxu0 %v796
        %809 = vmatpush.bf16.msra.mxu0 %v794
        %810 = vmatmul.bf16.gmra.mxu0 %v646
        %v811 = vpop.f32.mrf.mxu0
        %v812 = vadd.f32 %v800, %v811
        %v813 = vpop.f32.mrf.mxu0
        %814 = vdwg.mxu0
        %815 = vrot.lane.b32.xlu0 %v791, 88
        %v816 = vpop.permute.xlu0 %815
        %817 = vrot.lane.b32.xlu0 %v792, 88
        %v818 = vpop.permute.xlu0 %817
        %821 = vrot.lane.b32.xlu0 %v782, 88
        %v822 = vpop.permute.xlu0 %821
        %824 = vmatpush.bf16.msra.mxu0 0
        %825 = vmatpush.bf16.msra.mxu0 0
        %826 = vmatpush.bf16.msra.mxu0 0
        %827 = vmatpush.bf16.msra.mxu0 0
        %828 = vmatpush.bf16.msra.mxu0 0
        %829 = vmatpush.bf16.msra.mxu0 0
        %830 = vmatpush.bf16.msra.mxu0 %v818
        %831 = vmatpush.bf16.msra.mxu0 %v816
        %832 = vmatmul.bf16.gmra.mxu0 %v646
        %v833 = vpop.f32.mrf.mxu0
        %v834 = vadd.f32 %v822, %v833
        %v835 = vpop.f32.mrf.mxu0
        %836 = vdwg.mxu0
        %837 = vrot.lane.b32.xlu0 %v791, 56
        %v838 = vpop.permute.xlu0 %837
        %839 = vrot.lane.b32.xlu0 %v792, 56
        %v840 = vpop.permute.xlu0 %839
        %843 = vrot.lane.b32.xlu0 %v782, 56
        %v844 = vpop.permute.xlu0 %843
        %846 = vmatpush.bf16.msra.mxu0 0
        %847 = vmatpush.bf16.msra.mxu0 0
        %848 = vmatpush.bf16.msra.mxu0 0
        %849 = vmatpush.bf16.msra.mxu0 0
        %850 = vmatpush.bf16.msra.mxu0 0
        %851 = vmatpush.bf16.msra.mxu0 0
        %852 = vmatpush.bf16.msra.mxu0 %v840
        %853 = vmatpush.bf16.msra.mxu0 %v838
        %854 = vmatmul.bf16.gmra.mxu0 %v646
        %v855 = vpop.f32.mrf.mxu0
        %v856 = vadd.f32 %v844, %v855
        %v857 = vpop.f32.mrf.mxu0
        %858 = vdwg.mxu0
        %v859 = vpack.c.bf16 %v812, %v812
        %v860 = vpack.c.bf16 %v834, %v834
        %v862 = vsel %vm707, %v859, 0
        %v865 = vsel %vm707, %v860, 0
        %867 = vmatpush.bf16.xpose.msra.mxu0 0
        %868 = vmatpush.bf16.xpose.msra.mxu0 0
        %869 = vmatpush.bf16.xpose.msra.mxu0 0
        %870 = vmatpush.bf16.xpose.msra.mxu0 0
        %871 = vmatpush.bf16.xpose.msra.mxu0 0
        %872 = vmatpush.bf16.xpose.msra.mxu0 0
        %873 = vmatpush.bf16.xpose.msra.mxu0 0
        %874 = vmatpush.bf16.xpose.msra.mxu0 %v865
        %875 = vmatmul.bf16.gmra.mxu0 %v862
        %v876 = vpop.f32.mrf.mxu0
        %v877 = vadd.f32 0.0, %v876
        %v878 = vpop.f32.mrf.mxu0
        %879 = vdwg.mxu0
        %v880 = vmul.f32 %v877, 0.35355338
        %v881 = vadd.f32 %v880, %v621
        %v882 = vsel %vm707, %v881, -inf
        %883 = vmax.xlane.f32.xlu0 %v882
        %v884 = vpop.xlane.xlu0 %883
        %v885 = vsub.f32 %v881, %v884
        %v886 = vmul.f32 %v885, 1.442695
        %v887 = vpow.pop %v886
        %v888 = vsel %vm707, %v887, 0.0
        %889 = vadd.xlane.f32.xlu0 %v888
        %v890 = vpop.xlane.xlu0 %889
        %v891 = vrcp.pop %v890
        %v892 = vmul.f32 %v890, %v891
        %v893 = vsub.f32 1.0, %v892
        %v894 = vmul.f32 %v891, %v893
        %v895 = vadd.f32 %v891, %v894
        %vm896 = vweird.f32 %v890
        %vm897 = vweird.f32 %v891
        %vm898 = vmor %vm896, %vm897
        %v899 = vsel %vm898, %v891, %v895
        %v900 = vand.u32 2147483647, %v890
        %vm901 = vcmp.eq.f32.partialorder %v900, 8.507059e+37
        %v902 = vand.u32 %v890, 2147483648
        %v903 = vor.u32 1.1754944e-38, %v902
        %v904 = vsel %vm901, %v903, %v899
        %v905 = vmul.f32 %v887, %v904
        %v906 = vpack.c.bf16 %v905, %v905
        %v907 = vpack.c.bf16 %v856, %v856
        %v909 = vsel %vm707, %v906, 0
        %v912 = vsel %vm758, %v907, 0
        %914 = vmatpush.bf16.msra.mxu0 0
        %915 = vmatpush.bf16.msra.mxu0 0
        %916 = vmatpush.bf16.msra.mxu0 0
        %917 = vmatpush.bf16.msra.mxu0 0
        %918 = vmatpush.bf16.msra.mxu0 0
        %919 = vmatpush.bf16.msra.mxu0 0
        %920 = vmatpush.bf16.msra.mxu0 0
        %921 = vmatpush.bf16.msra.mxu0 %v912
        %922 = vmatmul.bf16.gmra.mxu0 %v909
        %v923 = vpop.f32.mrf.mxu0
        %v924 = vadd.f32 0.0, %v923
        %v925 = vpop.f32.mrf.mxu0
        %926 = vdwg.mxu0
        %v927 = vld [vmem:[%s519 + $0x10] sm:$0xf]
        %v928 = vpack.c.bf16 %v924, %v924
        %v930 = vunpack.c.l.b16 %v927
        %v931 = vpack.c.b16 %v930, %v930
        %932 = vrot.lane.b32.xlu0 %v931, 32
        %v933 = vpop.permute.xlu0 %932
        %v935 = vsel %vm707, %v928, 0
        %v938 = vsel %vm758, %v933, 0
        %940 = vmatpush.bf16.msra.mxu0 0
        %941 = vmatpush.bf16.msra.mxu0 0
        %942 = vmatpush.bf16.msra.mxu0 0
        %943 = vmatpush.bf16.msra.mxu0 0
        %944 = vmatpush.bf16.msra.mxu0 0
        %945 = vmatpush.bf16.msra.mxu0 0
        %946 = vmatpush.bf16.msra.mxu0 0
        %947 = vmatpush.bf16.msra.mxu0 %v938
        %948 = vmatmul.bf16.gmra.mxu0 %v935
        %v949 = vpop.f32.mrf.mxu0
        %v950 = vadd.f32 0.0, %v949
        %v951 = vpop.f32.mrf.mxu0
        %952 = vdwg.mxu0
        %v953 = vpack.c.b16 %v787, %v787
        %954 = vrot.lane.b32.xlu0 %v953, 32
        %v955 = vpop.permute.xlu0 %954
        %v957 = vsel %vm707, %v776, 0
        %v960 = vsel %vm758, %v955, 0
        %962 = vmatpush.bf16.msra.mxu0 0
        %963 = vmatpush.bf16.msra.mxu0 0
        %964 = vmatpush.bf16.msra.mxu0 0
        %965 = vmatpush.bf16.msra.mxu0 0
        %966 = vmatpush.bf16.msra.mxu0 0
        %967 = vmatpush.bf16.msra.mxu0 0
        %968 = vmatpush.bf16.msra.mxu0 0
        %969 = vmatpush.bf16.msra.mxu0 %v960
        %970 = vmatmul.bf16.gmra.mxu0 %v957
        %v971 = vpop.f32.mrf.mxu0
        %v972 = vadd.f32 %v950, %v971
        %v973 = vpop.f32.mrf.mxu0
        %974 = vdwg.mxu0
        %v975 = vld [vmem:[%s519] sm:$0xf]
        %v976 = vld [vmem:[%s519 + $0x10] sm:$0xf]
        %v977 = vld [vmem:[%s519 + $0x20] sm:$0xf]
        %v978 = vld [vmem:[%s519 + $0x30] sm:$0xf]
        %v979 = vld [vmem:[%s523] sm:$0x1]
        %v981 = vperm.slane %v979, 0
        %v986 = vunpack.c.l.b16 %v975
        %v987 = vunpack.c.l.b16 %v976
        %v988 = vunpack.c.l.b16 %v977
        %v989 = vunpack.c.l.b16 %v978
        %v990 = vpack.c.b16 %v987, %v986
        %v991 = vpack.c.b16 %v989, %v988
        %992 = vrot.lane.b32.xlu0 %v990, 112
        %v993 = vpop.permute.xlu0 %992
        %994 = vrot.lane.b32.xlu0 %v991, 112
        %v995 = vpop.permute.xlu0 %994
        %998 = vrot.lane.b32.xlu0 %v981, 112
        %v999 = vpop.permute.xlu0 %998
        %1001 = vmatpush.bf16.msra.mxu0 0
        %1002 = vmatpush.bf16.msra.mxu0 0
        %1003 = vmatpush.bf16.msra.mxu0 0
        %1004 = vmatpush.bf16.msra.mxu0 0
        %1005 = vmatpush.bf16.msra.mxu0 0
        %1006 = vmatpush.bf16.msra.mxu0 0
        %1007 = vmatpush.bf16.msra.mxu0 %v995
        %1008 = vmatpush.bf16.msra.mxu0 %v993
        %1009 = vmatmul.bf16.gmra.mxu0 %v646
        %v1010 = vpop.f32.mrf.mxu0
        %v1011 = vadd.f32 %v999, %v1010
        %v1012 = vpop.f32.mrf.mxu0
        %1013 = vdwg.mxu0
        %1014 = vrot.lane.b32.xlu0 %v990, 80
        %v1015 = vpop.permute.xlu0 %1014
        %1016 = vrot.lane.b32.xlu0 %v991, 80
        %v1017 = vpop.permute.xlu0 %1016
        %1020 = vrot.lane.b32.xlu0 %v981, 80
        %v1021 = vpop.permute.xlu0 %1020
        %1023 = vmatpush.bf16.msra.mxu0 0
        %1024 = vmatpush.bf16.msra.mxu0 0
        %1025 = vmatpush.bf16.msra.mxu0 0
        %1026 = vmatpush.bf16.msra.mxu0 0
        %1027 = vmatpush.bf16.msra.mxu0 0
        %1028 = vmatpush.bf16.msra.mxu0 0
        %1029 = vmatpush.bf16.msra.mxu0 %v1017
        %1030 = vmatpush.bf16.msra.mxu0 %v1015
        %1031 = vmatmul.bf16.gmra.mxu0 %v646
        %v1032 = vpop.f32.mrf.mxu0
        %v1033 = vadd.f32 %v1021, %v1032
        %v1034 = vpop.f32.mrf.mxu0
        %1035 = vdwg.mxu0
        %1036 = vrot.lane.b32.xlu0 %v990, 48
        %v1037 = vpop.permute.xlu0 %1036
        %1038 = vrot.lane.b32.xlu0 %v991, 48
        %v1039 = vpop.permute.xlu0 %1038
        %1042 = vrot.lane.b32.xlu0 %v981, 48
        %v1043 = vpop.permute.xlu0 %1042
        %1045 = vmatpush.bf16.msra.mxu0 0
        %1046 = vmatpush.bf16.msra.mxu0 0
        %1047 = vmatpush.bf16.msra.mxu0 0
        %1048 = vmatpush.bf16.msra.mxu0 0
        %1049 = vmatpush.bf16.msra.mxu0 0
        %1050 = vmatpush.bf16.msra.mxu0 0
        %1051 = vmatpush.bf16.msra.mxu0 %v1039
        %1052 = vmatpush.bf16.msra.mxu0 %v1037
        %1053 = vmatmul.bf16.gmra.mxu0 %v646
        %v1054 = vpop.f32.mrf.mxu0
        %v1055 = vadd.f32 %v1043, %v1054
        %v1056 = vpop.f32.mrf.mxu0
        %1057 = vdwg.mxu0
        %v1058 = vpack.c.bf16 %v1011, %v1011
        %v1059 = vpack.c.bf16 %v1033, %v1033
        %v1061 = vsel %vm707, %v1058, 0
        %v1064 = vsel %vm707, %v1059, 0
        %1066 = vmatpush.bf16.xpose.msra.mxu0 0
        %1067 = vmatpush.bf16.xpose.msra.mxu0 0
        %1068 = vmatpush.bf16.xpose.msra.mxu0 0
        %1069 = vmatpush.bf16.xpose.msra.mxu0 0
        %1070 = vmatpush.bf16.xpose.msra.mxu0 0
        %1071 = vmatpush.bf16.xpose.msra.mxu0 0
        %1072 = vmatpush.bf16.xpose.msra.mxu0 0
        %1073 = vmatpush.bf16.xpose.msra.mxu0 %v1064
        %1074 = vmatmul.bf16.gmra.mxu0 %v1061
        %v1075 = vpop.f32.mrf.mxu0
        %v1076 = vadd.f32 0.0, %v1075
        %v1077 = vpop.f32.mrf.mxu0
        %1078 = vdwg.mxu0
        %v1079 = vmul.f32 %v1076, 0.35355338
        %v1080 = vadd.f32 %v1079, %v621
        %v1081 = vsel %vm707, %v1080, -inf
        %1082 = vmax.xlane.f32.xlu0 %v1081
        %v1083 = vpop.xlane.xlu0 %1082
        %v1084 = vsub.f32 %v1080, %v1083
        %v1085 = vmul.f32 %v1084, 1.442695
        %v1086 = vpow.pop %v1085
        %v1087 = vsel %vm707, %v1086, 0.0
        %1088 = vadd.xlane.f32.xlu0 %v1087
        %v1089 = vpop.xlane.xlu0 %1088
        %v1090 = vrcp.pop %v1089
        %v1091 = vmul.f32 %v1089, %v1090
        %v1092 = vsub.f32 1.0, %v1091
        %v1093 = vmul.f32 %v1090, %v1092
        %v1094 = vadd.f32 %v1090, %v1093
        %vm1095 = vweird.f32 %v1089
        %vm1096 = vweird.f32 %v1090
        %vm1097 = vmor %vm1095, %vm1096
        %v1098 = vsel %vm1097, %v1090, %v1094
        %v1099 = vand.u32 2147483647, %v1089
        %vm1100 = vcmp.eq.f32.partialorder %v1099, 8.507059e+37
        %v1101 = vand.u32 %v1089, 2147483648
        %v1102 = vor.u32 1.1754944e-38, %v1101
        %v1103 = vsel %vm1100, %v1102, %v1098
        %v1104 = vmul.f32 %v1086, %v1103
        %v1105 = vpack.c.bf16 %v1104, %v1104
        %v1106 = vpack.c.bf16 %v1055, %v1055
        %v1108 = vsel %vm707, %v1105, 0
        %v1111 = vsel %vm758, %v1106, 0
        %1113 = vmatpush.bf16.msra.mxu0 0
        %1114 = vmatpush.bf16.msra.mxu0 0
        %1115 = vmatpush.bf16.msra.mxu0 0
        %1116 = vmatpush.bf16.msra.mxu0 0
        %1117 = vmatpush.bf16.msra.mxu0 0
        %1118 = vmatpush.bf16.msra.mxu0 0
        %1119 = vmatpush.bf16.msra.mxu0 0
        %1120 = vmatpush.bf16.msra.mxu0 %v1111
        %1121 = vmatmul.bf16.gmra.mxu0 %v1108
        %v1122 = vpop.f32.mrf.mxu0
        %v1123 = vadd.f32 0.0, %v1122
        %v1124 = vpop.f32.mrf.mxu0
        %1125 = vdwg.mxu0
        %v1126 = vld [vmem:[%s519 + $0x20] sm:$0xf]
        %v1127 = vpack.c.bf16 %v1123, %v1123
        %v1129 = vunpack.c.l.b16 %v1126
        %v1130 = vpack.c.b16 %v1129, %v1129
        %1131 = vrot.lane.b32.xlu0 %v1130, 32
        %v1132 = vpop.permute.xlu0 %1131
        %v1134 = vsel %vm707, %v1127, 0
        %v1137 = vsel %vm758, %v1132, 0
        %1139 = vmatpush.bf16.msra.mxu0 0
        %1140 = vmatpush.bf16.msra.mxu0 0
        %1141 = vmatpush.bf16.msra.mxu0 0
        %1142 = vmatpush.bf16.msra.mxu0 0
        %1143 = vmatpush.bf16.msra.mxu0 0
        %1144 = vmatpush.bf16.msra.mxu0 0
        %1145 = vmatpush.bf16.msra.mxu0 0
        %1146 = vmatpush.bf16.msra.mxu0 %v1137
        %1147 = vmatmul.bf16.gmra.mxu0 %v1134
        %v1148 = vpop.f32.mrf.mxu0
        %v1149 = vadd.f32 0.0, %v1148
        %v1150 = vpop.f32.mrf.mxu0
        %1151 = vdwg.mxu0
        %v1152 = vadd.f32 %v972, %v1149
        %v1153 = vld [vmem:[%s519] sm:$0xf]
        %v1154 = vld [vmem:[%s519 + $0x10] sm:$0xf]
        %v1155 = vld [vmem:[%s519 + $0x20] sm:$0xf]
        %v1156 = vld [vmem:[%s519 + $0x30] sm:$0xf]
        %v1157 = vld [vmem:[%s523] sm:$0x1]
        %v1159 = vperm.slane %v1157, 0
        %v1164 = vunpack.c.l.b16 %v1153
        %v1165 = vunpack.c.l.b16 %v1154
        %v1166 = vunpack.c.l.b16 %v1155
        %v1167 = vunpack.c.l.b16 %v1156
        %v1168 = vpack.c.b16 %v1165, %v1164
        %v1169 = vpack.c.b16 %v1167, %v1166
        %1170 = vrot.lane.b32.xlu0 %v1168, 104
        %v1171 = vpop.permute.xlu0 %1170
        %1172 = vrot.lane.b32.xlu0 %v1169, 104
        %v1173 = vpop.permute.xlu0 %1172
        %1176 = vrot.lane.b32.xlu0 %v1159, 104
        %v1177 = vpop.permute.xlu0 %1176
        %1179 = vmatpush.bf16.msra.mxu0 0
        %1180 = vmatpush.bf16.msra.mxu0 0
        %1181 = vmatpush.bf16.msra.mxu0 0
        %1182 = vmatpush.bf16.msra.mxu0 0
        %1183 = vmatpush.bf16.msra.mxu0 0
        %1184 = vmatpush.bf16.msra.mxu0 0
        %1185 = vmatpush.bf16.msra.mxu0 %v1173
        %1186 = vmatpush.bf16.msra.mxu0 %v1171
        %1187 = vmatmul.bf16.gmra.mxu0 %v646
        %v1188 = vpop.f32.mrf.mxu0
        %v1189 = vadd.f32 %v1177, %v1188
        %v1190 = vpop.f32.mrf.mxu0
        %1191 = vdwg.mxu0
        %1192 = vrot.lane.b32.xlu0 %v1168, 72
        %v1193 = vpop.permute.xlu0 %1192
        %1194 = vrot.lane.b32.xlu0 %v1169, 72
        %v1195 = vpop.permute.xlu0 %1194
        %1198 = vrot.lane.b32.xlu0 %v1159, 72
        %v1199 = vpop.permute.xlu0 %1198
        %1201 = vmatpush.bf16.msra.mxu0 0
        %1202 = vmatpush.bf16.msra.mxu0 0
        %1203 = vmatpush.bf16.msra.mxu0 0
        %1204 = vmatpush.bf16.msra.mxu0 0
        %1205 = vmatpush.bf16.msra.mxu0 0
        %1206 = vmatpush.bf16.msra.mxu0 0
        %1207 = vmatpush.bf16.msra.mxu0 %v1195
        %1208 = vmatpush.bf16.msra.mxu0 %v1193
        %1209 = vmatmul.bf16.gmra.mxu0 %v646
        %v1210 = vpop.f32.mrf.mxu0
        %v1211 = vadd.f32 %v1199, %v1210
        %v1212 = vpop.f32.mrf.mxu0
        %1213 = vdwg.mxu0
        %1214 = vrot.lane.b32.xlu0 %v1168, 40
        %v1215 = vpop.permute.xlu0 %1214
        %1216 = vrot.lane.b32.xlu0 %v1169, 40
        %v1217 = vpop.permute.xlu0 %1216
        %1220 = vrot.lane.b32.xlu0 %v1159, 40
        %v1221 = vpop.permute.xlu0 %1220
        %1223 = vmatpush.bf16.msra.mxu0 0
        %1224 = vmatpush.bf16.msra.mxu0 0
        %1225 = vmatpush.bf16.msra.mxu0 0
        %1226 = vmatpush.bf16.msra.mxu0 0
        %1227 = vmatpush.bf16.msra.mxu0 0
        %1228 = vmatpush.bf16.msra.mxu0 0
        %1229 = vmatpush.bf16.msra.mxu0 %v1217
        %1230 = vmatpush.bf16.msra.mxu0 %v1215
        %1231 = vmatmul.bf16.gmra.mxu0 %v646
        %v1232 = vpop.f32.mrf.mxu0
        %v1233 = vadd.f32 %v1221, %v1232
        %v1234 = vpop.f32.mrf.mxu0
        %1235 = vdwg.mxu0
        %v1236 = vpack.c.bf16 %v1189, %v1189
        %v1237 = vpack.c.bf16 %v1211, %v1211
        %v1239 = vsel %vm707, %v1236, 0
        %v1242 = vsel %vm707, %v1237, 0
        %1244 = vmatpush.bf16.xpose.msra.mxu0 0
        %1245 = vmatpush.bf16.xpose.msra.mxu0 0
        %1246 = vmatpush.bf16.xpose.msra.mxu0 0
        %1247 = vmatpush.bf16.xpose.msra.mxu0 0
        %1248 = vmatpush.bf16.xpose.msra.mxu0 0
        %1249 = vmatpush.bf16.xpose.msra.mxu0 0
        %1250 = vmatpush.bf16.xpose.msra.mxu0 0
        %1251 = vmatpush.bf16.xpose.msra.mxu0 %v1242
        %1252 = vmatmul.bf16.gmra.mxu0 %v1239
        %v1253 = vpop.f32.mrf.mxu0
        %v1254 = vadd.f32 0.0, %v1253
        %v1255 = vpop.f32.mrf.mxu0
        %1256 = vdwg.mxu0
        %v1257 = vmul.f32 %v1254, 0.35355338
        %v1258 = vadd.f32 %v1257, %v621
        %v1259 = vsel %vm707, %v1258, -inf
        %1260 = vmax.xlane.f32.xlu0 %v1259
        %v1261 = vpop.xlane.xlu0 %1260
        %v1262 = vsub.f32 %v1258, %v1261
        %v1263 = vmul.f32 %v1262, 1.442695
        %v1264 = vpow.pop %v1263
        %v1265 = vsel %vm707, %v1264, 0.0
        %1266 = vadd.xlane.f32.xlu0 %v1265
        %v1267 = vpop.xlane.xlu0 %1266
        %v1268 = vrcp.pop %v1267
        %v1269 = vmul.f32 %v1267, %v1268
        %v1270 = vsub.f32 1.0, %v1269
        %v1271 = vmul.f32 %v1268, %v1270
        %v1272 = vadd.f32 %v1268, %v1271
        %vm1273 = vweird.f32 %v1267
        %vm1274 = vweird.f32 %v1268
        %vm1275 = vmor %vm1273, %vm1274
        %v1276 = vsel %vm1275, %v1268, %v1272
        %v1277 = vand.u32 2147483647, %v1267
        %vm1278 = vcmp.eq.f32.partialorder %v1277, 8.507059e+37
        %v1279 = vand.u32 %v1267, 2147483648
        %v1280 = vor.u32 1.1754944e-38, %v1279
        %v1281 = vsel %vm1278, %v1280, %v1276
        %v1282 = vmul.f32 %v1264, %v1281
        %v1283 = vpack.c.bf16 %v1282, %v1282
        %v1284 = vpack.c.bf16 %v1233, %v1233
        %v1286 = vsel %vm707, %v1283, 0
        %v1289 = vsel %vm758, %v1284, 0
        %1291 = vmatpush.bf16.msra.mxu0 0
        %1292 = vmatpush.bf16.msra.mxu0 0
        %1293 = vmatpush.bf16.msra.mxu0 0
        %1294 = vmatpush.bf16.msra.mxu0 0
        %1295 = vmatpush.bf16.msra.mxu0 0
        %1296 = vmatpush.bf16.msra.mxu0 0
        %1297 = vmatpush.bf16.msra.mxu0 0
        %1298 = vmatpush.bf16.msra.mxu0 %v1289
        %1299 = vmatmul.bf16.gmra.mxu0 %v1286
        %v1300 = vpop.f32.mrf.mxu0
        %v1301 = vadd.f32 0.0, %v1300
        %v1302 = vpop.f32.mrf.mxu0
        %1303 = vdwg.mxu0
        %v1304 = vld [vmem:[%s519 + $0x30] sm:$0xf]
        %v1305 = vpack.c.bf16 %v1301, %v1301
        %v1307 = vunpack.c.l.b16 %v1304
        %v1308 = vpack.c.b16 %v1307, %v1307
        %1309 = vrot.lane.b32.xlu0 %v1308, 32
        %v1310 = vpop.permute.xlu0 %1309
        %v1312 = vsel %vm707, %v1305, 0
        %v1315 = vsel %vm758, %v1310, 0
        %1317 = vmatpush.bf16.msra.mxu0 0
        %1318 = vmatpush.bf16.msra.mxu0 0
        %1319 = vmatpush.bf16.msra.mxu0 0
        %1320 = vmatpush.bf16.msra.mxu0 0
        %1321 = vmatpush.bf16.msra.mxu0 0
        %1322 = vmatpush.bf16.msra.mxu0 0
        %1323 = vmatpush.bf16.msra.mxu0 0
        %1324 = vmatpush.bf16.msra.mxu0 %v1315
        %1325 = vmatmul.bf16.gmra.mxu0 %v1312
        %v1326 = vpop.f32.mrf.mxu0
        %v1327 = vadd.f32 0.0, %v1326
        %v1328 = vpop.f32.mrf.mxu0
        %1329 = vdwg.mxu0
        %v1330 = vadd.f32 %v1152, %v1327
        %v1331 = vld [vmem:[%s523] sm:$0x1]
        %v1333 = vperm.slane %v1331, 0
        %1334 = vrot.lane.b32.xlu0 %v1333, 32
        %v1335 = vpop.permute.xlu0 %1334
        %v1337 = vadd.f32 %v1330, %v1335
        %v1338 = vadd.f32 %v618, %v1337
        %v1339 = vld [vmem:[%s523 + $0x1] sm:$0x1]
        %v1340 = vld [vmem:[%s523 + $0x2] sm:$0x1]
        %v1341 = vsel %vm644, %v1338, 0.0
        %1342 = vadd.xlane.f32.xlu0 %v1341
        %v1343 = vpop.xlane.xlu0 %1342
        %v1344 = vrcp.pop 32.0
        %v1345 = vmul.f32 32.0, %v1344
        %v1346 = vsub.f32 1.0, %v1345
        %v1347 = vmul.f32 %v1344, %v1346
        %v1348 = vadd.f32 %v1344, %v1347
        %vm1349 = vweird.f32 %v1344
        %v1350 = vsel %vm1349, %v1344, %v1348
        %v1351 = vmul.f32 %v1343, %v1350
        %v1352 = vsub.f32 %v1338, %v1351
        %v1353 = vmul.f32 %v1352, %v1352
        %v1354 = vsel %vm644, %v1353, 0.0
        %1355 = vadd.xlane.f32.xlu0 %v1354
        %v1356 = vpop.xlane.xlu0 %1355
        %v1357 = vmul.f32 %v1356, 0.032258064
        %v1358 = vrsqrt.pop %v1357
        %v1359 = vmul.f32 %v1358, %v1357
        %v1360 = vmul.f32 %v1359, %v1358
        %v1361 = vmul.f32 0.5, %v1360
        %v1362 = vsub.f32 1.5, %v1361
        %v1363 = vmul.f32 %v1358, %v1362
        %v1364 = vmul.f32 %v1357, %v1363
        %vm1365 = vcmp.eq.f32.partialorder %v1357, inf
        %v1366 = vsel %vm1365, %v1357, %v1364
        %vm1367 = vcmp.eq.f32.partialorder %v1357, 0.0
        %v1368 = vand.u32 %v1357, 2147483648
        %v1369 = vsel %vm1367, %v1368, %v1366
        %v1370 = vadd.f32 %v1369, 1e-06
        %v1371 = vrcp.pop %v1370
        %v1372 = vmul.f32 %v1370, %v1371
        %v1373 = vsub.f32 1.0, %v1372
        %v1374 = vmul.f32 %v1371, %v1373
        %v1375 = vadd.f32 %v1371, %v1374
        %vm1376 = vweird.f32 %v1370
        %vm1377 = vweird.f32 %v1371
        %vm1378 = vmor %vm1376, %vm1377
        %v1379 = vsel %vm1378, %v1371, %v1375
        %v1380 = vand.u32 2147483647, %v1370
        %vm1381 = vcmp.eq.f32.partialorder %v1380, 8.507059e+37
        %v1382 = vand.u32 %v1370, 2147483648
        %v1383 = vor.u32 1.1754944e-38, %v1382
        %v1384 = vsel %vm1381, %v1383, %v1379
        %v1385 = vmul.f32 %v1352, %v1384
        %v1387 = vperm.slane %v1339, 0
        %1390 = vrot.lane.b32.xlu0 %v1385, 96
        %v1391 = vpop.permute.xlu0 %1390
        %v1393 = vmul.f32 %v1387, %v1391
        %v1395 = vperm.slane %v1340, 0
        %1396 = vrot.lane.b32.xlu0 %v1395, 96
        %v1397 = vpop.permute.xlu0 %1396
        %v1399 = vadd.f32 %v1393, %v1397
        %v1400 = vld [vmem:[%s519 + $0x4] sm:$0xf]
        %v1401 = vld [vmem:[%s519 + $0x14] sm:$0xf]
        %v1402 = vld [vmem:[%s519 + $0x24] sm:$0xf]
        %v1403 = vld [vmem:[%s519 + $0x34] sm:$0xf]
        %v1404 = vpack.c.bf16 %v1399, %v1399
        %1406 = vrot.lane.b32.xlu0 %v1404, 32
        %v1407 = vpop.permute.xlu0 %1406
        %v1412 = vunpack.c.l.b16 %v1400
        %v1413 = vunpack.c.l.b16 %v1401
        %v1414 = vunpack.c.l.b16 %v1402
        %v1415 = vunpack.c.l.b16 %v1403
        %v1416 = vpack.c.b16 %v1413, %v1412
        %v1417 = vpack.c.b16 %v1415, %v1414
        %v1421 = vsel %vm644, %v1407, 0
        %1423 = vmatpush.bf16.msra.mxu0 0
        %1424 = vmatpush.bf16.msra.mxu0 0
        %1425 = vmatpush.bf16.msra.mxu0 0
        %1426 = vmatpush.bf16.msra.mxu0 0
        %1427 = vmatpush.bf16.msra.mxu0 0
        %1428 = vmatpush.bf16.msra.mxu0 0
        %1429 = vmatpush.bf16.msra.mxu0 %v1417
        %1430 = vmatpush.bf16.msra.mxu0 %v1416
        %1431 = vmatmul.bf16.gmra.mxu0 %v1421
        %v1432 = vpop.f32.mrf.mxu0
        %v1433 = vadd.f32 %v1387, %v1432
        %v1434 = vpop.f32.mrf.mxu0
        %1435 = vdwg.mxu0
        %v1436 = vmax.f32 %v1433, 0.0
        %v1437 = vld [vmem:[%s421] sm:$0xf]
        %v1438 = vld [vmem:[%s421 + $0x4] sm:$0xf]
        %v1439 = vld [vmem:[%s421 + $0x8] sm:$0xf]
        %v1440 = vld [vmem:[%s421 + $0xc] sm:$0xf]
        %v1441 = vld [vmem:[%s421 + $0x10] sm:$0xf]
        %v1442 = vld [vmem:[%s421 + $0x14] sm:$0xf]
        %v1443 = vld [vmem:[%s421 + $0x18] sm:$0xf]
        %v1444 = vld [vmem:[%s421 + $0x1c] sm:$0xf]
        %v1445 = vpack.c.bf16 %v1436, %v1436
        %v1454 = vunpack.c.l.b16 %v1437
        %v1455 = vunpack.c.l.b16 %v1438
        %v1456 = vunpack.c.l.b16 %v1439
        %v1457 = vunpack.c.l.b16 %v1440
        %v1458 = vunpack.c.l.b16 %v1441
        %v1459 = vunpack.c.l.b16 %v1442
        %v1460 = vunpack.c.l.b16 %v1443
        %v1461 = vunpack.c.l.b16 %v1444
        %v1462 = vpack.c.b16 %v1455, %v1454
        %v1463 = vpack.c.b16 %v1457, %v1456
        %v1464 = vpack.c.b16 %v1459, %v1458
        %v1465 = vpack.c.b16 %v1461, %v1460
        %1470 = vrot.lane.b32.xlu0 %v1387, 64
        %v1471 = vpop.permute.xlu0 %1470
        %vm1473 = vcmask 523264
        %v1475 = vsel %vm1473, %v1445, 0
        %1477 = vmatpush.bf16.msra.mxu0 0
        %1478 = vmatpush.bf16.msra.mxu0 0
        %1479 = vmatpush.bf16.msra.mxu0 0
        %1480 = vmatpush.bf16.msra.mxu0 0
        %1481 = vmatpush.bf16.msra.mxu0 %v1465
        %1482 = vmatpush.bf16.msra.mxu0 %v1464
        %1483 = vmatpush.bf16.msra.mxu0 %v1463
        %1484 = vmatpush.bf16.msra.mxu0 %v1462
        %1485 = vmatmul.bf16.gmra.mxu0 %v1475
        %v1486 = vpop.f32.mrf.mxu0
        %v1487 = vadd.f32 %v1471, %v1486
        %v1488 = vpop.f32.mrf.mxu0
        %1489 = vdwg.mxu0
        %1491 = vrot.lane.b32.xlu0 %v1487, 96
        %v1492 = vpop.permute.xlu0 %1491
        %v1494 = vadd.f32 %v1399, %v1492
        %1496 = vrot.lane.b32.xlu0 %v1494, 32
        %v1497 = vpop.permute.xlu0 %1496
        %v1499 = vsel %vm644, %v1497, 0.0
        %1500 = vadd.xlane.f32.xlu0 %v1499
        %v1501 = vpop.xlane.xlu0 %1500
        %v1502 = vmul.f32 %v1501, %v1350
        %v1503 = vsub.f32 %v1494, %v1502
        %v1504 = vmul.f32 %v1503, %v1503
        %1506 = vrot.lane.b32.xlu0 %v1504, 32
        %v1507 = vpop.permute.xlu0 %1506
        %v1509 = vsel %vm644, %v1507, 0.0
        %1510 = vadd.xlane.f32.xlu0 %v1509
        %v1511 = vpop.xlane.xlu0 %1510
        %v1512 = vmul.f32 %v1511, 0.032258064
        %v1513 = vrsqrt.pop %v1512
        %v1514 = vmul.f32 %v1513, %v1512
        %v1515 = vmul.f32 %v1514, %v1513
        %v1516 = vmul.f32 0.5, %v1515
        %v1517 = vsub.f32 1.5, %v1516
        %v1518 = vmul.f32 %v1513, %v1517
        %v1519 = vmul.f32 %v1512, %v1518
        %vm1520 = vcmp.eq.f32.partialorder %v1512, inf
        %v1521 = vsel %vm1520, %v1512, %v1519
        %vm1522 = vcmp.eq.f32.partialorder %v1512, 0.0
        %v1523 = vand.u32 %v1512, 2147483648
        %v1524 = vsel %vm1522, %v1523, %v1521
        %v1525 = vadd.f32 %v1524, 1e-06
        %v1526 = vrcp.pop %v1525
        %v1527 = vmul.f32 %v1525, %v1526
        %v1528 = vsub.f32 1.0, %v1527
        %v1529 = vmul.f32 %v1526, %v1528
        %v1530 = vadd.f32 %v1526, %v1529
        %vm1531 = vweird.f32 %v1525
        %vm1532 = vweird.f32 %v1526
        %vm1533 = vmor %vm1531, %vm1532
        %v1534 = vsel %vm1533, %v1526, %v1530
        %v1535 = vand.u32 2147483647, %v1525
        %vm1536 = vcmp.eq.f32.partialorder %v1535, 8.507059e+37
        %v1537 = vand.u32 %v1525, 2147483648
        %v1538 = vor.u32 1.1754944e-38, %v1537
        %v1539 = vsel %vm1536, %v1538, %v1534
        %v1540 = vmul.f32 %v1503, %v1539
        %1543 = vrot.lane.b32.xlu0 %v1540, 64
        %v1544 = vpop.permute.xlu0 %1543
        %v1546 = vmul.f32 %v1395, %v1544
        %v1547 = vadd.f32 %v1546, %v1397
        %s1548 = scalar_lea.vmem %s519, 64
        %v1549 = vld [vmem:[%s1548] sm:$0xf]
        %v1550 = vld [vmem:[%s1548 + $0x10] sm:$0xf]
        %v1551 = vld [vmem:[%s1548 + $0x20] sm:$0xf]
        %v1552 = vld [vmem:[%s1548 + $0x30] sm:$0xf]
        %v1553 = vpack.c.bf16 %v1547, %v1547
        %s1554 = scalar_lea.vmem %s523, 7
        %v1555 = vld [vmem:[%s1554] sm:$0x1]
        %v1557 = vperm.slane %v1555, 0
        %1560 = vrot.lane.b32.xlu0 %v1553, 96
        %v1561 = vpop.permute.xlu0 %1560
        %v1566 = vunpack.c.l.b16 %v1549
        %v1567 = vunpack.c.l.b16 %v1550
        %v1568 = vunpack.c.l.b16 %v1551
        %v1569 = vunpack.c.l.b16 %v1552
        %v1570 = vpack.c.b16 %v1567, %v1566
        %v1571 = vpack.c.b16 %v1569, %v1568
        %v1575 = vsel %vm644, %v1561, 0
        %1577 = vmatpush.bf16.msra.mxu0 0
        %1578 = vmatpush.bf16.msra.mxu0 0
        %1579 = vmatpush.bf16.msra.mxu0 0
        %1580 = vmatpush.bf16.msra.mxu0 0
        %1581 = vmatpush.bf16.msra.mxu0 0
        %1582 = vmatpush.bf16.msra.mxu0 0
        %1583 = vmatpush.bf16.msra.mxu0 %v1571
        %1584 = vmatpush.bf16.msra.mxu0 %v1570
        %1585 = vmatmul.bf16.gmra.mxu0 %v1575
        %v1586 = vpop.f32.mrf.mxu0
        %v1587 = vadd.f32 %v1557, %v1586
        %v1588 = vpop.f32.mrf.mxu0
        %1589 = vdwg.mxu0
        %1590 = vrot.lane.b32.xlu0 %v1570, 96
        %v1591 = vpop.permute.xlu0 %1590
        %1592 = vrot.lane.b32.xlu0 %v1571, 96
        %v1593 = vpop.permute.xlu0 %1592
        %1596 = vrot.lane.b32.xlu0 %v1557, 96
        %v1597 = vpop.permute.xlu0 %1596
        %1599 = vmatpush.bf16.msra.mxu0 0
        %1600 = vmatpush.bf16.msra.mxu0 0
        %1601 = vmatpush.bf16.msra.mxu0 0
        %1602 = vmatpush.bf16.msra.mxu0 0
        %1603 = vmatpush.bf16.msra.mxu0 0
        %1604 = vmatpush.bf16.msra.mxu0 0
        %1605 = vmatpush.bf16.msra.mxu0 %v1593
        %1606 = vmatpush.bf16.msra.mxu0 %v1591
        %1607 = vmatmul.bf16.gmra.mxu0 %v1575
        %v1608 = vpop.f32.mrf.mxu0
        %v1609 = vadd.f32 %v1597, %v1608
        %v1610 = vpop.f32.mrf.mxu0
        %1611 = vdwg.mxu0
        %1612 = vrot.lane.b32.xlu0 %v1570, 64
        %v1613 = vpop.permute.xlu0 %1612
        %1614 = vrot.lane.b32.xlu0 %v1571, 64
        %v1615 = vpop.permute.xlu0 %1614
        %1618 = vrot.lane.b32.xlu0 %v1557, 64
        %v1619 = vpop.permute.xlu0 %1618
        %1621 = vmatpush.bf16.msra.mxu0 0
        %1622 = vmatpush.bf16.msra.mxu0 0
        %1623 = vmatpush.bf16.msra.mxu0 0
        %1624 = vmatpush.bf16.msra.mxu0 0
        %1625 = vmatpush.bf16.msra.mxu0 0
        %1626 = vmatpush.bf16.msra.mxu0 0
        %1627 = vmatpush.bf16.msra.mxu0 %v1615
        %1628 = vmatpush.bf16.msra.mxu0 %v1613
        %1629 = vmatmul.bf16.gmra.mxu0 %v1575
        %v1630 = vpop.f32.mrf.mxu0
        %v1631 = vadd.f32 %v1619, %v1630
        %v1632 = vpop.f32.mrf.mxu0
        %1633 = vdwg.mxu0
        %v1634 = vpack.c.bf16 %v1587, %v1587
        %v1635 = vpack.c.bf16 %v1609, %v1609
        %v1637 = vsel %vm707, %v1634, 0
        %v1640 = vsel %vm707, %v1635, 0
        %1642 = vmatpush.bf16.xpose.msra.mxu0 0
        %1643 = vmatpush.bf16.xpose.msra.mxu0 0
        %1644 = vmatpush.bf16.xpose.msra.mxu0 0
        %1645 = vmatpush.bf16.xpose.msra.mxu0 0
        %1646 = vmatpush.bf16.xpose.msra.mxu0 0
        %1647 = vmatpush.bf16.xpose.msra.mxu0 0
        %1648 = vmatpush.bf16.xpose.msra.mxu0 0
        %1649 = vmatpush.bf16.xpose.msra.mxu0 %v1640
        %1650 = vmatmul.bf16.gmra.mxu0 %v1637
        %v1651 = vpop.f32.mrf.mxu0
        %v1652 = vadd.f32 0.0, %v1651
        %v1653 = vpop.f32.mrf.mxu0
        %1654 = vdwg.mxu0
        %v1655 = vmul.f32 %v1652, 0.35355338
        %v1656 = vadd.f32 %v1655, %v621
        %v1657 = vsel %vm707, %v1656, -inf
        %1658 = vmax.xlane.f32.xlu0 %v1657
        %v1659 = vpop.xlane.xlu0 %1658
        %v1660 = vsub.f32 %v1656, %v1659
        %v1661 = vmul.f32 %v1660, 1.442695
        %v1662 = vpow.pop %v1661
        %v1663 = vsel %vm707, %v1662, 0.0
        %1664 = vadd.xlane.f32.xlu0 %v1663
        %v1665 = vpop.xlane.xlu0 %1664
        %v1666 = vrcp.pop %v1665
        %v1667 = vmul.f32 %v1665, %v1666
        %v1668 = vsub.f32 1.0, %v1667
        %v1669 = vmul.f32 %v1666, %v1668
        %v1670 = vadd.f32 %v1666, %v1669
        %vm1671 = vweird.f32 %v1665
        %vm1672 = vweird.f32 %v1666
        %vm1673 = vmor %vm1671, %vm1672
        %v1674 = vsel %vm1673, %v1666, %v1670
        %v1675 = vand.u32 2147483647, %v1665
        %vm1676 = vcmp.eq.f32.partialorder %v1675, 8.507059e+37
        %v1677 = vand.u32 %v1665, 2147483648
        %v1678 = vor.u32 1.1754944e-38, %v1677
        %v1679 = vsel %vm1676, %v1678, %v1674
        %v1680 = vmul.f32 %v1662, %v1679
        %v1681 = vpack.c.bf16 %v1680, %v1680
        %v1682 = vpack.c.bf16 %v1631, %v1631
        %v1684 = vsel %vm707, %v1681, 0
        %v1687 = vsel %vm758, %v1682, 0
        %1689 = vmatpush.bf16.msra.mxu0 0
        %1690 = vmatpush.bf16.msra.mxu0 0
        %1691 = vmatpush.bf16.msra.mxu0 0
        %1692 = vmatpush.bf16.msra.mxu0 0
        %1693 = vmatpush.bf16.msra.mxu0 0
        %1694 = vmatpush.bf16.msra.mxu0 0
        %1695 = vmatpush.bf16.msra.mxu0 0
        %1696 = vmatpush.bf16.msra.mxu0 %v1687
        %1697 = vmatmul.bf16.gmra.mxu0 %v1684
        %v1698 = vpop.f32.mrf.mxu0
        %v1699 = vadd.f32 0.0, %v1698
        %v1700 = vpop.f32.mrf.mxu0
        %1701 = vdwg.mxu0
        %v1702 = vld [vmem:[%s1548] sm:$0xf]
        %v1703 = vpack.c.bf16 %v1699, %v1699
        %v1704 = vld [vmem:[%s1548 + $0x10] sm:$0xf]
        %v1705 = vld [vmem:[%s1548 + $0x20] sm:$0xf]
        %v1706 = vld [vmem:[%s1548 + $0x30] sm:$0xf]
        %v1707 = vld [vmem:[%s1554] sm:$0x1]
        %v1709 = vperm.slane %v1707, 0
        %v1714 = vunpack.c.l.b16 %v1702
        %v1715 = vunpack.c.l.b16 %v1704
        %v1716 = vunpack.c.l.b16 %v1705
        %v1717 = vunpack.c.l.b16 %v1706
        %v1718 = vpack.c.b16 %v1715, %v1714
        %v1719 = vpack.c.b16 %v1717, %v1716
        %1720 = vrot.lane.b32.xlu0 %v1718, 120
        %v1721 = vpop.permute.xlu0 %1720
        %1722 = vrot.lane.b32.xlu0 %v1719, 120
        %v1723 = vpop.permute.xlu0 %1722
        %1726 = vrot.lane.b32.xlu0 %v1709, 120
        %v1727 = vpop.permute.xlu0 %1726
        %1729 = vmatpush.bf16.msra.mxu0 0
        %1730 = vmatpush.bf16.msra.mxu0 0
        %1731 = vmatpush.bf16.msra.mxu0 0
        %1732 = vmatpush.bf16.msra.mxu0 0
        %1733 = vmatpush.bf16.msra.mxu0 0
        %1734 = vmatpush.bf16.msra.mxu0 0
        %1735 = vmatpush.bf16.msra.mxu0 %v1723
        %1736 = vmatpush.bf16.msra.mxu0 %v1721
        %1737 = vmatmul.bf16.gmra.mxu0 %v1575
        %v1738 = vpop.f32.mrf.mxu0
        %v1739 = vadd.f32 %v1727, %v1738
        %v1740 = vpop.f32.mrf.mxu0
        %1741 = vdwg.mxu0
        %1742 = vrot.lane.b32.xlu0 %v1718, 88
        %v1743 = vpop.permute.xlu0 %1742
        %1744 = vrot.lane.b32.xlu0 %v1719, 88
        %v1745 = vpop.permute.xlu0 %1744
        %1748 = vrot.lane.b32.xlu0 %v1709, 88
        %v1749 = vpop.permute.xlu0 %1748
        %1751 = vmatpush.bf16.msra.mxu0 0
        %1752 = vmatpush.bf16.msra.mxu0 0
        %1753 = vmatpush.bf16.msra.mxu0 0
        %1754 = vmatpush.bf16.msra.mxu0 0
        %1755 = vmatpush.bf16.msra.mxu0 0
        %1756 = vmatpush.bf16.msra.mxu0 0
        %1757 = vmatpush.bf16.msra.mxu0 %v1745
        %1758 = vmatpush.bf16.msra.mxu0 %v1743
        %1759 = vmatmul.bf16.gmra.mxu0 %v1575
        %v1760 = vpop.f32.mrf.mxu0
        %v1761 = vadd.f32 %v1749, %v1760
        %v1762 = vpop.f32.mrf.mxu0
        %1763 = vdwg.mxu0
        %1764 = vrot.lane.b32.xlu0 %v1718, 56
        %v1765 = vpop.permute.xlu0 %1764
        %1766 = vrot.lane.b32.xlu0 %v1719, 56
        %v1767 = vpop.permute.xlu0 %1766
        %1770 = vrot.lane.b32.xlu0 %v1709, 56
        %v1771 = vpop.permute.xlu0 %1770
        %1773 = vmatpush.bf16.msra.mxu0 0
        %1774 = vmatpush.bf16.msra.mxu0 0
        %1775 = vmatpush.bf16.msra.mxu0 0
        %1776 = vmatpush.bf16.msra.mxu0 0
        %1777 = vmatpush.bf16.msra.mxu0 0
        %1778 = vmatpush.bf16.msra.mxu0 0
        %1779 = vmatpush.bf16.msra.mxu0 %v1767
        %1780 = vmatpush.bf16.msra.mxu0 %v1765
        %1781 = vmatmul.bf16.gmra.mxu0 %v1575
        %v1782 = vpop.f32.mrf.mxu0
        %v1783 = vadd.f32 %v1771, %v1782
        %v1784 = vpop.f32.mrf.mxu0
        %1785 = vdwg.mxu0
        %v1786 = vpack.c.bf16 %v1739, %v1739
        %v1787 = vpack.c.bf16 %v1761, %v1761
        %v1789 = vsel %vm707, %v1786, 0
        %v1792 = vsel %vm707, %v1787, 0
        %1794 = vmatpush.bf16.xpose.msra.mxu0 0
        %1795 = vmatpush.bf16.xpose.msra.mxu0 0
        %1796 = vmatpush.bf16.xpose.msra.mxu0 0
        %1797 = vmatpush.bf16.xpose.msra.mxu0 0
        %1798 = vmatpush.bf16.xpose.msra.mxu0 0
        %1799 = vmatpush.bf16.xpose.msra.mxu0 0
        %1800 = vmatpush.bf16.xpose.msra.mxu0 0
        %1801 = vmatpush.bf16.xpose.msra.mxu0 %v1792
        %1802 = vmatmul.bf16.gmra.mxu0 %v1789
        %v1803 = vpop.f32.mrf.mxu0
        %v1804 = vadd.f32 0.0, %v1803
        %v1805 = vpop.f32.mrf.mxu0
        %1806 = vdwg.mxu0
        %v1807 = vmul.f32 %v1804, 0.35355338
        %v1808 = vadd.f32 %v1807, %v621
        %v1809 = vsel %vm707, %v1808, -inf
        %1810 = vmax.xlane.f32.xlu0 %v1809
        %v1811 = vpop.xlane.xlu0 %1810
        %v1812 = vsub.f32 %v1808, %v1811
        %v1813 = vmul.f32 %v1812, 1.442695
        %v1814 = vpow.pop %v1813
        %v1815 = vsel %vm707, %v1814, 0.0
        %1816 = vadd.xlane.f32.xlu0 %v1815
        %v1817 = vpop.xlane.xlu0 %1816
        %v1818 = vrcp.pop %v1817
        %v1819 = vmul.f32 %v1817, %v1818
        %v1820 = vsub.f32 1.0, %v1819
        %v1821 = vmul.f32 %v1818, %v1820
        %v1822 = vadd.f32 %v1818, %v1821
        %vm1823 = vweird.f32 %v1817
        %vm1824 = vweird.f32 %v1818
        %vm1825 = vmor %vm1823, %vm1824
        %v1826 = vsel %vm1825, %v1818, %v1822
        %v1827 = vand.u32 2147483647, %v1817
        %vm1828 = vcmp.eq.f32.partialorder %v1827, 8.507059e+37
        %v1829 = vand.u32 %v1817, 2147483648
        %v1830 = vor.u32 1.1754944e-38, %v1829
        %v1831 = vsel %vm1828, %v1830, %v1826
        %v1832 = vmul.f32 %v1814, %v1831
        %v1833 = vpack.c.bf16 %v1832, %v1832
        %v1834 = vpack.c.bf16 %v1783, %v1783
        %v1836 = vsel %vm707, %v1833, 0
        %v1839 = vsel %vm758, %v1834, 0
        %1841 = vmatpush.bf16.msra.mxu0 0
        %1842 = vmatpush.bf16.msra.mxu0 0
        %1843 = vmatpush.bf16.msra.mxu0 0
        %1844 = vmatpush.bf16.msra.mxu0 0
        %1845 = vmatpush.bf16.msra.mxu0 0
        %1846 = vmatpush.bf16.msra.mxu0 0
        %1847 = vmatpush.bf16.msra.mxu0 0
        %1848 = vmatpush.bf16.msra.mxu0 %v1839
        %1849 = vmatmul.bf16.gmra.mxu0 %v1836
        %v1850 = vpop.f32.mrf.mxu0
        %v1851 = vadd.f32 0.0, %v1850
        %v1852 = vpop.f32.mrf.mxu0
        %1853 = vdwg.mxu0
        %v1854 = vld [vmem:[%s1548 + $0x10] sm:$0xf]
        %v1855 = vpack.c.bf16 %v1851, %v1851
        %v1857 = vunpack.c.l.b16 %v1854
        %v1858 = vpack.c.b16 %v1857, %v1857
        %1859 = vrot.lane.b32.xlu0 %v1858, 32
        %v1860 = vpop.permute.xlu0 %1859
        %v1862 = vsel %vm707, %v1855, 0
        %v1865 = vsel %vm758, %v1860, 0
        %1867 = vmatpush.bf16.msra.mxu0 0
        %1868 = vmatpush.bf16.msra.mxu0 0
        %1869 = vmatpush.bf16.msra.mxu0 0
        %1870 = vmatpush.bf16.msra.mxu0 0
        %1871 = vmatpush.bf16.msra.mxu0 0
        %1872 = vmatpush.bf16.msra.mxu0 0
        %1873 = vmatpush.bf16.msra.mxu0 0
        %1874 = vmatpush.bf16.msra.mxu0 %v1865
        %1875 = vmatmul.bf16.gmra.mxu0 %v1862
        %v1876 = vpop.f32.mrf.mxu0
        %v1877 = vadd.f32 0.0, %v1876
        %v1878 = vpop.f32.mrf.mxu0
        %1879 = vdwg.mxu0
        %v1880 = vpack.c.b16 %v1714, %v1714
        %1881 = vrot.lane.b32.xlu0 %v1880, 32
        %v1882 = vpop.permute.xlu0 %1881
        %v1884 = vsel %vm707, %v1703, 0
        %v1887 = vsel %vm758, %v1882, 0
        %1889 = vmatpush.bf16.msra.mxu0 0
        %1890 = vmatpush.bf16.msra.mxu0 0
        %1891 = vmatpush.bf16.msra.mxu0 0
        %1892 = vmatpush.bf16.msra.mxu0 0
        %1893 = vmatpush.bf16.msra.mxu0 0
        %1894 = vmatpush.bf16.msra.mxu0 0
        %1895 = vmatpush.bf16.msra.mxu0 0
        %1896 = vmatpush.bf16.msra.mxu0 %v1887
        %1897 = vmatmul.bf16.gmra.mxu0 %v1884
        %v1898 = vpop.f32.mrf.mxu0
        %v1899 = vadd.f32 %v1877, %v1898
        %v1900 = vpop.f32.mrf.mxu0
        %1901 = vdwg.mxu0
        %v1902 = vld [vmem:[%s1548] sm:$0xf]
        %v1903 = vld [vmem:[%s1548 + $0x10] sm:$0xf]
        %v1904 = vld [vmem:[%s1548 + $0x20] sm:$0xf]
        %v1905 = vld [vmem:[%s1548 + $0x30] sm:$0xf]
        %v1906 = vld [vmem:[%s1554] sm:$0x1]
        %v1908 = vperm.slane %v1906, 0
        %v1913 = vunpack.c.l.b16 %v1902
        %v1914 = vunpack.c.l.b16 %v1903
        %v1915 = vunpack.c.l.b16 %v1904
        %v1916 = vunpack.c.l.b16 %v1905
        %v1917 = vpack.c.b16 %v1914, %v1913
        %v1918 = vpack.c.b16 %v1916, %v1915
        %1919 = vrot.lane.b32.xlu0 %v1917, 112
        %v1920 = vpop.permute.xlu0 %1919
        %1921 = vrot.lane.b32.xlu0 %v1918, 112
        %v1922 = vpop.permute.xlu0 %1921
        %1925 = vrot.lane.b32.xlu0 %v1908, 112
        %v1926 = vpop.permute.xlu0 %1925
        %1928 = vmatpush.bf16.msra.mxu0 0
        %1929 = vmatpush.bf16.msra.mxu0 0
        %1930 = vmatpush.bf16.msra.mxu0 0
        %1931 = vmatpush.bf16.msra.mxu0 0
        %1932 = vmatpush.bf16.msra.mxu0 0
        %1933 = vmatpush.bf16.msra.mxu0 0
        %1934 = vmatpush.bf16.msra.mxu0 %v1922
        %1935 = vmatpush.bf16.msra.mxu0 %v1920
        %1936 = vmatmul.bf16.gmra.mxu0 %v1575
        %v1937 = vpop.f32.mrf.mxu0
        %v1938 = vadd.f32 %v1926, %v1937
        %v1939 = vpop.f32.mrf.mxu0
        %1940 = vdwg.mxu0
        %1941 = vrot.lane.b32.xlu0 %v1917, 80
        %v1942 = vpop.permute.xlu0 %1941
        %1943 = vrot.lane.b32.xlu0 %v1918, 80
        %v1944 = vpop.permute.xlu0 %1943
        %1947 = vrot.lane.b32.xlu0 %v1908, 80
        %v1948 = vpop.permute.xlu0 %1947
        %1950 = vmatpush.bf16.msra.mxu0 0
        %1951 = vmatpush.bf16.msra.mxu0 0
        %1952 = vmatpush.bf16.msra.mxu0 0
        %1953 = vmatpush.bf16.msra.mxu0 0
        %1954 = vmatpush.bf16.msra.mxu0 0
        %1955 = vmatpush.bf16.msra.mxu0 0
        %1956 = vmatpush.bf16.msra.mxu0 %v1944
        %1957 = vmatpush.bf16.msra.mxu0 %v1942
        %1958 = vmatmul.bf16.gmra.mxu0 %v1575
        %v1959 = vpop.f32.mrf.mxu0
        %v1960 = vadd.f32 %v1948, %v1959
        %v1961 = vpop.f32.mrf.mxu0
        %1962 = vdwg.mxu0
        %1963 = vrot.lane.b32.xlu0 %v1917, 48
        %v1964 = vpop.permute.xlu0 %1963
        %1965 = vrot.lane.b32.xlu0 %v1918, 48
        %v1966 = vpop.permute.xlu0 %1965
        %1969 = vrot.lane.b32.xlu0 %v1908, 48
        %v1970 = vpop.permute.xlu0 %1969
        %1972 = vmatpush.bf16.msra.mxu0 0
        %1973 = vmatpush.bf16.msra.mxu0 0
        %1974 = vmatpush.bf16.msra.mxu0 0
        %1975 = vmatpush.bf16.msra.mxu0 0
        %1976 = vmatpush.bf16.msra.mxu0 0
        %1977 = vmatpush.bf16.msra.mxu0 0
        %1978 = vmatpush.bf16.msra.mxu0 %v1966
        %1979 = vmatpush.bf16.msra.mxu0 %v1964
        %1980 = vmatmul.bf16.gmra.mxu0 %v1575
        %v1981 = vpop.f32.mrf.mxu0
        %v1982 = vadd.f32 %v1970, %v1981
        %v1983 = vpop.f32.mrf.mxu0
        %1984 = vdwg.mxu0
        %v1985 = vpack.c.bf16 %v1938, %v1938
        %v1986 = vpack.c.bf16 %v1960, %v1960
        %v1988 = vsel %vm707, %v1985, 0
        %v1991 = vsel %vm707, %v1986, 0
        %1993 = vmatpush.bf16.xpose.msra.mxu0 0
        %1994 = vmatpush.bf16.xpose.msra.mxu0 0
        %1995 = vmatpush.bf16.xpose.msra.mxu0 0
        %1996 = vmatpush.bf16.xpose.msra.mxu0 0
        %1997 = vmatpush.bf16.xpose.msra.mxu0 0
        %1998 = vmatpush.bf16.xpose.msra.mxu0 0
        %1999 = vmatpush.bf16.xpose.msra.mxu0 0
        %2000 = vmatpush.bf16.xpose.msra.mxu0 %v1991
        %2001 = vmatmul.bf16.gmra.mxu0 %v1988
        %v2002 = vpop.f32.mrf.mxu0
        %v2003 = vadd.f32 0.0, %v2002
        %v2004 = vpop.f32.mrf.mxu0
        %2005 = vdwg.mxu0
        %v2006 = vmul.f32 %v2003, 0.35355338
        %v2007 = vadd.f32 %v2006, %v621
        %v2008 = vsel %vm707, %v2007, -inf
        %2009 = vmax.xlane.f32.xlu0 %v2008
        %v2010 = vpop.xlane.xlu0 %2009
        %v2011 = vsub.f32 %v2007, %v2010
        %v2012 = vmul.f32 %v2011, 1.442695
        %v2013 = vpow.pop %v2012
        %v2014 = vsel %vm707, %v2013, 0.0
        %2015 = vadd.xlane.f32.xlu0 %v2014
        %v2016 = vpop.xlane.xlu0 %2015
        %v2017 = vrcp.pop %v2016
        %v2018 = vmul.f32 %v2016, %v2017
        %v2019 = vsub.f32 1.0, %v2018
        %v2020 = vmul.f32 %v2017, %v2019
        %v2021 = vadd.f32 %v2017, %v2020
        %vm2022 = vweird.f32 %v2016
        %vm2023 = vweird.f32 %v2017
        %vm2024 = vmor %vm2022, %vm2023
        %v2025 = vsel %vm2024, %v2017, %v2021
        %v2026 = vand.u32 2147483647, %v2016
        %vm2027 = vcmp.eq.f32.partialorder %v2026, 8.507059e+37
        %v2028 = vand.u32 %v2016, 2147483648
        %v2029 = vor.u32 1.1754944e-38, %v2028
        %v2030 = vsel %vm2027, %v2029, %v2025
        %v2031 = vmul.f32 %v2013, %v2030
        %v2032 = vpack.c.bf16 %v2031, %v2031
        %v2033 = vpack.c.bf16 %v1982, %v1982
        %v2035 = vsel %vm707, %v2032, 0
        %v2038 = vsel %vm758, %v2033, 0
        %2040 = vmatpush.bf16.msra.mxu0 0
        %2041 = vmatpush.bf16.msra.mxu0 0
        %2042 = vmatpush.bf16.msra.mxu0 0
        %2043 = vmatpush.bf16.msra.mxu0 0
        %2044 = vmatpush.bf16.msra.mxu0 0
        %2045 = vmatpush.bf16.msra.mxu0 0
        %2046 = vmatpush.bf16.msra.mxu0 0
        %2047 = vmatpush.bf16.msra.mxu0 %v2038
        %2048 = vmatmul.bf16.gmra.mxu0 %v2035
        %v2049 = vpop.f32.mrf.mxu0
        %v2050 = vadd.f32 0.0, %v2049
        %v2051 = vpop.f32.mrf.mxu0
        %2052 = vdwg.mxu0
        %v2053 = vld [vmem:[%s1548 + $0x20] sm:$0xf]
        %v2054 = vpack.c.bf16 %v2050, %v2050
        %v2056 = vunpack.c.l.b16 %v2053
        %v2057 = vpack.c.b16 %v2056, %v2056
        %2058 = vrot.lane.b32.xlu0 %v2057, 32
        %v2059 = vpop.permute.xlu0 %2058
        %v2061 = vsel %vm707, %v2054, 0
        %v2064 = vsel %vm758, %v2059, 0
        %2066 = vmatpush.bf16.msra.mxu0 0
        %2067 = vmatpush.bf16.msra.mxu0 0
        %2068 = vmatpush.bf16.msra.mxu0 0
        %2069 = vmatpush.bf16.msra.mxu0 0
        %2070 = vmatpush.bf16.msra.mxu0 0
        %2071 = vmatpush.bf16.msra.mxu0 0
        %2072 = vmatpush.bf16.msra.mxu0 0
        %2073 = vmatpush.bf16.msra.mxu0 %v2064
        %2074 = vmatmul.bf16.gmra.mxu0 %v2061
        %v2075 = vpop.f32.mrf.mxu0
        %v2076 = vadd.f32 0.0, %v2075
        %v2077 = vpop.f32.mrf.mxu0
        %2078 = vdwg.mxu0
        %v2079 = vadd.f32 %v1899, %v2076
        %v2080 = vld [vmem:[%s1548] sm:$0xf]
        %v2081 = vld [vmem:[%s1548 + $0x10] sm:$0xf]
        %v2082 = vld [vmem:[%s1548 + $0x20] sm:$0xf]
        %v2083 = vld [vmem:[%s1548 + $0x30] sm:$0xf]
        %v2084 = vld [vmem:[%s1554] sm:$0x1]
        %v2086 = vperm.slane %v2084, 0
        %v2091 = vunpack.c.l.b16 %v2080
        %v2092 = vunpack.c.l.b16 %v2081
        %v2093 = vunpack.c.l.b16 %v2082
        %v2094 = vunpack.c.l.b16 %v2083
        %v2095 = vpack.c.b16 %v2092, %v2091
        %v2096 = vpack.c.b16 %v2094, %v2093
        %2097 = vrot.lane.b32.xlu0 %v2095, 104
        %v2098 = vpop.permute.xlu0 %2097
        %2099 = vrot.lane.b32.xlu0 %v2096, 104
        %v2100 = vpop.permute.xlu0 %2099
        %2103 = vrot.lane.b32.xlu0 %v2086, 104
        %v2104 = vpop.permute.xlu0 %2103
        %2106 = vmatpush.bf16.msra.mxu0 0
        %2107 = vmatpush.bf16.msra.mxu0 0
        %2108 = vmatpush.bf16.msra.mxu0 0
        %2109 = vmatpush.bf16.msra.mxu0 0
        %2110 = vmatpush.bf16.msra.mxu0 0
        %2111 = vmatpush.bf16.msra.mxu0 0
        %2112 = vmatpush.bf16.msra.mxu0 %v2100
        %2113 = vmatpush.bf16.msra.mxu0 %v2098
        %2114 = vmatmul.bf16.gmra.mxu0 %v1575
        %v2115 = vpop.f32.mrf.mxu0
        %v2116 = vadd.f32 %v2104, %v2115
        %v2117 = vpop.f32.mrf.mxu0
        %2118 = vdwg.mxu0
        %2119 = vrot.lane.b32.xlu0 %v2095, 72
        %v2120 = vpop.permute.xlu0 %2119
        %2121 = vrot.lane.b32.xlu0 %v2096, 72
        %v2122 = vpop.permute.xlu0 %2121
        %2125 = vrot.lane.b32.xlu0 %v2086, 72
        %v2126 = vpop.permute.xlu0 %2125
        %2128 = vmatpush.bf16.msra.mxu0 0
        %2129 = vmatpush.bf16.msra.mxu0 0
        %2130 = vmatpush.bf16.msra.mxu0 0
        %2131 = vmatpush.bf16.msra.mxu0 0
        %2132 = vmatpush.bf16.msra.mxu0 0
        %2133 = vmatpush.bf16.msra.mxu0 0
        %2134 = vmatpush.bf16.msra.mxu0 %v2122
        %2135 = vmatpush.bf16.msra.mxu0 %v2120
        %2136 = vmatmul.bf16.gmra.mxu0 %v1575
        %v2137 = vpop.f32.mrf.mxu0
        %v2138 = vadd.f32 %v2126, %v2137
        %v2139 = vpop.f32.mrf.mxu0
        %2140 = vdwg.mxu0
        %2141 = vrot.lane.b32.xlu0 %v2095, 40
        %v2142 = vpop.permute.xlu0 %2141
        %2143 = vrot.lane.b32.xlu0 %v2096, 40
        %v2144 = vpop.permute.xlu0 %2143
        %2147 = vrot.lane.b32.xlu0 %v2086, 40
        %v2148 = vpop.permute.xlu0 %2147
        %2150 = vmatpush.bf16.msra.mxu0 0
        %2151 = vmatpush.bf16.msra.mxu0 0
        %2152 = vmatpush.bf16.msra.mxu0 0
        %2153 = vmatpush.bf16.msra.mxu0 0
        %2154 = vmatpush.bf16.msra.mxu0 0
        %2155 = vmatpush.bf16.msra.mxu0 0
        %2156 = vmatpush.bf16.msra.mxu0 %v2144
        %2157 = vmatpush.bf16.msra.mxu0 %v2142
        %2158 = vmatmul.bf16.gmra.mxu0 %v1575
        %v2159 = vpop.f32.mrf.mxu0
        %v2160 = vadd.f32 %v2148, %v2159
        %v2161 = vpop.f32.mrf.mxu0
        %2162 = vdwg.mxu0
        %v2163 = vpack.c.bf16 %v2116, %v2116
        %v2164 = vpack.c.bf16 %v2138, %v2138
        %v2166 = vsel %vm707, %v2163, 0
        %v2169 = vsel %vm707, %v2164, 0
        %2171 = vmatpush.bf16.xpose.msra.mxu0 0
        %2172 = vmatpush.bf16.xpose.msra.mxu0 0
        %2173 = vmatpush.bf16.xpose.msra.mxu0 0
        %2174 = vmatpush.bf16.xpose.msra.mxu0 0
        %2175 = vmatpush.bf16.xpose.msra.mxu0 0
        %2176 = vmatpush.bf16.xpose.msra.mxu0 0
        %2177 = vmatpush.bf16.xpose.msra.mxu0 0
        %2178 = vmatpush.bf16.xpose.msra.mxu0 %v2169
        %2179 = vmatmul.bf16.gmra.mxu0 %v2166
        %v2180 = vpop.f32.mrf.mxu0
        %v2181 = vadd.f32 0.0, %v2180
        %v2182 = vpop.f32.mrf.mxu0
        %2183 = vdwg.mxu0
        %v2184 = vmul.f32 %v2181, 0.35355338
        %v2185 = vadd.f32 %v2184, %v621
        %v2186 = vsel %vm707, %v2185, -inf
        %2187 = vmax.xlane.f32.xlu0 %v2186
        %v2188 = vpop.xlane.xlu0 %2187
        %v2189 = vsub.f32 %v2185, %v2188
        %v2190 = vmul.f32 %v2189, 1.442695
        %v2191 = vpow.pop %v2190
        %v2192 = vsel %vm707, %v2191, 0.0
        %2193 = vadd.xlane.f32.xlu0 %v2192
        %v2194 = vpop.xlane.xlu0 %2193
        %v2195 = vrcp.pop %v2194
        %v2196 = vmul.f32 %v2194, %v2195
        %v2197 = vsub.f32 1.0, %v2196
        %v2198 = vmul.f32 %v2195, %v2197
        %v2199 = vadd.f32 %v2195, %v2198
        %vm2200 = vweird.f32 %v2194
        %vm2201 = vweird.f32 %v2195
        %vm2202 = vmor %vm2200, %vm2201
        %v2203 = vsel %vm2202, %v2195, %v2199
        %v2204 = vand.u32 2147483647, %v2194
        %vm2205 = vcmp.eq.f32.partialorder %v2204, 8.507059e+37
        %v2206 = vand.u32 %v2194, 2147483648
        %v2207 = vor.u32 1.1754944e-38, %v2206
        %v2208 = vsel %vm2205, %v2207, %v2203
        %v2209 = vmul.f32 %v2191, %v2208
        %v2210 = vpack.c.bf16 %v2209, %v2209
        %v2211 = vpack.c.bf16 %v2160, %v2160
        %v2213 = vsel %vm707, %v2210, 0
        %v2216 = vsel %vm758, %v2211, 0
        %2218 = vmatpush.bf16.msra.mxu0 0
        %2219 = vmatpush.bf16.msra.mxu0 0
        %2220 = vmatpush.bf16.msra.mxu0 0
        %2221 = vmatpush.bf16.msra.mxu0 0
        %2222 = vmatpush.bf16.msra.mxu0 0
        %2223 = vmatpush.bf16.msra.mxu0 0
        %2224 = vmatpush.bf16.msra.mxu0 0
        %2225 = vmatpush.bf16.msra.mxu0 %v2216
        %2226 = vmatmul.bf16.gmra.mxu0 %v2213
        %v2227 = vpop.f32.mrf.mxu0
        %v2228 = vadd.f32 0.0, %v2227
        %v2229 = vpop.f32.mrf.mxu0
        %2230 = vdwg.mxu0
        %v2231 = vld [vmem:[%s1548 + $0x30] sm:$0xf]
        %v2232 = vpack.c.bf16 %v2228, %v2228
        %v2234 = vunpack.c.l.b16 %v2231
        %v2235 = vpack.c.b16 %v2234, %v2234
        %2236 = vrot.lane.b32.xlu0 %v2235, 32
        %v2237 = vpop.permute.xlu0 %2236
        %v2239 = vsel %vm707, %v2232, 0
        %v2242 = vsel %vm758, %v2237, 0
        %2244 = vmatpush.bf16.msra.mxu0 0
        %2245 = vmatpush.bf16.msra.mxu0 0
        %2246 = vmatpush.bf16.msra.mxu0 0
        %2247 = vmatpush.bf16.msra.mxu0 0
        %2248 = vmatpush.bf16.msra.mxu0 0
        %2249 = vmatpush.bf16.msra.mxu0 0
        %2250 = vmatpush.bf16.msra.mxu0 0
        %2251 = vmatpush.bf16.msra.mxu0 %v2242
        %2252 = vmatmul.bf16.gmra.mxu0 %v2239
        %v2253 = vpop.f32.mrf.mxu0
        %v2254 = vadd.f32 0.0, %v2253
        %v2255 = vpop.f32.mrf.mxu0
        %2256 = vdwg.mxu0
        %v2257 = vadd.f32 %v2079, %v2254
        %v2258 = vld [vmem:[%s1554] sm:$0x1]
        %v2260 = vperm.slane %v2258, 0
        %2261 = vrot.lane.b32.xlu0 %v2260, 32
        %v2262 = vpop.permute.xlu0 %2261
        %v2264 = vadd.f32 %v2257, %v2262
        %2266 = vrot.lane.b32.xlu0 %v2264, 32
        %v2267 = vpop.permute.xlu0 %2266
        %v2269 = vadd.f32 %v1547, %v2267
        %v2270 = vld [vmem:[%s1554 + $0x1] sm:$0x1]
        %v2271 = vld [vmem:[%s1554 + $0x2] sm:$0x1]
        %2273 = vrot.lane.b32.xlu0 %v2269, 96
        %v2274 = vpop.permute.xlu0 %2273
        %v2276 = vsel %vm644, %v2274, 0.0
        %2277 = vadd.xlane.f32.xlu0 %v2276
        %v2278 = vpop.xlane.xlu0 %2277
        %v2279 = vmul.f32 %v2278, %v1350
        %v2280 = vsub.f32 %v2269, %v2279
        %v2281 = vmul.f32 %v2280, %v2280
        %2283 = vrot.lane.b32.xlu0 %v2281, 96
        %v2284 = vpop.permute.xlu0 %2283
        %v2286 = vsel %vm644, %v2284, 0.0
        %2287 = vadd.xlane.f32.xlu0 %v2286
        %v2288 = vpop.xlane.xlu0 %2287
        %v2289 = vmul.f32 %v2288, 0.032258064
        %v2290 = vrsqrt.pop %v2289
        %v2291 = vmul.f32 %v2290, %v2289
        %v2292 = vmul.f32 %v2291, %v2290
        %v2293 = vmul.f32 0.5, %v2292
        %v2294 = vsub.f32 1.5, %v2293
        %v2295 = vmul.f32 %v2290, %v2294
        %v2296 = vmul.f32 %v2289, %v2295
        %vm2297 = vcmp.eq.f32.partialorder %v2289, inf
        %v2298 = vsel %vm2297, %v2289, %v2296
        %vm2299 = vcmp.eq.f32.partialorder %v2289, 0.0
        %v2300 = vand.u32 %v2289, 2147483648
        %v2301 = vsel %vm2299, %v2300, %v2298
        %v2302 = vadd.f32 %v2301, 1e-06
        %v2303 = vrcp.pop %v2302
        %v2304 = vmul.f32 %v2302, %v2303
        %v2305 = vsub.f32 1.0, %v2304
        %v2306 = vmul.f32 %v2303, %v2305
        %v2307 = vadd.f32 %v2303, %v2306
        %vm2308 = vweird.f32 %v2302
        %vm2309 = vweird.f32 %v2303
        %vm2310 = vmor %vm2308, %vm2309
        %v2311 = vsel %vm2310, %v2303, %v2307
        %v2312 = vand.u32 2147483647, %v2302
        %vm2313 = vcmp.eq.f32.partialorder %v2312, 8.507059e+37
        %v2314 = vand.u32 %v2302, 2147483648
        %v2315 = vor.u32 1.1754944e-38, %v2314
        %v2316 = vsel %vm2313, %v2315, %v2311
        %v2317 = vmul.f32 %v2280, %v2316
        %v2319 = vperm.slane %v2270, 0
        %2322 = vrot.lane.b32.xlu0 %v2317, 64
        %v2323 = vpop.permute.xlu0 %2322
        %v2325 = vmul.f32 %v2319, %v2323
        %v2327 = vperm.slane %v2271, 0
        %2328 = vrot.lane.b32.xlu0 %v2327, 96
        %v2329 = vpop.permute.xlu0 %2328
        %v2331 = vadd.f32 %v2325, %v2329
        %v2332 = vld [vmem:[%s1548 + $0x4] sm:$0xf]
        %v2333 = vld [vmem:[%s1548 + $0x14] sm:$0xf]
        %v2334 = vld [vmem:[%s1548 + $0x24] sm:$0xf]
        %v2335 = vld [vmem:[%s1548 + $0x34] sm:$0xf]
        %v2336 = vpack.c.bf16 %v2331, %v2331
        %2338 = vrot.lane.b32.xlu0 %v2336, 32
        %v2339 = vpop.permute.xlu0 %2338
        %v2344 = vunpack.c.l.b16 %v2332
        %v2345 = vunpack.c.l.b16 %v2333
        %v2346 = vunpack.c.l.b16 %v2334
        %v2347 = vunpack.c.l.b16 %v2335
        %v2348 = vpack.c.b16 %v2345, %v2344
        %v2349 = vpack.c.b16 %v2347, %v2346
        %v2353 = vsel %vm644, %v2339, 0
        %2355 = vmatpush.bf16.msra.mxu0 0
        %2356 = vmatpush.bf16.msra.mxu0 0
        %2357 = vmatpush.bf16.msra.mxu0 0
        %2358 = vmatpush.bf16.msra.mxu0 0
        %2359 = vmatpush.bf16.msra.mxu0 0
        %2360 = vmatpush.bf16.msra.mxu0 0
        %2361 = vmatpush.bf16.msra.mxu0 %v2349
        %2362 = vmatpush.bf16.msra.mxu0 %v2348
        %2363 = vmatmul.bf16.gmra.mxu0 %v2353
        %v2364 = vpop.f32.mrf.mxu0
        %v2365 = vadd.f32 %v2319, %v2364
        %v2366 = vpop.f32.mrf.mxu0
        %2367 = vdwg.mxu0
        %v2368 = vmax.f32 %v2365, 0.0
        %s2369 = scalar_lea.vmem %s421, 32 [#allocation2]
        %v2370 = vld [vmem:[%s2369] sm:$0xf]
        %v2371 = vld [vmem:[%s2369 + $0x4] sm:$0xf]
        %v2372 = vld [vmem:[%s2369 + $0x8] sm:$0xf]
        %v2373 = vld [vmem:[%s2369 + $0xc] sm:$0xf]
        %v2374 = vld [vmem:[%s2369 + $0x10] sm:$0xf]
        %v2375 = vld [vmem:[%s2369 + $0x14] sm:$0xf]
        %v2376 = vld [vmem:[%s2369 + $0x18] sm:$0xf]
        %v2377 = vld [vmem:[%s2369 + $0x1c] sm:$0xf]
        %v2378 = vpack.c.bf16 %v2368, %v2368
        %v2387 = vunpack.c.l.b16 %v2370
        %v2388 = vunpack.c.l.b16 %v2371
        %v2389 = vunpack.c.l.b16 %v2372
        %v2390 = vunpack.c.l.b16 %v2373
        %v2391 = vunpack.c.l.b16 %v2374
        %v2392 = vunpack.c.l.b16 %v2375
        %v2393 = vunpack.c.l.b16 %v2376
        %v2394 = vunpack.c.l.b16 %v2377
        %v2395 = vpack.c.b16 %v2388, %v2387
        %v2396 = vpack.c.b16 %v2390, %v2389
        %v2397 = vpack.c.b16 %v2392, %v2391
        %v2398 = vpack.c.b16 %v2394, %v2393
        %2403 = vrot.lane.b32.xlu0 %v2319, 64
        %v2404 = vpop.permute.xlu0 %2403
        %v2407 = vsel %vm1473, %v2378, 0
        %2409 = vmatpush.bf16.msra.mxu0 0
        %2410 = vmatpush.bf16.msra.mxu0 0
        %2411 = vmatpush.bf16.msra.mxu0 0
        %2412 = vmatpush.bf16.msra.mxu0 0
        %2413 = vmatpush.bf16.msra.mxu0 %v2398
        %2414 = vmatpush.bf16.msra.mxu0 %v2397
        %2415 = vmatpush.bf16.msra.mxu0 %v2396
        %2416 = vmatpush.bf16.msra.mxu0 %v2395
        %2417 = vmatmul.bf16.gmra.mxu0 %v2407
        %v2418 = vpop.f32.mrf.mxu0
        %v2419 = vadd.f32 %v2404, %v2418
        %v2420 = vpop.f32.mrf.mxu0
        %2421 = vdwg.mxu0
        %2423 = vrot.lane.b32.xlu0 %v2419, 96
        %v2424 = vpop.permute.xlu0 %2423
        %v2426 = vadd.f32 %v2331, %v2424
        %2428 = vrot.lane.b32.xlu0 %v2426, 32
        %v2429 = vpop.permute.xlu0 %2428
        %v2431 = vsel %vm644, %v2429, 0.0
        %2432 = vadd.xlane.f32.xlu0 %v2431
        %v2433 = vpop.xlane.xlu0 %2432
        %v2434 = vmul.f32 %v2433, %v1350
        %v2435 = vsub.f32 %v2426, %v2434
        %v2436 = vmul.f32 %v2435, %v2435
        %2438 = vrot.lane.b32.xlu0 %v2436, 32
        %v2439 = vpop.permute.xlu0 %2438
        %v2441 = vsel %vm644, %v2439, 0.0
        %2442 = vadd.xlane.f32.xlu0 %v2441
        %v2443 = vpop.xlane.xlu0 %2442
        %v2444 = vmul.f32 %v2443, 0.032258064
        %v2445 = vrsqrt.pop %v2444
        %v2446 = vmul.f32 %v2445, %v2444
        %v2447 = vmul.f32 %v2446, %v2445
        %v2448 = vmul.f32 0.5, %v2447
        %v2449 = vsub.f32 1.5, %v2448
        %v2450 = vmul.f32 %v2445, %v2449
        %v2451 = vmul.f32 %v2444, %v2450
        %vm2452 = vcmp.eq.f32.partialorder %v2444, inf
        %v2453 = vsel %vm2452, %v2444, %v2451
        %vm2454 = vcmp.eq.f32.partialorder %v2444, 0.0
        %v2455 = vand.u32 %v2444, 2147483648
        %v2456 = vsel %vm2454, %v2455, %v2453
        %v2457 = vadd.f32 %v2456, 1e-06
        %v2458 = vrcp.pop %v2457
        %v2459 = vmul.f32 %v2457, %v2458
        %v2460 = vsub.f32 1.0, %v2459
        %v2461 = vmul.f32 %v2458, %v2460
        %v2462 = vadd.f32 %v2458, %v2461
        %vm2463 = vweird.f32 %v2457
        %vm2464 = vweird.f32 %v2458
        %vm2465 = vmor %vm2463, %vm2464
        %v2466 = vsel %vm2465, %v2458, %v2462
        %v2467 = vand.u32 2147483647, %v2457
        %vm2468 = vcmp.eq.f32.partialorder %v2467, 8.507059e+37
        %v2469 = vand.u32 %v2457, 2147483648
        %v2470 = vor.u32 1.1754944e-38, %v2469
        %v2471 = vsel %vm2468, %v2470, %v2466
        %v2472 = vmul.f32 %v2435, %v2471
        %2475 = vrot.lane.b32.xlu0 %v2472, 64
        %v2476 = vpop.permute.xlu0 %2475
        %v2478 = vmul.f32 %v2327, %v2476
        %v2479 = vadd.f32 %v2478, %v2329
        %v2480 = vld [vmem:[%s519 + $0x4] sm:$0xf]
        %v2481 = vld [vmem:[%s519 + $0x14] sm:$0xf]
        %v2482 = vld [vmem:[%s519 + $0x24] sm:$0xf]
        %v2483 = vld [vmem:[%s519 + $0x34] sm:$0xf]
        %v2484 = vpack.c.bf16 %v616, %v614
        %v2485 = vld [vmem:[%s523 + $0x2] sm:$0x1]
        %v2487 = vperm.slane %v2485, 0
        %v2492 = vunpack.c.l.b16 %v2480
        %v2493 = vunpack.c.l.b16 %v2481
        %v2494 = vunpack.c.l.b16 %v2482
        %v2495 = vunpack.c.l.b16 %v2483
        %v2496 = vpack.c.b16 %v2493, %v2492
        %v2497 = vpack.c.b16 %v2495, %v2494
        %2498 = vrot.lane.b32.xlu0 %v2496, 64
        %v2499 = vpop.permute.xlu0 %2498
        %2500 = vrot.lane.b32.xlu0 %v2497, 64
        %v2501 = vpop.permute.xlu0 %2500
        %2504 = vrot.lane.b32.xlu0 %v2487, 32
        %v2505 = vpop.permute.xlu0 %2504
        %v2508 = vsel %vm644, %v2484, 0
        %2510 = vmatpush.bf16.msra.mxu0 0
        %2511 = vmatpush.bf16.msra.mxu0 0
        %2512 = vmatpush.bf16.msra.mxu0 0
        %2513 = vmatpush.bf16.msra.mxu0 0
        %2514 = vmatpush.bf16.msra.mxu0 0
        %2515 = vmatpush.bf16.msra.mxu0 0
        %2516 = vmatpush.bf16.msra.mxu0 %v2501
        %2517 = vmatpush.bf16.msra.mxu0 %v2499
        %2518 = vmatmul.bf16.gmra.mxu0 %v2508
        %v2519 = vpop.f32.mrf.mxu0
        %v2520 = vadd.f32 %v2505, %v2519
        %v2521 = vpop.f32.mrf.mxu0
        %v2522 = vadd.f32 %v2505, %v2521
        %2523 = vdwg.mxu0
        %v2524 = vld [vmem:[%s523 + $0x3] sm:$0x1]
        %v2526 = vperm.slane %v2524, 0
        %2528 = vrot.lane.b32.xlu0 %v2496, 32
        %v2529 = vpop.permute.xlu0 %2528
        %2530 = vrot.lane.b32.xlu0 %v2497, 32
        %v2531 = vpop.permute.xlu0 %2530
        %2534 = vmatpush.bf16.msra.mxu0 0
        %2535 = vmatpush.bf16.msra.mxu0 0
        %2536 = vmatpush.bf16.msra.mxu0 0
        %2537 = vmatpush.bf16.msra.mxu0 0
        %2538 = vmatpush.bf16.msra.mxu0 0
        %2539 = vmatpush.bf16.msra.mxu0 0
        %2540 = vmatpush.bf16.msra.mxu0 %v2531
        %2541 = vmatpush.bf16.msra.mxu0 %v2529
        %2542 = vmatmul.bf16.gmra.mxu0 %v2508
        %v2543 = vpop.f32.mrf.mxu0
        %v2544 = vadd.f32 %v2526, %v2543
        %v2545 = vpop.f32.mrf.mxu0
        %v2546 = vadd.f32 %v2526, %v2545
        %2547 = vdwg.mxu0
        %v2548 = vld [vmem:[%s519 + $0x8] sm:$0xf]
        %v2549 = vld [vmem:[%s519 + $0x18] sm:$0xf]
        %v2550 = vld [vmem:[%s519 + $0x28] sm:$0xf]
        %v2551 = vld [vmem:[%s519 + $0x38] sm:$0xf]
        %v2556 = vunpack.c.l.b16 %v2548
        %v2557 = vunpack.c.l.b16 %v2549
        %v2558 = vunpack.c.l.b16 %v2550
        %v2559 = vunpack.c.l.b16 %v2551
        %v2560 = vpack.c.b16 %v2557, %v2556
        %v2561 = vpack.c.b16 %v2559, %v2558
        %2564 = vrot.lane.b32.xlu0 %v2526, 96
        %v2565 = vpop.permute.xlu0 %2564
        %2567 = vmatpush.bf16.msra.mxu0 0
        %2568 = vmatpush.bf16.msra.mxu0 0
        %2569 = vmatpush.bf16.msra.mxu0 0
        %2570 = vmatpush.bf16.msra.mxu0 0
        %2571 = vmatpush.bf16.msra.mxu0 0
        %2572 = vmatpush.bf16.msra.mxu0 0
        %2573 = vmatpush.bf16.msra.mxu0 %v2561
        %2574 = vmatpush.bf16.msra.mxu0 %v2560
        %2575 = vmatmul.bf16.gmra.mxu0 %v2508
        %v2576 = vpop.f32.mrf.mxu0
        %v2577 = vadd.f32 %v2565, %v2576
        %v2578 = vpop.f32.mrf.mxu0
        %v2579 = vadd.f32 %v2565, %v2578
        %2580 = vdwg.mxu0
        %v2581 = vpack.c.bf16 %v2522, %v2520
        %v2582 = vpack.c.bf16 %v2546, %v2544
        %v2584 = vsel %vm707, %v2581, 0
        %v2587 = vsel %vm707, %v2582, 0
        %2589 = vmatpush.bf16.xpose.msra.mxu0 0
        %2590 = vmatpush.bf16.xpose.msra.mxu0 0
        %2591 = vmatpush.bf16.xpose.msra.mxu0 0
        %2592 = vmatpush.bf16.xpose.msra.mxu0 0
        %2593 = vmatpush.bf16.xpose.msra.mxu0 0
        %2594 = vmatpush.bf16.xpose.msra.mxu0 0
        %2595 = vmatpush.bf16.xpose.msra.mxu0 0
        %2596 = vmatpush.bf16.xpose.msra.mxu0 %v2587
        %2597 = vmatmul.bf16.gmra.mxu0 %v2584
        %v2598 = vpop.f32.mrf.mxu0
        %v2599 = vadd.f32 0.0, %v2598
        %v2600 = vpop.f32.mrf.mxu0
        %v2601 = vadd.f32 0.0, %v2600
        %2602 = vdwg.mxu0
        %v2603 = vmul.f32 %v2599, 0.35355338
        %v2604 = vmul.f32 %v2601, 0.35355338
        %vm2605 = vcmask 130048
        %v2606 = vsel %vm2605, %v2603, -inf
        %2607 = vmax.xlane.f32.xlu0 %v2606
        %v2608 = vpop.xlane.xlu0 %2607
        %v2609 = vsel %vm2605, %v2604, -inf
        %2610 = vmax.xlane.f32.xlu0 %v2609
        %v2611 = vpop.xlane.xlu0 %2610
        %v2612 = vsub.f32 %v2603, %v2608
        %v2613 = vsub.f32 %v2604, %v2611
        %v2614 = vmul.f32 %v2612, 1.442695
        %v2615 = vpow.pop %v2614
        %v2616 = vmul.f32 %v2613, 1.442695
        %v2617 = vpow.pop %v2616
        %v2618 = vsel %vm2605, %v2615, 0.0
        %2619 = vadd.xlane.f32.xlu0 %v2618
        %v2620 = vpop.xlane.xlu0 %2619
        %v2621 = vsel %vm2605, %v2617, 0.0
        %2622 = vadd.xlane.f32.xlu0 %v2621
        %v2623 = vpop.xlane.xlu0 %2622
        %v2624 = vrcp.pop %v2620
        %v2625 = vmul.f32 %v2620, %v2624
        %v2626 = vsub.f32 1.0, %v2625
        %v2627 = vmul.f32 %v2624, %v2626
        %v2628 = vadd.f32 %v2624, %v2627
        %vm2629 = vweird.f32 %v2620
        %vm2630 = vweird.f32 %v2624
        %vm2631 = vmor %vm2629, %vm2630
        %v2632 = vsel %vm2631, %v2624, %v2628
        %v2633 = vand.u32 2147483647, %v2620
        %vm2634 = vcmp.eq.f32.partialorder %v2633, 8.507059e+37
        %v2635 = vand.u32 %v2620, 2147483648
        %v2636 = vor.u32 1.1754944e-38, %v2635
        %v2637 = vsel %vm2634, %v2636, %v2632
        %v2638 = vmul.f32 %v2615, %v2637
        %v2639 = vrcp.pop %v2623
        %v2640 = vmul.f32 %v2623, %v2639
        %v2641 = vsub.f32 1.0, %v2640
        %v2642 = vmul.f32 %v2639, %v2641
        %v2643 = vadd.f32 %v2639, %v2642
        %vm2644 = vweird.f32 %v2623
        %vm2645 = vweird.f32 %v2639
        %vm2646 = vmor %vm2644, %vm2645
        %v2647 = vsel %vm2646, %v2639, %v2643
        %v2648 = vand.u32 2147483647, %v2623
        %vm2649 = vcmp.eq.f32.partialorder %v2648, 8.507059e+37
        %v2650 = vand.u32 %v2623, 2147483648
        %v2651 = vor.u32 1.1754944e-38, %v2650
        %v2652 = vsel %vm2649, %v2651, %v2647
        %v2653 = vmul.f32 %v2617, %v2652
        %v2654 = vpack.c.bf16 %v2653, %v2638
        %v2655 = vpack.c.bf16 %v2579, %v2577
        %v2657 = vsel %vm2605, %v2654, 0
        %2659 = vmatpush.bf16.msra.mxu0 0
        %2660 = vmatpush.bf16.msra.mxu0 0
        %2661 = vmatpush.bf16.msra.mxu0 0
        %2662 = vmatpush.bf16.msra.mxu0 0
        %2663 = vmatpush.bf16.msra.mxu0 0
        %2664 = vmatpush.bf16.msra.mxu0 0
        %2665 = vmatpush.bf16.msra.mxu0 0
        %2666 = vmatpush.bf16.msra.mxu0 %v2655
        %2667 = vmatmul.bf16.gmra.mxu0 %v2657
        %v2668 = vpop.f32.mrf.mxu0
        %v2669 = vadd.f32 0.0, %v2668
        %v2670 = vpop.f32.mrf.mxu0
        %v2671 = vadd.f32 0.0, %v2670
        %2672 = vdwg.mxu0
        %v2673 = vld [vmem:[%s519 + $0x8] sm:$0xf]
        %v2674 = vpack.c.bf16 %v2671, %v2669
        %v2675 = vld [vmem:[%s519 + $0x4] sm:$0xf]
        %v2676 = vld [vmem:[%s519 + $0x14] sm:$0xf]
        %v2677 = vld [vmem:[%s519 + $0x24] sm:$0xf]
        %v2678 = vld [vmem:[%s519 + $0x34] sm:$0xf]
        %v2679 = vld [vmem:[%s523 + $0x2] sm:$0x1]
        %v2681 = vperm.slane %v2679, 0
        %v2686 = vunpack.c.l.b16 %v2675
        %v2687 = vunpack.c.l.b16 %v2676
        %v2688 = vunpack.c.l.b16 %v2677
        %v2689 = vunpack.c.l.b16 %v2678
        %v2690 = vpack.c.b16 %v2687, %v2686
        %v2691 = vpack.c.b16 %v2689, %v2688
        %2692 = vrot.lane.b32.xlu0 %v2690, 56
        %v2693 = vpop.permute.xlu0 %2692
        %2694 = vrot.lane.b32.xlu0 %v2691, 56
        %v2695 = vpop.permute.xlu0 %2694
        %2698 = vrot.lane.b32.xlu0 %v2681, 24
        %v2699 = vpop.permute.xlu0 %2698
        %2701 = vmatpush.bf16.msra.mxu0 0
        %2702 = vmatpush.bf16.msra.mxu0 0
        %2703 = vmatpush.bf16.msra.mxu0 0
        %2704 = vmatpush.bf16.msra.mxu0 0
        %2705 = vmatpush.bf16.msra.mxu0 0
        %2706 = vmatpush.bf16.msra.mxu0 0
        %2707 = vmatpush.bf16.msra.mxu0 %v2695
        %2708 = vmatpush.bf16.msra.mxu0 %v2693
        %2709 = vmatmul.bf16.gmra.mxu0 %v2508
        %v2710 = vpop.f32.mrf.mxu0
        %v2711 = vadd.f32 %v2699, %v2710
        %v2712 = vpop.f32.mrf.mxu0
        %v2713 = vadd.f32 %v2699, %v2712
        %2714 = vdwg.mxu0
        %v2715 = vld [vmem:[%s523 + $0x3] sm:$0x1]
        %v2717 = vperm.slane %v2715, 0
        %2718 = vrot.lane.b32.xlu0 %v2690, 24
        %v2719 = vpop.permute.xlu0 %2718
        %2720 = vrot.lane.b32.xlu0 %v2691, 24
        %v2721 = vpop.permute.xlu0 %2720
        %2724 = vrot.lane.b32.xlu0 %v2717, 120
        %v2725 = vpop.permute.xlu0 %2724
        %2727 = vmatpush.bf16.msra.mxu0 0
        %2728 = vmatpush.bf16.msra.mxu0 0
        %2729 = vmatpush.bf16.msra.mxu0 0
        %2730 = vmatpush.bf16.msra.mxu0 0
        %2731 = vmatpush.bf16.msra.mxu0 0
        %2732 = vmatpush.bf16.msra.mxu0 0
        %2733 = vmatpush.bf16.msra.mxu0 %v2721
        %2734 = vmatpush.bf16.msra.mxu0 %v2719
        %2735 = vmatmul.bf16.gmra.mxu0 %v2508
        %v2736 = vpop.f32.mrf.mxu0
        %v2737 = vadd.f32 %v2725, %v2736
        %v2738 = vpop.f32.mrf.mxu0
        %v2739 = vadd.f32 %v2725, %v2738
        %2740 = vdwg.mxu0
        %v2741 = vld [vmem:[%s519 + $0x8] sm:$0xf]
        %v2742 = vld [vmem:[%s519 + $0x18] sm:$0xf]
        %v2743 = vld [vmem:[%s519 + $0x28] sm:$0xf]
        %v2744 = vld [vmem:[%s519 + $0x38] sm:$0xf]
        %v2749 = vunpack.c.l.b16 %v2741
        %v2750 = vunpack.c.l.b16 %v2742
        %v2751 = vunpack.c.l.b16 %v2743
        %v2752 = vunpack.c.l.b16 %v2744
        %v2753 = vpack.c.b16 %v2750, %v2749
        %v2754 = vpack.c.b16 %v2752, %v2751
        %2755 = vrot.lane.b32.xlu0 %v2753, 120
        %v2756 = vpop.permute.xlu0 %2755
        %2757 = vrot.lane.b32.xlu0 %v2754, 120
        %v2758 = vpop.permute.xlu0 %2757
        %2761 = vrot.lane.b32.xlu0 %v2717, 88
        %v2762 = vpop.permute.xlu0 %2761
        %2764 = vmatpush.bf16.msra.mxu0 0
        %2765 = vmatpush.bf16.msra.mxu0 0
        %2766 = vmatpush.bf16.msra.mxu0 0
        %2767 = vmatpush.bf16.msra.mxu0 0
        %2768 = vmatpush.bf16.msra.mxu0 0
        %2769 = vmatpush.bf16.msra.mxu0 0
        %2770 = vmatpush.bf16.msra.mxu0 %v2758
        %2771 = vmatpush.bf16.msra.mxu0 %v2756
        %2772 = vmatmul.bf16.gmra.mxu0 %v2508
        %v2773 = vpop.f32.mrf.mxu0
        %v2774 = vadd.f32 %v2762, %v2773
        %v2775 = vpop.f32.mrf.mxu0
        %v2776 = vadd.f32 %v2762, %v2775
        %2777 = vdwg.mxu0
        %v2778 = vpack.c.bf16 %v2713, %v2711
        %v2779 = vpack.c.bf16 %v2739, %v2737
        %v2781 = vsel %vm707, %v2778, 0
        %v2784 = vsel %vm707, %v2779, 0
        %2786 = vmatpush.bf16.xpose.msra.mxu0 0
        %2787 = vmatpush.bf16.xpose.msra.mxu0 0
        %2788 = vmatpush.bf16.xpose.msra.mxu0 0
        %2789 = vmatpush.bf16.xpose.msra.mxu0 0
        %2790 = vmatpush.bf16.xpose.msra.mxu0 0
        %2791 = vmatpush.bf16.xpose.msra.mxu0 0
        %2792 = vmatpush.bf16.xpose.msra.mxu0 0
        %2793 = vmatpush.bf16.xpose.msra.mxu0 %v2784
        %2794 = vmatmul.bf16.gmra.mxu0 %v2781
        %v2795 = vpop.f32.mrf.mxu0
        %v2796 = vadd.f32 0.0, %v2795
        %v2797 = vpop.f32.mrf.mxu0
        %v2798 = vadd.f32 0.0, %v2797
        %2799 = vdwg.mxu0
        %v2800 = vmul.f32 %v2796, 0.35355338
        %v2801 = vmul.f32 %v2798, 0.35355338
        %v2802 = vsel %vm2605, %v2800, -inf
        %2803 = vmax.xlane.f32.xlu0 %v2802
        %v2804 = vpop.xlane.xlu0 %2803
        %v2805 = vsel %vm2605, %v2801, -inf
        %2806 = vmax.xlane.f32.xlu0 %v2805
        %v2807 = vpop.xlane.xlu0 %2806
        %v2808 = vsub.f32 %v2800, %v2804
        %v2809 = vsub.f32 %v2801, %v2807
        %v2810 = vmul.f32 %v2808, 1.442695
        %v2811 = vpow.pop %v2810
        %v2812 = vmul.f32 %v2809, 1.442695
        %v2813 = vpow.pop %v2812
        %v2814 = vsel %vm2605, %v2811, 0.0
        %2815 = vadd.xlane.f32.xlu0 %v2814
        %v2816 = vpop.xlane.xlu0 %2815
        %v2817 = vsel %vm2605, %v2813, 0.0
        %2818 = vadd.xlane.f32.xlu0 %v2817
        %v2819 = vpop.xlane.xlu0 %2818
        %v2820 = vrcp.pop %v2816
        %v2821 = vmul.f32 %v2816, %v2820
        %v2822 = vsub.f32 1.0, %v2821
        %v2823 = vmul.f32 %v2820, %v2822
        %v2824 = vadd.f32 %v2820, %v2823
        %vm2825 = vweird.f32 %v2816
        %vm2826 = vweird.f32 %v2820
        %vm2827 = vmor %vm2825, %vm2826
        %v2828 = vsel %vm2827, %v2820, %v2824
        %v2829 = vand.u32 2147483647, %v2816
        %vm2830 = vcmp.eq.f32.partialorder %v2829, 8.507059e+37
        %v2831 = vand.u32 %v2816, 2147483648
        %v2832 = vor.u32 1.1754944e-38, %v2831
        %v2833 = vsel %vm2830, %v2832, %v2828
        %v2834 = vmul.f32 %v2811, %v2833
        %v2835 = vrcp.pop %v2819
        %v2836 = vmul.f32 %v2819, %v2835
        %v2837 = vsub.f32 1.0, %v2836
        %v2838 = vmul.f32 %v2835, %v2837
        %v2839 = vadd.f32 %v2835, %v2838
        %vm2840 = vweird.f32 %v2819
        %vm2841 = vweird.f32 %v2835
        %vm2842 = vmor %vm2840, %vm2841
        %v2843 = vsel %vm2842, %v2835, %v2839
        %v2844 = vand.u32 2147483647, %v2819
        %vm2845 = vcmp.eq.f32.partialorder %v2844, 8.507059e+37
        %v2846 = vand.u32 %v2819, 2147483648
        %v2847 = vor.u32 1.1754944e-38, %v2846
        %v2848 = vsel %vm2845, %v2847, %v2843
        %v2849 = vmul.f32 %v2813, %v2848
        %v2850 = vpack.c.bf16 %v2849, %v2834
        %v2851 = vpack.c.bf16 %v2776, %v2774
        %v2853 = vsel %vm2605, %v2850, 0
        %2855 = vmatpush.bf16.msra.mxu0 0
        %2856 = vmatpush.bf16.msra.mxu0 0
        %2857 = vmatpush.bf16.msra.mxu0 0
        %2858 = vmatpush.bf16.msra.mxu0 0
        %2859 = vmatpush.bf16.msra.mxu0 0
        %2860 = vmatpush.bf16.msra.mxu0 0
        %2861 = vmatpush.bf16.msra.mxu0 0
        %2862 = vmatpush.bf16.msra.mxu0 %v2851
        %2863 = vmatmul.bf16.gmra.mxu0 %v2853
        %v2864 = vpop.f32.mrf.mxu0
        %v2865 = vadd.f32 0.0, %v2864
        %v2866 = vpop.f32.mrf.mxu0
        %v2867 = vadd.f32 0.0, %v2866
        %2868 = vdwg.mxu0
        %v2869 = vld [vmem:[%s519 + $0x18] sm:$0xf]
        %v2870 = vpack.c.bf16 %v2867, %v2865
        %v2872 = vunpack.c.l.b16 %v2869
        %v2873 = vpack.c.b16 %v2872, %v2872
        %2874 = vrot.lane.b32.xlu0 %v2873, 96
        %v2875 = vpop.permute.xlu0 %2874
        %v2877 = vsel %vm707, %v2870, 0
        %v2880 = vsel %vm758, %v2875, 0
        %2882 = vmatpush.bf16.msra.mxu0 0
        %2883 = vmatpush.bf16.msra.mxu0 0
        %2884 = vmatpush.bf16.msra.mxu0 0
        %2885 = vmatpush.bf16.msra.mxu0 0
        %2886 = vmatpush.bf16.msra.mxu0 0
        %2887 = vmatpush.bf16.msra.mxu0 0
        %2888 = vmatpush.bf16.msra.mxu0 0
        %2889 = vmatpush.bf16.msra.mxu0 %v2880
        %2890 = vmatmul.bf16.gmra.mxu0 %v2877
        %v2891 = vpop.f32.mrf.mxu0
        %v2892 = vadd.f32 0.0, %v2891
        %v2893 = vpop.f32.mrf.mxu0
        %v2894 = vadd.f32 0.0, %v2893
        %2895 = vdwg.mxu0
        %v2897 = vunpack.c.l.b16 %v2673
        %v2898 = vpack.c.b16 %v2897, %v2897
        %2899 = vrot.lane.b32.xlu0 %v2898, 96
        %v2900 = vpop.permute.xlu0 %2899
        %v2902 = vsel %vm707, %v2674, 0
        %v2905 = vsel %vm758, %v2900, 0
        %2907 = vmatpush.bf16.msra.mxu0 0
        %2908 = vmatpush.bf16.msra.mxu0 0
        %2909 = vmatpush.bf16.msra.mxu0 0
        %2910 = vmatpush.bf16.msra.mxu0 0
        %2911 = vmatpush.bf16.msra.mxu0 0
        %2912 = vmatpush.bf16.msra.mxu0 0
        %2913 = vmatpush.bf16.msra.mxu0 0
        %2914 = vmatpush.bf16.msra.mxu0 %v2905
        %2915 = vmatmul.bf16.gmra.mxu0 %v2902
        %v2916 = vpop.f32.mrf.mxu0
        %v2917 = vadd.f32 %v2892, %v2916
        %v2918 = vpop.f32.mrf.mxu0
        %v2919 = vadd.f32 %v2894, %v2918
        %2920 = vdwg.mxu0
        %v2921 = vld [vmem:[%s519 + $0x4] sm:$0xf]
        %v2922 = vld [vmem:[%s519 + $0x14] sm:$0xf]
        %v2923 = vld [vmem:[%s519 + $0x24] sm:$0xf]
        %v2924 = vld [vmem:[%s519 + $0x34] sm:$0xf]
        %v2925 = vld [vmem:[%s523 + $0x2] sm:$0x1]
        %v2927 = vperm.slane %v2925, 0
        %v2932 = vunpack.c.l.b16 %v2921
        %v2933 = vunpack.c.l.b16 %v2922
        %v2934 = vunpack.c.l.b16 %v2923
        %v2935 = vunpack.c.l.b16 %v2924
        %v2936 = vpack.c.b16 %v2933, %v2932
        %v2937 = vpack.c.b16 %v2935, %v2934
        %2938 = vrot.lane.b32.xlu0 %v2936, 48
        %v2939 = vpop.permute.xlu0 %2938
        %2940 = vrot.lane.b32.xlu0 %v2937, 48
        %v2941 = vpop.permute.xlu0 %2940
        %2944 = vrot.lane.b32.xlu0 %v2927, 16
        %v2945 = vpop.permute.xlu0 %2944
        %2947 = vmatpush.bf16.msra.mxu0 0
        %2948 = vmatpush.bf16.msra.mxu0 0
        %2949 = vmatpush.bf16.msra.mxu0 0
        %2950 = vmatpush.bf16.msra.mxu0 0
        %2951 = vmatpush.bf16.msra.mxu0 0
        %2952 = vmatpush.bf16.msra.mxu0 0
        %2953 = vmatpush.bf16.msra.mxu0 %v2941
        %2954 = vmatpush.bf16.msra.mxu0 %v2939
        %2955 = vmatmul.bf16.gmra.mxu0 %v2508
        %v2956 = vpop.f32.mrf.mxu0
        %v2957 = vadd.f32 %v2945, %v2956
        %v2958 = vpop.f32.mrf.mxu0
        %v2959 = vadd.f32 %v2945, %v2958
        %2960 = vdwg.mxu0
        %v2961 = vld [vmem:[%s523 + $0x3] sm:$0x1]
        %v2963 = vperm.slane %v2961, 0
        %2964 = vrot.lane.b32.xlu0 %v2936, 16
        %v2965 = vpop.permute.xlu0 %2964
        %2966 = vrot.lane.b32.xlu0 %v2937, 16
        %v2967 = vpop.permute.xlu0 %2966
        %2970 = vrot.lane.b32.xlu0 %v2963, 112
        %v2971 = vpop.permute.xlu0 %2970
        %2973 = vmatpush.bf16.msra.mxu0 0
        %2974 = vmatpush.bf16.msra.mxu0 0
        %2975 = vmatpush.bf16.msra.mxu0 0
        %2976 = vmatpush.bf16.msra.mxu0 0
        %2977 = vmatpush.bf16.msra.mxu0 0
        %2978 = vmatpush.bf16.msra.mxu0 0
        %2979 = vmatpush.bf16.msra.mxu0 %v2967
        %2980 = vmatpush.bf16.msra.mxu0 %v2965
        %2981 = vmatmul.bf16.gmra.mxu0 %v2508
        %v2982 = vpop.f32.mrf.mxu0
        %v2983 = vadd.f32 %v2971, %v2982
        %v2984 = vpop.f32.mrf.mxu0
        %v2985 = vadd.f32 %v2971, %v2984
        %2986 = vdwg.mxu0
        %v2987 = vld [vmem:[%s519 + $0x8] sm:$0xf]
        %v2988 = vld [vmem:[%s519 + $0x18] sm:$0xf]
        %v2989 = vld [vmem:[%s519 + $0x28] sm:$0xf]
        %v2990 = vld [vmem:[%s519 + $0x38] sm:$0xf]
        %v2995 = vunpack.c.l.b16 %v2987
        %v2996 = vunpack.c.l.b16 %v2988
        %v2997 = vunpack.c.l.b16 %v2989
        %v2998 = vunpack.c.l.b16 %v2990
        %v2999 = vpack.c.b16 %v2996, %v2995
        %v3000 = vpack.c.b16 %v2998, %v2997
        %3001 = vrot.lane.b32.xlu0 %v2999, 112
        %v3002 = vpop.permute.xlu0 %3001
        %3003 = vrot.lane.b32.xlu0 %v3000, 112
        %v3004 = vpop.permute.xlu0 %3003
        %3007 = vrot.lane.b32.xlu0 %v2963, 80
        %v3008 = vpop.permute.xlu0 %3007
        %3010 = vmatpush.bf16.msra.mxu0 0
        %3011 = vmatpush.bf16.msra.mxu0 0
        %3012 = vmatpush.bf16.msra.mxu0 0
        %3013 = vmatpush.bf16.msra.mxu0 0
        %3014 = vmatpush.bf16.msra.mxu0 0
        %3015 = vmatpush.bf16.msra.mxu0 0
        %3016 = vmatpush.bf16.msra.mxu0 %v3004
        %3017 = vmatpush.bf16.msra.mxu0 %v3002
        %3018 = vmatmul.bf16.gmra.mxu0 %v2508
        %v3019 = vpop.f32.mrf.mxu0
        %v3020 = vadd.f32 %v3008, %v3019
        %v3021 = vpop.f32.mrf.mxu0
        %v3022 = vadd.f32 %v3008, %v3021
        %3023 = vdwg.mxu0
        %v3024 = vpack.c.bf16 %v2959, %v2957
        %v3025 = vpack.c.bf16 %v2985, %v2983
        %v3027 = vsel %vm707, %v3024, 0
        %v3030 = vsel %vm707, %v3025, 0
        %3032 = vmatpush.bf16.xpose.msra.mxu0 0
        %3033 = vmatpush.bf16.xpose.msra.mxu0 0
        %3034 = vmatpush.bf16.xpose.msra.mxu0 0
        %3035 = vmatpush.bf16.xpose.msra.mxu0 0
        %3036 = vmatpush.bf16.xpose.msra.mxu0 0
        %3037 = vmatpush.bf16.xpose.msra.mxu0 0
        %3038 = vmatpush.bf16.xpose.msra.mxu0 0
        %3039 = vmatpush.bf16.xpose.msra.mxu0 %v3030
        %3040 = vmatmul.bf16.gmra.mxu0 %v3027
        %v3041 = vpop.f32.mrf.mxu0
        %v3042 = vadd.f32 0.0, %v3041
        %v3043 = vpop.f32.mrf.mxu0
        %v3044 = vadd.f32 0.0, %v3043
        %3045 = vdwg.mxu0
        %v3046 = vmul.f32 %v3042, 0.35355338
        %v3047 = vmul.f32 %v3044, 0.35355338
        %v3048 = vsel %vm2605, %v3046, -inf
        %3049 = vmax.xlane.f32.xlu0 %v3048
        %v3050 = vpop.xlane.xlu0 %3049
        %v3051 = vsel %vm2605, %v3047, -inf
        %3052 = vmax.xlane.f32.xlu0 %v3051
        %v3053 = vpop.xlane.xlu0 %3052
        %v3054 = vsub.f32 %v3046, %v3050
        %v3055 = vsub.f32 %v3047, %v3053
        %v3056 = vmul.f32 %v3054, 1.442695
        %v3057 = vpow.pop %v3056
        %v3058 = vmul.f32 %v3055, 1.442695
        %v3059 = vpow.pop %v3058
        %v3060 = vsel %vm2605, %v3057, 0.0
        %3061 = vadd.xlane.f32.xlu0 %v3060
        %v3062 = vpop.xlane.xlu0 %3061
        %v3063 = vsel %vm2605, %v3059, 0.0
        %3064 = vadd.xlane.f32.xlu0 %v3063
        %v3065 = vpop.xlane.xlu0 %3064
        %v3066 = vrcp.pop %v3062
        %v3067 = vmul.f32 %v3062, %v3066
        %v3068 = vsub.f32 1.0, %v3067
        %v3069 = vmul.f32 %v3066, %v3068
        %v3070 = vadd.f32 %v3066, %v3069
        %vm3071 = vweird.f32 %v3062
        %vm3072 = vweird.f32 %v3066
        %vm3073 = vmor %vm3071, %vm3072
        %v3074 = vsel %vm3073, %v3066, %v3070
        %v3075 = vand.u32 2147483647, %v3062
        %vm3076 = vcmp.eq.f32.partialorder %v3075, 8.507059e+37
        %v3077 = vand.u32 %v3062, 2147483648
        %v3078 = vor.u32 1.1754944e-38, %v3077
        %v3079 = vsel %vm3076, %v3078, %v3074
        %v3080 = vmul.f32 %v3057, %v3079
        %v3081 = vrcp.pop %v3065
        %v3082 = vmul.f32 %v3065, %v3081
        %v3083 = vsub.f32 1.0, %v3082
        %v3084 = vmul.f32 %v3081, %v3083
        %v3085 = vadd.f32 %v3081, %v3084
        %vm3086 = vweird.f32 %v3065
        %vm3087 = vweird.f32 %v3081
        %vm3088 = vmor %vm3086, %vm3087
        %v3089 = vsel %vm3088, %v3081, %v3085
        %v3090 = vand.u32 2147483647, %v3065
        %vm3091 = vcmp.eq.f32.partialorder %v3090, 8.507059e+37
        %v3092 = vand.u32 %v3065, 2147483648
        %v3093 = vor.u32 1.1754944e-38, %v3092
        %v3094 = vsel %vm3091, %v3093, %v3089
        %v3095 = vmul.f32 %v3059, %v3094
        %v3096 = vpack.c.bf16 %v3095, %v3080
        %v3097 = vpack.c.bf16 %v3022, %v3020
        %v3099 = vsel %vm2605, %v3096, 0
        %3101 = vmatpush.bf16.msra.mxu0 0
        %3102 = vmatpush.bf16.msra.mxu0 0
        %3103 = vmatpush.bf16.msra.mxu0 0
        %3104 = vmatpush.bf16.msra.mxu0 0
        %3105 = vmatpush.bf16.msra.mxu0 0
        %3106 = vmatpush.bf16.msra.mxu0 0
        %3107 = vmatpush.bf16.msra.mxu0 0
        %3108 = vmatpush.bf16.msra.mxu0 %v3097
        %3109 = vmatmul.bf16.gmra.mxu0 %v3099
        %v3110 = vpop.f32.mrf.mxu0
        %v3111 = vadd.f32 0.0, %v3110
        %v3112 = vpop.f32.mrf.mxu0
        %v3113 = vadd.f32 0.0, %v3112
        %3114 = vdwg.mxu0
        %v3115 = vld [vmem:[%s519 + $0x28] sm:$0xf]
        %v3116 = vpack.c.bf16 %v3113, %v3111
        %v3118 = vunpack.c.l.b16 %v3115
        %v3119 = vpack.c.b16 %v3118, %v3118
        %3120 = vrot.lane.b32.xlu0 %v3119, 96
        %v3121 = vpop.permute.xlu0 %3120
        %v3123 = vsel %vm707, %v3116, 0
        %v3126 = vsel %vm758, %v3121, 0
        %3128 = vmatpush.bf16.msra.mxu0 0
        %3129 = vmatpush.bf16.msra.mxu0 0
        %3130 = vmatpush.bf16.msra.mxu0 0
        %3131 = vmatpush.bf16.msra.mxu0 0
        %3132 = vmatpush.bf16.msra.mxu0 0
        %3133 = vmatpush.bf16.msra.mxu0 0
        %3134 = vmatpush.bf16.msra.mxu0 0
        %3135 = vmatpush.bf16.msra.mxu0 %v3126
        %3136 = vmatmul.bf16.gmra.mxu0 %v3123
        %v3137 = vpop.f32.mrf.mxu0
        %v3138 = vadd.f32 0.0, %v3137
        %v3139 = vpop.f32.mrf.mxu0
        %v3140 = vadd.f32 0.0, %v3139
        %3141 = vdwg.mxu0
        %v3142 = vadd.f32 %v2917, %v3138
        %v3143 = vadd.f32 %v2919, %v3140
        %v3144 = vld [vmem:[%s519 + $0x4] sm:$0xf]
        %v3145 = vld [vmem:[%s519 + $0x14] sm:$0xf]
        %v3146 = vld [vmem:[%s519 + $0x24] sm:$0xf]
        %v3147 = vld [vmem:[%s519 + $0x34] sm:$0xf]
        %v3148 = vld [vmem:[%s523 + $0x2] sm:$0x1]
        %v3150 = vperm.slane %v3148, 0
        %v3155 = vunpack.c.l.b16 %v3144
        %v3156 = vunpack.c.l.b16 %v3145
        %v3157 = vunpack.c.l.b16 %v3146
        %v3158 = vunpack.c.l.b16 %v3147
        %v3159 = vpack.c.b16 %v3156, %v3155
        %v3160 = vpack.c.b16 %v3158, %v3157
        %3161 = vrot.lane.b32.xlu0 %v3159, 40
        %v3162 = vpop.permute.xlu0 %3161
        %3163 = vrot.lane.b32.xlu0 %v3160, 40
        %v3164 = vpop.permute.xlu0 %3163
        %3167 = vrot.lane.b32.xlu0 %v3150, 8
        %v3168 = vpop.permute.xlu0 %3167
        %3170 = vmatpush.bf16.msra.mxu0 0
        %3171 = vmatpush.bf16.msra.mxu0 0
        %3172 = vmatpush.bf16.msra.mxu0 0
        %3173 = vmatpush.bf16.msra.mxu0 0
        %3174 = vmatpush.bf16.msra.mxu0 0
        %3175 = vmatpush.bf16.msra.mxu0 0
        %3176 = vmatpush.bf16.msra.mxu0 %v3164
        %3177 = vmatpush.bf16.msra.mxu0 %v3162
        %3178 = vmatmul.bf16.gmra.mxu0 %v2508
        %v3179 = vpop.f32.mrf.mxu0
        %v3180 = vadd.f32 %v3168, %v3179
        %v3181 = vpop.f32.mrf.mxu0
        %v3182 = vadd.f32 %v3168, %v3181
        %3183 = vdwg.mxu0
        %v3184 = vld [vmem:[%s523 + $0x3] sm:$0x1]
        %v3186 = vperm.slane %v3184, 0
        %3187 = vrot.lane.b32.xlu0 %v3159, 8
        %v3188 = vpop.permute.xlu0 %3187
        %3189 = vrot.lane.b32.xlu0 %v3160, 8
        %v3190 = vpop.permute.xlu0 %3189
        %3193 = vrot.lane.b32.xlu0 %v3186, 104
        %v3194 = vpop.permute.xlu0 %3193
        %3196 = vmatpush.bf16.msra.mxu0 0
        %3197 = vmatpush.bf16.msra.mxu0 0
        %3198 = vmatpush.bf16.msra.mxu0 0
        %3199 = vmatpush.bf16.msra.mxu0 0
        %3200 = vmatpush.bf16.msra.mxu0 0
        %3201 = vmatpush.bf16.msra.mxu0 0
        %3202 = vmatpush.bf16.msra.mxu0 %v3190
        %3203 = vmatpush.bf16.msra.mxu0 %v3188
        %3204 = vmatmul.bf16.gmra.mxu0 %v2508
        %v3205 = vpop.f32.mrf.mxu0
        %v3206 = vadd.f32 %v3194, %v3205
        %v3207 = vpop.f32.mrf.mxu0
        %v3208 = vadd.f32 %v3194, %v3207
        %3209 = vdwg.mxu0
        %v3210 = vld [vmem:[%s519 + $0x8] sm:$0xf]
        %v3211 = vld [vmem:[%s519 + $0x18] sm:$0xf]
        %v3212 = vld [vmem:[%s519 + $0x28] sm:$0xf]
        %v3213 = vld [vmem:[%s519 + $0x38] sm:$0xf]
        %v3218 = vunpack.c.l.b16 %v3210
        %v3219 = vunpack.c.l.b16 %v3211
        %v3220 = vunpack.c.l.b16 %v3212
        %v3221 = vunpack.c.l.b16 %v3213
        %v3222 = vpack.c.b16 %v3219, %v3218
        %v3223 = vpack.c.b16 %v3221, %v3220
        %3224 = vrot.lane.b32.xlu0 %v3222, 104
        %v3225 = vpop.permute.xlu0 %3224
        %3226 = vrot.lane.b32.xlu0 %v3223, 104
        %v3227 = vpop.permute.xlu0 %3226
        %3230 = vrot.lane.b32.xlu0 %v3186, 72
        %v3231 = vpop.permute.xlu0 %3230
        %3233 = vmatpush.bf16.msra.mxu0 0
        %3234 = vmatpush.bf16.msra.mxu0 0
        %3235 = vmatpush.bf16.msra.mxu0 0
        %3236 = vmatpush.bf16.msra.mxu0 0
        %3237 = vmatpush.bf16.msra.mxu0 0
        %3238 = vmatpush.bf16.msra.mxu0 0
        %3239 = vmatpush.bf16.msra.mxu0 %v3227
        %3240 = vmatpush.bf16.msra.mxu0 %v3225
        %3241 = vmatmul.bf16.gmra.mxu0 %v2508
        %v3242 = vpop.f32.mrf.mxu0
        %v3243 = vadd.f32 %v3231, %v3242
        %v3244 = vpop.f32.mrf.mxu0
        %v3245 = vadd.f32 %v3231, %v3244
        %3246 = vdwg.mxu0
        %v3247 = vpack.c.bf16 %v3182, %v3180
        %v3248 = vpack.c.bf16 %v3208, %v3206
        %v3250 = vsel %vm707, %v3247, 0
        %v3253 = vsel %vm707, %v3248, 0
        %3255 = vmatpush.bf16.xpose.msra.mxu0 0
        %3256 = vmatpush.bf16.xpose.msra.mxu0 0
        %3257 = vmatpush.bf16.xpose.msra.mxu0 0
        %3258 = vmatpush.bf16.xpose.msra.mxu0 0
        %3259 = vmatpush.bf16.xpose.msra.mxu0 0
        %3260 = vmatpush.bf16.xpose.msra.mxu0 0
        %3261 = vmatpush.bf16.xpose.msra.mxu0 0
        %3262 = vmatpush.bf16.xpose.msra.mxu0 %v3253
        %3263 = vmatmul.bf16.gmra.mxu0 %v3250
        %v3264 = vpop.f32.mrf.mxu0
        %v3265 = vadd.f32 0.0, %v3264
        %v3266 = vpop.f32.mrf.mxu0
        %v3267 = vadd.f32 0.0, %v3266
        %3268 = vdwg.mxu0
        %v3269 = vmul.f32 %v3265, 0.35355338
        %v3270 = vmul.f32 %v3267, 0.35355338
        %v3271 = vsel %vm2605, %v3269, -inf
        %3272 = vmax.xlane.f32.xlu0 %v3271
        %v3273 = vpop.xlane.xlu0 %3272
        %v3274 = vsel %vm2605, %v3270, -inf
        %3275 = vmax.xlane.f32.xlu0 %v3274
        %v3276 = vpop.xlane.xlu0 %3275
        %v3277 = vsub.f32 %v3269, %v3273
        %v3278 = vsub.f32 %v3270, %v3276
        %v3279 = vmul.f32 %v3277, 1.442695
        %v3280 = vpow.pop %v3279
        %v3281 = vmul.f32 %v3278, 1.442695
        %v3282 = vpow.pop %v3281
        %v3283 = vsel %vm2605, %v3280, 0.0
        %3284 = vadd.xlane.f32.xlu0 %v3283
        %v3285 = vpop.xlane.xlu0 %3284
        %v3286 = vsel %vm2605, %v3282, 0.0
        %3287 = vadd.xlane.f32.xlu0 %v3286
        %v3288 = vpop.xlane.xlu0 %3287
        %v3289 = vrcp.pop %v3285
        %v3290 = vmul.f32 %v3285, %v3289
        %v3291 = vsub.f32 1.0, %v3290
        %v3292 = vmul.f32 %v3289, %v3291
        %v3293 = vadd.f32 %v3289, %v3292
        %vm3294 = vweird.f32 %v3285
        %vm3295 = vweird.f32 %v3289
        %vm3296 = vmor %vm3294, %vm3295
        %v3297 = vsel %vm3296, %v3289, %v3293
        %v3298 = vand.u32 2147483647, %v3285
        %vm3299 = vcmp.eq.f32.partialorder %v3298, 8.507059e+37
        %v3300 = vand.u32 %v3285, 2147483648
        %v3301 = vor.u32 1.1754944e-38, %v3300
        %v3302 = vsel %vm3299, %v3301, %v3297
        %v3303 = vmul.f32 %v3280, %v3302
        %v3304 = vrcp.pop %v3288
        %v3305 = vmul.f32 %v3288, %v3304
        %v3306 = vsub.f32 1.0, %v3305
        %v3307 = vmul.f32 %v3304, %v3306
        %v3308 = vadd.f32 %v3304, %v3307
        %vm3309 = vweird.f32 %v3288
        %vm3310 = vweird.f32 %v3304
        %vm3311 = vmor %vm3309, %vm3310
        %v3312 = vsel %vm3311, %v3304, %v3308
        %v3313 = vand.u32 2147483647, %v3288
        %vm3314 = vcmp.eq.f32.partialorder %v3313, 8.507059e+37
        %v3315 = vand.u32 %v3288, 2147483648
        %v3316 = vor.u32 1.1754944e-38, %v3315
        %v3317 = vsel %vm3314, %v3316, %v3312
        %v3318 = vmul.f32 %v3282, %v3317
        %v3319 = vpack.c.bf16 %v3318, %v3303
        %v3320 = vpack.c.bf16 %v3245, %v3243
        %v3322 = vsel %vm2605, %v3319, 0
        %3324 = vmatpush.bf16.msra.mxu0 0
        %3325 = vmatpush.bf16.msra.mxu0 0
        %3326 = vmatpush.bf16.msra.mxu0 0
        %3327 = vmatpush.bf16.msra.mxu0 0
        %3328 = vmatpush.bf16.msra.mxu0 0
        %3329 = vmatpush.bf16.msra.mxu0 0
        %3330 = vmatpush.bf16.msra.mxu0 0
        %3331 = vmatpush.bf16.msra.mxu0 %v3320
        %3332 = vmatmul.bf16.gmra.mxu0 %v3322
        %v3333 = vpop.f32.mrf.mxu0
        %v3334 = vadd.f32 0.0, %v3333
        %v3335 = vpop.f32.mrf.mxu0
        %v3336 = vadd.f32 0.0, %v3335
        %3337 = vdwg.mxu0
        %v3338 = vld [vmem:[%s519 + $0x38] sm:$0xf]
        %v3339 = vpack.c.bf16 %v3336, %v3334
        %v3341 = vunpack.c.l.b16 %v3338
        %v3342 = vpack.c.b16 %v3341, %v3341
        %3343 = vrot.lane.b32.xlu0 %v3342, 96
        %v3344 = vpop.permute.xlu0 %3343
        %v3346 = vsel %vm707, %v3339, 0
        %v3349 = vsel %vm758, %v3344, 0
        %3351 = vmatpush.bf16.msra.mxu0 0
        %3352 = vmatpush.bf16.msra.mxu0 0
        %3353 = vmatpush.bf16.msra.mxu0 0
        %3354 = vmatpush.bf16.msra.mxu0 0
        %3355 = vmatpush.bf16.msra.mxu0 0
        %3356 = vmatpush.bf16.msra.mxu0 0
        %3357 = vmatpush.bf16.msra.mxu0 0
        %3358 = vmatpush.bf16.msra.mxu0 %v3349
        %3359 = vmatmul.bf16.gmra.mxu0 %v3346
        %v3360 = vpop.f32.mrf.mxu0
        %v3361 = vadd.f32 0.0, %v3360
        %v3362 = vpop.f32.mrf.mxu0
        %v3363 = vadd.f32 0.0, %v3362
        %3364 = vdwg.mxu0
        %v3365 = vadd.f32 %v3142, %v3361
        %v3366 = vadd.f32 %v3143, %v3363
        %v3367 = vld [vmem:[%s523 + $0x3] sm:$0x1]
        %v3369 = vperm.slane %v3367, 0
        %3370 = vrot.lane.b32.xlu0 %v3369, 64
        %v3371 = vpop.permute.xlu0 %3370
        %v3373 = vadd.f32 %v3365, %v3371
        %v3374 = vadd.f32 %v3366, %v3371
        %v3375 = vadd.f32 %v614, %v3373
        %v3376 = vadd.f32 %v616, %v3374
        %v3377 = vld [vmem:[%s523 + $0x5] sm:$0x1]
        %v3378 = vsel %vm644, %v3375, 0.0
        %3379 = vadd.xlane.f32.xlu0 %v3378
        %v3380 = vpop.xlane.xlu0 %3379
        %v3381 = vsel %vm644, %v3376, 0.0
        %3382 = vadd.xlane.f32.xlu0 %v3381
        %v3383 = vpop.xlane.xlu0 %3382
        %v3384 = vmul.f32 %v3380, %v1350
        %v3385 = vmul.f32 %v3383, %v1350
        %v3386 = vsub.f32 %v3375, %v3384
        %v3387 = vsub.f32 %v3376, %v3385
        %v3388 = vmul.f32 %v3386, %v3386
        %v3389 = vmul.f32 %v3387, %v3387
        %v3390 = vsel %vm644, %v3388, 0.0
        %3391 = vadd.xlane.f32.xlu0 %v3390
        %v3392 = vpop.xlane.xlu0 %3391
        %v3393 = vsel %vm644, %v3389, 0.0
        %3394 = vadd.xlane.f32.xlu0 %v3393
        %v3395 = vpop.xlane.xlu0 %3394
        %v3396 = vmul.f32 %v3392, 0.032258064
        %v3397 = vmul.f32 %v3395, 0.032258064
        %v3398 = vrsqrt.pop %v3396
        %v3399 = vmul.f32 %v3398, %v3396
        %v3400 = vmul.f32 %v3399, %v3398
        %v3401 = vmul.f32 0.5, %v3400
        %v3402 = vsub.f32 1.5, %v3401
        %v3403 = vmul.f32 %v3398, %v3402
        %v3404 = vmul.f32 %v3396, %v3403
        %vm3405 = vcmp.eq.f32.partialorder %v3396, inf
        %v3406 = vsel %vm3405, %v3396, %v3404
        %vm3407 = vcmp.eq.f32.partialorder %v3396, 0.0
        %v3408 = vand.u32 %v3396, 2147483648
        %v3409 = vsel %vm3407, %v3408, %v3406
        %v3410 = vrsqrt.pop %v3397
        %v3411 = vmul.f32 %v3410, %v3397
        %v3412 = vmul.f32 %v3411, %v3410
        %v3413 = vmul.f32 0.5, %v3412
        %v3414 = vsub.f32 1.5, %v3413
        %v3415 = vmul.f32 %v3410, %v3414
        %v3416 = vmul.f32 %v3397, %v3415
        %vm3417 = vcmp.eq.f32.partialorder %v3397, inf
        %v3418 = vsel %vm3417, %v3397, %v3416
        %vm3419 = vcmp.eq.f32.partialorder %v3397, 0.0
        %v3420 = vand.u32 %v3397, 2147483648
        %v3421 = vsel %vm3419, %v3420, %v3418
        %v3422 = vadd.f32 %v3409, 1e-06
        %v3423 = vadd.f32 %v3421, 1e-06
        %v3424 = vrcp.pop %v3422
        %v3425 = vmul.f32 %v3422, %v3424
        %v3426 = vsub.f32 1.0, %v3425
        %v3427 = vmul.f32 %v3424, %v3426
        %v3428 = vadd.f32 %v3424, %v3427
        %vm3429 = vweird.f32 %v3422
        %vm3430 = vweird.f32 %v3424
        %vm3431 = vmor %vm3429, %vm3430
        %v3432 = vsel %vm3431, %v3424, %v3428
        %v3433 = vand.u32 2147483647, %v3422
        %vm3434 = vcmp.eq.f32.partialorder %v3433, 8.507059e+37
        %v3435 = vand.u32 %v3422, 2147483648
        %v3436 = vor.u32 1.1754944e-38, %v3435
        %v3437 = vsel %vm3434, %v3436, %v3432
        %v3438 = vmul.f32 %v3386, %v3437
        %v3439 = vrcp.pop %v3423
        %v3440 = vmul.f32 %v3423, %v3439
        %v3441 = vsub.f32 1.0, %v3440
        %v3442 = vmul.f32 %v3439, %v3441
        %v3443 = vadd.f32 %v3439, %v3442
        %vm3444 = vweird.f32 %v3423
        %vm3445 = vweird.f32 %v3439
        %vm3446 = vmor %vm3444, %vm3445
        %v3447 = vsel %vm3446, %v3439, %v3443
        %v3448 = vand.u32 2147483647, %v3423
        %vm3449 = vcmp.eq.f32.partialorder %v3448, 8.507059e+37
        %v3450 = vand.u32 %v3423, 2147483648
        %v3451 = vor.u32 1.1754944e-38, %v3450
        %v3452 = vsel %vm3449, %v3451, %v3447
        %v3453 = vmul.f32 %v3387, %v3452
        %v3455 = vperm.slane %v3377, 0
        %3459 = vrot.lane.b32.xlu0 %v3438, 64
        %v3460 = vpop.permute.xlu0 %3459
        %3461 = vrot.lane.b32.xlu0 %v3453, 64
        %v3462 = vpop.permute.xlu0 %3461
        %v3465 = vmul.f32 %v3455, %v3460
        %v3466 = vmul.f32 %v3455, %v3462
        %3467 = vrot.lane.b32.xlu0 %v3455, 96
        %v3468 = vpop.permute.xlu0 %3467
        %v3470 = vadd.f32 %v3465, %v3468
        %v3471 = vadd.f32 %v3466, %v3468
        %v3472 = vld [vmem:[%s519 + $0x8] sm:$0xf]
        %v3473 = vld [vmem:[%s519 + $0x18] sm:$0xf]
        %v3474 = vld [vmem:[%s519 + $0x28] sm:$0xf]
        %v3475 = vpack.c.bf16 %v3471, %v3470
        %3477 = vrot.lane.b32.xlu0 %v3475, 64
        %v3478 = vpop.permute.xlu0 %3477
        %v3482 = vunpack.c.l.b16 %v3472
        %v3483 = vunpack.c.l.b16 %v3473
        %v3484 = vunpack.c.l.b16 %v3474
        %v3485 = vpack.c.b16 %v3483, %v3482
        %v3486 = vpack.c.b16 %v3341, %v3484
        %3487 = vrot.lane.b32.xlu0 %v3485, 64
        %v3488 = vpop.permute.xlu0 %3487
        %3489 = vrot.lane.b32.xlu0 %v3486, 64
        %v3490 = vpop.permute.xlu0 %3489
        %3493 = vrot.lane.b32.xlu0 %v3369, 32
        %v3494 = vpop.permute.xlu0 %3493
        %v3497 = vsel %vm644, %v3478, 0
        %3499 = vmatpush.bf16.msra.mxu0 0
        %3500 = vmatpush.bf16.msra.mxu0 0
        %3501 = vmatpush.bf16.msra.mxu0 0
        %3502 = vmatpush.bf16.msra.mxu0 0
        %3503 = vmatpush.bf16.msra.mxu0 0
        %3504 = vmatpush.bf16.msra.mxu0 0
        %3505 = vmatpush.bf16.msra.mxu0 %v3490
        %3506 = vmatpush.bf16.msra.mxu0 %v3488
        %3507 = vmatmul.bf16.gmra.mxu0 %v3497
        %v3508 = vpop.f32.mrf.mxu0
        %v3509 = vadd.f32 %v3494, %v3508
        %v3510 = vpop.f32.mrf.mxu0
        %v3511 = vadd.f32 %v3494, %v3510
        %3512 = vdwg.mxu0
        %v3513 = vpack.c.bf16 %v2479, %v2479
        %v3514 = vld [vmem:[%s523 + $0x4] sm:$0x1]
        %v3516 = vperm.slane %v3514, 0
        %3519 = vrot.lane.b32.xlu0 %v3513, 96
        %v3520 = vpop.permute.xlu0 %3519
        %3521 = vrot.lane.b32.xlu0 %v3485, 32
        %v3522 = vpop.permute.xlu0 %3521
        %3523 = vrot.lane.b32.xlu0 %v3486, 32
        %v3524 = vpop.permute.xlu0 %3523
        %v3528 = vsel %vm644, %v3520, 0
        %3530 = vmatpush.bf16.msra.mxu0 0
        %3531 = vmatpush.bf16.msra.mxu0 0
        %3532 = vmatpush.bf16.msra.mxu0 0
        %3533 = vmatpush.bf16.msra.mxu0 0
        %3534 = vmatpush.bf16.msra.mxu0 0
        %3535 = vmatpush.bf16.msra.mxu0 0
        %3536 = vmatpush.bf16.msra.mxu0 %v3524
        %3537 = vmatpush.bf16.msra.mxu0 %v3522
        %3538 = vmatmul.bf16.gmra.mxu0 %v3528
        %v3539 = vpop.f32.mrf.mxu0
        %v3540 = vadd.f32 %v3516, %v3539
        %v3541 = vpop.f32.mrf.mxu0
        %3542 = vdwg.mxu0
        %v3543 = vld [vmem:[%s519 + $0xc] sm:$0xf]
        %v3544 = vld [vmem:[%s519 + $0x1c] sm:$0xf]
        %v3545 = vld [vmem:[%s519 + $0x2c] sm:$0xf]
        %v3546 = vld [vmem:[%s519 + $0x3c] sm:$0xf]
        %v3551 = vunpack.c.l.b16 %v3543
        %v3552 = vunpack.c.l.b16 %v3544
        %v3553 = vunpack.c.l.b16 %v3545
        %v3554 = vunpack.c.l.b16 %v3546
        %v3555 = vpack.c.b16 %v3552, %v3551
        %v3556 = vpack.c.b16 %v3554, %v3553
        %3559 = vrot.lane.b32.xlu0 %v3516, 96
        %v3560 = vpop.permute.xlu0 %3559
        %3562 = vmatpush.bf16.msra.mxu0 0
        %3563 = vmatpush.bf16.msra.mxu0 0
        %3564 = vmatpush.bf16.msra.mxu0 0
        %3565 = vmatpush.bf16.msra.mxu0 0
        %3566 = vmatpush.bf16.msra.mxu0 0
        %3567 = vmatpush.bf16.msra.mxu0 0
        %3568 = vmatpush.bf16.msra.mxu0 %v3556
        %3569 = vmatpush.bf16.msra.mxu0 %v3555
        %3570 = vmatmul.bf16.gmra.mxu0 %v3528
        %v3571 = vpop.f32.mrf.mxu0
        %v3572 = vadd.f32 %v3560, %v3571
        %v3573 = vpop.f32.mrf.mxu0
        %3574 = vdwg.mxu0
        %v3575 = vpack.c.bf16 %v3511, %v3509
        %v3576 = vpack.c.bf16 %v3540, %v3540
        %v3578 = vsel %vm707, %v3575, 0
        %v3581 = vsel %vm707, %v3576, 0
        %3583 = vmatpush.bf16.xpose.msra.mxu0 0
        %3584 = vmatpush.bf16.xpose.msra.mxu0 0
        %3585 = vmatpush.bf16.xpose.msra.mxu0 0
        %3586 = vmatpush.bf16.xpose.msra.mxu0 0
        %3587 = vmatpush.bf16.xpose.msra.mxu0 0
        %3588 = vmatpush.bf16.xpose.msra.mxu0 0
        %3589 = vmatpush.bf16.xpose.msra.mxu0 0
        %3590 = vmatpush.bf16.xpose.msra.mxu0 %v3581
        %3591 = vmatmul.bf16.gmra.mxu0 %v3578
        %v3592 = vpop.f32.mrf.mxu0
        %v3593 = vadd.f32 0.0, %v3592
        %v3594 = vpop.f32.mrf.mxu0
        %v3595 = vadd.f32 0.0, %v3594
        %3596 = vdwg.mxu0
        %v3597 = vmul.f32 %v3593, 0.35355338
        %v3598 = vmul.f32 %v3595, 0.35355338
        %v3599 = vadd.f32 %v3597, %v621
        %v3600 = vadd.f32 %v3598, %v621
        %v3601 = vsel %vm707, %v3599, -inf
        %3602 = vmax.xlane.f32.xlu0 %v3601
        %v3603 = vpop.xlane.xlu0 %3602
        %v3604 = vsel %vm707, %v3600, -inf
        %3605 = vmax.xlane.f32.xlu0 %v3604
        %v3606 = vpop.xlane.xlu0 %3605
        %v3607 = vsub.f32 %v3599, %v3603
        %v3608 = vsub.f32 %v3600, %v3606
        %v3609 = vmul.f32 %v3607, 1.442695
        %v3610 = vpow.pop %v3609
        %v3611 = vmul.f32 %v3608, 1.442695
        %v3612 = vpow.pop %v3611
        %v3613 = vsel %vm707, %v3610, 0.0
        %3614 = vadd.xlane.f32.xlu0 %v3613
        %v3615 = vpop.xlane.xlu0 %3614
        %v3616 = vsel %vm707, %v3612, 0.0
        %3617 = vadd.xlane.f32.xlu0 %v3616
        %v3618 = vpop.xlane.xlu0 %3617
        %v3619 = vrcp.pop %v3615
        %v3620 = vmul.f32 %v3615, %v3619
        %v3621 = vsub.f32 1.0, %v3620
        %v3622 = vmul.f32 %v3619, %v3621
        %v3623 = vadd.f32 %v3619, %v3622
        %vm3624 = vweird.f32 %v3615
        %vm3625 = vweird.f32 %v3619
        %vm3626 = vmor %vm3624, %vm3625
        %v3627 = vsel %vm3626, %v3619, %v3623
        %v3628 = vand.u32 2147483647, %v3615
        %vm3629 = vcmp.eq.f32.partialorder %v3628, 8.507059e+37
        %v3630 = vand.u32 %v3615, 2147483648
        %v3631 = vor.u32 1.1754944e-38, %v3630
        %v3632 = vsel %vm3629, %v3631, %v3627
        %v3633 = vmul.f32 %v3610, %v3632
        %v3634 = vrcp.pop %v3618
        %v3635 = vmul.f32 %v3618, %v3634
        %v3636 = vsub.f32 1.0, %v3635
        %v3637 = vmul.f32 %v3634, %v3636
        %v3638 = vadd.f32 %v3634, %v3637
        %vm3639 = vweird.f32 %v3618
        %vm3640 = vweird.f32 %v3634
        %vm3641 = vmor %vm3639, %vm3640
        %v3642 = vsel %vm3641, %v3634, %v3638
        %v3643 = vand.u32 2147483647, %v3618
        %vm3644 = vcmp.eq.f32.partialorder %v3643, 8.507059e+37
        %v3645 = vand.u32 %v3618, 2147483648
        %v3646 = vor.u32 1.1754944e-38, %v3645
        %v3647 = vsel %vm3644, %v3646, %v3642
        %v3648 = vmul.f32 %v3612, %v3647
        %v3649 = vpack.c.bf16 %v3648, %v3633
        %v3650 = vpack.c.bf16 %v3572, %v3572
        %v3652 = vsel %vm707, %v3649, 0
        %v3655 = vsel %vm758, %v3650, 0
        %3657 = vmatpush.bf16.msra.mxu0 0
        %3658 = vmatpush.bf16.msra.mxu0 0
        %3659 = vmatpush.bf16.msra.mxu0 0
        %3660 = vmatpush.bf16.msra.mxu0 0
        %3661 = vmatpush.bf16.msra.mxu0 0
        %3662 = vmatpush.bf16.msra.mxu0 0
        %3663 = vmatpush.bf16.msra.mxu0 0
        %3664 = vmatpush.bf16.msra.mxu0 %v3655
        %3665 = vmatmul.bf16.gmra.mxu0 %v3652
        %v3666 = vpop.f32.mrf.mxu0
        %v3667 = vadd.f32 0.0, %v3666
        %v3668 = vpop.f32.mrf.mxu0
        %v3669 = vadd.f32 0.0, %v3668
        %3670 = vdwg.mxu0
        %v3671 = vld [vmem:[%s519 + $0xc] sm:$0xf]
        %v3672 = vpack.c.bf16 %v3669, %v3667
        %v3673 = vld [vmem:[%s519 + $0x8] sm:$0xf]
        %v3674 = vld [vmem:[%s519 + $0x18] sm:$0xf]
        %v3675 = vld [vmem:[%s519 + $0x28] sm:$0xf]
        %v3676 = vld [vmem:[%s519 + $0x38] sm:$0xf]
        %v3677 = vld [vmem:[%s523 + $0x3] sm:$0x1]
        %v3679 = vperm.slane %v3677, 0
        %v3684 = vunpack.c.l.b16 %v3673
        %v3685 = vunpack.c.l.b16 %v3674
        %v3686 = vunpack.c.l.b16 %v3675
        %v3687 = vunpack.c.l.b16 %v3676
        %v3688 = vpack.c.b16 %v3685, %v3684
        %v3689 = vpack.c.b16 %v3687, %v3686
        %3690 = vrot.lane.b32.xlu0 %v3688, 56
        %v3691 = vpop.permute.xlu0 %3690
        %3692 = vrot.lane.b32.xlu0 %v3689, 56
        %v3693 = vpop.permute.xlu0 %3692
        %3696 = vrot.lane.b32.xlu0 %v3679, 24
        %v3697 = vpop.permute.xlu0 %3696
        %3699 = vmatpush.bf16.msra.mxu0 0
        %3700 = vmatpush.bf16.msra.mxu0 0
        %3701 = vmatpush.bf16.msra.mxu0 0
        %3702 = vmatpush.bf16.msra.mxu0 0
        %3703 = vmatpush.bf16.msra.mxu0 0
        %3704 = vmatpush.bf16.msra.mxu0 0
        %3705 = vmatpush.bf16.msra.mxu0 %v3693
        %3706 = vmatpush.bf16.msra.mxu0 %v3691
        %3707 = vmatmul.bf16.gmra.mxu0 %v3497
        %v3708 = vpop.f32.mrf.mxu0
        %v3709 = vadd.f32 %v3697, %v3708
        %v3710 = vpop.f32.mrf.mxu0
        %v3711 = vadd.f32 %v3697, %v3710
        %3712 = vdwg.mxu0
        %v3713 = vld [vmem:[%s523 + $0x4] sm:$0x1]
        %v3715 = vperm.slane %v3713, 0
        %3716 = vrot.lane.b32.xlu0 %v3688, 24
        %v3717 = vpop.permute.xlu0 %3716
        %3718 = vrot.lane.b32.xlu0 %v3689, 24
        %v3719 = vpop.permute.xlu0 %3718
        %3722 = vrot.lane.b32.xlu0 %v3715, 120
        %v3723 = vpop.permute.xlu0 %3722
        %3725 = vmatpush.bf16.msra.mxu0 0
        %3726 = vmatpush.bf16.msra.mxu0 0
        %3727 = vmatpush.bf16.msra.mxu0 0
        %3728 = vmatpush.bf16.msra.mxu0 0
        %3729 = vmatpush.bf16.msra.mxu0 0
        %3730 = vmatpush.bf16.msra.mxu0 0
        %3731 = vmatpush.bf16.msra.mxu0 %v3719
        %3732 = vmatpush.bf16.msra.mxu0 %v3717
        %3733 = vmatmul.bf16.gmra.mxu0 %v3528
        %v3734 = vpop.f32.mrf.mxu0
        %v3735 = vadd.f32 %v3723, %v3734
        %v3736 = vpop.f32.mrf.mxu0
        %3737 = vdwg.mxu0
        %v3738 = vld [vmem:[%s519 + $0xc] sm:$0xf]
        %v3739 = vld [vmem:[%s519 + $0x1c] sm:$0xf]
        %v3740 = vld [vmem:[%s519 + $0x2c] sm:$0xf]
        %v3741 = vld [vmem:[%s519 + $0x3c] sm:$0xf]
        %v3746 = vunpack.c.l.b16 %v3738
        %v3747 = vunpack.c.l.b16 %v3739
        %v3748 = vunpack.c.l.b16 %v3740
        %v3749 = vunpack.c.l.b16 %v3741
        %v3750 = vpack.c.b16 %v3747, %v3746
        %v3751 = vpack.c.b16 %v3749, %v3748
        %3752 = vrot.lane.b32.xlu0 %v3750, 120
        %v3753 = vpop.permute.xlu0 %3752
        %3754 = vrot.lane.b32.xlu0 %v3751, 120
        %v3755 = vpop.permute.xlu0 %3754
        %3758 = vrot.lane.b32.xlu0 %v3715, 88
        %v3759 = vpop.permute.xlu0 %3758
        %3761 = vmatpush.bf16.msra.mxu0 0
        %3762 = vmatpush.bf16.msra.mxu0 0
        %3763 = vmatpush.bf16.msra.mxu0 0
        %3764 = vmatpush.bf16.msra.mxu0 0
        %3765 = vmatpush.bf16.msra.mxu0 0
        %3766 = vmatpush.bf16.msra.mxu0 0
        %3767 = vmatpush.bf16.msra.mxu0 %v3755
        %3768 = vmatpush.bf16.msra.mxu0 %v3753
        %3769 = vmatmul.bf16.gmra.mxu0 %v3528
        %v3770 = vpop.f32.mrf.mxu0
        %v3771 = vadd.f32 %v3759, %v3770
        %v3772 = vpop.f32.mrf.mxu0
        %3773 = vdwg.mxu0
        %v3774 = vpack.c.bf16 %v3711, %v3709
        %v3775 = vpack.c.bf16 %v3735, %v3735
        %v3777 = vsel %vm707, %v3774, 0
        %v3780 = vsel %vm707, %v3775, 0
        %3782 = vmatpush.bf16.xpose.msra.mxu0 0
        %3783 = vmatpush.bf16.xpose.msra.mxu0 0
        %3784 = vmatpush.bf16.xpose.msra.mxu0 0
        %3785 = vmatpush.bf16.xpose.msra.mxu0 0
        %3786 = vmatpush.bf16.xpose.msra.mxu0 0
        %3787 = vmatpush.bf16.xpose.msra.mxu0 0
        %3788 = vmatpush.bf16.xpose.msra.mxu0 0
        %3789 = vmatpush.bf16.xpose.msra.mxu0 %v3780
        %3790 = vmatmul.bf16.gmra.mxu0 %v3777
        %v3791 = vpop.f32.mrf.mxu0
        %v3792 = vadd.f32 0.0, %v3791
        %v3793 = vpop.f32.mrf.mxu0
        %v3794 = vadd.f32 0.0, %v3793
        %3795 = vdwg.mxu0
        %v3796 = vmul.f32 %v3792, 0.35355338
        %v3797 = vmul.f32 %v3794, 0.35355338
        %v3798 = vadd.f32 %v3796, %v621
        %v3799 = vadd.f32 %v3797, %v621
        %v3800 = vsel %vm707, %v3798, -inf
        %3801 = vmax.xlane.f32.xlu0 %v3800
        %v3802 = vpop.xlane.xlu0 %3801
        %v3803 = vsel %vm707, %v3799, -inf
        %3804 = vmax.xlane.f32.xlu0 %v3803
        %v3805 = vpop.xlane.xlu0 %3804
        %v3806 = vsub.f32 %v3798, %v3802
        %v3807 = vsub.f32 %v3799, %v3805
        %v3808 = vmul.f32 %v3806, 1.442695
        %v3809 = vpow.pop %v3808
        %v3810 = vmul.f32 %v3807, 1.442695
        %v3811 = vpow.pop %v3810
        %v3812 = vsel %vm707, %v3809, 0.0
        %3813 = vadd.xlane.f32.xlu0 %v3812
        %v3814 = vpop.xlane.xlu0 %3813
        %v3815 = vsel %vm707, %v3811, 0.0
        %3816 = vadd.xlane.f32.xlu0 %v3815
        %v3817 = vpop.xlane.xlu0 %3816
        %v3818 = vrcp.pop %v3814
        %v3819 = vmul.f32 %v3814, %v3818
        %v3820 = vsub.f32 1.0, %v3819
        %v3821 = vmul.f32 %v3818, %v3820
        %v3822 = vadd.f32 %v3818, %v3821
        %vm3823 = vweird.f32 %v3814
        %vm3824 = vweird.f32 %v3818
        %vm3825 = vmor %vm3823, %vm3824
        %v3826 = vsel %vm3825, %v3818, %v3822
        %v3827 = vand.u32 2147483647, %v3814
        %vm3828 = vcmp.eq.f32.partialorder %v3827, 8.507059e+37
        %v3829 = vand.u32 %v3814, 2147483648
        %v3830 = vor.u32 1.1754944e-38, %v3829
        %v3831 = vsel %vm3828, %v3830, %v3826
        %v3832 = vmul.f32 %v3809, %v3831
        %v3833 = vrcp.pop %v3817
        %v3834 = vmul.f32 %v3817, %v3833
        %v3835 = vsub.f32 1.0, %v3834
        %v3836 = vmul.f32 %v3833, %v3835
        %v3837 = vadd.f32 %v3833, %v3836
        %vm3838 = vweird.f32 %v3817
        %vm3839 = vweird.f32 %v3833
        %vm3840 = vmor %vm3838, %vm3839
        %v3841 = vsel %vm3840, %v3833, %v3837
        %v3842 = vand.u32 2147483647, %v3817
        %vm3843 = vcmp.eq.f32.partialorder %v3842, 8.507059e+37
        %v3844 = vand.u32 %v3817, 2147483648
        %v3845 = vor.u32 1.1754944e-38, %v3844
        %v3846 = vsel %vm3843, %v3845, %v3841
        %v3847 = vmul.f32 %v3811, %v3846
        %v3848 = vpack.c.bf16 %v3847, %v3832
        %v3849 = vpack.c.bf16 %v3771, %v3771
        %v3851 = vsel %vm707, %v3848, 0
        %v3854 = vsel %vm758, %v3849, 0
        %3856 = vmatpush.bf16.msra.mxu0 0
        %3857 = vmatpush.bf16.msra.mxu0 0
        %3858 = vmatpush.bf16.msra.mxu0 0
        %3859 = vmatpush.bf16.msra.mxu0 0
        %3860 = vmatpush.bf16.msra.mxu0 0
        %3861 = vmatpush.bf16.msra.mxu0 0
        %3862 = vmatpush.bf16.msra.mxu0 0
        %3863 = vmatpush.bf16.msra.mxu0 %v3854
        %3864 = vmatmul.bf16.gmra.mxu0 %v3851
        %v3865 = vpop.f32.mrf.mxu0
        %v3866 = vadd.f32 0.0, %v3865
        %v3867 = vpop.f32.mrf.mxu0
        %v3868 = vadd.f32 0.0, %v3867
        %3869 = vdwg.mxu0
        %v3870 = vld [vmem:[%s519 + $0x1c] sm:$0xf]
        %v3871 = vpack.c.bf16 %v3868, %v3866
        %v3873 = vunpack.c.l.b16 %v3870
        %v3874 = vpack.c.b16 %v3873, %v3873
        %3875 = vrot.lane.b32.xlu0 %v3874, 96
        %v3876 = vpop.permute.xlu0 %3875
        %v3878 = vsel %vm707, %v3871, 0
        %v3881 = vsel %vm758, %v3876, 0
        %3883 = vmatpush.bf16.msra.mxu0 0
        %3884 = vmatpush.bf16.msra.mxu0 0
        %3885 = vmatpush.bf16.msra.mxu0 0
        %3886 = vmatpush.bf16.msra.mxu0 0
        %3887 = vmatpush.bf16.msra.mxu0 0
        %3888 = vmatpush.bf16.msra.mxu0 0
        %3889 = vmatpush.bf16.msra.mxu0 0
        %3890 = vmatpush.bf16.msra.mxu0 %v3881
        %3891 = vmatmul.bf16.gmra.mxu0 %v3878
        %v3892 = vpop.f32.mrf.mxu0
        %v3893 = vadd.f32 0.0, %v3892
        %v3894 = vpop.f32.mrf.mxu0
        %v3895 = vadd.f32 0.0, %v3894
        %3896 = vdwg.mxu0
        %v3898 = vunpack.c.l.b16 %v3671
        %v3899 = vpack.c.b16 %v3898, %v3898
        %3900 = vrot.lane.b32.xlu0 %v3899, 96
        %v3901 = vpop.permute.xlu0 %3900
        %v3903 = vsel %vm707, %v3672, 0
        %v3906 = vsel %vm758, %v3901, 0
        %3908 = vmatpush.bf16.msra.mxu0 0
        %3909 = vmatpush.bf16.msra.mxu0 0
        %3910 = vmatpush.bf16.msra.mxu0 0
        %3911 = vmatpush.bf16.msra.mxu0 0
        %3912 = vmatpush.bf16.msra.mxu0 0
        %3913 = vmatpush.bf16.msra.mxu0 0
        %3914 = vmatpush.bf16.msra.mxu0 0
        %3915 = vmatpush.bf16.msra.mxu0 %v3906
        %3916 = vmatmul.bf16.gmra.mxu0 %v3903
        %v3917 = vpop.f32.mrf.mxu0
        %v3918 = vadd.f32 %v3893, %v3917
        %v3919 = vpop.f32.mrf.mxu0
        %v3920 = vadd.f32 %v3895, %v3919
        %3921 = vdwg.mxu0
        %v3922 = vld [vmem:[%s519 + $0x8] sm:$0xf]
        %v3923 = vld [vmem:[%s519 + $0x18] sm:$0xf]
        %v3924 = vld [vmem:[%s519 + $0x28] sm:$0xf]
        %v3925 = vld [vmem:[%s519 + $0x38] sm:$0xf]
        %v3926 = vld [vmem:[%s523 + $0x3] sm:$0x1]
        %v3928 = vperm.slane %v3926, 0
        %v3933 = vunpack.c.l.b16 %v3922
        %v3934 = vunpack.c.l.b16 %v3923
        %v3935 = vunpack.c.l.b16 %v3924
        %v3936 = vunpack.c.l.b16 %v3925
        %v3937 = vpack.c.b16 %v3934, %v3933
        %v3938 = vpack.c.b16 %v3936, %v3935
        %3939 = vrot.lane.b32.xlu0 %v3937, 48
        %v3940 = vpop.permute.xlu0 %3939
        %3941 = vrot.lane.b32.xlu0 %v3938, 48
        %v3942 = vpop.permute.xlu0 %3941
        %3945 = vrot.lane.b32.xlu0 %v3928, 16
        %v3946 = vpop.permute.xlu0 %3945
        %3948 = vmatpush.bf16.msra.mxu0 0
        %3949 = vmatpush.bf16.msra.mxu0 0
        %3950 = vmatpush.bf16.msra.mxu0 0
        %3951 = vmatpush.bf16.msra.mxu0 0
        %3952 = vmatpush.bf16.msra.mxu0 0
        %3953 = vmatpush.bf16.msra.mxu0 0
        %3954 = vmatpush.bf16.msra.mxu0 %v3942
        %3955 = vmatpush.bf16.msra.mxu0 %v3940
        %3956 = vmatmul.bf16.gmra.mxu0 %v3497
        %v3957 = vpop.f32.mrf.mxu0
        %v3958 = vadd.f32 %v3946, %v3957
        %v3959 = vpop.f32.mrf.mxu0
        %v3960 = vadd.f32 %v3946, %v3959
        %3961 = vdwg.mxu0
        %v3962 = vld [vmem:[%s523 + $0x4] sm:$0x1]
        %v3964 = vperm.slane %v3962, 0
        %3965 = vrot.lane.b32.xlu0 %v3937, 16
        %v3966 = vpop.permute.xlu0 %3965
        %3967 = vrot.lane.b32.xlu0 %v3938, 16
        %v3968 = vpop.permute.xlu0 %3967
        %3971 = vrot.lane.b32.xlu0 %v3964, 112
        %v3972 = vpop.permute.xlu0 %3971
        %3974 = vmatpush.bf16.msra.mxu0 0
        %3975 = vmatpush.bf16.msra.mxu0 0
        %3976 = vmatpush.bf16.msra.mxu0 0
        %3977 = vmatpush.bf16.msra.mxu0 0
        %3978 = vmatpush.bf16.msra.mxu0 0
        %3979 = vmatpush.bf16.msra.mxu0 0
        %3980 = vmatpush.bf16.msra.mxu0 %v3968
        %3981 = vmatpush.bf16.msra.mxu0 %v3966
        %3982 = vmatmul.bf16.gmra.mxu0 %v3528
        %v3983 = vpop.f32.mrf.mxu0
        %v3984 = vadd.f32 %v3972, %v3983
        %v3985 = vpop.f32.mrf.mxu0
        %3986 = vdwg.mxu0
        %v3987 = vld [vmem:[%s519 + $0xc] sm:$0xf]
        %v3988 = vld [vmem:[%s519 + $0x1c] sm:$0xf]
        %v3989 = vld [vmem:[%s519 + $0x2c] sm:$0xf]
        %v3990 = vld [vmem:[%s519 + $0x3c] sm:$0xf]
        %v3995 = vunpack.c.l.b16 %v3987
        %v3996 = vunpack.c.l.b16 %v3988
        %v3997 = vunpack.c.l.b16 %v3989
        %v3998 = vunpack.c.l.b16 %v3990
        %v3999 = vpack.c.b16 %v3996, %v3995
        %v4000 = vpack.c.b16 %v3998, %v3997
        %4001 = vrot.lane.b32.xlu0 %v3999, 112
        %v4002 = vpop.permute.xlu0 %4001
        %4003 = vrot.lane.b32.xlu0 %v4000, 112
        %v4004 = vpop.permute.xlu0 %4003
        %4007 = vrot.lane.b32.xlu0 %v3964, 80
        %v4008 = vpop.permute.xlu0 %4007
        %4010 = vmatpush.bf16.msra.mxu0 0
        %4011 = vmatpush.bf16.msra.mxu0 0
        %4012 = vmatpush.bf16.msra.mxu0 0
        %4013 = vmatpush.bf16.msra.mxu0 0
        %4014 = vmatpush.bf16.msra.mxu0 0
        %4015 = vmatpush.bf16.msra.mxu0 0
        %4016 = vmatpush.bf16.msra.mxu0 %v4004
        %4017 = vmatpush.bf16.msra.mxu0 %v4002
        %4018 = vmatmul.bf16.gmra.mxu0 %v3528
        %v4019 = vpop.f32.mrf.mxu0
        %v4020 = vadd.f32 %v4008, %v4019
        %v4021 = vpop.f32.mrf.mxu0
        %4022 = vdwg.mxu0
        %v4023 = vpack.c.bf16 %v3960, %v3958
        %v4024 = vpack.c.bf16 %v3984, %v3984
        %v4026 = vsel %vm707, %v4023, 0
        %v4029 = vsel %vm707, %v4024, 0
        %4031 = vmatpush.bf16.xpose.msra.mxu0 0
        %4032 = vmatpush.bf16.xpose.msra.mxu0 0
        %4033 = vmatpush.bf16.xpose.msra.mxu0 0
        %4034 = vmatpush.bf16.xpose.msra.mxu0 0
        %4035 = vmatpush.bf16.xpose.msra.mxu0 0
        %4036 = vmatpush.bf16.xpose.msra.mxu0 0
        %4037 = vmatpush.bf16.xpose.msra.mxu0 0
        %4038 = vmatpush.bf16.xpose.msra.mxu0 %v4029
        %4039 = vmatmul.bf16.gmra.mxu0 %v4026
        %v4040 = vpop.f32.mrf.mxu0
        %v4041 = vadd.f32 0.0, %v4040
        %v4042 = vpop.f32.mrf.mxu0
        %v4043 = vadd.f32 0.0, %v4042
        %4044 = vdwg.mxu0
        %v4045 = vmul.f32 %v4041, 0.35355338
        %v4046 = vmul.f32 %v4043, 0.35355338
        %v4047 = vadd.f32 %v4045, %v621
        %v4048 = vadd.f32 %v4046, %v621
        %v4049 = vsel %vm707, %v4047, -inf
        %4050 = vmax.xlane.f32.xlu0 %v4049
        %v4051 = vpop.xlane.xlu0 %4050
        %v4052 = vsel %vm707, %v4048, -inf
        %4053 = vmax.xlane.f32.xlu0 %v4052
        %v4054 = vpop.xlane.xlu0 %4053
        %v4055 = vsub.f32 %v4047, %v4051
        %v4056 = vsub.f32 %v4048, %v4054
        %v4057 = vmul.f32 %v4055, 1.442695
        %v4058 = vpow.pop %v4057
        %v4059 = vmul.f32 %v4056, 1.442695
        %v4060 = vpow.pop %v4059
        %v4061 = vsel %vm707, %v4058, 0.0
        %4062 = vadd.xlane.f32.xlu0 %v4061
        %v4063 = vpop.xlane.xlu0 %4062
        %v4064 = vsel %vm707, %v4060, 0.0
        %4065 = vadd.xlane.f32.xlu0 %v4064
        %v4066 = vpop.xlane.xlu0 %4065
        %v4067 = vrcp.pop %v4063
        %v4068 = vmul.f32 %v4063, %v4067
        %v4069 = vsub.f32 1.0, %v4068
        %v4070 = vmul.f32 %v4067, %v4069
        %v4071 = vadd.f32 %v4067, %v4070
        %vm4072 = vweird.f32 %v4063
        %vm4073 = vweird.f32 %v4067
        %vm4074 = vmor %vm4072, %vm4073
        %v4075 = vsel %vm4074, %v4067, %v4071
        %v4076 = vand.u32 2147483647, %v4063
        %vm4077 = vcmp.eq.f32.partialorder %v4076, 8.507059e+37
        %v4078 = vand.u32 %v4063, 2147483648
        %v4079 = vor.u32 1.1754944e-38, %v4078
        %v4080 = vsel %vm4077, %v4079, %v4075
        %v4081 = vmul.f32 %v4058, %v4080
        %v4082 = vrcp.pop %v4066
        %v4083 = vmul.f32 %v4066, %v4082
        %v4084 = vsub.f32 1.0, %v4083
        %v4085 = vmul.f32 %v4082, %v4084
        %v4086 = vadd.f32 %v4082, %v4085
        %vm4087 = vweird.f32 %v4066
        %vm4088 = vweird.f32 %v4082
        %vm4089 = vmor %vm4087, %vm4088
        %v4090 = vsel %vm4089, %v4082, %v4086
        %v4091 = vand.u32 2147483647, %v4066
        %vm4092 = vcmp.eq.f32.partialorder %v4091, 8.507059e+37
        %v4093 = vand.u32 %v4066, 2147483648
        %v4094 = vor.u32 1.1754944e-38, %v4093
        %v4095 = vsel %vm4092, %v4094, %v4090
        %v4096 = vmul.f32 %v4060, %v4095
        %v4097 = vpack.c.bf16 %v4096, %v4081
        %v4098 = vpack.c.bf16 %v4020, %v4020
        %v4100 = vsel %vm707, %v4097, 0
        %v4103 = vsel %vm758, %v4098, 0
        %4105 = vmatpush.bf16.msra.mxu0 0
        %4106 = vmatpush.bf16.msra.mxu0 0
        %4107 = vmatpush.bf16.msra.mxu0 0
        %4108 = vmatpush.bf16.msra.mxu0 0
        %4109 = vmatpush.bf16.msra.mxu0 0
        %4110 = vmatpush.bf16.msra.mxu0 0
        %4111 = vmatpush.bf16.msra.mxu0 0
        %4112 = vmatpush.bf16.msra.mxu0 %v4103
        %4113 = vmatmul.bf16.gmra.mxu0 %v4100
        %v4114 = vpop.f32.mrf.mxu0
        %v4115 = vadd.f32 0.0, %v4114
        %v4116 = vpop.f32.mrf.mxu0
        %v4117 = vadd.f32 0.0, %v4116
        %4118 = vdwg.mxu0
        %v4119 = vld [vmem:[%s519 + $0x2c] sm:$0xf]
        %v4120 = vpack.c.bf16 %v4117, %v4115
        %v4122 = vunpack.c.l.b16 %v4119
        %v4123 = vpack.c.b16 %v4122, %v4122
        %4124 = vrot.lane.b32.xlu0 %v4123, 96
        %v4125 = vpop.permute.xlu0 %4124
        %v4127 = vsel %vm707, %v4120, 0
        %v4130 = vsel %vm758, %v4125, 0
        %4132 = vmatpush.bf16.msra.mxu0 0
        %4133 = vmatpush.bf16.msra.mxu0 0
        %4134 = vmatpush.bf16.msra.mxu0 0
        %4135 = vmatpush.bf16.msra.mxu0 0
        %4136 = vmatpush.bf16.msra.mxu0 0
        %4137 = vmatpush.bf16.msra.mxu0 0
        %4138 = vmatpush.bf16.msra.mxu0 0
        %4139 = vmatpush.bf16.msra.mxu0 %v4130
        %4140 = vmatmul.bf16.gmra.mxu0 %v4127
        %v4141 = vpop.f32.mrf.mxu0
        %v4142 = vadd.f32 0.0, %v4141
        %v4143 = vpop.f32.mrf.mxu0
        %v4144 = vadd.f32 0.0, %v4143
        %4145 = vdwg.mxu0
        %v4146 = vadd.f32 %v3918, %v4142
        %v4147 = vadd.f32 %v3920, %v4144
        %v4148 = vld [vmem:[%s519 + $0x8] sm:$0xf]
        %v4149 = vld [vmem:[%s519 + $0x18] sm:$0xf]
        %v4150 = vld [vmem:[%s519 + $0x28] sm:$0xf]
        %v4151 = vld [vmem:[%s519 + $0x38] sm:$0xf]
        %v4152 = vld [vmem:[%s523 + $0x3] sm:$0x1]
        %v4154 = vperm.slane %v4152, 0
        %v4159 = vunpack.c.l.b16 %v4148
        %v4160 = vunpack.c.l.b16 %v4149
        %v4161 = vunpack.c.l.b16 %v4150
        %v4162 = vunpack.c.l.b16 %v4151
        %v4163 = vpack.c.b16 %v4160, %v4159
        %v4164 = vpack.c.b16 %v4162, %v4161
        %4165 = vrot.lane.b32.xlu0 %v4163, 40
        %v4166 = vpop.permute.xlu0 %4165
        %4167 = vrot.lane.b32.xlu0 %v4164, 40
        %v4168 = vpop.permute.xlu0 %4167
        %4171 = vrot.lane.b32.xlu0 %v4154, 8
        %v4172 = vpop.permute.xlu0 %4171
        %4174 = vmatpush.bf16.msra.mxu0 0
        %4175 = vmatpush.bf16.msra.mxu0 0
        %4176 = vmatpush.bf16.msra.mxu0 0
        %4177 = vmatpush.bf16.msra.mxu0 0
        %4178 = vmatpush.bf16.msra.mxu0 0
        %4179 = vmatpush.bf16.msra.mxu0 0
        %4180 = vmatpush.bf16.msra.mxu0 %v4168
        %4181 = vmatpush.bf16.msra.mxu0 %v4166
        %4182 = vmatmul.bf16.gmra.mxu0 %v3497
        %v4183 = vpop.f32.mrf.mxu0
        %v4184 = vadd.f32 %v4172, %v4183
        %v4185 = vpop.f32.mrf.mxu0
        %v4186 = vadd.f32 %v4172, %v4185
        %4187 = vdwg.mxu0
        %v4188 = vld [vmem:[%s523 + $0x4] sm:$0x1]
        %v4190 = vperm.slane %v4188, 0
        %4191 = vrot.lane.b32.xlu0 %v4163, 8
        %v4192 = vpop.permute.xlu0 %4191
        %4193 = vrot.lane.b32.xlu0 %v4164, 8
        %v4194 = vpop.permute.xlu0 %4193
        %4197 = vrot.lane.b32.xlu0 %v4190, 104
        %v4198 = vpop.permute.xlu0 %4197
        %4200 = vmatpush.bf16.msra.mxu0 0
        %4201 = vmatpush.bf16.msra.mxu0 0
        %4202 = vmatpush.bf16.msra.mxu0 0
        %4203 = vmatpush.bf16.msra.mxu0 0
        %4204 = vmatpush.bf16.msra.mxu0 0
        %4205 = vmatpush.bf16.msra.mxu0 0
        %4206 = vmatpush.bf16.msra.mxu0 %v4194
        %4207 = vmatpush.bf16.msra.mxu0 %v4192
        %4208 = vmatmul.bf16.gmra.mxu0 %v3528
        %v4209 = vpop.f32.mrf.mxu0
        %v4210 = vadd.f32 %v4198, %v4209
        %v4211 = vpop.f32.mrf.mxu0
        %4212 = vdwg.mxu0
        %v4213 = vld [vmem:[%s519 + $0xc] sm:$0xf]
        %v4214 = vld [vmem:[%s519 + $0x1c] sm:$0xf]
        %v4215 = vld [vmem:[%s519 + $0x2c] sm:$0xf]
        %v4216 = vld [vmem:[%s519 + $0x3c] sm:$0xf]
        %v4221 = vunpack.c.l.b16 %v4213
        %v4222 = vunpack.c.l.b16 %v4214
        %v4223 = vunpack.c.l.b16 %v4215
        %v4224 = vunpack.c.l.b16 %v4216
        %v4225 = vpack.c.b16 %v4222, %v4221
        %v4226 = vpack.c.b16 %v4224, %v4223
        %4227 = vrot.lane.b32.xlu0 %v4225, 104
        %v4228 = vpop.permute.xlu0 %4227
        %4229 = vrot.lane.b32.xlu0 %v4226, 104
        %v4230 = vpop.permute.xlu0 %4229
        %4233 = vrot.lane.b32.xlu0 %v4190, 72
        %v4234 = vpop.permute.xlu0 %4233
        %4236 = vmatpush.bf16.msra.mxu0 0
        %4237 = vmatpush.bf16.msra.mxu0 0
        %4238 = vmatpush.bf16.msra.mxu0 0
        %4239 = vmatpush.bf16.msra.mxu0 0
        %4240 = vmatpush.bf16.msra.mxu0 0
        %4241 = vmatpush.bf16.msra.mxu0 0
        %4242 = vmatpush.bf16.msra.mxu0 %v4230
        %4243 = vmatpush.bf16.msra.mxu0 %v4228
        %4244 = vmatmul.bf16.gmra.mxu0 %v3528
        %v4245 = vpop.f32.mrf.mxu0
        %v4246 = vadd.f32 %v4234, %v4245
        %v4247 = vpop.f32.mrf.mxu0
        %4248 = vdwg.mxu0
        %v4249 = vpack.c.bf16 %v4186, %v4184
        %v4250 = vpack.c.bf16 %v4210, %v4210
        %v4252 = vsel %vm707, %v4249, 0
        %v4255 = vsel %vm707, %v4250, 0
        %4257 = vmatpush.bf16.xpose.msra.mxu0 0
        %4258 = vmatpush.bf16.xpose.msra.mxu0 0
        %4259 = vmatpush.bf16.xpose.msra.mxu0 0
        %4260 = vmatpush.bf16.xpose.msra.mxu0 0
        %4261 = vmatpush.bf16.xpose.msra.mxu0 0
        %4262 = vmatpush.bf16.xpose.msra.mxu0 0
        %4263 = vmatpush.bf16.xpose.msra.mxu0 0
        %4264 = vmatpush.bf16.xpose.msra.mxu0 %v4255
        %4265 = vmatmul.bf16.gmra.mxu0 %v4252
        %v4266 = vpop.f32.mrf.mxu0
        %v4267 = vadd.f32 0.0, %v4266
        %v4268 = vpop.f32.mrf.mxu0
        %v4269 = vadd.f32 0.0, %v4268
        %4270 = vdwg.mxu0
        %v4271 = vmul.f32 %v4267, 0.35355338
        %v4272 = vmul.f32 %v4269, 0.35355338
        %v4273 = vadd.f32 %v4271, %v621
        %v4274 = vadd.f32 %v4272, %v621
        %v4275 = vsel %vm707, %v4273, -inf
        %4276 = vmax.xlane.f32.xlu0 %v4275
        %v4277 = vpop.xlane.xlu0 %4276
        %v4278 = vsel %vm707, %v4274, -inf
        %4279 = vmax.xlane.f32.xlu0 %v4278
        %v4280 = vpop.xlane.xlu0 %4279
        %v4281 = vsub.f32 %v4273, %v4277
        %v4282 = vsub.f32 %v4274, %v4280
        %v4283 = vmul.f32 %v4281, 1.442695
        %v4284 = vpow.pop %v4283
        %v4285 = vmul.f32 %v4282, 1.442695
        %v4286 = vpow.pop %v4285
        %v4287 = vsel %vm707, %v4284, 0.0
        %4288 = vadd.xlane.f32.xlu0 %v4287
        %v4289 = vpop.xlane.xlu0 %4288
        %v4290 = vsel %vm707, %v4286, 0.0
        %4291 = vadd.xlane.f32.xlu0 %v4290
        %v4292 = vpop.xlane.xlu0 %4291
        %v4293 = vrcp.pop %v4289
        %v4294 = vmul.f32 %v4289, %v4293
        %v4295 = vsub.f32 1.0, %v4294
        %v4296 = vmul.f32 %v4293, %v4295
        %v4297 = vadd.f32 %v4293, %v4296
        %vm4298 = vweird.f32 %v4289
        %vm4299 = vweird.f32 %v4293
        %vm4300 = vmor %vm4298, %vm4299
        %v4301 = vsel %vm4300, %v4293, %v4297
        %v4302 = vand.u32 2147483647, %v4289
        %vm4303 = vcmp.eq.f32.partialorder %v4302, 8.507059e+37
        %v4304 = vand.u32 %v4289, 2147483648
        %v4305 = vor.u32 1.1754944e-38, %v4304
        %v4306 = vsel %vm4303, %v4305, %v4301
        %v4307 = vmul.f32 %v4284, %v4306
        %v4308 = vrcp.pop %v4292
        %v4309 = vmul.f32 %v4292, %v4308
        %v4310 = vsub.f32 1.0, %v4309
        %v4311 = vmul.f32 %v4308, %v4310
        %v4312 = vadd.f32 %v4308, %v4311
        %vm4313 = vweird.f32 %v4292
        %vm4314 = vweird.f32 %v4308
        %vm4315 = vmor %vm4313, %vm4314
        %v4316 = vsel %vm4315, %v4308, %v4312
        %v4317 = vand.u32 2147483647, %v4292
        %vm4318 = vcmp.eq.f32.partialorder %v4317, 8.507059e+37
        %v4319 = vand.u32 %v4292, 2147483648
        %v4320 = vor.u32 1.1754944e-38, %v4319
        %v4321 = vsel %vm4318, %v4320, %v4316
        %v4322 = vmul.f32 %v4286, %v4321
        %v4323 = vpack.c.bf16 %v4322, %v4307
        %v4324 = vpack.c.bf16 %v4246, %v4246
        %v4326 = vsel %vm707, %v4323, 0
        %v4329 = vsel %vm758, %v4324, 0
        %4331 = vmatpush.bf16.msra.mxu0 0
        %4332 = vmatpush.bf16.msra.mxu0 0
        %4333 = vmatpush.bf16.msra.mxu0 0
        %4334 = vmatpush.bf16.msra.mxu0 0
        %4335 = vmatpush.bf16.msra.mxu0 0
        %4336 = vmatpush.bf16.msra.mxu0 0
        %4337 = vmatpush.bf16.msra.mxu0 0
        %4338 = vmatpush.bf16.msra.mxu0 %v4329
        %4339 = vmatmul.bf16.gmra.mxu0 %v4326
        %v4340 = vpop.f32.mrf.mxu0
        %v4341 = vadd.f32 0.0, %v4340
        %v4342 = vpop.f32.mrf.mxu0
        %v4343 = vadd.f32 0.0, %v4342
        %4344 = vdwg.mxu0
        %v4345 = vld [vmem:[%s519 + $0x3c] sm:$0xf]
        %v4346 = vpack.c.bf16 %v4343, %v4341
        %v4348 = vunpack.c.l.b16 %v4345
        %v4349 = vpack.c.b16 %v4348, %v4348
        %4350 = vrot.lane.b32.xlu0 %v4349, 96
        %v4351 = vpop.permute.xlu0 %4350
        %v4353 = vsel %vm707, %v4346, 0
        %v4356 = vsel %vm758, %v4351, 0
        %4358 = vmatpush.bf16.msra.mxu0 0
        %4359 = vmatpush.bf16.msra.mxu0 0
        %4360 = vmatpush.bf16.msra.mxu0 0
        %4361 = vmatpush.bf16.msra.mxu0 0
        %4362 = vmatpush.bf16.msra.mxu0 0
        %4363 = vmatpush.bf16.msra.mxu0 0
        %4364 = vmatpush.bf16.msra.mxu0 0
        %4365 = vmatpush.bf16.msra.mxu0 %v4356
        %4366 = vmatmul.bf16.gmra.mxu0 %v4353
        %v4367 = vpop.f32.mrf.mxu0
        %v4368 = vadd.f32 0.0, %v4367
        %v4369 = vpop.f32.mrf.mxu0
        %v4370 = vadd.f32 0.0, %v4369
        %4371 = vdwg.mxu0
        %v4372 = vadd.f32 %v4146, %v4368
        %v4373 = vadd.f32 %v4147, %v4370
        %v4374 = vld [vmem:[%s523 + $0x4] sm:$0x1]
        %v4376 = vperm.slane %v4374, 0
        %4377 = vrot.lane.b32.xlu0 %v4376, 64
        %v4378 = vpop.permute.xlu0 %4377
        %v4380 = vadd.f32 %v4372, %v4378
        %v4381 = vadd.f32 %v4373, %v4378
        %4384 = vrot.lane.b32.xlu0 %v4380, 64
        %v4385 = vpop.permute.xlu0 %4384
        %4386 = vrot.lane.b32.xlu0 %v4381, 64
        %v4387 = vpop.permute.xlu0 %4386
        %v4390 = vadd.f32 %v3470, %v4385
        %v4391 = vadd.f32 %v3471, %v4387
        %v4392 = vld [vmem:[%s523 + $0x6] sm:$0x1]
        %4395 = vrot.lane.b32.xlu0 %v4390, 64
        %v4396 = vpop.permute.xlu0 %4395
        %4397 = vrot.lane.b32.xlu0 %v4391, 64
        %v4398 = vpop.permute.xlu0 %4397
        %v4401 = vsel %vm644, %v4396, 0.0
        %4402 = vadd.xlane.f32.xlu0 %v4401
        %v4403 = vpop.xlane.xlu0 %4402
        %v4404 = vsel %vm644, %v4398, 0.0
        %4405 = vadd.xlane.f32.xlu0 %v4404
        %v4406 = vpop.xlane.xlu0 %4405
        %v4407 = vmul.f32 %v4403, %v1350
        %v4408 = vmul.f32 %v4406, %v1350
        %v4409 = vsub.f32 %v4390, %v4407
        %v4410 = vsub.f32 %v4391, %v4408
        %v4411 = vmul.f32 %v4409, %v4409
        %v4412 = vmul.f32 %v4410, %v4410
        %4415 = vrot.lane.b32.xlu0 %v4411, 64
        %v4416 = vpop.permute.xlu0 %4415
        %4417 = vrot.lane.b32.xlu0 %v4412, 64
        %v4418 = vpop.permute.xlu0 %4417
        %v4421 = vsel %vm644, %v4416, 0.0
        %4422 = vadd.xlane.f32.xlu0 %v4421
        %v4423 = vpop.xlane.xlu0 %4422
        %v4424 = vsel %vm644, %v4418, 0.0
        %4425 = vadd.xlane.f32.xlu0 %v4424
        %v4426 = vpop.xlane.xlu0 %4425
        %v4427 = vmul.f32 %v4423, 0.032258064
        %v4428 = vmul.f32 %v4426, 0.032258064
        %v4429 = vrsqrt.pop %v4427
        %v4430 = vmul.f32 %v4429, %v4427
        %v4431 = vmul.f32 %v4430, %v4429
        %v4432 = vmul.f32 0.5, %v4431
        %v4433 = vsub.f32 1.5, %v4432
        %v4434 = vmul.f32 %v4429, %v4433
        %v4435 = vmul.f32 %v4427, %v4434
        %vm4436 = vcmp.eq.f32.partialorder %v4427, inf
        %v4437 = vsel %vm4436, %v4427, %v4435
        %vm4438 = vcmp.eq.f32.partialorder %v4427, 0.0
        %v4439 = vand.u32 %v4427, 2147483648
        %v4440 = vsel %vm4438, %v4439, %v4437
        %v4441 = vrsqrt.pop %v4428
        %v4442 = vmul.f32 %v4441, %v4428
        %v4443 = vmul.f32 %v4442, %v4441
        %v4444 = vmul.f32 0.5, %v4443
        %v4445 = vsub.f32 1.5, %v4444
        %v4446 = vmul.f32 %v4441, %v4445
        %v4447 = vmul.f32 %v4428, %v4446
        %vm4448 = vcmp.eq.f32.partialorder %v4428, inf
        %v4449 = vsel %vm4448, %v4428, %v4447
        %vm4450 = vcmp.eq.f32.partialorder %v4428, 0.0
        %v4451 = vand.u32 %v4428, 2147483648
        %v4452 = vsel %vm4450, %v4451, %v4449
        %v4453 = vadd.f32 %v4440, 1e-06
        %v4454 = vadd.f32 %v4452, 1e-06
        %v4455 = vrcp.pop %v4453
        %v4456 = vmul.f32 %v4453, %v4455
        %v4457 = vsub.f32 1.0, %v4456
        %v4458 = vmul.f32 %v4455, %v4457
        %v4459 = vadd.f32 %v4455, %v4458
        %vm4460 = vweird.f32 %v4453
        %vm4461 = vweird.f32 %v4455
        %vm4462 = vmor %vm4460, %vm4461
        %v4463 = vsel %vm4462, %v4455, %v4459
        %v4464 = vand.u32 2147483647, %v4453
        %vm4465 = vcmp.eq.f32.partialorder %v4464, 8.507059e+37
        %v4466 = vand.u32 %v4453, 2147483648
        %v4467 = vor.u32 1.1754944e-38, %v4466
        %v4468 = vsel %vm4465, %v4467, %v4463
        %v4469 = vmul.f32 %v4409, %v4468
        %v4470 = vrcp.pop %v4454
        %v4471 = vmul.f32 %v4454, %v4470
        %v4472 = vsub.f32 1.0, %v4471
        %v4473 = vmul.f32 %v4470, %v4472
        %v4474 = vadd.f32 %v4470, %v4473
        %vm4475 = vweird.f32 %v4454
        %vm4476 = vweird.f32 %v4470
        %vm4477 = vmor %vm4475, %vm4476
        %v4478 = vsel %vm4477, %v4470, %v4474
        %v4479 = vand.u32 2147483647, %v4454
        %vm4480 = vcmp.eq.f32.partialorder %v4479, 8.507059e+37
        %v4481 = vand.u32 %v4454, 2147483648
        %v4482 = vor.u32 1.1754944e-38, %v4481
        %v4483 = vsel %vm4480, %v4482, %v4478
        %v4484 = vmul.f32 %v4410, %v4483
        %v4486 = vperm.slane %v4392, 0
        %4490 = vrot.lane.b32.xlu0 %v4469, 64
        %v4491 = vpop.permute.xlu0 %4490
        %4492 = vrot.lane.b32.xlu0 %v4484, 64
        %v4493 = vpop.permute.xlu0 %4492
        %v4496 = vmul.f32 %v4486, %v4491
        %v4497 = vmul.f32 %v4486, %v4493
        %4498 = vrot.lane.b32.xlu0 %v4486, 96
        %v4499 = vpop.permute.xlu0 %4498
        %v4501 = vadd.f32 %v4496, %v4499
        %v4502 = vadd.f32 %v4497, %v4499
        %v4503 = vld [vmem:[%s519 + $0xc] sm:$0xf]
        %v4504 = vld [vmem:[%s519 + $0x1c] sm:$0xf]
        %v4505 = vld [vmem:[%s519 + $0x2c] sm:$0xf]
        %v4506 = vpack.c.bf16 %v4502, %v4501
        %v4507 = vld [vmem:[%s523 + $0x4] sm:$0x3]
        %v4509 = vperm.slane %v4507, 0
        %v4510 = vperm.slane %v4507, 1
        %v4514 = vunpack.c.l.b16 %v4503
        %v4515 = vunpack.c.l.b16 %v4504
        %v4516 = vunpack.c.l.b16 %v4505
        %v4517 = vpack.c.b16 %v4515, %v4514
        %v4518 = vpack.c.b16 %v4348, %v4516
        %4519 = vrot.lane.b32.xlu0 %v4517, 64
        %v4520 = vpop.permute.xlu0 %4519
        %4521 = vrot.lane.b32.xlu0 %v4518, 64
        %v4522 = vpop.permute.xlu0 %4521
        %4525 = vrot.lane.b32.xlu0 %v4509, 32
        %v4526 = vpop.permute.xlu0 %4525
        %4527 = vrot.lane.b32.xlu0 %v4510, 32
        %v4528 = vpop.permute.xlu0 %4527
        %v4529 = vsel %vm644, %v4526, %v4528
        %v4532 = vsel %vm644, %v4506, 0
        %4534 = vmatpush.bf16.msra.mxu0 0
        %4535 = vmatpush.bf16.msra.mxu0 0
        %4536 = vmatpush.bf16.msra.mxu0 0
        %4537 = vmatpush.bf16.msra.mxu0 0
        %4538 = vmatpush.bf16.msra.mxu0 0
        %4539 = vmatpush.bf16.msra.mxu0 0
        %4540 = vmatpush.bf16.msra.mxu0 %v4522
        %4541 = vmatpush.bf16.msra.mxu0 %v4520
        %4542 = vmatmul.bf16.gmra.mxu0 %v4532
        %v4543 = vpop.f32.mrf.mxu0
        %v4544 = vadd.f32 %v4529, %v4543
        %v4545 = vpop.f32.mrf.mxu0
        %v4546 = vadd.f32 %v4529, %v4545
        %4547 = vdwg.mxu0
        %v4548 = vmax.f32 %v4544, 0.0
        %v4549 = vmax.f32 %v4546, 0.0
        %v4550 = vld [vmem:[%s421] sm:$0xf]
        %v4551 = vld [vmem:[%s421 + $0x4] sm:$0xf]
        %v4552 = vld [vmem:[%s421 + $0x8] sm:$0xf]
        %v4553 = vld [vmem:[%s421 + $0xc] sm:$0xf]
        %v4554 = vld [vmem:[%s421 + $0x10] sm:$0xf]
        %v4555 = vld [vmem:[%s421 + $0x14] sm:$0xf]
        %v4556 = vld [vmem:[%s421 + $0x18] sm:$0xf]
        %v4557 = vld [vmem:[%s421 + $0x1c] sm:$0xf]
        %v4558 = vpack.c.bf16 %v4549, %v4548
        %v4559 = vld [vmem:[%s523 + $0x5] sm:$0x1]
        %v4561 = vperm.slane %v4559, 0
        %v4570 = vunpack.c.l.b16 %v4550
        %v4571 = vunpack.c.l.b16 %v4551
        %v4572 = vunpack.c.l.b16 %v4552
        %v4573 = vunpack.c.l.b16 %v4553
        %v4574 = vunpack.c.l.b16 %v4554
        %v4575 = vunpack.c.l.b16 %v4555
        %v4576 = vunpack.c.l.b16 %v4556
        %v4577 = vunpack.c.l.b16 %v4557
        %v4578 = vpack.c.b16 %v4571, %v4570
        %v4579 = vpack.c.b16 %v4573, %v4572
        %v4580 = vpack.c.b16 %v4575, %v4574
        %v4581 = vpack.c.b16 %v4577, %v4576
        %4582 = vrot.lane.b32.xlu0 %v4578, 96
        %v4583 = vpop.permute.xlu0 %4582
        %4584 = vrot.lane.b32.xlu0 %v4579, 96
        %v4585 = vpop.permute.xlu0 %4584
        %4586 = vrot.lane.b32.xlu0 %v4580, 96
        %v4587 = vpop.permute.xlu0 %4586
        %4588 = vrot.lane.b32.xlu0 %v4581, 96
        %v4589 = vpop.permute.xlu0 %4588
        %4594 = vrot.lane.b32.xlu0 %v4561, 96
        %v4595 = vpop.permute.xlu0 %4594
        %v4598 = vsel %vm1473, %v4558, 0
        %4600 = vmatpush.bf16.msra.mxu0 0
        %4601 = vmatpush.bf16.msra.mxu0 0
        %4602 = vmatpush.bf16.msra.mxu0 0
        %4603 = vmatpush.bf16.msra.mxu0 0
        %4604 = vmatpush.bf16.msra.mxu0 %v4589
        %4605 = vmatpush.bf16.msra.mxu0 %v4587
        %4606 = vmatpush.bf16.msra.mxu0 %v4585
        %4607 = vmatpush.bf16.msra.mxu0 %v4583
        %4608 = vmatmul.bf16.gmra.mxu0 %v4598
        %v4609 = vpop.f32.mrf.mxu0
        %v4610 = vadd.f32 %v4595, %v4609
        %v4611 = vpop.f32.mrf.mxu0
        %v4612 = vadd.f32 %v4595, %v4611
        %4613 = vdwg.mxu0
        %v4614 = vadd.f32 %v4501, %v4610
        %v4615 = vadd.f32 %v4502, %v4612
        %v4616 = vsel %vm644, %v4614, 0.0
        %4617 = vadd.xlane.f32.xlu0 %v4616
        %v4618 = vpop.xlane.xlu0 %4617
        %v4619 = vsel %vm644, %v4615, 0.0
        %4620 = vadd.xlane.f32.xlu0 %v4619
        %v4621 = vpop.xlane.xlu0 %4620
        %v4622 = vmul.f32 %v4618, %v1350
        %v4623 = vmul.f32 %v4621, %v1350
        %v4624 = vsub.f32 %v4614, %v4622
        %v4625 = vsub.f32 %v4615, %v4623
        %v4626 = vmul.f32 %v4624, %v4624
        %v4627 = vmul.f32 %v4625, %v4625
        %v4628 = vsel %vm644, %v4626, 0.0
        %4629 = vadd.xlane.f32.xlu0 %v4628
        %v4630 = vpop.xlane.xlu0 %4629
        %v4631 = vsel %vm644, %v4627, 0.0
        %4632 = vadd.xlane.f32.xlu0 %v4631
        %v4633 = vpop.xlane.xlu0 %4632
        %v4634 = vmul.f32 %v4630, 0.032258064
        %v4635 = vmul.f32 %v4633, 0.032258064
        %v4636 = vrsqrt.pop %v4634
        %v4637 = vmul.f32 %v4636, %v4634
        %v4638 = vmul.f32 %v4637, %v4636
        %v4639 = vmul.f32 0.5, %v4638
        %v4640 = vsub.f32 1.5, %v4639
        %v4641 = vmul.f32 %v4636, %v4640
        %v4642 = vmul.f32 %v4634, %v4641
        %vm4643 = vcmp.eq.f32.partialorder %v4634, inf
        %v4644 = vsel %vm4643, %v4634, %v4642
        %vm4645 = vcmp.eq.f32.partialorder %v4634, 0.0
        %v4646 = vand.u32 %v4634, 2147483648
        %v4647 = vsel %vm4645, %v4646, %v4644
        %v4648 = vrsqrt.pop %v4635
        %v4649 = vmul.f32 %v4648, %v4635
        %v4650 = vmul.f32 %v4649, %v4648
        %v4651 = vmul.f32 0.5, %v4650
        %v4652 = vsub.f32 1.5, %v4651
        %v4653 = vmul.f32 %v4648, %v4652
        %v4654 = vmul.f32 %v4635, %v4653
        %vm4655 = vcmp.eq.f32.partialorder %v4635, inf
        %v4656 = vsel %vm4655, %v4635, %v4654
        %vm4657 = vcmp.eq.f32.partialorder %v4635, 0.0
        %v4658 = vand.u32 %v4635, 2147483648
        %v4659 = vsel %vm4657, %v4658, %v4656
        %v4660 = vadd.f32 %v4647, 1e-06
        %v4661 = vadd.f32 %v4659, 1e-06
        %v4662 = vrcp.pop %v4660
        %v4663 = vmul.f32 %v4660, %v4662
        %v4664 = vsub.f32 1.0, %v4663
        %v4665 = vmul.f32 %v4662, %v4664
        %v4666 = vadd.f32 %v4662, %v4665
        %vm4667 = vweird.f32 %v4660
        %vm4668 = vweird.f32 %v4662
        %vm4669 = vmor %vm4667, %vm4668
        %v4670 = vsel %vm4669, %v4662, %v4666
        %v4671 = vand.u32 2147483647, %v4660
        %vm4672 = vcmp.eq.f32.partialorder %v4671, 8.507059e+37
        %v4673 = vand.u32 %v4660, 2147483648
        %v4674 = vor.u32 1.1754944e-38, %v4673
        %v4675 = vsel %vm4672, %v4674, %v4670
        %v4676 = vmul.f32 %v4624, %v4675
        %v4677 = vrcp.pop %v4661
        %v4678 = vmul.f32 %v4661, %v4677
        %v4679 = vsub.f32 1.0, %v4678
        %v4680 = vmul.f32 %v4677, %v4679
        %v4681 = vadd.f32 %v4677, %v4680
        %vm4682 = vweird.f32 %v4661
        %vm4683 = vweird.f32 %v4677
        %vm4684 = vmor %vm4682, %vm4683
        %v4685 = vsel %vm4684, %v4677, %v4681
        %v4686 = vand.u32 2147483647, %v4661
        %vm4687 = vcmp.eq.f32.partialorder %v4686, 8.507059e+37
        %v4688 = vand.u32 %v4661, 2147483648
        %v4689 = vor.u32 1.1754944e-38, %v4688
        %v4690 = vsel %vm4687, %v4689, %v4685
        %v4691 = vmul.f32 %v4625, %v4690
        %4694 = vrot.lane.b32.xlu0 %v4676, 64
        %v4695 = vpop.permute.xlu0 %4694
        %4696 = vrot.lane.b32.xlu0 %v4691, 64
        %v4697 = vpop.permute.xlu0 %4696
        %v4700 = vmul.f32 %v4486, %v4695
        %v4701 = vmul.f32 %v4486, %v4697
        %v4702 = vadd.f32 %v4700, %v4499
        %v4703 = vadd.f32 %v4701, %v4499
        %v4704 = vld [vmem:[%s1548 + $0x4] sm:$0xf]
        %v4705 = vld [vmem:[%s1548 + $0x14] sm:$0xf]
        %v4706 = vld [vmem:[%s1548 + $0x24] sm:$0xf]
        %v4707 = vld [vmem:[%s1548 + $0x34] sm:$0xf]
        %v4708 = vpack.c.bf16 %v4703, %v4702
        %v4709 = vld [vmem:[%s1554 + $0x2] sm:$0x1]
        %v4711 = vperm.slane %v4709, 0
        %4713 = vrot.lane.b32.xlu0 %v4708, 64
        %v4714 = vpop.permute.xlu0 %4713
        %v4719 = vunpack.c.l.b16 %v4704
        %v4720 = vunpack.c.l.b16 %v4705
        %v4721 = vunpack.c.l.b16 %v4706
        %v4722 = vunpack.c.l.b16 %v4707
        %v4723 = vpack.c.b16 %v4720, %v4719
        %v4724 = vpack.c.b16 %v4722, %v4721
        %4725 = vrot.lane.b32.xlu0 %v4723, 64
        %v4726 = vpop.permute.xlu0 %4725
        %4727 = vrot.lane.b32.xlu0 %v4724, 64
        %v4728 = vpop.permute.xlu0 %4727
        %4731 = vrot.lane.b32.xlu0 %v4711, 32
        %v4732 = vpop.permute.xlu0 %4731
        %v4735 = vsel %vm644, %v4714, 0
        %4737 = vmatpush.bf16.msra.mxu0 0
        %4738 = vmatpush.bf16.msra.mxu0 0
        %4739 = vmatpush.bf16.msra.mxu0 0
        %4740 = vmatpush.bf16.msra.mxu0 0
        %4741 = vmatpush.bf16.msra.mxu0 0
        %4742 = vmatpush.bf16.msra.mxu0 0
        %4743 = vmatpush.bf16.msra.mxu0 %v4728
        %4744 = vmatpush.bf16.msra.mxu0 %v4726
        %4745 = vmatmul.bf16.gmra.mxu0 %v4735
        %v4746 = vpop.f32.mrf.mxu0
        %v4747 = vadd.f32 %v4732, %v4746
        %v4748 = vpop.f32.mrf.mxu0
        %v4749 = vadd.f32 %v4732, %v4748
        %4750 = vdwg.mxu0
        %v4751 = vld [vmem:[%s1554 + $0x3] sm:$0x1]
        %v4753 = vperm.slane %v4751, 0
        %4755 = vrot.lane.b32.xlu0 %v4723, 32
        %v4756 = vpop.permute.xlu0 %4755
        %4757 = vrot.lane.b32.xlu0 %v4724, 32
        %v4758 = vpop.permute.xlu0 %4757
        %4761 = vmatpush.bf16.msra.mxu0 0
        %4762 = vmatpush.bf16.msra.mxu0 0
        %4763 = vmatpush.bf16.msra.mxu0 0
        %4764 = vmatpush.bf16.msra.mxu0 0
        %4765 = vmatpush.bf16.msra.mxu0 0
        %4766 = vmatpush.bf16.msra.mxu0 0
        %4767 = vmatpush.bf16.msra.mxu0 %v4758
        %4768 = vmatpush.bf16.msra.mxu0 %v4756
        %4769 = vmatmul.bf16.gmra.mxu0 %v4735
        %v4770 = vpop.f32.mrf.mxu0
        %v4771 = vadd.f32 %v4753, %v4770
        %v4772 = vpop.f32.mrf.mxu0
        %v4773 = vadd.f32 %v4753, %v4772
        %4774 = vdwg.mxu0
        %v4775 = vld [vmem:[%s1548 + $0x8] sm:$0xf]
        %v4776 = vld [vmem:[%s1548 + $0x18] sm:$0xf]
        %v4777 = vld [vmem:[%s1548 + $0x28] sm:$0xf]
        %v4778 = vld [vmem:[%s1548 + $0x38] sm:$0xf]
        %v4783 = vunpack.c.l.b16 %v4775
        %v4784 = vunpack.c.l.b16 %v4776
        %v4785 = vunpack.c.l.b16 %v4777
        %v4786 = vunpack.c.l.b16 %v4778
        %v4787 = vpack.c.b16 %v4784, %v4783
        %v4788 = vpack.c.b16 %v4786, %v4785
        %4791 = vrot.lane.b32.xlu0 %v4753, 96
        %v4792 = vpop.permute.xlu0 %4791
        %4794 = vmatpush.bf16.msra.mxu0 0
        %4795 = vmatpush.bf16.msra.mxu0 0
        %4796 = vmatpush.bf16.msra.mxu0 0
        %4797 = vmatpush.bf16.msra.mxu0 0
        %4798 = vmatpush.bf16.msra.mxu0 0
        %4799 = vmatpush.bf16.msra.mxu0 0
        %4800 = vmatpush.bf16.msra.mxu0 %v4788
        %4801 = vmatpush.bf16.msra.mxu0 %v4787
        %4802 = vmatmul.bf16.gmra.mxu0 %v4735
        %v4803 = vpop.f32.mrf.mxu0
        %v4804 = vadd.f32 %v4792, %v4803
        %v4805 = vpop.f32.mrf.mxu0
        %v4806 = vadd.f32 %v4792, %v4805
        %4807 = vdwg.mxu0
        %v4808 = vpack.c.bf16 %v4749, %v4747
        %v4809 = vpack.c.bf16 %v4773, %v4771
        %v4811 = vsel %vm707, %v4808, 0
        %v4814 = vsel %vm707, %v4809, 0
        %4816 = vmatpush.bf16.xpose.msra.mxu0 0
        %4817 = vmatpush.bf16.xpose.msra.mxu0 0
        %4818 = vmatpush.bf16.xpose.msra.mxu0 0
        %4819 = vmatpush.bf16.xpose.msra.mxu0 0
        %4820 = vmatpush.bf16.xpose.msra.mxu0 0
        %4821 = vmatpush.bf16.xpose.msra.mxu0 0
        %4822 = vmatpush.bf16.xpose.msra.mxu0 0
        %4823 = vmatpush.bf16.xpose.msra.mxu0 %v4814
        %4824 = vmatmul.bf16.gmra.mxu0 %v4811
        %v4825 = vpop.f32.mrf.mxu0
        %v4826 = vadd.f32 0.0, %v4825
        %v4827 = vpop.f32.mrf.mxu0
        %v4828 = vadd.f32 0.0, %v4827
        %4829 = vdwg.mxu0
        %v4830 = vmul.f32 %v4826, 0.35355338
        %v4831 = vmul.f32 %v4828, 0.35355338
        %v4832 = vsel %vm2605, %v4830, -inf
        %4833 = vmax.xlane.f32.xlu0 %v4832
        %v4834 = vpop.xlane.xlu0 %4833
        %v4835 = vsel %vm2605, %v4831, -inf
        %4836 = vmax.xlane.f32.xlu0 %v4835
        %v4837 = vpop.xlane.xlu0 %4836
        %v4838 = vsub.f32 %v4830, %v4834
        %v4839 = vsub.f32 %v4831, %v4837
        %v4840 = vmul.f32 %v4838, 1.442695
        %v4841 = vpow.pop %v4840
        %v4842 = vmul.f32 %v4839, 1.442695
        %v4843 = vpow.pop %v4842
        %v4844 = vsel %vm2605, %v4841, 0.0
        %4845 = vadd.xlane.f32.xlu0 %v4844
        %v4846 = vpop.xlane.xlu0 %4845
        %v4847 = vsel %vm2605, %v4843, 0.0
        %4848 = vadd.xlane.f32.xlu0 %v4847
        %v4849 = vpop.xlane.xlu0 %4848
        %v4850 = vrcp.pop %v4846
        %v4851 = vmul.f32 %v4846, %v4850
        %v4852 = vsub.f32 1.0, %v4851
        %v4853 = vmul.f32 %v4850, %v4852
        %v4854 = vadd.f32 %v4850, %v4853
        %vm4855 = vweird.f32 %v4846
        %vm4856 = vweird.f32 %v4850
        %vm4857 = vmor %vm4855, %vm4856
        %v4858 = vsel %vm4857, %v4850, %v4854
        %v4859 = vand.u32 2147483647, %v4846
        %vm4860 = vcmp.eq.f32.partialorder %v4859, 8.507059e+37
        %v4861 = vand.u32 %v4846, 2147483648
        %v4862 = vor.u32 1.1754944e-38, %v4861
        %v4863 = vsel %vm4860, %v4862, %v4858
        %v4864 = vmul.f32 %v4841, %v4863
        %v4865 = vrcp.pop %v4849
        %v4866 = vmul.f32 %v4849, %v4865
        %v4867 = vsub.f32 1.0, %v4866
        %v4868 = vmul.f32 %v4865, %v4867
        %v4869 = vadd.f32 %v4865, %v4868
        %vm4870 = vweird.f32 %v4849
        %vm4871 = vweird.f32 %v4865
        %vm4872 = vmor %vm4870, %vm4871
        %v4873 = vsel %vm4872, %v4865, %v4869
        %v4874 = vand.u32 2147483647, %v4849
        %vm4875 = vcmp.eq.f32.partialorder %v4874, 8.507059e+37
        %v4876 = vand.u32 %v4849, 2147483648
        %v4877 = vor.u32 1.1754944e-38, %v4876
        %v4878 = vsel %vm4875, %v4877, %v4873
        %v4879 = vmul.f32 %v4843, %v4878
        %v4880 = vpack.c.bf16 %v4879, %v4864
        %v4881 = vpack.c.bf16 %v4806, %v4804
        %v4883 = vsel %vm2605, %v4880, 0
        %4885 = vmatpush.bf16.msra.mxu0 0
        %4886 = vmatpush.bf16.msra.mxu0 0
        %4887 = vmatpush.bf16.msra.mxu0 0
        %4888 = vmatpush.bf16.msra.mxu0 0
        %4889 = vmatpush.bf16.msra.mxu0 0
        %4890 = vmatpush.bf16.msra.mxu0 0
        %4891 = vmatpush.bf16.msra.mxu0 0
        %4892 = vmatpush.bf16.msra.mxu0 %v4881
        %4893 = vmatmul.bf16.gmra.mxu0 %v4883
        %v4894 = vpop.f32.mrf.mxu0
        %v4895 = vadd.f32 0.0, %v4894
        %v4896 = vpop.f32.mrf.mxu0
        %v4897 = vadd.f32 0.0, %v4896
        %4898 = vdwg.mxu0
        %v4899 = vld [vmem:[%s1548 + $0x8] sm:$0xf]
        %v4900 = vpack.c.bf16 %v4897, %v4895
        %v4901 = vld [vmem:[%s1548 + $0x4] sm:$0xf]
        %v4902 = vld [vmem:[%s1548 + $0x14] sm:$0xf]
        %v4903 = vld [vmem:[%s1548 + $0x24] sm:$0xf]
        %v4904 = vld [vmem:[%s1548 + $0x34] sm:$0xf]
        %v4905 = vld [vmem:[%s1554 + $0x2] sm:$0x1]
        %v4907 = vperm.slane %v4905, 0
        %v4912 = vunpack.c.l.b16 %v4901
        %v4913 = vunpack.c.l.b16 %v4902
        %v4914 = vunpack.c.l.b16 %v4903
        %v4915 = vunpack.c.l.b16 %v4904
        %v4916 = vpack.c.b16 %v4913, %v4912
        %v4917 = vpack.c.b16 %v4915, %v4914
        %4918 = vrot.lane.b32.xlu0 %v4916, 56
        %v4919 = vpop.permute.xlu0 %4918
        %4920 = vrot.lane.b32.xlu0 %v4917, 56
        %v4921 = vpop.permute.xlu0 %4920
        %4924 = vrot.lane.b32.xlu0 %v4907, 24
        %v4925 = vpop.permute.xlu0 %4924
        %4927 = vmatpush.bf16.msra.mxu0 0
        %4928 = vmatpush.bf16.msra.mxu0 0
        %4929 = vmatpush.bf16.msra.mxu0 0
        %4930 = vmatpush.bf16.msra.mxu0 0
        %4931 = vmatpush.bf16.msra.mxu0 0
        %4932 = vmatpush.bf16.msra.mxu0 0
        %4933 = vmatpush.bf16.msra.mxu0 %v4921
        %4934 = vmatpush.bf16.msra.mxu0 %v4919
        %4935 = vmatmul.bf16.gmra.mxu0 %v4735
        %v4936 = vpop.f32.mrf.mxu0
        %v4937 = vadd.f32 %v4925, %v4936
        %v4938 = vpop.f32.mrf.mxu0
        %v4939 = vadd.f32 %v4925, %v4938
        %4940 = vdwg.mxu0
        %v4941 = vld [vmem:[%s1554 + $0x3] sm:$0x1]
        %v4943 = vperm.slane %v4941, 0
        %4944 = vrot.lane.b32.xlu0 %v4916, 24
        %v4945 = vpop.permute.xlu0 %4944
        %4946 = vrot.lane.b32.xlu0 %v4917, 24
        %v4947 = vpop.permute.xlu0 %4946
        %4950 = vrot.lane.b32.xlu0 %v4943, 120
        %v4951 = vpop.permute.xlu0 %4950
        %4953 = vmatpush.bf16.msra.mxu0 0
        %4954 = vmatpush.bf16.msra.mxu0 0
        %4955 = vmatpush.bf16.msra.mxu0 0
        %4956 = vmatpush.bf16.msra.mxu0 0
        %4957 = vmatpush.bf16.msra.mxu0 0
        %4958 = vmatpush.bf16.msra.mxu0 0
        %4959 = vmatpush.bf16.msra.mxu0 %v4947
        %4960 = vmatpush.bf16.msra.mxu0 %v4945
        %4961 = vmatmul.bf16.gmra.mxu0 %v4735
        %v4962 = vpop.f32.mrf.mxu0
        %v4963 = vadd.f32 %v4951, %v4962
        %v4964 = vpop.f32.mrf.mxu0
        %v4965 = vadd.f32 %v4951, %v4964
        %4966 = vdwg.mxu0
        %v4967 = vld [vmem:[%s1548 + $0x8] sm:$0xf]
        %v4968 = vld [vmem:[%s1548 + $0x18] sm:$0xf]
        %v4969 = vld [vmem:[%s1548 + $0x28] sm:$0xf]
        %v4970 = vld [vmem:[%s1548 + $0x38] sm:$0xf]
        %v4975 = vunpack.c.l.b16 %v4967
        %v4976 = vunpack.c.l.b16 %v4968
        %v4977 = vunpack.c.l.b16 %v4969
        %v4978 = vunpack.c.l.b16 %v4970
        %v4979 = vpack.c.b16 %v4976, %v4975
        %v4980 = vpack.c.b16 %v4978, %v4977
        %4981 = vrot.lane.b32.xlu0 %v4979, 120
        %v4982 = vpop.permute.xlu0 %4981
        %4983 = vrot.lane.b32.xlu0 %v4980, 120
        %v4984 = vpop.permute.xlu0 %4983
        %4987 = vrot.lane.b32.xlu0 %v4943, 88
        %v4988 = vpop.permute.xlu0 %4987
        %4990 = vmatpush.bf16.msra.mxu0 0
        %4991 = vmatpush.bf16.msra.mxu0 0
        %4992 = vmatpush.bf16.msra.mxu0 0
        %4993 = vmatpush.bf16.msra.mxu0 0
        %4994 = vmatpush.bf16.msra.mxu0 0
        %4995 = vmatpush.bf16.msra.mxu0 0
        %4996 = vmatpush.bf16.msra.mxu0 %v4984
        %4997 = vmatpush.bf16.msra.mxu0 %v4982
        %4998 = vmatmul.bf16.gmra.mxu0 %v4735
        %v4999 = vpop.f32.mrf.mxu0
        %v5000 = vadd.f32 %v4988, %v4999
        %v5001 = vpop.f32.mrf.mxu0
        %v5002 = vadd.f32 %v4988, %v5001
        %5003 = vdwg.mxu0
        %v5004 = vpack.c.bf16 %v4939, %v4937
        %v5005 = vpack.c.bf16 %v4965, %v4963
        %v5007 = vsel %vm707, %v5004, 0
        %v5010 = vsel %vm707, %v5005, 0
        %5012 = vmatpush.bf16.xpose.msra.mxu0 0
        %5013 = vmatpush.bf16.xpose.msra.mxu0 0
        %5014 = vmatpush.bf16.xpose.msra.mxu0 0
        %5015 = vmatpush.bf16.xpose.msra.mxu0 0
        %5016 = vmatpush.bf16.xpose.msra.mxu0 0
        %5017 = vmatpush.bf16.xpose.msra.mxu0 0
        %5018 = vmatpush.bf16.xpose.msra.mxu0 0
        %5019 = vmatpush.bf16.xpose.msra.mxu0 %v5010
        %5020 = vmatmul.bf16.gmra.mxu0 %v5007
        %v5021 = vpop.f32.mrf.mxu0
        %v5022 = vadd.f32 0.0, %v5021
        %v5023 = vpop.f32.mrf.mxu0
        %v5024 = vadd.f32 0.0, %v5023
        %5025 = vdwg.mxu0
        %v5026 = vmul.f32 %v5022, 0.35355338
        %v5027 = vmul.f32 %v5024, 0.35355338
        %v5028 = vsel %vm2605, %v5026, -inf
        %5029 = vmax.xlane.f32.xlu0 %v5028
        %v5030 = vpop.xlane.xlu0 %5029
        %v5031 = vsel %vm2605, %v5027, -inf
        %5032 = vmax.xlane.f32.xlu0 %v5031
        %v5033 = vpop.xlane.xlu0 %5032
        %v5034 = vsub.f32 %v5026, %v5030
        %v5035 = vsub.f32 %v5027, %v5033
        %v5036 = vmul.f32 %v5034, 1.442695
        %v5037 = vpow.pop %v5036
        %v5038 = vmul.f32 %v5035, 1.442695
        %v5039 = vpow.pop %v5038
        %v5040 = vsel %vm2605, %v5037, 0.0
        %5041 = vadd.xlane.f32.xlu0 %v5040
        %v5042 = vpop.xlane.xlu0 %5041
        %v5043 = vsel %vm2605, %v5039, 0.0
        %5044 = vadd.xlane.f32.xlu0 %v5043
        %v5045 = vpop.xlane.xlu0 %5044
        %v5046 = vrcp.pop %v5042
        %v5047 = vmul.f32 %v5042, %v5046
        %v5048 = vsub.f32 1.0, %v5047
        %v5049 = vmul.f32 %v5046, %v5048
        %v5050 = vadd.f32 %v5046, %v5049
        %vm5051 = vweird.f32 %v5042
        %vm5052 = vweird.f32 %v5046
        %vm5053 = vmor %vm5051, %vm5052
        %v5054 = vsel %vm5053, %v5046, %v5050
        %v5055 = vand.u32 2147483647, %v5042
        %vm5056 = vcmp.eq.f32.partialorder %v5055, 8.507059e+37
        %v5057 = vand.u32 %v5042, 2147483648
        %v5058 = vor.u32 1.1754944e-38, %v5057
        %v5059 = vsel %vm5056, %v5058, %v5054
        %v5060 = vmul.f32 %v5037, %v5059
        %v5061 = vrcp.pop %v5045
        %v5062 = vmul.f32 %v5045, %v5061
        %v5063 = vsub.f32 1.0, %v5062
        %v5064 = vmul.f32 %v5061, %v5063
        %v5065 = vadd.f32 %v5061, %v5064
        %vm5066 = vweird.f32 %v5045
        %vm5067 = vweird.f32 %v5061
        %vm5068 = vmor %vm5066, %vm5067
        %v5069 = vsel %vm5068, %v5061, %v5065
        %v5070 = vand.u32 2147483647, %v5045
        %vm5071 = vcmp.eq.f32.partialorder %v5070, 8.507059e+37
        %v5072 = vand.u32 %v5045, 2147483648
        %v5073 = vor.u32 1.1754944e-38, %v5072
        %v5074 = vsel %vm5071, %v5073, %v5069
        %v5075 = vmul.f32 %v5039, %v5074
        %v5076 = vpack.c.bf16 %v5075, %v5060
        %v5077 = vpack.c.bf16 %v5002, %v5000
        %v5079 = vsel %vm2605, %v5076, 0
        %5081 = vmatpush.bf16.msra.mxu0 0
        %5082 = vmatpush.bf16.msra.mxu0 0
        %5083 = vmatpush.bf16.msra.mxu0 0
        %5084 = vmatpush.bf16.msra.mxu0 0
        %5085 = vmatpush.bf16.msra.mxu0 0
        %5086 = vmatpush.bf16.msra.mxu0 0
        %5087 = vmatpush.bf16.msra.mxu0 0
        %5088 = vmatpush.bf16.msra.mxu0 %v5077
        %5089 = vmatmul.bf16.gmra.mxu0 %v5079
        %v5090 = vpop.f32.mrf.mxu0
        %v5091 = vadd.f32 0.0, %v5090
        %v5092 = vpop.f32.mrf.mxu0
        %v5093 = vadd.f32 0.0, %v5092
        %5094 = vdwg.mxu0
        %v5095 = vld [vmem:[%s1548 + $0x18] sm:$0xf]
        %v5096 = vpack.c.bf16 %v5093, %v5091
        %v5098 = vunpack.c.l.b16 %v5095
        %v5099 = vpack.c.b16 %v5098, %v5098
        %5100 = vrot.lane.b32.xlu0 %v5099, 96
        %v5101 = vpop.permute.xlu0 %5100
        %v5103 = vsel %vm707, %v5096, 0
        %v5106 = vsel %vm758, %v5101, 0
        %5108 = vmatpush.bf16.msra.mxu0 0
        %5109 = vmatpush.bf16.msra.mxu0 0
        %5110 = vmatpush.bf16.msra.mxu0 0
        %5111 = vmatpush.bf16.msra.mxu0 0
        %5112 = vmatpush.bf16.msra.mxu0 0
        %5113 = vmatpush.bf16.msra.mxu0 0
        %5114 = vmatpush.bf16.msra.mxu0 0
        %5115 = vmatpush.bf16.msra.mxu0 %v5106
        %5116 = vmatmul.bf16.gmra.mxu0 %v5103
        %v5117 = vpop.f32.mrf.mxu0
        %v5118 = vadd.f32 0.0, %v5117
        %v5119 = vpop.f32.mrf.mxu0
        %v5120 = vadd.f32 0.0, %v5119
        %5121 = vdwg.mxu0
        %v5123 = vunpack.c.l.b16 %v4899
        %v5124 = vpack.c.b16 %v5123, %v5123
        %5125 = vrot.lane.b32.xlu0 %v5124, 96
        %v5126 = vpop.permute.xlu0 %5125
        %v5128 = vsel %vm707, %v4900, 0
        %v5131 = vsel %vm758, %v5126, 0
        %5133 = vmatpush.bf16.msra.mxu0 0
        %5134 = vmatpush.bf16.msra.mxu0 0
        %5135 = vmatpush.bf16.msra.mxu0 0
        %5136 = vmatpush.bf16.msra.mxu0 0
        %5137 = vmatpush.bf16.msra.mxu0 0
        %5138 = vmatpush.bf16.msra.mxu0 0
        %5139 = vmatpush.bf16.msra.mxu0 0
        %5140 = vmatpush.bf16.msra.mxu0 %v5131
        %5141 = vmatmul.bf16.gmra.mxu0 %v5128
        %v5142 = vpop.f32.mrf.mxu0
        %v5143 = vadd.f32 %v5118, %v5142
        %v5144 = vpop.f32.mrf.mxu0
        %v5145 = vadd.f32 %v5120, %v5144
        %5146 = vdwg.mxu0
        %v5147 = vld [vmem:[%s1548 + $0x4] sm:$0xf]
        %v5148 = vld [vmem:[%s1548 + $0x14] sm:$0xf]
        %v5149 = vld [vmem:[%s1548 + $0x24] sm:$0xf]
        %v5150 = vld [vmem:[%s1548 + $0x34] sm:$0xf]
        %v5151 = vld [vmem:[%s1554 + $0x2] sm:$0x1]
        %v5153 = vperm.slane %v5151, 0
        %v5158 = vunpack.c.l.b16 %v5147
        %v5159 = vunpack.c.l.b16 %v5148
        %v5160 = vunpack.c.l.b16 %v5149
        %v5161 = vunpack.c.l.b16 %v5150
        %v5162 = vpack.c.b16 %v5159, %v5158
        %v5163 = vpack.c.b16 %v5161, %v5160
        %5164 = vrot.lane.b32.xlu0 %v5162, 48
        %v5165 = vpop.permute.xlu0 %5164
        %5166 = vrot.lane.b32.xlu0 %v5163, 48
        %v5167 = vpop.permute.xlu0 %5166
        %5170 = vrot.lane.b32.xlu0 %v5153, 16
        %v5171 = vpop.permute.xlu0 %5170
        %5173 = vmatpush.bf16.msra.mxu0 0
        %5174 = vmatpush.bf16.msra.mxu0 0
        %5175 = vmatpush.bf16.msra.mxu0 0
        %5176 = vmatpush.bf16.msra.mxu0 0
        %5177 = vmatpush.bf16.msra.mxu0 0
        %5178 = vmatpush.bf16.msra.mxu0 0
        %5179 = vmatpush.bf16.msra.mxu0 %v5167
        %5180 = vmatpush.bf16.msra.mxu0 %v5165
        %5181 = vmatmul.bf16.gmra.mxu0 %v4735
        %v5182 = vpop.f32.mrf.mxu0
        %v5183 = vadd.f32 %v5171, %v5182
        %v5184 = vpop.f32.mrf.mxu0
        %v5185 = vadd.f32 %v5171, %v5184
        %5186 = vdwg.mxu0
        %v5187 = vld [vmem:[%s1554 + $0x3] sm:$0x1]
        %v5189 = vperm.slane %v5187, 0
        %5190 = vrot.lane.b32.xlu0 %v5162, 16
        %v5191 = vpop.permute.xlu0 %5190
        %5192 = vrot.lane.b32.xlu0 %v5163, 16
        %v5193 = vpop.permute.xlu0 %5192
        %5196 = vrot.lane.b32.xlu0 %v5189, 112
        %v5197 = vpop.permute.xlu0 %5196
        %5199 = vmatpush.bf16.msra.mxu0 0
        %5200 = vmatpush.bf16.msra.mxu0 0
        %5201 = vmatpush.bf16.msra.mxu0 0
        %5202 = vmatpush.bf16.msra.mxu0 0
        %5203 = vmatpush.bf16.msra.mxu0 0
        %5204 = vmatpush.bf16.msra.mxu0 0
        %5205 = vmatpush.bf16.msra.mxu0 %v5193
        %5206 = vmatpush.bf16.msra.mxu0 %v5191
        %5207 = vmatmul.bf16.gmra.mxu0 %v4735
        %v5208 = vpop.f32.mrf.mxu0
        %v5209 = vadd.f32 %v5197, %v5208
        %v5210 = vpop.f32.mrf.mxu0
        %v5211 = vadd.f32 %v5197, %v5210
        %5212 = vdwg.mxu0
        %v5213 = vld [vmem:[%s1548 + $0x8] sm:$0xf]
        %v5214 = vld [vmem:[%s1548 + $0x18] sm:$0xf]
        %v5215 = vld [vmem:[%s1548 + $0x28] sm:$0xf]
        %v5216 = vld [vmem:[%s1548 + $0x38] sm:$0xf]
        %v5221 = vunpack.c.l.b16 %v5213
        %v5222 = vunpack.c.l.b16 %v5214
        %v5223 = vunpack.c.l.b16 %v5215
        %v5224 = vunpack.c.l.b16 %v5216
        %v5225 = vpack.c.b16 %v5222, %v5221
        %v5226 = vpack.c.b16 %v5224, %v5223
        %5227 = vrot.lane.b32.xlu0 %v5225, 112
        %v5228 = vpop.permute.xlu0 %5227
        %5229 = vrot.lane.b32.xlu0 %v5226, 112
        %v5230 = vpop.permute.xlu0 %5229
        %5233 = vrot.lane.b32.xlu0 %v5189, 80
        %v5234 = vpop.permute.xlu0 %5233
        %5236 = vmatpush.bf16.msra.mxu0 0
        %5237 = vmatpush.bf16.msra.mxu0 0
        %5238 = vmatpush.bf16.msra.mxu0 0
        %5239 = vmatpush.bf16.msra.mxu0 0
        %5240 = vmatpush.bf16.msra.mxu0 0
        %5241 = vmatpush.bf16.msra.mxu0 0
        %5242 = vmatpush.bf16.msra.mxu0 %v5230
        %5243 = vmatpush.bf16.msra.mxu0 %v5228
        %5244 = vmatmul.bf16.gmra.mxu0 %v4735
        %v5245 = vpop.f32.mrf.mxu0
        %v5246 = vadd.f32 %v5234, %v5245
        %v5247 = vpop.f32.mrf.mxu0
        %v5248 = vadd.f32 %v5234, %v5247
        %5249 = vdwg.mxu0
        %v5250 = vpack.c.bf16 %v5185, %v5183
        %v5251 = vpack.c.bf16 %v5211, %v5209
        %v5253 = vsel %vm707, %v5250, 0
        %v5256 = vsel %vm707, %v5251, 0
        %5258 = vmatpush.bf16.xpose.msra.mxu0 0
        %5259 = vmatpush.bf16.xpose.msra.mxu0 0
        %5260 = vmatpush.bf16.xpose.msra.mxu0 0
        %5261 = vmatpush.bf16.xpose.msra.mxu0 0
        %5262 = vmatpush.bf16.xpose.msra.mxu0 0
        %5263 = vmatpush.bf16.xpose.msra.mxu0 0
        %5264 = vmatpush.bf16.xpose.msra.mxu0 0
        %5265 = vmatpush.bf16.xpose.msra.mxu0 %v5256
        %5266 = vmatmul.bf16.gmra.mxu0 %v5253
        %v5267 = vpop.f32.mrf.mxu0
        %v5268 = vadd.f32 0.0, %v5267
        %v5269 = vpop.f32.mrf.mxu0
        %v5270 = vadd.f32 0.0, %v5269
        %5271 = vdwg.mxu0
        %v5272 = vmul.f32 %v5268, 0.35355338
        %v5273 = vmul.f32 %v5270, 0.35355338
        %v5274 = vsel %vm2605, %v5272, -inf
        %5275 = vmax.xlane.f32.xlu0 %v5274
        %v5276 = vpop.xlane.xlu0 %5275
        %v5277 = vsel %vm2605, %v5273, -inf
        %5278 = vmax.xlane.f32.xlu0 %v5277
        %v5279 = vpop.xlane.xlu0 %5278
        %v5280 = vsub.f32 %v5272, %v5276
        %v5281 = vsub.f32 %v5273, %v5279
        %v5282 = vmul.f32 %v5280, 1.442695
        %v5283 = vpow.pop %v5282
        %v5284 = vmul.f32 %v5281, 1.442695
        %v5285 = vpow.pop %v5284
        %v5286 = vsel %vm2605, %v5283, 0.0
        %5287 = vadd.xlane.f32.xlu0 %v5286
        %v5288 = vpop.xlane.xlu0 %5287
        %v5289 = vsel %vm2605, %v5285, 0.0
        %5290 = vadd.xlane.f32.xlu0 %v5289
        %v5291 = vpop.xlane.xlu0 %5290
        %v5292 = vrcp.pop %v5288
        %v5293 = vmul.f32 %v5288, %v5292
        %v5294 = vsub.f32 1.0, %v5293
        %v5295 = vmul.f32 %v5292, %v5294
        %v5296 = vadd.f32 %v5292, %v5295
        %vm5297 = vweird.f32 %v5288
        %vm5298 = vweird.f32 %v5292
        %vm5299 = vmor %vm5297, %vm5298
        %v5300 = vsel %vm5299, %v5292, %v5296
        %v5301 = vand.u32 2147483647, %v5288
        %vm5302 = vcmp.eq.f32.partialorder %v5301, 8.507059e+37
        %v5303 = vand.u32 %v5288, 2147483648
        %v5304 = vor.u32 1.1754944e-38, %v5303
        %v5305 = vsel %vm5302, %v5304, %v5300
        %v5306 = vmul.f32 %v5283, %v5305
        %v5307 = vrcp.pop %v5291
        %v5308 = vmul.f32 %v5291, %v5307
        %v5309 = vsub.f32 1.0, %v5308
        %v5310 = vmul.f32 %v5307, %v5309
        %v5311 = vadd.f32 %v5307, %v5310
        %vm5312 = vweird.f32 %v5291
        %vm5313 = vweird.f32 %v5307
        %vm5314 = vmor %vm5312, %vm5313
        %v5315 = vsel %vm5314, %v5307, %v5311
        %v5316 = vand.u32 2147483647, %v5291
        %vm5317 = vcmp.eq.f32.partialorder %v5316, 8.507059e+37
        %v5318 = vand.u32 %v5291, 2147483648
        %v5319 = vor.u32 1.1754944e-38, %v5318
        %v5320 = vsel %vm5317, %v5319, %v5315
        %v5321 = vmul.f32 %v5285, %v5320
        %v5322 = vpack.c.bf16 %v5321, %v5306
        %v5323 = vpack.c.bf16 %v5248, %v5246
        %v5325 = vsel %vm2605, %v5322, 0
        %5327 = vmatpush.bf16.msra.mxu0 0
        %5328 = vmatpush.bf16.msra.mxu0 0
        %5329 = vmatpush.bf16.msra.mxu0 0
        %5330 = vmatpush.bf16.msra.mxu0 0
        %5331 = vmatpush.bf16.msra.mxu0 0
        %5332 = vmatpush.bf16.msra.mxu0 0
        %5333 = vmatpush.bf16.msra.mxu0 0
        %5334 = vmatpush.bf16.msra.mxu0 %v5323
        %5335 = vmatmul.bf16.gmra.mxu0 %v5325
        %v5336 = vpop.f32.mrf.mxu0
        %v5337 = vadd.f32 0.0, %v5336
        %v5338 = vpop.f32.mrf.mxu0
        %v5339 = vadd.f32 0.0, %v5338
        %5340 = vdwg.mxu0
        %v5341 = vld [vmem:[%s1548 + $0x28] sm:$0xf]
        %v5342 = vpack.c.bf16 %v5339, %v5337
        %v5344 = vunpack.c.l.b16 %v5341
        %v5345 = vpack.c.b16 %v5344, %v5344
        %5346 = vrot.lane.b32.xlu0 %v5345, 96
        %v5347 = vpop.permute.xlu0 %5346
        %v5349 = vsel %vm707, %v5342, 0
        %v5352 = vsel %vm758, %v5347, 0
        %5354 = vmatpush.bf16.msra.mxu0 0
        %5355 = vmatpush.bf16.msra.mxu0 0
        %5356 = vmatpush.bf16.msra.mxu0 0
        %5357 = vmatpush.bf16.msra.mxu0 0
        %5358 = vmatpush.bf16.msra.mxu0 0
        %5359 = vmatpush.bf16.msra.mxu0 0
        %5360 = vmatpush.bf16.msra.mxu0 0
        %5361 = vmatpush.bf16.msra.mxu0 %v5352
        %5362 = vmatmul.bf16.gmra.mxu0 %v5349
        %v5363 = vpop.f32.mrf.mxu0
        %v5364 = vadd.f32 0.0, %v5363
        %v5365 = vpop.f32.mrf.mxu0
        %v5366 = vadd.f32 0.0, %v5365
        %5367 = vdwg.mxu0
        %v5368 = vadd.f32 %v5143, %v5364
        %v5369 = vadd.f32 %v5145, %v5366
        %v5370 = vld [vmem:[%s1548 + $0x4] sm:$0xf]
        %v5371 = vld [vmem:[%s1548 + $0x14] sm:$0xf]
        %v5372 = vld [vmem:[%s1548 + $0x24] sm:$0xf]
        %v5373 = vld [vmem:[%s1548 + $0x34] sm:$0xf]
        %v5374 = vld [vmem:[%s1554 + $0x2] sm:$0x1]
        %v5376 = vperm.slane %v5374, 0
        %v5381 = vunpack.c.l.b16 %v5370
        %v5382 = vunpack.c.l.b16 %v5371
        %v5383 = vunpack.c.l.b16 %v5372
        %v5384 = vunpack.c.l.b16 %v5373
        %v5385 = vpack.c.b16 %v5382, %v5381
        %v5386 = vpack.c.b16 %v5384, %v5383
        %5387 = vrot.lane.b32.xlu0 %v5385, 40
        %v5388 = vpop.permute.xlu0 %5387
        %5389 = vrot.lane.b32.xlu0 %v5386, 40
        %v5390 = vpop.permute.xlu0 %5389
        %5393 = vrot.lane.b32.xlu0 %v5376, 8
        %v5394 = vpop.permute.xlu0 %5393
        %5396 = vmatpush.bf16.msra.mxu0 0
        %5397 = vmatpush.bf16.msra.mxu0 0
        %5398 = vmatpush.bf16.msra.mxu0 0
        %5399 = vmatpush.bf16.msra.mxu0 0
        %5400 = vmatpush.bf16.msra.mxu0 0
        %5401 = vmatpush.bf16.msra.mxu0 0
        %5402 = vmatpush.bf16.msra.mxu0 %v5390
        %5403 = vmatpush.bf16.msra.mxu0 %v5388
        %5404 = vmatmul.bf16.gmra.mxu0 %v4735
        %v5405 = vpop.f32.mrf.mxu0
        %v5406 = vadd.f32 %v5394, %v5405
        %v5407 = vpop.f32.mrf.mxu0
        %v5408 = vadd.f32 %v5394, %v5407
        %5409 = vdwg.mxu0
        %v5410 = vld [vmem:[%s1554 + $0x3] sm:$0x1]
        %v5412 = vperm.slane %v5410, 0
        %5413 = vrot.lane.b32.xlu0 %v5385, 8
        %v5414 = vpop.permute.xlu0 %5413
        %5415 = vrot.lane.b32.xlu0 %v5386, 8
        %v5416 = vpop.permute.xlu0 %5415
        %5419 = vrot.lane.b32.xlu0 %v5412, 104
        %v5420 = vpop.permute.xlu0 %5419
        %5422 = vmatpush.bf16.msra.mxu0 0
        %5423 = vmatpush.bf16.msra.mxu0 0
        %5424 = vmatpush.bf16.msra.mxu0 0
        %5425 = vmatpush.bf16.msra.mxu0 0
        %5426 = vmatpush.bf16.msra.mxu0 0
        %5427 = vmatpush.bf16.msra.mxu0 0
        %5428 = vmatpush.bf16.msra.mxu0 %v5416
        %5429 = vmatpush.bf16.msra.mxu0 %v5414
        %5430 = vmatmul.bf16.gmra.mxu0 %v4735
        %v5431 = vpop.f32.mrf.mxu0
        %v5432 = vadd.f32 %v5420, %v5431
        %v5433 = vpop.f32.mrf.mxu0
        %v5434 = vadd.f32 %v5420, %v5433
        %5435 = vdwg.mxu0
        %v5436 = vld [vmem:[%s1548 + $0x8] sm:$0xf]
        %v5437 = vld [vmem:[%s1548 + $0x18] sm:$0xf]
        %v5438 = vld [vmem:[%s1548 + $0x28] sm:$0xf]
        %v5439 = vld [vmem:[%s1548 + $0x38] sm:$0xf]
        %v5444 = vunpack.c.l.b16 %v5436
        %v5445 = vunpack.c.l.b16 %v5437
        %v5446 = vunpack.c.l.b16 %v5438
        %v5447 = vunpack.c.l.b16 %v5439
        %v5448 = vpack.c.b16 %v5445, %v5444
        %v5449 = vpack.c.b16 %v5447, %v5446
        %5450 = vrot.lane.b32.xlu0 %v5448, 104
        %v5451 = vpop.permute.xlu0 %5450
        %5452 = vrot.lane.b32.xlu0 %v5449, 104
        %v5453 = vpop.permute.xlu0 %5452
        %5456 = vrot.lane.b32.xlu0 %v5412, 72
        %v5457 = vpop.permute.xlu0 %5456
        %5459 = vmatpush.bf16.msra.mxu0 0
        %5460 = vmatpush.bf16.msra.mxu0 0
        %5461 = vmatpush.bf16.msra.mxu0 0
        %5462 = vmatpush.bf16.msra.mxu0 0
        %5463 = vmatpush.bf16.msra.mxu0 0
        %5464 = vmatpush.bf16.msra.mxu0 0
        %5465 = vmatpush.bf16.msra.mxu0 %v5453
        %5466 = vmatpush.bf16.msra.mxu0 %v5451
        %5467 = vmatmul.bf16.gmra.mxu0 %v4735
        %v5468 = vpop.f32.mrf.mxu0
        %v5469 = vadd.f32 %v5457, %v5468
        %v5470 = vpop.f32.mrf.mxu0
        %v5471 = vadd.f32 %v5457, %v5470
        %5472 = vdwg.mxu0
        %v5473 = vpack.c.bf16 %v5408, %v5406
        %v5474 = vpack.c.bf16 %v5434, %v5432
        %v5476 = vsel %vm707, %v5473, 0
        %v5479 = vsel %vm707, %v5474, 0
        %5481 = vmatpush.bf16.xpose.msra.mxu0 0
        %5482 = vmatpush.bf16.xpose.msra.mxu0 0
        %5483 = vmatpush.bf16.xpose.msra.mxu0 0
        %5484 = vmatpush.bf16.xpose.msra.mxu0 0
        %5485 = vmatpush.bf16.xpose.msra.mxu0 0
        %5486 = vmatpush.bf16.xpose.msra.mxu0 0
        %5487 = vmatpush.bf16.xpose.msra.mxu0 0
        %5488 = vmatpush.bf16.xpose.msra.mxu0 %v5479
        %5489 = vmatmul.bf16.gmra.mxu0 %v5476
        %v5490 = vpop.f32.mrf.mxu0
        %v5491 = vadd.f32 0.0, %v5490
        %v5492 = vpop.f32.mrf.mxu0
        %v5493 = vadd.f32 0.0, %v5492
        %5494 = vdwg.mxu0
        %v5495 = vmul.f32 %v5491, 0.35355338
        %v5496 = vmul.f32 %v5493, 0.35355338
        %v5497 = vsel %vm2605, %v5495, -inf
        %5498 = vmax.xlane.f32.xlu0 %v5497
        %v5499 = vpop.xlane.xlu0 %5498
        %v5500 = vsel %vm2605, %v5496, -inf
        %5501 = vmax.xlane.f32.xlu0 %v5500
        %v5502 = vpop.xlane.xlu0 %5501
        %v5503 = vsub.f32 %v5495, %v5499
        %v5504 = vsub.f32 %v5496, %v5502
        %v5505 = vmul.f32 %v5503, 1.442695
        %v5506 = vpow.pop %v5505
        %v5507 = vmul.f32 %v5504, 1.442695
        %v5508 = vpow.pop %v5507
        %v5509 = vsel %vm2605, %v5506, 0.0
        %5510 = vadd.xlane.f32.xlu0 %v5509
        %v5511 = vpop.xlane.xlu0 %5510
        %v5512 = vsel %vm2605, %v5508, 0.0
        %5513 = vadd.xlane.f32.xlu0 %v5512
        %v5514 = vpop.xlane.xlu0 %5513
        %v5515 = vrcp.pop %v5511
        %v5516 = vmul.f32 %v5511, %v5515
        %v5517 = vsub.f32 1.0, %v5516
        %v5518 = vmul.f32 %v5515, %v5517
        %v5519 = vadd.f32 %v5515, %v5518
        %vm5520 = vweird.f32 %v5511
        %vm5521 = vweird.f32 %v5515
        %vm5522 = vmor %vm5520, %vm5521
        %v5523 = vsel %vm5522, %v5515, %v5519
        %v5524 = vand.u32 2147483647, %v5511
        %vm5525 = vcmp.eq.f32.partialorder %v5524, 8.507059e+37
        %v5526 = vand.u32 %v5511, 2147483648
        %v5527 = vor.u32 1.1754944e-38, %v5526
        %v5528 = vsel %vm5525, %v5527, %v5523
        %v5529 = vmul.f32 %v5506, %v5528
        %v5530 = vrcp.pop %v5514
        %v5531 = vmul.f32 %v5514, %v5530
        %v5532 = vsub.f32 1.0, %v5531
        %v5533 = vmul.f32 %v5530, %v5532
        %v5534 = vadd.f32 %v5530, %v5533
        %vm5535 = vweird.f32 %v5514
        %vm5536 = vweird.f32 %v5530
        %vm5537 = vmor %vm5535, %vm5536
        %v5538 = vsel %vm5537, %v5530, %v5534
        %v5539 = vand.u32 2147483647, %v5514
        %vm5540 = vcmp.eq.f32.partialorder %v5539, 8.507059e+37
        %v5541 = vand.u32 %v5514, 2147483648
        %v5542 = vor.u32 1.1754944e-38, %v5541
        %v5543 = vsel %vm5540, %v5542, %v5538
        %v5544 = vmul.f32 %v5508, %v5543
        %v5545 = vpack.c.bf16 %v5544, %v5529
        %v5546 = vpack.c.bf16 %v5471, %v5469
        %v5548 = vsel %vm2605, %v5545, 0
        %5550 = vmatpush.bf16.msra.mxu0 0
        %5551 = vmatpush.bf16.msra.mxu0 0
        %5552 = vmatpush.bf16.msra.mxu0 0
        %5553 = vmatpush.bf16.msra.mxu0 0
        %5554 = vmatpush.bf16.msra.mxu0 0
        %5555 = vmatpush.bf16.msra.mxu0 0
        %5556 = vmatpush.bf16.msra.mxu0 0
        %5557 = vmatpush.bf16.msra.mxu0 %v5546
        %5558 = vmatmul.bf16.gmra.mxu0 %v5548
        %v5559 = vpop.f32.mrf.mxu0
        %v5560 = vadd.f32 0.0, %v5559
        %v5561 = vpop.f32.mrf.mxu0
        %v5562 = vadd.f32 0.0, %v5561
        %5563 = vdwg.mxu0
        %v5564 = vld [vmem:[%s1548 + $0x38] sm:$0xf]
        %v5565 = vpack.c.bf16 %v5562, %v5560
        %v5567 = vunpack.c.l.b16 %v5564
        %v5568 = vpack.c.b16 %v5567, %v5567
        %5569 = vrot.lane.b32.xlu0 %v5568, 96
        %v5570 = vpop.permute.xlu0 %5569
        %v5572 = vsel %vm707, %v5565, 0
        %v5575 = vsel %vm758, %v5570, 0
        %5577 = vmatpush.bf16.msra.mxu0 0
        %5578 = vmatpush.bf16.msra.mxu0 0
        %5579 = vmatpush.bf16.msra.mxu0 0
        %5580 = vmatpush.bf16.msra.mxu0 0
        %5581 = vmatpush.bf16.msra.mxu0 0
        %5582 = vmatpush.bf16.msra.mxu0 0
        %5583 = vmatpush.bf16.msra.mxu0 0
        %5584 = vmatpush.bf16.msra.mxu0 %v5575
        %5585 = vmatmul.bf16.gmra.mxu0 %v5572
        %v5586 = vpop.f32.mrf.mxu0
        %v5587 = vadd.f32 0.0, %v5586
        %v5588 = vpop.f32.mrf.mxu0
        %v5589 = vadd.f32 0.0, %v5588
        %5590 = vdwg.mxu0
        %v5591 = vadd.f32 %v5368, %v5587
        %v5592 = vadd.f32 %v5369, %v5589
        %v5593 = vld [vmem:[%s1554 + $0x3] sm:$0x1]
        %v5595 = vperm.slane %v5593, 0
        %5596 = vrot.lane.b32.xlu0 %v5595, 64
        %v5597 = vpop.permute.xlu0 %5596
        %v5599 = vadd.f32 %v5591, %v5597
        %v5600 = vadd.f32 %v5592, %v5597
        %5603 = vrot.lane.b32.xlu0 %v5599, 64
        %v5604 = vpop.permute.xlu0 %5603
        %5605 = vrot.lane.b32.xlu0 %v5600, 64
        %v5606 = vpop.permute.xlu0 %5605
        %v5609 = vadd.f32 %v4702, %v5604
        %v5610 = vadd.f32 %v4703, %v5606
        %v5611 = vld [vmem:[%s1554 + $0x5] sm:$0x1]
        %5614 = vrot.lane.b32.xlu0 %v5609, 64
        %v5615 = vpop.permute.xlu0 %5614
        %5616 = vrot.lane.b32.xlu0 %v5610, 64
        %v5617 = vpop.permute.xlu0 %5616
        %v5620 = vsel %vm644, %v5615, 0.0
        %5621 = vadd.xlane.f32.xlu0 %v5620
        %v5622 = vpop.xlane.xlu0 %5621
        %v5623 = vsel %vm644, %v5617, 0.0
        %5624 = vadd.xlane.f32.xlu0 %v5623
        %v5625 = vpop.xlane.xlu0 %5624
        %v5626 = vmul.f32 %v5622, %v1350
        %v5627 = vmul.f32 %v5625, %v1350
        %v5628 = vsub.f32 %v5609, %v5626
        %v5629 = vsub.f32 %v5610, %v5627
        %v5630 = vmul.f32 %v5628, %v5628
        %v5631 = vmul.f32 %v5629, %v5629
        %5634 = vrot.lane.b32.xlu0 %v5630, 64
        %v5635 = vpop.permute.xlu0 %5634
        %5636 = vrot.lane.b32.xlu0 %v5631, 64
        %v5637 = vpop.permute.xlu0 %5636
        %v5640 = vsel %vm644, %v5635, 0.0
        %5641 = vadd.xlane.f32.xlu0 %v5640
        %v5642 = vpop.xlane.xlu0 %5641
        %v5643 = vsel %vm644, %v5637, 0.0
        %5644 = vadd.xlane.f32.xlu0 %v5643
        %v5645 = vpop.xlane.xlu0 %5644
        %v5646 = vmul.f32 %v5642, 0.032258064
        %v5647 = vmul.f32 %v5645, 0.032258064
        %v5648 = vrsqrt.pop %v5646
        %v5649 = vmul.f32 %v5648, %v5646
        %v5650 = vmul.f32 %v5649, %v5648
        %v5651 = vmul.f32 0.5, %v5650
        %v5652 = vsub.f32 1.5, %v5651
        %v5653 = vmul.f32 %v5648, %v5652
        %v5654 = vmul.f32 %v5646, %v5653
        %vm5655 = vcmp.eq.f32.partialorder %v5646, inf
        %v5656 = vsel %vm5655, %v5646, %v5654
        %vm5657 = vcmp.eq.f32.partialorder %v5646, 0.0
        %v5658 = vand.u32 %v5646, 2147483648
        %v5659 = vsel %vm5657, %v5658, %v5656
        %v5660 = vrsqrt.pop %v5647
        %v5661 = vmul.f32 %v5660, %v5647
        %v5662 = vmul.f32 %v5661, %v5660
        %v5663 = vmul.f32 0.5, %v5662
        %v5664 = vsub.f32 1.5, %v5663
        %v5665 = vmul.f32 %v5660, %v5664
        %v5666 = vmul.f32 %v5647, %v5665
        %vm5667 = vcmp.eq.f32.partialorder %v5647, inf
        %v5668 = vsel %vm5667, %v5647, %v5666
        %vm5669 = vcmp.eq.f32.partialorder %v5647, 0.0
        %v5670 = vand.u32 %v5647, 2147483648
        %v5671 = vsel %vm5669, %v5670, %v5668
        %v5672 = vadd.f32 %v5659, 1e-06
        %v5673 = vadd.f32 %v5671, 1e-06
        %v5674 = vrcp.pop %v5672
        %v5675 = vmul.f32 %v5672, %v5674
        %v5676 = vsub.f32 1.0, %v5675
        %v5677 = vmul.f32 %v5674, %v5676
        %v5678 = vadd.f32 %v5674, %v5677
        %vm5679 = vweird.f32 %v5672
        %vm5680 = vweird.f32 %v5674
        %vm5681 = vmor %vm5679, %vm5680
        %v5682 = vsel %vm5681, %v5674, %v5678
        %v5683 = vand.u32 2147483647, %v5672
        %vm5684 = vcmp.eq.f32.partialorder %v5683, 8.507059e+37
        %v5685 = vand.u32 %v5672, 2147483648
        %v5686 = vor.u32 1.1754944e-38, %v5685
        %v5687 = vsel %vm5684, %v5686, %v5682
        %v5688 = vmul.f32 %v5628, %v5687
        %v5689 = vrcp.pop %v5673
        %v5690 = vmul.f32 %v5673, %v5689
        %v5691 = vsub.f32 1.0, %v5690
        %v5692 = vmul.f32 %v5689, %v5691
        %v5693 = vadd.f32 %v5689, %v5692
        %vm5694 = vweird.f32 %v5673
        %vm5695 = vweird.f32 %v5689
        %vm5696 = vmor %vm5694, %vm5695
        %v5697 = vsel %vm5696, %v5689, %v5693
        %v5698 = vand.u32 2147483647, %v5673
        %vm5699 = vcmp.eq.f32.partialorder %v5698, 8.507059e+37
        %v5700 = vand.u32 %v5673, 2147483648
        %v5701 = vor.u32 1.1754944e-38, %v5700
        %v5702 = vsel %vm5699, %v5701, %v5697
        %v5703 = vmul.f32 %v5629, %v5702
        %v5705 = vperm.slane %v5611, 0
        %v5707 = vmul.f32 %v5705, %v5688
        %v5708 = vmul.f32 %v5705, %v5703
        %5709 = vrot.lane.b32.xlu0 %v5705, 96
        %v5710 = vpop.permute.xlu0 %5709
        %v5712 = vadd.f32 %v5707, %v5710
        %v5713 = vadd.f32 %v5708, %v5710
        %v5714 = vld [vmem:[%s1548 + $0x8] sm:$0xf]
        %v5715 = vld [vmem:[%s1548 + $0x18] sm:$0xf]
        %v5716 = vld [vmem:[%s1548 + $0x28] sm:$0xf]
        %v5717 = vpack.c.bf16 %v5713, %v5712
        %5719 = vrot.lane.b32.xlu0 %v5717, 64
        %v5720 = vpop.permute.xlu0 %5719
        %v5724 = vunpack.c.l.b16 %v5714
        %v5725 = vunpack.c.l.b16 %v5715
        %v5726 = vunpack.c.l.b16 %v5716
        %v5727 = vpack.c.b16 %v5725, %v5724
        %v5728 = vpack.c.b16 %v5567, %v5726
        %5729 = vrot.lane.b32.xlu0 %v5727, 64
        %v5730 = vpop.permute.xlu0 %5729
        %5731 = vrot.lane.b32.xlu0 %v5728, 64
        %v5732 = vpop.permute.xlu0 %5731
        %5735 = vrot.lane.b32.xlu0 %v5595, 32
        %v5736 = vpop.permute.xlu0 %5735
        %v5739 = vsel %vm644, %v5720, 0
        %5741 = vmatpush.bf16.msra.mxu0 0
        %5742 = vmatpush.bf16.msra.mxu0 0
        %5743 = vmatpush.bf16.msra.mxu0 0
        %5744 = vmatpush.bf16.msra.mxu0 0
        %5745 = vmatpush.bf16.msra.mxu0 0
        %5746 = vmatpush.bf16.msra.mxu0 0
        %5747 = vmatpush.bf16.msra.mxu0 %v5732
        %5748 = vmatpush.bf16.msra.mxu0 %v5730
        %5749 = vmatmul.bf16.gmra.mxu0 %v5739
        %v5750 = vpop.f32.mrf.mxu0
        %v5751 = vadd.f32 %v5736, %v5750
        %v5752 = vpop.f32.mrf.mxu0
        %v5753 = vadd.f32 %v5736, %v5752
        %5754 = vdwg.mxu0
        %v5755 = vld [vmem:[%s1554 + $0x4] sm:$0x1]
        %v5757 = vperm.slane %v5755, 0
        %5759 = vrot.lane.b32.xlu0 %v5727, 32
        %v5760 = vpop.permute.xlu0 %5759
        %5761 = vrot.lane.b32.xlu0 %v5728, 32
        %v5762 = vpop.permute.xlu0 %5761
        %5765 = vmatpush.bf16.msra.mxu0 0
        %5766 = vmatpush.bf16.msra.mxu0 0
        %5767 = vmatpush.bf16.msra.mxu0 0
        %5768 = vmatpush.bf16.msra.mxu0 0
        %5769 = vmatpush.bf16.msra.mxu0 0
        %5770 = vmatpush.bf16.msra.mxu0 0
        %5771 = vmatpush.bf16.msra.mxu0 %v5762
        %5772 = vmatpush.bf16.msra.mxu0 %v5760
        %5773 = vmatmul.bf16.gmra.mxu0 %v3528
        %v5774 = vpop.f32.mrf.mxu0
        %v5775 = vadd.f32 %v5757, %v5774
        %v5776 = vpop.f32.mrf.mxu0
        %5777 = vdwg.mxu0
        %v5778 = vld [vmem:[%s1548 + $0xc] sm:$0xf]
        %v5779 = vld [vmem:[%s1548 + $0x1c] sm:$0xf]
        %v5780 = vld [vmem:[%s1548 + $0x2c] sm:$0xf]
        %v5781 = vld [vmem:[%s1548 + $0x3c] sm:$0xf]
        %v5786 = vunpack.c.l.b16 %v5778
        %v5787 = vunpack.c.l.b16 %v5779
        %v5788 = vunpack.c.l.b16 %v5780
        %v5789 = vunpack.c.l.b16 %v5781
        %v5790 = vpack.c.b16 %v5787, %v5786
        %v5791 = vpack.c.b16 %v5789, %v5788
        %5794 = vrot.lane.b32.xlu0 %v5757, 96
        %v5795 = vpop.permute.xlu0 %5794
        %5797 = vmatpush.bf16.msra.mxu0 0
        %5798 = vmatpush.bf16.msra.mxu0 0
        %5799 = vmatpush.bf16.msra.mxu0 0
        %5800 = vmatpush.bf16.msra.mxu0 0
        %5801 = vmatpush.bf16.msra.mxu0 0
        %5802 = vmatpush.bf16.msra.mxu0 0
        %5803 = vmatpush.bf16.msra.mxu0 %v5791
        %5804 = vmatpush.bf16.msra.mxu0 %v5790
        %5805 = vmatmul.bf16.gmra.mxu0 %v3528
        %v5806 = vpop.f32.mrf.mxu0
        %v5807 = vadd.f32 %v5795, %v5806
        %v5808 = vpop.f32.mrf.mxu0
        %5809 = vdwg.mxu0
        %v5810 = vpack.c.bf16 %v5753, %v5751
        %v5811 = vpack.c.bf16 %v5775, %v5775
        %v5813 = vsel %vm707, %v5810, 0
        %v5816 = vsel %vm707, %v5811, 0
        %5818 = vmatpush.bf16.xpose.msra.mxu0 0
        %5819 = vmatpush.bf16.xpose.msra.mxu0 0
        %5820 = vmatpush.bf16.xpose.msra.mxu0 0
        %5821 = vmatpush.bf16.xpose.msra.mxu0 0
        %5822 = vmatpush.bf16.xpose.msra.mxu0 0
        %5823 = vmatpush.bf16.xpose.msra.mxu0 0
        %5824 = vmatpush.bf16.xpose.msra.mxu0 0
        %5825 = vmatpush.bf16.xpose.msra.mxu0 %v5816
        %5826 = vmatmul.bf16.gmra.mxu0 %v5813
        %v5827 = vpop.f32.mrf.mxu0
        %v5828 = vadd.f32 0.0, %v5827
        %v5829 = vpop.f32.mrf.mxu0
        %v5830 = vadd.f32 0.0, %v5829
        %5831 = vdwg.mxu0
        %v5832 = vmul.f32 %v5828, 0.35355338
        %v5833 = vmul.f32 %v5830, 0.35355338
        %v5834 = vadd.f32 %v5832, %v621
        %v5835 = vadd.f32 %v5833, %v621
        %v5836 = vsel %vm707, %v5834, -inf
        %5837 = vmax.xlane.f32.xlu0 %v5836
        %v5838 = vpop.xlane.xlu0 %5837
        %v5839 = vsel %vm707, %v5835, -inf
        %5840 = vmax.xlane.f32.xlu0 %v5839
        %v5841 = vpop.xlane.xlu0 %5840
        %v5842 = vsub.f32 %v5834, %v5838
        %v5843 = vsub.f32 %v5835, %v5841
        %v5844 = vmul.f32 %v5842, 1.442695
        %v5845 = vpow.pop %v5844
        %v5846 = vmul.f32 %v5843, 1.442695
        %v5847 = vpow.pop %v5846
        %v5848 = vsel %vm707, %v5845, 0.0
        %5849 = vadd.xlane.f32.xlu0 %v5848
        %v5850 = vpop.xlane.xlu0 %5849
        %v5851 = vsel %vm707, %v5847, 0.0
        %5852 = vadd.xlane.f32.xlu0 %v5851
        %v5853 = vpop.xlane.xlu0 %5852
        %v5854 = vrcp.pop %v5850
        %v5855 = vmul.f32 %v5850, %v5854
        %v5856 = vsub.f32 1.0, %v5855
        %v5857 = vmul.f32 %v5854, %v5856
        %v5858 = vadd.f32 %v5854, %v5857
        %vm5859 = vweird.f32 %v5850
        %vm5860 = vweird.f32 %v5854
        %vm5861 = vmor %vm5859, %vm5860
        %v5862 = vsel %vm5861, %v5854, %v5858
        %v5863 = vand.u32 2147483647, %v5850
        %vm5864 = vcmp.eq.f32.partialorder %v5863, 8.507059e+37
        %v5865 = vand.u32 %v5850, 2147483648
        %v5866 = vor.u32 1.1754944e-38, %v5865
        %v5867 = vsel %vm5864, %v5866, %v5862
        %v5868 = vmul.f32 %v5845, %v5867
        %v5869 = vrcp.pop %v5853
        %v5870 = vmul.f32 %v5853, %v5869
        %v5871 = vsub.f32 1.0, %v5870
        %v5872 = vmul.f32 %v5869, %v5871
        %v5873 = vadd.f32 %v5869, %v5872
        %vm5874 = vweird.f32 %v5853
        %vm5875 = vweird.f32 %v5869
        %vm5876 = vmor %vm5874, %vm5875
        %v5877 = vsel %vm5876, %v5869, %v5873
        %v5878 = vand.u32 2147483647, %v5853
        %vm5879 = vcmp.eq.f32.partialorder %v5878, 8.507059e+37
        %v5880 = vand.u32 %v5853, 2147483648
        %v5881 = vor.u32 1.1754944e-38, %v5880
        %v5882 = vsel %vm5879, %v5881, %v5877
        %v5883 = vmul.f32 %v5847, %v5882
        %v5884 = vpack.c.bf16 %v5883, %v5868
        %v5885 = vpack.c.bf16 %v5807, %v5807
        %v5887 = vsel %vm707, %v5884, 0
        %v5890 = vsel %vm758, %v5885, 0
        %5892 = vmatpush.bf16.msra.mxu0 0
        %5893 = vmatpush.bf16.msra.mxu0 0
        %5894 = vmatpush.bf16.msra.mxu0 0
        %5895 = vmatpush.bf16.msra.mxu0 0
        %5896 = vmatpush.bf16.msra.mxu0 0
        %5897 = vmatpush.bf16.msra.mxu0 0
        %5898 = vmatpush.bf16.msra.mxu0 0
        %5899 = vmatpush.bf16.msra.mxu0 %v5890
        %5900 = vmatmul.bf16.gmra.mxu0 %v5887
        %v5901 = vpop.f32.mrf.mxu0
        %v5902 = vadd.f32 0.0, %v5901
        %v5903 = vpop.f32.mrf.mxu0
        %v5904 = vadd.f32 0.0, %v5903
        %5905 = vdwg.mxu0
        %v5906 = vld [vmem:[%s1548 + $0xc] sm:$0xf]
        %v5907 = vpack.c.bf16 %v5904, %v5902
        %v5908 = vld [vmem:[%s1548 + $0x8] sm:$0xf]
        %v5909 = vld [vmem:[%s1548 + $0x18] sm:$0xf]
        %v5910 = vld [vmem:[%s1548 + $0x28] sm:$0xf]
        %v5911 = vld [vmem:[%s1548 + $0x38] sm:$0xf]
        %v5912 = vld [vmem:[%s1554 + $0x3] sm:$0x1]
        %v5914 = vperm.slane %v5912, 0
        %v5919 = vunpack.c.l.b16 %v5908
        %v5920 = vunpack.c.l.b16 %v5909
        %v5921 = vunpack.c.l.b16 %v5910
        %v5922 = vunpack.c.l.b16 %v5911
        %v5923 = vpack.c.b16 %v5920, %v5919
        %v5924 = vpack.c.b16 %v5922, %v5921
        %5925 = vrot.lane.b32.xlu0 %v5923, 56
        %v5926 = vpop.permute.xlu0 %5925
        %5927 = vrot.lane.b32.xlu0 %v5924, 56
        %v5928 = vpop.permute.xlu0 %5927
        %5931 = vrot.lane.b32.xlu0 %v5914, 24
        %v5932 = vpop.permute.xlu0 %5931
        %5934 = vmatpush.bf16.msra.mxu0 0
        %5935 = vmatpush.bf16.msra.mxu0 0
        %5936 = vmatpush.bf16.msra.mxu0 0
        %5937 = vmatpush.bf16.msra.mxu0 0
        %5938 = vmatpush.bf16.msra.mxu0 0
        %5939 = vmatpush.bf16.msra.mxu0 0
        %5940 = vmatpush.bf16.msra.mxu0 %v5928
        %5941 = vmatpush.bf16.msra.mxu0 %v5926
        %5942 = vmatmul.bf16.gmra.mxu0 %v5739
        %v5943 = vpop.f32.mrf.mxu0
        %v5944 = vadd.f32 %v5932, %v5943
        %v5945 = vpop.f32.mrf.mxu0
        %v5946 = vadd.f32 %v5932, %v5945
        %5947 = vdwg.mxu0
        %v5948 = vld [vmem:[%s1554 + $0x4] sm:$0x1]
        %v5950 = vperm.slane %v5948, 0
        %5951 = vrot.lane.b32.xlu0 %v5923, 24
        %v5952 = vpop.permute.xlu0 %5951
        %5953 = vrot.lane.b32.xlu0 %v5924, 24
        %v5954 = vpop.permute.xlu0 %5953
        %5957 = vrot.lane.b32.xlu0 %v5950, 120
        %v5958 = vpop.permute.xlu0 %5957
        %5960 = vmatpush.bf16.msra.mxu0 0
        %5961 = vmatpush.bf16.msra.mxu0 0
        %5962 = vmatpush.bf16.msra.mxu0 0
        %5963 = vmatpush.bf16.msra.mxu0 0
        %5964 = vmatpush.bf16.msra.mxu0 0
        %5965 = vmatpush.bf16.msra.mxu0 0
        %5966 = vmatpush.bf16.msra.mxu0 %v5954
        %5967 = vmatpush.bf16.msra.mxu0 %v5952
        %5968 = vmatmul.bf16.gmra.mxu0 %v3528
        %v5969 = vpop.f32.mrf.mxu0
        %v5970 = vadd.f32 %v5958, %v5969
        %v5971 = vpop.f32.mrf.mxu0
        %5972 = vdwg.mxu0
        %v5973 = vld [vmem:[%s1548 + $0xc] sm:$0xf]
        %v5974 = vld [vmem:[%s1548 + $0x1c] sm:$0xf]
        %v5975 = vld [vmem:[%s1548 + $0x2c] sm:$0xf]
        %v5976 = vld [vmem:[%s1548 + $0x3c] sm:$0xf]
        %v5981 = vunpack.c.l.b16 %v5973
        %v5982 = vunpack.c.l.b16 %v5974
        %v5983 = vunpack.c.l.b16 %v5975
        %v5984 = vunpack.c.l.b16 %v5976
        %v5985 = vpack.c.b16 %v5982, %v5981
        %v5986 = vpack.c.b16 %v5984, %v5983
        %5987 = vrot.lane.b32.xlu0 %v5985, 120
        %v5988 = vpop.permute.xlu0 %5987
        %5989 = vrot.lane.b32.xlu0 %v5986, 120
        %v5990 = vpop.permute.xlu0 %5989
        %5993 = vrot.lane.b32.xlu0 %v5950, 88
        %v5994 = vpop.permute.xlu0 %5993
        %5996 = vmatpush.bf16.msra.mxu0 0
        %5997 = vmatpush.bf16.msra.mxu0 0
        %5998 = vmatpush.bf16.msra.mxu0 0
        %5999 = vmatpush.bf16.msra.mxu0 0
        %6000 = vmatpush.bf16.msra.mxu0 0
        %6001 = vmatpush.bf16.msra.mxu0 0
        %6002 = vmatpush.bf16.msra.mxu0 %v5990
        %6003 = vmatpush.bf16.msra.mxu0 %v5988
        %6004 = vmatmul.bf16.gmra.mxu0 %v3528
        %v6005 = vpop.f32.mrf.mxu0
        %v6006 = vadd.f32 %v5994, %v6005
        %v6007 = vpop.f32.mrf.mxu0
        %6008 = vdwg.mxu0
        %v6009 = vpack.c.bf16 %v5946, %v5944
        %v6010 = vpack.c.bf16 %v5970, %v5970
        %v6012 = vsel %vm707, %v6009, 0
        %v6015 = vsel %vm707, %v6010, 0
        %6017 = vmatpush.bf16.xpose.msra.mxu0 0
        %6018 = vmatpush.bf16.xpose.msra.mxu0 0
        %6019 = vmatpush.bf16.xpose.msra.mxu0 0
        %6020 = vmatpush.bf16.xpose.msra.mxu0 0
        %6021 = vmatpush.bf16.xpose.msra.mxu0 0
        %6022 = vmatpush.bf16.xpose.msra.mxu0 0
        %6023 = vmatpush.bf16.xpose.msra.mxu0 0
        %6024 = vmatpush.bf16.xpose.msra.mxu0 %v6015
        %6025 = vmatmul.bf16.gmra.mxu0 %v6012
        %v6026 = vpop.f32.mrf.mxu0
        %v6027 = vadd.f32 0.0, %v6026
        %v6028 = vpop.f32.mrf.mxu0
        %v6029 = vadd.f32 0.0, %v6028
        %6030 = vdwg.mxu0
        %v6031 = vmul.f32 %v6027, 0.35355338
        %v6032 = vmul.f32 %v6029, 0.35355338
        %v6033 = vadd.f32 %v6031, %v621
        %v6034 = vadd.f32 %v6032, %v621
        %v6035 = vsel %vm707, %v6033, -inf
        %6036 = vmax.xlane.f32.xlu0 %v6035
        %v6037 = vpop.xlane.xlu0 %6036
        %v6038 = vsel %vm707, %v6034, -inf
        %6039 = vmax.xlane.f32.xlu0 %v6038
        %v6040 = vpop.xlane.xlu0 %6039
        %v6041 = vsub.f32 %v6033, %v6037
        %v6042 = vsub.f32 %v6034, %v6040
        %v6043 = vmul.f32 %v6041, 1.442695
        %v6044 = vpow.pop %v6043
        %v6045 = vmul.f32 %v6042, 1.442695
        %v6046 = vpow.pop %v6045
        %v6047 = vsel %vm707, %v6044, 0.0
        %6048 = vadd.xlane.f32.xlu0 %v6047
        %v6049 = vpop.xlane.xlu0 %6048
        %v6050 = vsel %vm707, %v6046, 0.0
        %6051 = vadd.xlane.f32.xlu0 %v6050
        %v6052 = vpop.xlane.xlu0 %6051
        %v6053 = vrcp.pop %v6049
        %v6054 = vmul.f32 %v6049, %v6053
        %v6055 = vsub.f32 1.0, %v6054
        %v6056 = vmul.f32 %v6053, %v6055
        %v6057 = vadd.f32 %v6053, %v6056
        %vm6058 = vweird.f32 %v6049
        %vm6059 = vweird.f32 %v6053
        %vm6060 = vmor %vm6058, %vm6059
        %v6061 = vsel %vm6060, %v6053, %v6057
        %v6062 = vand.u32 2147483647, %v6049
        %vm6063 = vcmp.eq.f32.partialorder %v6062, 8.507059e+37
        %v6064 = vand.u32 %v6049, 2147483648
        %v6065 = vor.u32 1.1754944e-38, %v6064
        %v6066 = vsel %vm6063, %v6065, %v6061
        %v6067 = vmul.f32 %v6044, %v6066
        %v6068 = vrcp.pop %v6052
        %v6069 = vmul.f32 %v6052, %v6068
        %v6070 = vsub.f32 1.0, %v6069
        %v6071 = vmul.f32 %v6068, %v6070
        %v6072 = vadd.f32 %v6068, %v6071
        %vm6073 = vweird.f32 %v6052
        %vm6074 = vweird.f32 %v6068
        %vm6075 = vmor %vm6073, %vm6074
        %v6076 = vsel %vm6075, %v6068, %v6072
        %v6077 = vand.u32 2147483647, %v6052
        %vm6078 = vcmp.eq.f32.partialorder %v6077, 8.507059e+37
        %v6079 = vand.u32 %v6052, 2147483648
        %v6080 = vor.u32 1.1754944e-38, %v6079
        %v6081 = vsel %vm6078, %v6080, %v6076
        %v6082 = vmul.f32 %v6046, %v6081
        %v6083 = vpack.c.bf16 %v6082, %v6067
        %v6084 = vpack.c.bf16 %v6006, %v6006
        %v6086 = vsel %vm707, %v6083, 0
        %v6089 = vsel %vm758, %v6084, 0
        %6091 = vmatpush.bf16.msra.mxu0 0
        %6092 = vmatpush.bf16.msra.mxu0 0
        %6093 = vmatpush.bf16.msra.mxu0 0
        %6094 = vmatpush.bf16.msra.mxu0 0
        %6095 = vmatpush.bf16.msra.mxu0 0
        %6096 = vmatpush.bf16.msra.mxu0 0
        %6097 = vmatpush.bf16.msra.mxu0 0
        %6098 = vmatpush.bf16.msra.mxu0 %v6089
        %6099 = vmatmul.bf16.gmra.mxu0 %v6086
        %v6100 = vpop.f32.mrf.mxu0
        %v6101 = vadd.f32 0.0, %v6100
        %v6102 = vpop.f32.mrf.mxu0
        %v6103 = vadd.f32 0.0, %v6102
        %6104 = vdwg.mxu0
        %v6105 = vld [vmem:[%s1548 + $0x1c] sm:$0xf]
        %v6106 = vpack.c.bf16 %v6103, %v6101
        %v6108 = vunpack.c.l.b16 %v6105
        %v6109 = vpack.c.b16 %v6108, %v6108
        %6110 = vrot.lane.b32.xlu0 %v6109, 96
        %v6111 = vpop.permute.xlu0 %6110
        %v6113 = vsel %vm707, %v6106, 0
        %v6116 = vsel %vm758, %v6111, 0
        %6118 = vmatpush.bf16.msra.mxu0 0
        %6119 = vmatpush.bf16.msra.mxu0 0
        %6120 = vmatpush.bf16.msra.mxu0 0
        %6121 = vmatpush.bf16.msra.mxu0 0
        %6122 = vmatpush.bf16.msra.mxu0 0
        %6123 = vmatpush.bf16.msra.mxu0 0
        %6124 = vmatpush.bf16.msra.mxu0 0
        %6125 = vmatpush.bf16.msra.mxu0 %v6116
        %6126 = vmatmul.bf16.gmra.mxu0 %v6113
        %v6127 = vpop.f32.mrf.mxu0
        %v6128 = vadd.f32 0.0, %v6127
        %v6129 = vpop.f32.mrf.mxu0
        %v6130 = vadd.f32 0.0, %v6129
        %6131 = vdwg.mxu0
        %v6133 = vunpack.c.l.b16 %v5906
        %v6134 = vpack.c.b16 %v6133, %v6133
        %6135 = vrot.lane.b32.xlu0 %v6134, 96
        %v6136 = vpop.permute.xlu0 %6135
        %v6138 = vsel %vm707, %v5907, 0
        %v6141 = vsel %vm758, %v6136, 0
        %6143 = vmatpush.bf16.msra.mxu0 0
        %6144 = vmatpush.bf16.msra.mxu0 0
        %6145 = vmatpush.bf16.msra.mxu0 0
        %6146 = vmatpush.bf16.msra.mxu0 0
        %6147 = vmatpush.bf16.msra.mxu0 0
        %6148 = vmatpush.bf16.msra.mxu0 0
        %6149 = vmatpush.bf16.msra.mxu0 0
        %6150 = vmatpush.bf16.msra.mxu0 %v6141
        %6151 = vmatmul.bf16.gmra.mxu0 %v6138
        %v6152 = vpop.f32.mrf.mxu0
        %v6153 = vadd.f32 %v6128, %v6152
        %v6154 = vpop.f32.mrf.mxu0
        %v6155 = vadd.f32 %v6130, %v6154
        %6156 = vdwg.mxu0
        %v6157 = vld [vmem:[%s1548 + $0x8] sm:$0xf]
        %v6158 = vld [vmem:[%s1548 + $0x18] sm:$0xf]
        %v6159 = vld [vmem:[%s1548 + $0x28] sm:$0xf]
        %v6160 = vld [vmem:[%s1548 + $0x38] sm:$0xf]
        %v6161 = vld [vmem:[%s1554 + $0x3] sm:$0x1]
        %v6163 = vperm.slane %v6161, 0
        %v6168 = vunpack.c.l.b16 %v6157
        %v6169 = vunpack.c.l.b16 %v6158
        %v6170 = vunpack.c.l.b16 %v6159
        %v6171 = vunpack.c.l.b16 %v6160
        %v6172 = vpack.c.b16 %v6169, %v6168
        %v6173 = vpack.c.b16 %v6171, %v6170
        %6174 = vrot.lane.b32.xlu0 %v6172, 48
        %v6175 = vpop.permute.xlu0 %6174
        %6176 = vrot.lane.b32.xlu0 %v6173, 48
        %v6177 = vpop.permute.xlu0 %6176
        %6180 = vrot.lane.b32.xlu0 %v6163, 16
        %v6181 = vpop.permute.xlu0 %6180
        %6183 = vmatpush.bf16.msra.mxu0 0
        %6184 = vmatpush.bf16.msra.mxu0 0
        %6185 = vmatpush.bf16.msra.mxu0 0
        %6186 = vmatpush.bf16.msra.mxu0 0
        %6187 = vmatpush.bf16.msra.mxu0 0
        %6188 = vmatpush.bf16.msra.mxu0 0
        %6189 = vmatpush.bf16.msra.mxu0 %v6177
        %6190 = vmatpush.bf16.msra.mxu0 %v6175
        %6191 = vmatmul.bf16.gmra.mxu0 %v5739
        %v6192 = vpop.f32.mrf.mxu0
        %v6193 = vadd.f32 %v6181, %v6192
        %v6194 = vpop.f32.mrf.mxu0
        %v6195 = vadd.f32 %v6181, %v6194
        %6196 = vdwg.mxu0
        %v6197 = vld [vmem:[%s1554 + $0x4] sm:$0x1]
        %v6199 = vperm.slane %v6197, 0
        %6200 = vrot.lane.b32.xlu0 %v6172, 16
        %v6201 = vpop.permute.xlu0 %6200
        %6202 = vrot.lane.b32.xlu0 %v6173, 16
        %v6203 = vpop.permute.xlu0 %6202
        %6206 = vrot.lane.b32.xlu0 %v6199, 112
        %v6207 = vpop.permute.xlu0 %6206
        %6209 = vmatpush.bf16.msra.mxu0 0
        %6210 = vmatpush.bf16.msra.mxu0 0
        %6211 = vmatpush.bf16.msra.mxu0 0
        %6212 = vmatpush.bf16.msra.mxu0 0
        %6213 = vmatpush.bf16.msra.mxu0 0
        %6214 = vmatpush.bf16.msra.mxu0 0
        %6215 = vmatpush.bf16.msra.mxu0 %v6203
        %6216 = vmatpush.bf16.msra.mxu0 %v6201
        %6217 = vmatmul.bf16.gmra.mxu0 %v3528
        %v6218 = vpop.f32.mrf.mxu0
        %v6219 = vadd.f32 %v6207, %v6218
        %v6220 = vpop.f32.mrf.mxu0
        %6221 = vdwg.mxu0
        %v6222 = vld [vmem:[%s1548 + $0xc] sm:$0xf]
        %v6223 = vld [vmem:[%s1548 + $0x1c] sm:$0xf]
        %v6224 = vld [vmem:[%s1548 + $0x2c] sm:$0xf]
        %v6225 = vld [vmem:[%s1548 + $0x3c] sm:$0xf]
        %v6230 = vunpack.c.l.b16 %v6222
        %v6231 = vunpack.c.l.b16 %v6223
        %v6232 = vunpack.c.l.b16 %v6224
        %v6233 = vunpack.c.l.b16 %v6225
        %v6234 = vpack.c.b16 %v6231, %v6230
        %v6235 = vpack.c.b16 %v6233, %v6232
        %6236 = vrot.lane.b32.xlu0 %v6234, 112
        %v6237 = vpop.permute.xlu0 %6236
        %6238 = vrot.lane.b32.xlu0 %v6235, 112
        %v6239 = vpop.permute.xlu0 %6238
        %6242 = vrot.lane.b32.xlu0 %v6199, 80
        %v6243 = vpop.permute.xlu0 %6242
        %6245 = vmatpush.bf16.msra.mxu0 0
        %6246 = vmatpush.bf16.msra.mxu0 0
        %6247 = vmatpush.bf16.msra.mxu0 0
        %6248 = vmatpush.bf16.msra.mxu0 0
        %6249 = vmatpush.bf16.msra.mxu0 0
        %6250 = vmatpush.bf16.msra.mxu0 0
        %6251 = vmatpush.bf16.msra.mxu0 %v6239
        %6252 = vmatpush.bf16.msra.mxu0 %v6237
        %6253 = vmatmul.bf16.gmra.mxu0 %v3528
        %v6254 = vpop.f32.mrf.mxu0
        %v6255 = vadd.f32 %v6243, %v6254
        %v6256 = vpop.f32.mrf.mxu0
        %6257 = vdwg.mxu0
        %v6258 = vpack.c.bf16 %v6195, %v6193
        %v6259 = vpack.c.bf16 %v6219, %v6219
        %v6261 = vsel %vm707, %v6258, 0
        %v6264 = vsel %vm707, %v6259, 0
        %6266 = vmatpush.bf16.xpose.msra.mxu0 0
        %6267 = vmatpush.bf16.xpose.msra.mxu0 0
        %6268 = vmatpush.bf16.xpose.msra.mxu0 0
        %6269 = vmatpush.bf16.xpose.msra.mxu0 0
        %6270 = vmatpush.bf16.xpose.msra.mxu0 0
        %6271 = vmatpush.bf16.xpose.msra.mxu0 0
        %6272 = vmatpush.bf16.xpose.msra.mxu0 0
        %6273 = vmatpush.bf16.xpose.msra.mxu0 %v6264
        %6274 = vmatmul.bf16.gmra.mxu0 %v6261
        %v6275 = vpop.f32.mrf.mxu0
        %v6276 = vadd.f32 0.0, %v6275
        %v6277 = vpop.f32.mrf.mxu0
        %v6278 = vadd.f32 0.0, %v6277
        %6279 = vdwg.mxu0
        %v6280 = vmul.f32 %v6276, 0.35355338
        %v6281 = vmul.f32 %v6278, 0.35355338
        %v6282 = vadd.f32 %v6280, %v621
        %v6283 = vadd.f32 %v6281, %v621
        %v6284 = vsel %vm707, %v6282, -inf
        %6285 = vmax.xlane.f32.xlu0 %v6284
        %v6286 = vpop.xlane.xlu0 %6285
        %v6287 = vsel %vm707, %v6283, -inf
        %6288 = vmax.xlane.f32.xlu0 %v6287
        %v6289 = vpop.xlane.xlu0 %6288
        %v6290 = vsub.f32 %v6282, %v6286
        %v6291 = vsub.f32 %v6283, %v6289
        %v6292 = vmul.f32 %v6290, 1.442695
        %v6293 = vpow.pop %v6292
        %v6294 = vmul.f32 %v6291, 1.442695
        %v6295 = vpow.pop %v6294
        %v6296 = vsel %vm707, %v6293, 0.0
        %6297 = vadd.xlane.f32.xlu0 %v6296
        %v6298 = vpop.xlane.xlu0 %6297
        %v6299 = vsel %vm707, %v6295, 0.0
        %6300 = vadd.xlane.f32.xlu0 %v6299
        %v6301 = vpop.xlane.xlu0 %6300
        %v6302 = vrcp.pop %v6298
        %v6303 = vmul.f32 %v6298, %v6302
        %v6304 = vsub.f32 1.0, %v6303
        %v6305 = vmul.f32 %v6302, %v6304
        %v6306 = vadd.f32 %v6302, %v6305
        %vm6307 = vweird.f32 %v6298
        %vm6308 = vweird.f32 %v6302
        %vm6309 = vmor %vm6307, %vm6308
        %v6310 = vsel %vm6309, %v6302, %v6306
        %v6311 = vand.u32 2147483647, %v6298
        %vm6312 = vcmp.eq.f32.partialorder %v6311, 8.507059e+37
        %v6313 = vand.u32 %v6298, 2147483648
        %v6314 = vor.u32 1.1754944e-38, %v6313
        %v6315 = vsel %vm6312, %v6314, %v6310
        %v6316 = vmul.f32 %v6293, %v6315
        %v6317 = vrcp.pop %v6301
        %v6318 = vmul.f32 %v6301, %v6317
        %v6319 = vsub.f32 1.0, %v6318
        %v6320 = vmul.f32 %v6317, %v6319
        %v6321 = vadd.f32 %v6317, %v6320
        %vm6322 = vweird.f32 %v6301
        %vm6323 = vweird.f32 %v6317
        %vm6324 = vmor %vm6322, %vm6323
        %v6325 = vsel %vm6324, %v6317, %v6321
        %v6326 = vand.u32 2147483647, %v6301
        %vm6327 = vcmp.eq.f32.partialorder %v6326, 8.507059e+37
        %v6328 = vand.u32 %v6301, 2147483648
        %v6329 = vor.u32 1.1754944e-38, %v6328
        %v6330 = vsel %vm6327, %v6329, %v6325
        %v6331 = vmul.f32 %v6295, %v6330
        %v6332 = vpack.c.bf16 %v6331, %v6316
        %v6333 = vpack.c.bf16 %v6255, %v6255
        %v6335 = vsel %vm707, %v6332, 0
        %v6338 = vsel %vm758, %v6333, 0
        %6340 = vmatpush.bf16.msra.mxu0 0
        %6341 = vmatpush.bf16.msra.mxu0 0
        %6342 = vmatpush.bf16.msra.mxu0 0
        %6343 = vmatpush.bf16.msra.mxu0 0
        %6344 = vmatpush.bf16.msra.mxu0 0
        %6345 = vmatpush.bf16.msra.mxu0 0
        %6346 = vmatpush.bf16.msra.mxu0 0
        %6347 = vmatpush.bf16.msra.mxu0 %v6338
        %6348 = vmatmul.bf16.gmra.mxu0 %v6335
        %v6349 = vpop.f32.mrf.mxu0
        %v6350 = vadd.f32 0.0, %v6349
        %v6351 = vpop.f32.mrf.mxu0
        %v6352 = vadd.f32 0.0, %v6351
        %6353 = vdwg.mxu0
        %v6354 = vld [vmem:[%s1548 + $0x2c] sm:$0xf]
        %v6355 = vpack.c.bf16 %v6352, %v6350
        %v6357 = vunpack.c.l.b16 %v6354
        %v6358 = vpack.c.b16 %v6357, %v6357
        %6359 = vrot.lane.b32.xlu0 %v6358, 96
        %v6360 = vpop.permute.xlu0 %6359
        %v6362 = vsel %vm707, %v6355, 0
        %v6365 = vsel %vm758, %v6360, 0
        %6367 = vmatpush.bf16.msra.mxu0 0
        %6368 = vmatpush.bf16.msra.mxu0 0
        %6369 = vmatpush.bf16.msra.mxu0 0
        %6370 = vmatpush.bf16.msra.mxu0 0
        %6371 = vmatpush.bf16.msra.mxu0 0
        %6372 = vmatpush.bf16.msra.mxu0 0
        %6373 = vmatpush.bf16.msra.mxu0 0
        %6374 = vmatpush.bf16.msra.mxu0 %v6365
        %6375 = vmatmul.bf16.gmra.mxu0 %v6362
        %v6376 = vpop.f32.mrf.mxu0
        %v6377 = vadd.f32 0.0, %v6376
        %v6378 = vpop.f32.mrf.mxu0
        %v6379 = vadd.f32 0.0, %v6378
        %6380 = vdwg.mxu0
        %v6381 = vadd.f32 %v6153, %v6377
        %v6382 = vadd.f32 %v6155, %v6379
        %v6383 = vld [vmem:[%s1548 + $0x8] sm:$0xf]
        %v6384 = vld [vmem:[%s1548 + $0x18] sm:$0xf]
        %v6385 = vld [vmem:[%s1548 + $0x28] sm:$0xf]
        %v6386 = vld [vmem:[%s1548 + $0x38] sm:$0xf]
        %v6387 = vld [vmem:[%s1554 + $0x3] sm:$0x1]
        %v6389 = vperm.slane %v6387, 0
        %v6394 = vunpack.c.l.b16 %v6383
        %v6395 = vunpack.c.l.b16 %v6384
        %v6396 = vunpack.c.l.b16 %v6385
        %v6397 = vunpack.c.l.b16 %v6386
        %v6398 = vpack.c.b16 %v6395, %v6394
        %v6399 = vpack.c.b16 %v6397, %v6396
        %6400 = vrot.lane.b32.xlu0 %v6398, 40
        %v6401 = vpop.permute.xlu0 %6400
        %6402 = vrot.lane.b32.xlu0 %v6399, 40
        %v6403 = vpop.permute.xlu0 %6402
        %6406 = vrot.lane.b32.xlu0 %v6389, 8
        %v6407 = vpop.permute.xlu0 %6406
        %6409 = vmatpush.bf16.msra.mxu0 0
        %6410 = vmatpush.bf16.msra.mxu0 0
        %6411 = vmatpush.bf16.msra.mxu0 0
        %6412 = vmatpush.bf16.msra.mxu0 0
        %6413 = vmatpush.bf16.msra.mxu0 0
        %6414 = vmatpush.bf16.msra.mxu0 0
        %6415 = vmatpush.bf16.msra.mxu0 %v6403
        %6416 = vmatpush.bf16.msra.mxu0 %v6401
        %6417 = vmatmul.bf16.gmra.mxu0 %v5739
        %v6418 = vpop.f32.mrf.mxu0
        %v6419 = vadd.f32 %v6407, %v6418
        %v6420 = vpop.f32.mrf.mxu0
        %v6421 = vadd.f32 %v6407, %v6420
        %6422 = vdwg.mxu0
        %v6423 = vld [vmem:[%s1554 + $0x4] sm:$0x1]
        %v6425 = vperm.slane %v6423, 0
        %6426 = vrot.lane.b32.xlu0 %v6398, 8
        %v6427 = vpop.permute.xlu0 %6426
        %6428 = vrot.lane.b32.xlu0 %v6399, 8
        %v6429 = vpop.permute.xlu0 %6428
        %6432 = vrot.lane.b32.xlu0 %v6425, 104
        %v6433 = vpop.permute.xlu0 %6432
        %6435 = vmatpush.bf16.msra.mxu0 0
        %6436 = vmatpush.bf16.msra.mxu0 0
        %6437 = vmatpush.bf16.msra.mxu0 0
        %6438 = vmatpush.bf16.msra.mxu0 0
        %6439 = vmatpush.bf16.msra.mxu0 0
        %6440 = vmatpush.bf16.msra.mxu0 0
        %6441 = vmatpush.bf16.msra.mxu0 %v6429
        %6442 = vmatpush.bf16.msra.mxu0 %v6427
        %6443 = vmatmul.bf16.gmra.mxu0 %v3528
        %v6444 = vpop.f32.mrf.mxu0
        %v6445 = vadd.f32 %v6433, %v6444
        %v6446 = vpop.f32.mrf.mxu0
        %6447 = vdwg.mxu0
        %v6448 = vld [vmem:[%s1548 + $0xc] sm:$0xf]
        %v6449 = vld [vmem:[%s1548 + $0x1c] sm:$0xf]
        %v6450 = vld [vmem:[%s1548 + $0x2c] sm:$0xf]
        %v6451 = vld [vmem:[%s1548 + $0x3c] sm:$0xf]
        %v6456 = vunpack.c.l.b16 %v6448
        %v6457 = vunpack.c.l.b16 %v6449
        %v6458 = vunpack.c.l.b16 %v6450
        %v6459 = vunpack.c.l.b16 %v6451
        %v6460 = vpack.c.b16 %v6457, %v6456
        %v6461 = vpack.c.b16 %v6459, %v6458
        %6462 = vrot.lane.b32.xlu0 %v6460, 104
        %v6463 = vpop.permute.xlu0 %6462
        %6464 = vrot.lane.b32.xlu0 %v6461, 104
        %v6465 = vpop.permute.xlu0 %6464
        %6468 = vrot.lane.b32.xlu0 %v6425, 72
        %v6469 = vpop.permute.xlu0 %6468
        %6471 = vmatpush.bf16.msra.mxu0 0
        %6472 = vmatpush.bf16.msra.mxu0 0
        %6473 = vmatpush.bf16.msra.mxu0 0
        %6474 = vmatpush.bf16.msra.mxu0 0
        %6475 = vmatpush.bf16.msra.mxu0 0
        %6476 = vmatpush.bf16.msra.mxu0 0
        %6477 = vmatpush.bf16.msra.mxu0 %v6465
        %6478 = vmatpush.bf16.msra.mxu0 %v6463
        %6479 = vmatmul.bf16.gmra.mxu0 %v3528
        %v6480 = vpop.f32.mrf.mxu0
        %v6481 = vadd.f32 %v6469, %v6480
        %v6482 = vpop.f32.mrf.mxu0
        %6483 = vdwg.mxu0
        %v6484 = vpack.c.bf16 %v6421, %v6419
        %v6485 = vpack.c.bf16 %v6445, %v6445
        %v6487 = vsel %vm707, %v6484, 0
        %v6490 = vsel %vm707, %v6485, 0
        %6492 = vmatpush.bf16.xpose.msra.mxu0 0
        %6493 = vmatpush.bf16.xpose.msra.mxu0 0
        %6494 = vmatpush.bf16.xpose.msra.mxu0 0
        %6495 = vmatpush.bf16.xpose.msra.mxu0 0
        %6496 = vmatpush.bf16.xpose.msra.mxu0 0
        %6497 = vmatpush.bf16.xpose.msra.mxu0 0
        %6498 = vmatpush.bf16.xpose.msra.mxu0 0
        %6499 = vmatpush.bf16.xpose.msra.mxu0 %v6490
        %6500 = vmatmul.bf16.gmra.mxu0 %v6487
        %v6501 = vpop.f32.mrf.mxu0
        %v6502 = vadd.f32 0.0, %v6501
        %v6503 = vpop.f32.mrf.mxu0
        %v6504 = vadd.f32 0.0, %v6503
        %6505 = vdwg.mxu0
        %v6506 = vmul.f32 %v6502, 0.35355338
        %v6507 = vmul.f32 %v6504, 0.35355338
        %v6508 = vadd.f32 %v6506, %v621
        %v6509 = vadd.f32 %v6507, %v621
        %v6510 = vsel %vm707, %v6508, -inf
        %6511 = vmax.xlane.f32.xlu0 %v6510
        %v6512 = vpop.xlane.xlu0 %6511
        %v6513 = vsel %vm707, %v6509, -inf
        %6514 = vmax.xlane.f32.xlu0 %v6513
        %v6515 = vpop.xlane.xlu0 %6514
        %v6516 = vsub.f32 %v6508, %v6512
        %v6517 = vsub.f32 %v6509, %v6515
        %v6518 = vmul.f32 %v6516, 1.442695
        %v6519 = vpow.pop %v6518
        %v6520 = vmul.f32 %v6517, 1.442695
        %v6521 = vpow.pop %v6520
        %v6522 = vsel %vm707, %v6519, 0.0
        %6523 = vadd.xlane.f32.xlu0 %v6522
        %v6524 = vpop.xlane.xlu0 %6523
        %v6525 = vsel %vm707, %v6521, 0.0
        %6526 = vadd.xlane.f32.xlu0 %v6525
        %v6527 = vpop.xlane.xlu0 %6526
        %v6528 = vrcp.pop %v6524
        %v6529 = vmul.f32 %v6524, %v6528
        %v6530 = vsub.f32 1.0, %v6529
        %v6531 = vmul.f32 %v6528, %v6530
        %v6532 = vadd.f32 %v6528, %v6531
        %vm6533 = vweird.f32 %v6524
        %vm6534 = vweird.f32 %v6528
        %vm6535 = vmor %vm6533, %vm6534
        %v6536 = vsel %vm6535, %v6528, %v6532
        %v6537 = vand.u32 2147483647, %v6524
        %vm6538 = vcmp.eq.f32.partialorder %v6537, 8.507059e+37
        %v6539 = vand.u32 %v6524, 2147483648
        %v6540 = vor.u32 1.1754944e-38, %v6539
        %v6541 = vsel %vm6538, %v6540, %v6536
        %v6542 = vmul.f32 %v6519, %v6541
        %v6543 = vrcp.pop %v6527
        %v6544 = vmul.f32 %v6527, %v6543
        %v6545 = vsub.f32 1.0, %v6544
        %v6546 = vmul.f32 %v6543, %v6545
        %v6547 = vadd.f32 %v6543, %v6546
        %vm6548 = vweird.f32 %v6527
        %vm6549 = vweird.f32 %v6543
        %vm6550 = vmor %vm6548, %vm6549
        %v6551 = vsel %vm6550, %v6543, %v6547
        %v6552 = vand.u32 2147483647, %v6527
        %vm6553 = vcmp.eq.f32.partialorder %v6552, 8.507059e+37
        %v6554 = vand.u32 %v6527, 2147483648
        %v6555 = vor.u32 1.1754944e-38, %v6554
        %v6556 = vsel %vm6553, %v6555, %v6551
        %v6557 = vmul.f32 %v6521, %v6556
        %v6558 = vpack.c.bf16 %v6557, %v6542
        %v6559 = vpack.c.bf16 %v6481, %v6481
        %v6561 = vsel %vm707, %v6558, 0
        %v6564 = vsel %vm758, %v6559, 0
        %6566 = vmatpush.bf16.msra.mxu0 0
        %6567 = vmatpush.bf16.msra.mxu0 0
        %6568 = vmatpush.bf16.msra.mxu0 0
        %6569 = vmatpush.bf16.msra.mxu0 0
        %6570 = vmatpush.bf16.msra.mxu0 0
        %6571 = vmatpush.bf16.msra.mxu0 0
        %6572 = vmatpush.bf16.msra.mxu0 0
        %6573 = vmatpush.bf16.msra.mxu0 %v6564
        %6574 = vmatmul.bf16.gmra.mxu0 %v6561
        %v6575 = vpop.f32.mrf.mxu0
        %v6576 = vadd.f32 0.0, %v6575
        %v6577 = vpop.f32.mrf.mxu0
        %v6578 = vadd.f32 0.0, %v6577
        %6579 = vdwg.mxu0
        %v6580 = vld [vmem:[%s1548 + $0x3c] sm:$0xf]
        %v6581 = vpack.c.bf16 %v6578, %v6576
        %v6583 = vunpack.c.l.b16 %v6580
        %v6584 = vpack.c.b16 %v6583, %v6583
        %6585 = vrot.lane.b32.xlu0 %v6584, 96
        %v6586 = vpop.permute.xlu0 %6585
        %v6588 = vsel %vm707, %v6581, 0
        %v6591 = vsel %vm758, %v6586, 0
        %6593 = vmatpush.bf16.msra.mxu0 0
        %6594 = vmatpush.bf16.msra.mxu0 0
        %6595 = vmatpush.bf16.msra.mxu0 0
        %6596 = vmatpush.bf16.msra.mxu0 0
        %6597 = vmatpush.bf16.msra.mxu0 0
        %6598 = vmatpush.bf16.msra.mxu0 0
        %6599 = vmatpush.bf16.msra.mxu0 0
        %6600 = vmatpush.bf16.msra.mxu0 %v6591
        %6601 = vmatmul.bf16.gmra.mxu0 %v6588
        %v6602 = vpop.f32.mrf.mxu0
        %v6603 = vadd.f32 0.0, %v6602
        %v6604 = vpop.f32.mrf.mxu0
        %v6605 = vadd.f32 0.0, %v6604
        %6606 = vdwg.mxu0
        %v6607 = vadd.f32 %v6381, %v6603
        %v6608 = vadd.f32 %v6382, %v6605
        %v6609 = vld [vmem:[%s1554 + $0x4] sm:$0x1]
        %v6611 = vperm.slane %v6609, 0
        %6612 = vrot.lane.b32.xlu0 %v6611, 64
        %v6613 = vpop.permute.xlu0 %6612
        %v6615 = vadd.f32 %v6607, %v6613
        %v6616 = vadd.f32 %v6608, %v6613
        %6619 = vrot.lane.b32.xlu0 %v6615, 64
        %v6620 = vpop.permute.xlu0 %6619
        %6621 = vrot.lane.b32.xlu0 %v6616, 64
        %v6622 = vpop.permute.xlu0 %6621
        %v6625 = vadd.f32 %v5712, %v6620
        %v6626 = vadd.f32 %v5713, %v6622
        %v6627 = vld [vmem:[%s1554 + $0x6] sm:$0x1]
        %6630 = vrot.lane.b32.xlu0 %v6625, 64
        %v6631 = vpop.permute.xlu0 %6630
        %6632 = vrot.lane.b32.xlu0 %v6626, 64
        %v6633 = vpop.permute.xlu0 %6632
        %v6636 = vsel %vm644, %v6631, 0.0
        %6637 = vadd.xlane.f32.xlu0 %v6636
        %v6638 = vpop.xlane.xlu0 %6637
        %v6639 = vsel %vm644, %v6633, 0.0
        %6640 = vadd.xlane.f32.xlu0 %v6639
        %v6641 = vpop.xlane.xlu0 %6640
        %v6642 = vmul.f32 %v6638, %v1350
        %v6643 = vmul.f32 %v6641, %v1350
        %v6644 = vsub.f32 %v6625, %v6642
        %v6645 = vsub.f32 %v6626, %v6643
        %v6646 = vmul.f32 %v6644, %v6644
        %v6647 = vmul.f32 %v6645, %v6645
        %6650 = vrot.lane.b32.xlu0 %v6646, 64
        %v6651 = vpop.permute.xlu0 %6650
        %6652 = vrot.lane.b32.xlu0 %v6647, 64
        %v6653 = vpop.permute.xlu0 %6652
        %v6656 = vsel %vm644, %v6651, 0.0
        %6657 = vadd.xlane.f32.xlu0 %v6656
        %v6658 = vpop.xlane.xlu0 %6657
        %v6659 = vsel %vm644, %v6653, 0.0
        %6660 = vadd.xlane.f32.xlu0 %v6659
        %v6661 = vpop.xlane.xlu0 %6660
        %v6662 = vmul.f32 %v6658, 0.032258064
        %v6663 = vmul.f32 %v6661, 0.032258064
        %v6664 = vrsqrt.pop %v6662
        %v6665 = vmul.f32 %v6664, %v6662
        %v6666 = vmul.f32 %v6665, %v6664
        %v6667 = vmul.f32 0.5, %v6666
        %v6668 = vsub.f32 1.5, %v6667
        %v6669 = vmul.f32 %v6664, %v6668
        %v6670 = vmul.f32 %v6662, %v6669
        %vm6671 = vcmp.eq.f32.partialorder %v6662, inf
        %v6672 = vsel %vm6671, %v6662, %v6670
        %vm6673 = vcmp.eq.f32.partialorder %v6662, 0.0
        %v6674 = vand.u32 %v6662, 2147483648
        %v6675 = vsel %vm6673, %v6674, %v6672
        %v6676 = vrsqrt.pop %v6663
        %v6677 = vmul.f32 %v6676, %v6663
        %v6678 = vmul.f32 %v6677, %v6676
        %v6679 = vmul.f32 0.5, %v6678
        %v6680 = vsub.f32 1.5, %v6679
        %v6681 = vmul.f32 %v6676, %v6680
        %v6682 = vmul.f32 %v6663, %v6681
        %vm6683 = vcmp.eq.f32.partialorder %v6663, inf
        %v6684 = vsel %vm6683, %v6663, %v6682
        %vm6685 = vcmp.eq.f32.partialorder %v6663, 0.0
        %v6686 = vand.u32 %v6663, 2147483648
        %v6687 = vsel %vm6685, %v6686, %v6684
        %v6688 = vadd.f32 %v6675, 1e-06
        %v6689 = vadd.f32 %v6687, 1e-06
        %v6690 = vrcp.pop %v6688
        %v6691 = vmul.f32 %v6688, %v6690
        %v6692 = vsub.f32 1.0, %v6691
        %v6693 = vmul.f32 %v6690, %v6692
        %v6694 = vadd.f32 %v6690, %v6693
        %vm6695 = vweird.f32 %v6688
        %vm6696 = vweird.f32 %v6690
        %vm6697 = vmor %vm6695, %vm6696
        %v6698 = vsel %vm6697, %v6690, %v6694
        %v6699 = vand.u32 2147483647, %v6688
        %vm6700 = vcmp.eq.f32.partialorder %v6699, 8.507059e+37
        %v6701 = vand.u32 %v6688, 2147483648
        %v6702 = vor.u32 1.1754944e-38, %v6701
        %v6703 = vsel %vm6700, %v6702, %v6698
        %v6704 = vmul.f32 %v6644, %v6703
        %v6705 = vrcp.pop %v6689
        %v6706 = vmul.f32 %v6689, %v6705
        %v6707 = vsub.f32 1.0, %v6706
        %v6708 = vmul.f32 %v6705, %v6707
        %v6709 = vadd.f32 %v6705, %v6708
        %vm6710 = vweird.f32 %v6689
        %vm6711 = vweird.f32 %v6705
        %vm6712 = vmor %vm6710, %vm6711
        %v6713 = vsel %vm6712, %v6705, %v6709
        %v6714 = vand.u32 2147483647, %v6689
        %vm6715 = vcmp.eq.f32.partialorder %v6714, 8.507059e+37
        %v6716 = vand.u32 %v6689, 2147483648
        %v6717 = vor.u32 1.1754944e-38, %v6716
        %v6718 = vsel %vm6715, %v6717, %v6713
        %v6719 = vmul.f32 %v6645, %v6718
        %v6721 = vperm.slane %v6627, 0
        %6725 = vrot.lane.b32.xlu0 %v6704, 64
        %v6726 = vpop.permute.xlu0 %6725
        %6727 = vrot.lane.b32.xlu0 %v6719, 64
        %v6728 = vpop.permute.xlu0 %6727
        %v6731 = vmul.f32 %v6721, %v6726
        %v6732 = vmul.f32 %v6721, %v6728
        %6733 = vrot.lane.b32.xlu0 %v6721, 96
        %v6734 = vpop.permute.xlu0 %6733
        %v6736 = vadd.f32 %v6731, %v6734
        %v6737 = vadd.f32 %v6732, %v6734
        %v6738 = vld [vmem:[%s1548 + $0xc] sm:$0xf]
        %v6739 = vld [vmem:[%s1548 + $0x1c] sm:$0xf]
        %v6740 = vld [vmem:[%s1548 + $0x2c] sm:$0xf]
        %v6741 = vpack.c.bf16 %v6737, %v6736
        %v6742 = vld [vmem:[%s1554 + $0x4] sm:$0x3]
        %v6744 = vperm.slane %v6742, 0
        %v6745 = vperm.slane %v6742, 1
        %v6749 = vunpack.c.l.b16 %v6738
        %v6750 = vunpack.c.l.b16 %v6739
        %v6751 = vunpack.c.l.b16 %v6740
        %v6752 = vpack.c.b16 %v6750, %v6749
        %v6753 = vpack.c.b16 %v6583, %v6751
        %6754 = vrot.lane.b32.xlu0 %v6752, 64
        %v6755 = vpop.permute.xlu0 %6754
        %6756 = vrot.lane.b32.xlu0 %v6753, 64
        %v6757 = vpop.permute.xlu0 %6756
        %6760 = vrot.lane.b32.xlu0 %v6744, 32
        %v6761 = vpop.permute.xlu0 %6760
        %6762 = vrot.lane.b32.xlu0 %v6745, 32
        %v6763 = vpop.permute.xlu0 %6762
        %v6764 = vsel %vm644, %v6761, %v6763
        %v6767 = vsel %vm644, %v6741, 0
        %6769 = vmatpush.bf16.msra.mxu0 0
        %6770 = vmatpush.bf16.msra.mxu0 0
        %6771 = vmatpush.bf16.msra.mxu0 0
        %6772 = vmatpush.bf16.msra.mxu0 0
        %6773 = vmatpush.bf16.msra.mxu0 0
        %6774 = vmatpush.bf16.msra.mxu0 0
        %6775 = vmatpush.bf16.msra.mxu0 %v6757
        %6776 = vmatpush.bf16.msra.mxu0 %v6755
        %6777 = vmatmul.bf16.gmra.mxu0 %v6767
        %v6778 = vpop.f32.mrf.mxu0
        %v6779 = vadd.f32 %v6764, %v6778
        %v6780 = vpop.f32.mrf.mxu0
        %v6781 = vadd.f32 %v6764, %v6780
        %6782 = vdwg.mxu0
        %v6783 = vmax.f32 %v6779, 0.0
        %v6784 = vmax.f32 %v6781, 0.0
        %v6785 = vld [vmem:[%s2369] sm:$0xf]
        %v6786 = vld [vmem:[%s2369 + $0x4] sm:$0xf]
        %v6787 = vld [vmem:[%s2369 + $0x8] sm:$0xf]
        %v6788 = vld [vmem:[%s2369 + $0xc] sm:$0xf]
        %v6789 = vld [vmem:[%s2369 + $0x10] sm:$0xf]
        %v6790 = vld [vmem:[%s2369 + $0x14] sm:$0xf]
        %v6791 = vld [vmem:[%s2369 + $0x18] sm:$0xf]
        %v6792 = vld [vmem:[%s2369 + $0x1c] sm:$0xf]
        %v6793 = vpack.c.bf16 %v6784, %v6783
        %v6794 = vld [vmem:[%s1554 + $0x5] sm:$0x1]
        %v6796 = vperm.slane %v6794, 0
        %v6805 = vunpack.c.l.b16 %v6785
        %v6806 = vunpack.c.l.b16 %v6786
        %v6807 = vunpack.c.l.b16 %v6787
        %v6808 = vunpack.c.l.b16 %v6788
        %v6809 = vunpack.c.l.b16 %v6789
        %v6810 = vunpack.c.l.b16 %v6790
        %v6811 = vunpack.c.l.b16 %v6791
        %v6812 = vunpack.c.l.b16 %v6792
        %v6813 = vpack.c.b16 %v6806, %v6805
        %v6814 = vpack.c.b16 %v6808, %v6807
        %v6815 = vpack.c.b16 %v6810, %v6809
        %v6816 = vpack.c.b16 %v6812, %v6811
        %6817 = vrot.lane.b32.xlu0 %v6813, 96
        %v6818 = vpop.permute.xlu0 %6817
        %6819 = vrot.lane.b32.xlu0 %v6814, 96
        %v6820 = vpop.permute.xlu0 %6819
        %6821 = vrot.lane.b32.xlu0 %v6815, 96
        %v6822 = vpop.permute.xlu0 %6821
        %6823 = vrot.lane.b32.xlu0 %v6816, 96
        %v6824 = vpop.permute.xlu0 %6823
        %6829 = vrot.lane.b32.xlu0 %v6796, 96
        %v6830 = vpop.permute.xlu0 %6829
        %v6833 = vsel %vm1473, %v6793, 0
        %6835 = vmatpush.bf16.msra.mxu0 0
        %6836 = vmatpush.bf16.msra.mxu0 0
        %6837 = vmatpush.bf16.msra.mxu0 0
        %6838 = vmatpush.bf16.msra.mxu0 0
        %6839 = vmatpush.bf16.msra.mxu0 %v6824
        %6840 = vmatpush.bf16.msra.mxu0 %v6822
        %6841 = vmatpush.bf16.msra.mxu0 %v6820
        %6842 = vmatpush.bf16.msra.mxu0 %v6818
        %6843 = vmatmul.bf16.gmra.mxu0 %v6833
        %v6844 = vpop.f32.mrf.mxu0
        %v6845 = vadd.f32 %v6830, %v6844
        %v6846 = vpop.f32.mrf.mxu0
        %v6847 = vadd.f32 %v6830, %v6846
        %6848 = vdwg.mxu0
        %v6849 = vadd.f32 %v6736, %v6845
        %v6850 = vadd.f32 %v6737, %v6847
        %v6851 = vsel %vm644, %v6849, 0.0
        %6852 = vadd.xlane.f32.xlu0 %v6851
        %v6853 = vpop.xlane.xlu0 %6852
        %v6854 = vsel %vm644, %v6850, 0.0
        %6855 = vadd.xlane.f32.xlu0 %v6854
        %v6856 = vpop.xlane.xlu0 %6855
        %v6857 = vmul.f32 %v6853, %v1350
        %v6858 = vmul.f32 %v6856, %v1350
        %v6859 = vsub.f32 %v6849, %v6857
        %v6860 = vsub.f32 %v6850, %v6858
        %v6861 = vmul.f32 %v6859, %v6859
        %v6862 = vmul.f32 %v6860, %v6860
        %v6863 = vsel %vm644, %v6861, 0.0
        %6864 = vadd.xlane.f32.xlu0 %v6863
        %v6865 = vpop.xlane.xlu0 %6864
        %v6866 = vsel %vm644, %v6862, 0.0
        %6867 = vadd.xlane.f32.xlu0 %v6866
        %v6868 = vpop.xlane.xlu0 %6867
        %v6869 = vmul.f32 %v6865, 0.032258064
        %v6870 = vmul.f32 %v6868, 0.032258064
        %v6871 = vrsqrt.pop %v6869
        %v6872 = vmul.f32 %v6871, %v6869
        %v6873 = vmul.f32 %v6872, %v6871
        %v6874 = vmul.f32 0.5, %v6873
        %v6875 = vsub.f32 1.5, %v6874
        %v6876 = vmul.f32 %v6871, %v6875
        %v6877 = vmul.f32 %v6869, %v6876
        %vm6878 = vcmp.eq.f32.partialorder %v6869, inf
        %v6879 = vsel %vm6878, %v6869, %v6877
        %vm6880 = vcmp.eq.f32.partialorder %v6869, 0.0
        %v6881 = vand.u32 %v6869, 2147483648
        %v6882 = vsel %vm6880, %v6881, %v6879
        %v6883 = vrsqrt.pop %v6870
        %v6884 = vmul.f32 %v6883, %v6870
        %v6885 = vmul.f32 %v6884, %v6883
        %v6886 = vmul.f32 0.5, %v6885
        %v6887 = vsub.f32 1.5, %v6886
        %v6888 = vmul.f32 %v6883, %v6887
        %v6889 = vmul.f32 %v6870, %v6888
        %vm6890 = vcmp.eq.f32.partialorder %v6870, inf
        %v6891 = vsel %vm6890, %v6870, %v6889
        %vm6892 = vcmp.eq.f32.partialorder %v6870, 0.0
        %v6893 = vand.u32 %v6870, 2147483648
        %v6894 = vsel %vm6892, %v6893, %v6891
        %v6895 = vadd.f32 %v6882, 1e-06
        %v6896 = vadd.f32 %v6894, 1e-06
        %v6897 = vrcp.pop %v6895
        %v6898 = vmul.f32 %v6895, %v6897
        %v6899 = vsub.f32 1.0, %v6898
        %v6900 = vmul.f32 %v6897, %v6899
        %v6901 = vadd.f32 %v6897, %v6900
        %vm6902 = vweird.f32 %v6895
        %vm6903 = vweird.f32 %v6897
        %vm6904 = vmor %vm6902, %vm6903
        %v6905 = vsel %vm6904, %v6897, %v6901
        %v6906 = vand.u32 2147483647, %v6895
        %vm6907 = vcmp.eq.f32.partialorder %v6906, 8.507059e+37
        %v6908 = vand.u32 %v6895, 2147483648
        %v6909 = vor.u32 1.1754944e-38, %v6908
        %v6910 = vsel %vm6907, %v6909, %v6905
        %v6911 = vmul.f32 %v6859, %v6910
        %v6912 = vrcp.pop %v6896
        %v6913 = vmul.f32 %v6896, %v6912
        %v6914 = vsub.f32 1.0, %v6913
        %v6915 = vmul.f32 %v6912, %v6914
        %v6916 = vadd.f32 %v6912, %v6915
        %vm6917 = vweird.f32 %v6896
        %vm6918 = vweird.f32 %v6912
        %vm6919 = vmor %vm6917, %vm6918
        %v6920 = vsel %vm6919, %v6912, %v6916
        %v6921 = vand.u32 2147483647, %v6896
        %vm6922 = vcmp.eq.f32.partialorder %v6921, 8.507059e+37
        %v6923 = vand.u32 %v6896, 2147483648
        %v6924 = vor.u32 1.1754944e-38, %v6923
        %v6925 = vsel %vm6922, %v6924, %v6920
        %v6926 = vmul.f32 %v6860, %v6925
        %6929 = vrot.lane.b32.xlu0 %v6911, 64
        %v6930 = vpop.permute.xlu0 %6929
        %6931 = vrot.lane.b32.xlu0 %v6926, 64
        %v6932 = vpop.permute.xlu0 %6931
        %v6935 = vmul.f32 %v6721, %v6930
        %v6936 = vmul.f32 %v6721, %v6932
        %v6937 = vadd.f32 %v6935, %v6734
        %v6938 = vadd.f32 %v6936, %v6734
        %vm6939 = vcmask 785920
        %v6940 = vsel %vm6939, %v6937, 0.0
        %v6941 = vsel %vm6939, %v6938, 0.0
        %v6942 = vadd.f32 %v6940, %v6941
        %v6943 = vrot.slane %v6942, 4
        %v6944 = vadd.f32 %v6942, %v6943
        %v6945 = vrot.slane %v6944, 2
        %v6946 = vadd.f32 %v6944, %v6945
        %v6947 = vrot.slane %v6946, 1
        %v6948 = vadd.f32 %v6946, %v6947
        %v6949 = vmul.f32 %v6948, 0.0625
        %v6950 = vpack.c.bf16 %v6949, %v6949
        %v6951 = vld [vmem:[%s528] sm:$0xf]
        %v6952 = vld [vmem:[%s528 + $0x4] sm:$0xf]
        %v6953 = vld [vmem:[%s528 + $0x8] sm:$0xf]
        %v6954 = vld [vmem:[%s528 + $0xc] sm:$0xf]
        %6956 = vrot.lane.b32.xlu0 %v6950, 64
        %v6957 = vpop.permute.xlu0 %6956
        %v6962 = vunpack.c.l.b16 %v6951
        %v6963 = vunpack.c.l.b16 %v6952
        %v6964 = vunpack.c.l.b16 %v6953
        %v6965 = vunpack.c.l.b16 %v6954
        %v6966 = vpack.c.b16 %v6963, %v6962
        %v6967 = vpack.c.b16 %v6965, %v6964
        %v6971 = vsel %vm644, %v6957, 0
        %6973 = vmatpush.bf16.msra.mxu0 0
        %6974 = vmatpush.bf16.msra.mxu0 0
        %6975 = vmatpush.bf16.msra.mxu0 0
        %6976 = vmatpush.bf16.msra.mxu0 0
        %6977 = vmatpush.bf16.msra.mxu0 0
        %6978 = vmatpush.bf16.msra.mxu0 0
        %6979 = vmatpush.bf16.msra.mxu0 %v6967
        %6980 = vmatpush.bf16.msra.mxu0 %v6966
        %6981 = vmatmul.bf16.gmra.mxu0 %v6971
        %v6982 = vpop.f32.mrf.mxu0
        %v6983 = vadd.f32 0.0, %v6982
        %v6984 = vpop.f32.mrf.mxu0
        %6985 = vdwg.mxu0
        %vm6986 = vcmask 73728
        %6987 = vst.msk [vmem:[%s535] sm:$0x1] %vm6986, %v6983
        %p6988 = scmp.lt.s32.totalorder %s28, 1
        %s6989 = scalar_select %p6988, %s28, 1
        %p6990 = scmp.lt.s32.totalorder %s29, 1
        %s6991 = scalar_select %p6990, %s29, 1
        %s6992 = smul.addr %s6989, 2
        %s6993 = sadd.s32 %s6991, %s6992
        %s6994 = scalar_lea.vmem %s10, %s6993
        // Predicated region
        $region65: #{forward.1} parent=59 // pred_check
          %p6995 = pneg %p305
        $region66: #{forward.1} parent=59 // pred_check_branch
          %6997 = sbr.rel (%p6995) target = $region68
        $region67: #{forward.1} parent=59 // pred_region
          _
        $region68: #{forward.1} parent=59 // pred_fallthru
          _
      $region60: #{forward.1} parent=5 // pred_fallthru
        _
      %p6998 = scmp.le.s32.totalorder 2, %s19
      // Predicated region
      $region69: #{forward.1} parent=5 // pred_check
        %p6999 = pneg %p6998
      $region70: #{forward.1} parent=5 // pred_check_branch
        %7001 = sbr.rel (%p6999) target = $region72
      $region71: #{forward.1} parent=5 // pred_region
        %s7002 = ssub.s32 %s19, 2
        // Predicated region
        $region73: #{forward.1} parent=71 // pred_check
          %p7003 = pneg %p311
        $region74: #{forward.1} parent=71 // pred_check_branch
          %7005 = sbr.rel (%p7003) target = $region76
        $region75: #{forward.1} parent=71 // pred_region
          %p7006 = scmp.lt.s32.totalorder %s30, 1
          %s7007 = scalar_select %p7006, %s30, 1
          %p7008 = scmp.lt.s32.totalorder %s31, 1
          %s7009 = scalar_select %p7008, %s31, 1
          %s7010 = smul.addr %s7007, 2
          %s7011 = sadd.s32 %s7009, %s7010
          %s7012 = scalar_lea.vmem %s10, %s7011
        $region76: #{forward.1} parent=71 // pred_fallthru
          _
      $region72: #{forward.1} parent=5 // pred_fallthru
        _
    $region6: #{forward.1} parent=1 // loop_footer
      %s23 = sadd.s32 1, %s19
    $region7: #{forward.1} parent=1 // loop_footer_branch
      %18 = sbr.rel target = $region3
    $region8: #{forward.1} parent=1 // loop_exit
      _
    %7013 = vsyncpa [#allocation3], 1
    %s7014 = scalar_lea.sflag [#allocation3], 1
    %7015 = vsyncpa %s7014, 1

</llo_original>
